<compile_context>
chip_gen: v6e
topology: v6e:2x2x1
jax: 0.10.0
libtpu: 0.0.40
codegen_flags: <defaults>
</compile_context>

<pallas_src>
import jax
import jax.numpy as jnp
from jax.experimental import pallas as pl
from jax.experimental.pallas import tpu as pltpu

_EPS = 1e-5


def _resblock_kernel(x_ref, w1_ref, b1_ref, w2_ref, b2_ref, o_ref, pad_ref):
    """Fused ResBlock forward for one batch sample.

    x_ref  : (C, H*W)       input sample, lane-dense (VMEM)
    w*_ref : (3, 3, C, C)   conv weights, (ky, kx, Cin, Cout) (VMEM)
    b*_ref : (1, C)         conv biases (VMEM)
    o_ref  : (C, H*W)       output sample (VMEM)
    pad_ref: (H+2, W+2, C)  f32 scratch: zero-padded channels-last activation
    """
    C = x_ref.shape[0]
    Hp, Wp, _ = pad_ref.shape
    H, W = Hp - 2, Wp - 2
    HW = H * W

    # Zero only the 1-element halo; the interior is fully overwritten below.
    zero_row = jnp.zeros((1, Wp, C), jnp.float32)
    zero_col = jnp.zeros((Hp, 1, C), jnp.float32)
    pad_ref[0:1, :, :] = zero_row
    pad_ref[H + 1:H + 2, :, :] = zero_row
    pad_ref[:, 0:1, :] = zero_col
    pad_ref[:, W + 1:W + 2, :] = zero_col

    def conv3x3(w_ref, b_ref):
        # Shifted-matmul convolution on the MXU: 9 taps, each
        # (H*W, Cin) @ (Cin, Cout), accumulated in f32; one bias add at the end.
        acc = jnp.zeros((HW, C), jnp.float32)
        for dy in range(3):
            for dx in range(3):
                win = pad_ref[dy:dy + H, dx:dx + W, :].reshape(HW, C)
                acc = acc + jnp.dot(win, w_ref[dy, dx],
                                    preferred_element_type=jnp.float32)
        return acc + b_ref[...]

    def instance_norm(h):
        # Per-channel mean / biased variance over H*W, eps inside the rsqrt
        # (matches torch.nn.InstanceNorm2d, affine=False).
        inv_hw = 1.0 / float(HW)
        m = jnp.sum(h, axis=0, keepdims=True) * inv_hw          # (1, C)
        d = h - m
        v = jnp.sum(d * d, axis=0, keepdims=True) * inv_hw      # (1, C)
        return d * jax.lax.rsqrt(v + _EPS)

    # ---- Conv2dBlock #1: zero-pad -> conv3x3 -> InstanceNorm -> ReLU ----
    x_lc = jnp.transpose(x_ref[...].astype(jnp.float32))        # (H*W, C)
    pad_ref[1:H + 1, 1:W + 1, :] = x_lc.reshape(H, W, C)
    h1 = jnp.maximum(instance_norm(conv3x3(w1_ref, b1_ref)), 0.0)

    # ---- Conv2dBlock #2: zero-pad -> conv3x3 -> InstanceNorm (no act) ----
    pad_ref[1:H + 1, 1:W + 1, :] = h1.reshape(H, W, C)           # halo still 0
    h2 = instance_norm(conv3x3(w2_ref, b2_ref))

    # ---- residual add: re-read x (still VMEM-resident) right before store ----
    o_ref[...] = (jnp.transpose(h2)
                  + x_ref[...].astype(jnp.float32)).astype(o_ref.dtype)


@jax.jit
def resblock_forward(x, w1, b1, w2, b2):
    """ResBlock forward. x: (N,C,H,W); w1,w2: (C,C,3,3) OIHW; b1,b2: (C,)."""
    N, C, H, W = x.shape
    assert w1.shape == (C, C, 3, 3) and w2.shape == (C, C, 3, 3)
    assert b1.shape == (C,) and b2.shape == (C,)
    HW = H * W

    # Free trailing-dim reshape: kernel I/O is a lane-dense (C, H*W) slab.
    x2 = x.reshape(N, C, HW)
    # OIHW -> (ky, kx, Cin, Cout) so each tap is a plain (Cin, Cout) matmul RHS.
    w1k = jnp.transpose(w1.astype(jnp.float32), (2, 3, 1, 0))
    w2k = jnp.transpose(w2.astype(jnp.float32), (2, 3, 1, 0))
    b1r = b1.astype(jnp.float32).reshape(1, C)
    b2r = b2.astype(jnp.float32).reshape(1, C)

    out2 = pl.pallas_call(
        _resblock_kernel,
        out_shape=jax.ShapeDtypeStruct((N, C, HW), x.dtype),
        grid_spec=pltpu.PrefetchScalarGridSpec(
            num_scalar_prefetch=0,
            grid=(N,),
            in_specs=[
                pl.BlockSpec((None, C, HW), lambda n: (n, 0, 0)),     # x
                pl.BlockSpec((3, 3, C, C), lambda n: (0, 0, 0, 0)),   # w1
                pl.BlockSpec((1, C), lambda n: (0, 0)),               # b1
                pl.BlockSpec((3, 3, C, C), lambda n: (0, 0, 0, 0)),   # w2
                pl.BlockSpec((1, C), lambda n: (0, 0)),               # b2
            ],
            out_specs=pl.BlockSpec((None, C, HW), lambda n: (n, 0, 0)),
            scratch_shapes=[
                pltpu.VMEM((H + 2, W + 2, C), jnp.float32),  # padded activation
            ],
        ),
        compiler_params=pltpu.CompilerParams(
            dimension_semantics=("parallel",),
            vmem_limit_bytes=32 * 1024 * 1024,
        ),
    )(x2, w1k, b1r, w2k, b2r)
    return out2.reshape(N, C, H, W)


class ResBlock:
    """JAX/Pallas port of model/von.py::ResBlock
    (defaults: norm='inst', activation='relu', pad_type='zero', nz=0)."""

    def __init__(self, w1, b1, w2, b2):
        self.w1, self.b1, self.w2, self.b2 = w1, b1, w2, b2

    def __call__(self, x):
        return resblock_forward(x, self.w1, self.b1, self.w2, self.b2)


def resblock_reference(x, w1, b1, w2, b2):
    """Pure-JAX reference matching the PyTorch ResBlock forward."""
    def conv(h, w, b):
        y = jax.lax.conv_general_dilated(
            h, w, window_strides=(1, 1), padding=((1, 1), (1, 1)),
            dimension_numbers=("NCHW", "OIHW", "NCHW"),
            precision=jax.lax.Precision.HIGHEST)
        return y + b[None, :, None, None]

    def inorm(h):
        m = jnp.mean(h, axis=(2, 3), keepdims=True)
        v = jnp.mean(jnp.square(h - m), axis=(2, 3), keepdims=True)
        return (h - m) / jnp.sqrt(v + _EPS)

    h = jnp.maximum(inorm(conv(x, w1, b1)), 0.0)
    h = inorm(conv(h, w2, b2))
    return h + x


if __name__ == "__main__":
    key = jax.random.PRNGKey(0)
    N, C, H, W = 2, 4, 16, 16
    k1, k2, k3, k4, k5 = jax.random.split(key, 5)

    x = jax.random.normal(k1, (N, C, H, W), dtype=jnp.float32)
    w1 = jax.random.normal(k2, (C, C, 3, 3), dtype=jnp.float32) * 0.1
    b1 = jax.random.normal(k3, (C,), dtype=jnp.float32) * 0.1
    w2 = jax.random.normal(k4, (C, C, 3, 3), dtype=jnp.float32) * 0.1
    b2 = jax.random.normal(k5, (C,), dtype=jnp.float32) * 0.1

    block = ResBlock(w1, b1, w2, b2)
    y = jax.block_until_ready(block(x))

    y_ref = resblock_reference(x, w1, b1, w2, b2)
    assert y.shape == (N, C, H, W), y.shape
    max_err = float(jnp.max(jnp.abs(y - y_ref)))
    assert jnp.allclose(y, y_ref, atol=1e-3, rtol=1e-3), max_err

    print("KERNEL_OK")
</pallas_src>

<mosaic_0001>
module attributes {stable_mosaic.version = 11 : i64} {
  func.func @_resblock_kernel(%arg0: i32, %arg1: memref<1x4x256xf32, #tpu.memory_space<vmem>>, %arg2: memref<3x3x4x4xf32, #tpu.memory_space<vmem>>, %arg3: memref<1x4xf32, #tpu.memory_space<vmem>>, %arg4: memref<3x3x4x4xf32, #tpu.memory_space<vmem>>, %arg5: memref<1x4xf32, #tpu.memory_space<vmem>>, %arg6: memref<1x4x256xf32, #tpu.memory_space<vmem>>, %arg7: memref<18x18x4xf32, #tpu.memory_space<vmem>>) attributes {dimension_semantics = [#tpu.dimension_semantics<parallel>], iteration_bounds = array<i64: 2>, scalar_prefetch = 0 : i64, scratch_operands = 1 : i64, tpu.core_type = #tpu.core_type<tc>, window_params = [{transform_indices = @transform_0, window_bounds = array<i64: 1, 4, 256>}, {pipeline_mode = #tpu.pipeline_mode<synchronous>, transform_indices = @transform_1, window_bounds = array<i64: 3, 3, 4, 4>}, {pipeline_mode = #tpu.pipeline_mode<synchronous>, transform_indices = @transform_2, window_bounds = array<i64: 1, 4>}, {pipeline_mode = #tpu.pipeline_mode<synchronous>, transform_indices = @transform_3, window_bounds = array<i64: 3, 3, 4, 4>}, {pipeline_mode = #tpu.pipeline_mode<synchronous>, transform_indices = @transform_4, window_bounds = array<i64: 1, 4>}, {transform_indices = @transform_5, window_bounds = array<i64: 1, 4, 256>}]} {
    %cst = arith.constant 0.000000e+00 : f32
    %0 = vector.broadcast %cst : f32 to vector<1x18x4xf32>
    %cst_0 = arith.constant 0.000000e+00 : f32
    %1 = vector.broadcast %cst_0 : f32 to vector<18x1x4xf32>
    %c0 = arith.constant 0 : index
    %c0_1 = arith.constant 0 : index
    %c0_2 = arith.constant 0 : index
    %2 = vector.load %arg7[%c0, %c0_1, %c0_2] : memref<18x18x4xf32, #tpu.memory_space<vmem>>, vector<1x18x4xf32>
    tpu.vector_store %arg7[%c0, %c0_1, %c0_2], %0 {strides = array<i32>} : memref<18x18x4xf32, #tpu.memory_space<vmem>>, vector<1x18x4xf32>,
    %c17 = arith.constant 17 : index
    %c0_3 = arith.constant 0 : index
    %c0_4 = arith.constant 0 : index
    %3 = vector.load %arg7[%c17, %c0_3, %c0_4] : memref<18x18x4xf32, #tpu.memory_space<vmem>>, vector<1x18x4xf32>
    tpu.vector_store %arg7[%c17, %c0_3, %c0_4], %0 {strides = array<i32>} : memref<18x18x4xf32, #tpu.memory_space<vmem>>, vector<1x18x4xf32>,
    %c0_5 = arith.constant 0 : index
    %c0_6 = arith.constant 0 : index
    %c0_7 = arith.constant 0 : index
    %4 = vector.load %arg7[%c0_5, %c0_6, %c0_7] : memref<18x18x4xf32, #tpu.memory_space<vmem>>, vector<18x1x4xf32>
    tpu.vector_store %arg7[%c0_5, %c0_6, %c0_7], %1 {strides = array<i32>} : memref<18x18x4xf32, #tpu.memory_space<vmem>>, vector<18x1x4xf32>,
    %c0_8 = arith.constant 0 : index
    %c17_9 = arith.constant 17 : index
    %c0_10 = arith.constant 0 : index
    %5 = vector.load %arg7[%c0_8, %c17_9, %c0_10] : memref<18x18x4xf32, #tpu.memory_space<vmem>>, vector<18x1x4xf32>
    tpu.vector_store %arg7[%c0_8, %c17_9, %c0_10], %1 {strides = array<i32>} : memref<18x18x4xf32, #tpu.memory_space<vmem>>, vector<18x1x4xf32>,
    %c0_11 = arith.constant 0 : index
    %c0_12 = arith.constant 0 : index
    %c0_13 = arith.constant 0 : index
    %6 = vector.load %arg1[%c0_11, %c0_12, %c0_13] : memref<1x4x256xf32, #tpu.memory_space<vmem>>, vector<1x4x256xf32>
    %7 = vector.shape_cast %6 : vector<1x4x256xf32> to vector<4x256xf32>
    %8 = tpu.transpose %7, [1, 0] : vector<4x256xf32> -> vector<256x4xf32>
    %9 = vector.shape_cast %8 : vector<256x4xf32> to vector<16x16x4xf32>
    %c1 = arith.constant 1 : index
    %c1_14 = arith.constant 1 : index
    %c0_15 = arith.constant 0 : index
    %10 = vector.load %arg7[%c1, %c1_14, %c0_15] : memref<18x18x4xf32, #tpu.memory_space<vmem>>, vector<16x16x4xf32>
    tpu.vector_store %arg7[%c1, %c1_14, %c0_15], %9 {strides = array<i32>} : memref<18x18x4xf32, #tpu.memory_space<vmem>>, vector<16x16x4xf32>,
    %cst_16 = arith.constant 0.000000e+00 : f32
    %11 = vector.broadcast %cst_16 : f32 to vector<256x4xf32>
    %c0_17 = arith.constant 0 : index
    %c0_18 = arith.constant 0 : index
    %c0_19 = arith.constant 0 : index
    %12 = vector.load %arg7[%c0_17, %c0_18, %c0_19] : memref<18x18x4xf32, #tpu.memory_space<vmem>>, vector<16x16x4xf32>
    %13 = vector.shape_cast %12 : vector<16x16x4xf32> to vector<256x4xf32>
    %c0_20 = arith.constant 0 : index
    %c0_21 = arith.constant 0 : index
    %c0_22 = arith.constant 0 : index
    %c0_23 = arith.constant 0 : index
    %14 = vector.load %arg2[%c0_20, %c0_21, %c0_22, %c0_23] : memref<3x3x4x4xf32, #tpu.memory_space<vmem>>, vector<1x1x4x4xf32>
    %15 = vector.shape_cast %14 : vector<1x1x4x4xf32> to vector<4x4xf32>
    %cst_24 = arith.constant dense<0.000000e+00> : vector<256x4xf32>
    %16 = tpu.matmul %13, %15, %cst_24 {dimension_numbers = #tpu.dot_dimension_numbers<[1], [0], [0], [1], [0, 0, 1, 1], [], []>} : vector<256x4xf32>, vector<4x4xf32>, vector<256x4xf32> -> vector<256x4xf32>
    %17 = arith.addf %11, %16 : vector<256x4xf32>
    %c0_25 = arith.constant 0 : index
    %c1_26 = arith.constant 1 : index
    %c0_27 = arith.constant 0 : index
    %18 = vector.load %arg7[%c0_25, %c1_26, %c0_27] : memref<18x18x4xf32, #tpu.memory_space<vmem>>, vector<16x16x4xf32>
    %19 = vector.shape_cast %18 : vector<16x16x4xf32> to vector<256x4xf32>
    %c0_28 = arith.constant 0 : index
    %c1_29 = arith.constant 1 : index
    %c0_30 = arith.constant 0 : index
    %c0_31 = arith.constant 0 : index
    %20 = vector.load %arg2[%c0_28, %c1_29, %c0_30, %c0_31] : memref<3x3x4x4xf32, #tpu.memory_space<vmem>>, vector<1x1x4x4xf32>
    %21 = vector.shape_cast %20 : vector<1x1x4x4xf32> to vector<4x4xf32>
    %cst_32 = arith.constant dense<0.000000e+00> : vector<256x4xf32>
    %22 = tpu.matmul %19, %21, %cst_32 {dimension_numbers = #tpu.dot_dimension_numbers<[1], [0], [0], [1], [0, 0, 1, 1], [], []>} : vector<256x4xf32>, vector<4x4xf32>, vector<256x4xf32> -> vector<256x4xf32>
    %23 = arith.addf %17, %22 : vector<256x4xf32>
    %c0_33 = arith.constant 0 : index
    %c2 = arith.constant 2 : index
    %c0_34 = arith.constant 0 : index
    %24 = vector.load %arg7[%c0_33, %c2, %c0_34] : memref<18x18x4xf32, #tpu.memory_space<vmem>>, vector<16x16x4xf32>
    %25 = vector.shape_cast %24 : vector<16x16x4xf32> to vector<256x4xf32>
    %c0_35 = arith.constant 0 : index
    %c2_36 = arith.constant 2 : index
    %c0_37 = arith.constant 0 : index
    %c0_38 = arith.constant 0 : index
    %26 = vector.load %arg2[%c0_35, %c2_36, %c0_37, %c0_38] : memref<3x3x4x4xf32, #tpu.memory_space<vmem>>, vector<1x1x4x4xf32>
    %27 = vector.shape_cast %26 : vector<1x1x4x4xf32> to vector<4x4xf32>
    %cst_39 = arith.constant dense<0.000000e+00> : vector<256x4xf32>
    %28 = tpu.matmul %25, %27, %cst_39 {dimension_numbers = #tpu.dot_dimension_numbers<[1], [0], [0], [1], [0, 0, 1, 1], [], []>} : vector<256x4xf32>, vector<4x4xf32>, vector<256x4xf32> -> vector<256x4xf32>
    %29 = arith.addf %23, %28 : vector<256x4xf32>
    %c1_40 = arith.constant 1 : index
    %c0_41 = arith.constant 0 : index
    %c0_42 = arith.constant 0 : index
    %30 = vector.load %arg7[%c1_40, %c0_41, %c0_42] : memref<18x18x4xf32, #tpu.memory_space<vmem>>, vector<16x16x4xf32>
    %31 = vector.shape_cast %30 : vector<16x16x4xf32> to vector<256x4xf32>
    %c1_43 = arith.constant 1 : index
    %c0_44 = arith.constant 0 : index
    %c0_45 = arith.constant 0 : index
    %c0_46 = arith.constant 0 : index
    %32 = vector.load %arg2[%c1_43, %c0_44, %c0_45, %c0_46] : memref<3x3x4x4xf32, #tpu.memory_space<vmem>>, vector<1x1x4x4xf32>
    %33 = vector.shape_cast %32 : vector<1x1x4x4xf32> to vector<4x4xf32>
    %cst_47 = arith.constant dense<0.000000e+00> : vector<256x4xf32>
    %34 = tpu.matmul %31, %33, %cst_47 {dimension_numbers = #tpu.dot_dimension_numbers<[1], [0], [0], [1], [0, 0, 1, 1], [], []>} : vector<256x4xf32>, vector<4x4xf32>, vector<256x4xf32> -> vector<256x4xf32>
    %35 = arith.addf %29, %34 : vector<256x4xf32>
    %c1_48 = arith.constant 1 : index
    %c1_49 = arith.constant 1 : index
    %c0_50 = arith.constant 0 : index
    %36 = vector.load %arg7[%c1_48, %c1_49, %c0_50] : memref<18x18x4xf32, #tpu.memory_space<vmem>>, vector<16x16x4xf32>
    %37 = vector.shape_cast %36 : vector<16x16x4xf32> to vector<256x4xf32>
    %c1_51 = arith.constant 1 : index
    %c1_52 = arith.constant 1 : index
    %c0_53 = arith.constant 0 : index
    %c0_54 = arith.constant 0 : index
    %38 = vector.load %arg2[%c1_51, %c1_52, %c0_53, %c0_54] : memref<3x3x4x4xf32, #tpu.memory_space<vmem>>, vector<1x1x4x4xf32>
    %39 = vector.shape_cast %38 : vector<1x1x4x4xf32> to vector<4x4xf32>
    %cst_55 = arith.constant dense<0.000000e+00> : vector<256x4xf32>
    %40 = tpu.matmul %37, %39, %cst_55 {dimension_numbers = #tpu.dot_dimension_numbers<[1], [0], [0], [1], [0, 0, 1, 1], [], []>} : vector<256x4xf32>, vector<4x4xf32>, vector<256x4xf32> -> vector<256x4xf32>
    %41 = arith.addf %35, %40 : vector<256x4xf32>
    %c1_56 = arith.constant 1 : index
    %c2_57 = arith.constant 2 : index
    %c0_58 = arith.constant 0 : index
    %42 = vector.load %arg7[%c1_56, %c2_57, %c0_58] : memref<18x18x4xf32, #tpu.memory_space<vmem>>, vector<16x16x4xf32>
    %43 = vector.shape_cast %42 : vector<16x16x4xf32> to vector<256x4xf32>
    %c1_59 = arith.constant 1 : index
    %c2_60 = arith.constant 2 : index
    %c0_61 = arith.constant 0 : index
    %c0_62 = arith.constant 0 : index
    %44 = vector.load %arg2[%c1_59, %c2_60, %c0_61, %c0_62] : memref<3x3x4x4xf32, #tpu.memory_space<vmem>>, vector<1x1x4x4xf32>
    %45 = vector.shape_cast %44 : vector<1x1x4x4xf32> to vector<4x4xf32>
    %cst_63 = arith.constant dense<0.000000e+00> : vector<256x4xf32>
    %46 = tpu.matmul %43, %45, %cst_63 {dimension_numbers = #tpu.dot_dimension_numbers<[1], [0], [0], [1], [0, 0, 1, 1], [], []>} : vector<256x4xf32>, vector<4x4xf32>, vector<256x4xf32> -> vector<256x4xf32>
    %47 = arith.addf %41, %46 : vector<256x4xf32>
    %c2_64 = arith.constant 2 : index
    %c0_65 = arith.constant 0 : index
    %c0_66 = arith.constant 0 : index
    %48 = vector.load %arg7[%c2_64, %c0_65, %c0_66] : memref<18x18x4xf32, #tpu.memory_space<vmem>>, vector<16x16x4xf32>
    %49 = vector.shape_cast %48 : vector<16x16x4xf32> to vector<256x4xf32>
    %c2_67 = arith.constant 2 : index
    %c0_68 = arith.constant 0 : index
    %c0_69 = arith.constant 0 : index
    %c0_70 = arith.constant 0 : index
    %50 = vector.load %arg2[%c2_67, %c0_68, %c0_69, %c0_70] : memref<3x3x4x4xf32, #tpu.memory_space<vmem>>, vector<1x1x4x4xf32>
    %51 = vector.shape_cast %50 : vector<1x1x4x4xf32> to vector<4x4xf32>
    %cst_71 = arith.constant dense<0.000000e+00> : vector<256x4xf32>
    %52 = tpu.matmul %49, %51, %cst_71 {dimension_numbers = #tpu.dot_dimension_numbers<[1], [0], [0], [1], [0, 0, 1, 1], [], []>} : vector<256x4xf32>, vector<4x4xf32>, vector<256x4xf32> -> vector<256x4xf32>
    %53 = arith.addf %47, %52 : vector<256x4xf32>
    %c2_72 = arith.constant 2 : index
    %c1_73 = arith.constant 1 : index
    %c0_74 = arith.constant 0 : index
    %54 = vector.load %arg7[%c2_72, %c1_73, %c0_74] : memref<18x18x4xf32, #tpu.memory_space<vmem>>, vector<16x16x4xf32>
    %55 = vector.shape_cast %54 : vector<16x16x4xf32> to vector<256x4xf32>
    %c2_75 = arith.constant 2 : index
    %c1_76 = arith.constant 1 : index
    %c0_77 = arith.constant 0 : index
    %c0_78 = arith.constant 0 : index
    %56 = vector.load %arg2[%c2_75, %c1_76, %c0_77, %c0_78] : memref<3x3x4x4xf32, #tpu.memory_space<vmem>>, vector<1x1x4x4xf32>
    %57 = vector.shape_cast %56 : vector<1x1x4x4xf32> to vector<4x4xf32>
    %cst_79 = arith.constant dense<0.000000e+00> : vector<256x4xf32>
    %58 = tpu.matmul %55, %57, %cst_79 {dimension_numbers = #tpu.dot_dimension_numbers<[1], [0], [0], [1], [0, 0, 1, 1], [], []>} : vector<256x4xf32>, vector<4x4xf32>, vector<256x4xf32> -> vector<256x4xf32>
    %59 = arith.addf %53, %58 : vector<256x4xf32>
    %c2_80 = arith.constant 2 : index
    %c2_81 = arith.constant 2 : index
    %c0_82 = arith.constant 0 : index
    %60 = vector.load %arg7[%c2_80, %c2_81, %c0_82] : memref<18x18x4xf32, #tpu.memory_space<vmem>>, vector<16x16x4xf32>
    %61 = vector.shape_cast %60 : vector<16x16x4xf32> to vector<256x4xf32>
    %c2_83 = arith.constant 2 : index
    %c2_84 = arith.constant 2 : index
    %c0_85 = arith.constant 0 : index
    %c0_86 = arith.constant 0 : index
    %62 = vector.load %arg2[%c2_83, %c2_84, %c0_85, %c0_86] : memref<3x3x4x4xf32, #tpu.memory_space<vmem>>, vector<1x1x4x4xf32>
    %63 = vector.shape_cast %62 : vector<1x1x4x4xf32> to vector<4x4xf32>
    %cst_87 = arith.constant dense<0.000000e+00> : vector<256x4xf32>
    %64 = tpu.matmul %61, %63, %cst_87 {dimension_numbers = #tpu.dot_dimension_numbers<[1], [0], [0], [1], [0, 0, 1, 1], [], []>} : vector<256x4xf32>, vector<4x4xf32>, vector<256x4xf32> -> vector<256x4xf32>
    %65 = arith.addf %59, %64 : vector<256x4xf32>
    %c0_88 = arith.constant 0 : index
    %c0_89 = arith.constant 0 : index
    %66 = vector.load %arg3[%c0_88, %c0_89] : memref<1x4xf32, #tpu.memory_space<vmem>>, vector<1x4xf32>
    %67 = vector.broadcast %66 : vector<1x4xf32> to vector<256x4xf32>
    %68 = arith.addf %65, %67 : vector<256x4xf32>
    %cst_90 = arith.constant dense<0.000000e+00> : vector<4xf32>
    %69 = vector.multi_reduction <add>, %68, %cst_90 [0] : vector<256x4xf32> to vector<4xf32>
    %70 = vector.shape_cast %69 : vector<4xf32> to vector<1x4xf32>
    %cst_91 = arith.constant 3.906250e-03 : f32
    %71 = vector.broadcast %cst_91 : f32 to vector<1x4xf32>
    %72 = arith.mulf %70, %71 : vector<1x4xf32>
    %73 = vector.broadcast %72 : vector<1x4xf32> to vector<256x4xf32>
    %74 = arith.subf %68, %73 : vector<256x4xf32>
    %75 = arith.mulf %74, %74 : vector<256x4xf32>
    %cst_92 = arith.constant dense<0.000000e+00> : vector<4xf32>
    %76 = vector.multi_reduction <add>, %75, %cst_92 [0] : vector<256x4xf32> to vector<4xf32>
    %77 = vector.shape_cast %76 : vector<4xf32> to vector<1x4xf32>
    %cst_93 = arith.constant 3.906250e-03 : f32
    %78 = vector.broadcast %cst_93 : f32 to vector<1x4xf32>
    %79 = arith.mulf %77, %78 : vector<1x4xf32>
    %cst_94 = arith.constant 9.99999974E-6 : f32
    %80 = vector.broadcast %cst_94 : f32 to vector<1x4xf32>
    %81 = arith.addf %79, %80 : vector<1x4xf32>
    %82 = math.rsqrt %81 : vector<1x4xf32>
    %83 = vector.broadcast %82 : vector<1x4xf32> to vector<256x4xf32>
    %84 = arith.mulf %74, %83 : vector<256x4xf32>
    %cst_95 = arith.constant 0.000000e+00 : f32
    %85 = vector.broadcast %cst_95 : f32 to vector<256x4xf32>
    %86 = arith.maximumf %84, %85 : vector<256x4xf32>
    %87 = vector.shape_cast %86 : vector<256x4xf32> to vector<16x16x4xf32>
    %c1_96 = arith.constant 1 : index
    %c1_97 = arith.constant 1 : index
    %c0_98 = arith.constant 0 : index
    %88 = vector.load %arg7[%c1_96, %c1_97, %c0_98] : memref<18x18x4xf32, #tpu.memory_space<vmem>>, vector<16x16x4xf32>
    tpu.vector_store %arg7[%c1_96, %c1_97, %c0_98], %87 {strides = array<i32>} : memref<18x18x4xf32, #tpu.memory_space<vmem>>, vector<16x16x4xf32>,
    %cst_99 = arith.constant 0.000000e+00 : f32
    %89 = vector.broadcast %cst_99 : f32 to vector<256x4xf32>
    %c0_100 = arith.constant 0 : index
    %c0_101 = arith.constant 0 : index
    %c0_102 = arith.constant 0 : index
    %90 = vector.load %arg7[%c0_100, %c0_101, %c0_102] : memref<18x18x4xf32, #tpu.memory_space<vmem>>, vector<16x16x4xf32>
    %91 = vector.shape_cast %90 : vector<16x16x4xf32> to vector<256x4xf32>
    %c0_103 = arith.constant 0 : index
    %c0_104 = arith.constant 0 : index
    %c0_105 = arith.constant 0 : index
    %c0_106 = arith.constant 0 : index
    %92 = vector.load %arg4[%c0_103, %c0_104, %c0_105, %c0_106] : memref<3x3x4x4xf32, #tpu.memory_space<vmem>>, vector<1x1x4x4xf32>
    %93 = vector.shape_cast %92 : vector<1x1x4x4xf32> to vector<4x4xf32>
    %cst_107 = arith.constant dense<0.000000e+00> : vector<256x4xf32>
    %94 = tpu.matmul %91, %93, %cst_107 {dimension_numbers = #tpu.dot_dimension_numbers<[1], [0], [0], [1], [0, 0, 1, 1], [], []>} : vector<256x4xf32>, vector<4x4xf32>, vector<256x4xf32> -> vector<256x4xf32>
    %95 = arith.addf %89, %94 : vector<256x4xf32>
    %c0_108 = arith.constant 0 : index
    %c1_109 = arith.constant 1 : index
    %c0_110 = arith.constant 0 : index
    %96 = vector.load %arg7[%c0_108, %c1_109, %c0_110] : memref<18x18x4xf32, #tpu.memory_space<vmem>>, vector<16x16x4xf32>
    %97 = vector.shape_cast %96 : vector<16x16x4xf32> to vector<256x4xf32>
    %c0_111 = arith.constant 0 : index
    %c1_112 = arith.constant 1 : index
    %c0_113 = arith.constant 0 : index
    %c0_114 = arith.constant 0 : index
    %98 = vector.load %arg4[%c0_111, %c1_112, %c0_113, %c0_114] : memref<3x3x4x4xf32, #tpu.memory_space<vmem>>, vector<1x1x4x4xf32>
    %99 = vector.shape_cast %98 : vector<1x1x4x4xf32> to vector<4x4xf32>
    %cst_115 = arith.constant dense<0.000000e+00> : vector<256x4xf32>
    %100 = tpu.matmul %97, %99, %cst_115 {dimension_numbers = #tpu.dot_dimension_numbers<[1], [0], [0], [1], [0, 0, 1, 1], [], []>} : vector<256x4xf32>, vector<4x4xf32>, vector<256x4xf32> -> vector<256x4xf32>
    %101 = arith.addf %95, %100 : vector<256x4xf32>
    %c0_116 = arith.constant 0 : index
    %c2_117 = arith.constant 2 : index
    %c0_118 = arith.constant 0 : index
    %102 = vector.load %arg7[%c0_116, %c2_117, %c0_118] : memref<18x18x4xf32, #tpu.memory_space<vmem>>, vector<16x16x4xf32>
    %103 = vector.shape_cast %102 : vector<16x16x4xf32> to vector<256x4xf32>
    %c0_119 = arith.constant 0 : index
    %c2_120 = arith.constant 2 : index
    %c0_121 = arith.constant 0 : index
    %c0_122 = arith.constant 0 : index
    %104 = vector.load %arg4[%c0_119, %c2_120, %c0_121, %c0_122] : memref<3x3x4x4xf32, #tpu.memory_space<vmem>>, vector<1x1x4x4xf32>
    %105 = vector.shape_cast %104 : vector<1x1x4x4xf32> to vector<4x4xf32>
    %cst_123 = arith.constant dense<0.000000e+00> : vector<256x4xf32>
    %106 = tpu.matmul %103, %105, %cst_123 {dimension_numbers = #tpu.dot_dimension_numbers<[1], [0], [0], [1], [0, 0, 1, 1], [], []>} : vector<256x4xf32>, vector<4x4xf32>, vector<256x4xf32> -> vector<256x4xf32>
    %107 = arith.addf %101, %106 : vector<256x4xf32>
    %c1_124 = arith.constant 1 : index
    %c0_125 = arith.constant 0 : index
    %c0_126 = arith.constant 0 : index
    %108 = vector.load %arg7[%c1_124, %c0_125, %c0_126] : memref<18x18x4xf32, #tpu.memory_space<vmem>>, vector<16x16x4xf32>
    %109 = vector.shape_cast %108 : vector<16x16x4xf32> to vector<256x4xf32>
    %c1_127 = arith.constant 1 : index
    %c0_128 = arith.constant 0 : index
    %c0_129 = arith.constant 0 : index
    %c0_130 = arith.constant 0 : index
    %110 = vector.load %arg4[%c1_127, %c0_128, %c0_129, %c0_130] : memref<3x3x4x4xf32, #tpu.memory_space<vmem>>, vector<1x1x4x4xf32>
    %111 = vector.shape_cast %110 : vector<1x1x4x4xf32> to vector<4x4xf32>
    %cst_131 = arith.constant dense<0.000000e+00> : vector<256x4xf32>
    %112 = tpu.matmul %109, %111, %cst_131 {dimension_numbers = #tpu.dot_dimension_numbers<[1], [0], [0], [1], [0, 0, 1, 1], [], []>} : vector<256x4xf32>, vector<4x4xf32>, vector<256x4xf32> -> vector<256x4xf32>
    %113 = arith.addf %107, %112 : vector<256x4xf32>
    %c1_132 = arith.constant 1 : index
    %c1_133 = arith.constant 1 : index
    %c0_134 = arith.constant 0 : index
    %114 = vector.load %arg7[%c1_132, %c1_133, %c0_134] : memref<18x18x4xf32, #tpu.memory_space<vmem>>, vector<16x16x4xf32>
    %115 = vector.shape_cast %114 : vector<16x16x4xf32> to vector<256x4xf32>
    %c1_135 = arith.constant 1 : index
    %c1_136 = arith.constant 1 : index
    %c0_137 = arith.constant 0 : index
    %c0_138 = arith.constant 0 : index
    %116 = vector.load %arg4[%c1_135, %c1_136, %c0_137, %c0_138] : memref<3x3x4x4xf32, #tpu.memory_space<vmem>>, vector<1x1x4x4xf32>
    %117 = vector.shape_cast %116 : vector<1x1x4x4xf32> to vector<4x4xf32>
    %cst_139 = arith.constant dense<0.000000e+00> : vector<256x4xf32>
    %118 = tpu.matmul %115, %117, %cst_139 {dimension_numbers = #tpu.dot_dimension_numbers<[1], [0], [0], [1], [0, 0, 1, 1], [], []>} : vector<256x4xf32>, vector<4x4xf32>, vector<256x4xf32> -> vector<256x4xf32>
    %119 = arith.addf %113, %118 : vector<256x4xf32>
    %c1_140 = arith.constant 1 : index
    %c2_141 = arith.constant 2 : index
    %c0_142 = arith.constant 0 : index
    %120 = vector.load %arg7[%c1_140, %c2_141, %c0_142] : memref<18x18x4xf32, #tpu.memory_space<vmem>>, vector<16x16x4xf32>
    %121 = vector.shape_cast %120 : vector<16x16x4xf32> to vector<256x4xf32>
    %c1_143 = arith.constant 1 : index
    %c2_144 = arith.constant 2 : index
    %c0_145 = arith.constant 0 : index
    %c0_146 = arith.constant 0 : index
    %122 = vector.load %arg4[%c1_143, %c2_144, %c0_145, %c0_146] : memref<3x3x4x4xf32, #tpu.memory_space<vmem>>, vector<1x1x4x4xf32>
    %123 = vector.shape_cast %122 : vector<1x1x4x4xf32> to vector<4x4xf32>
    %cst_147 = arith.constant dense<0.000000e+00> : vector<256x4xf32>
    %124 = tpu.matmul %121, %123, %cst_147 {dimension_numbers = #tpu.dot_dimension_numbers<[1], [0], [0], [1], [0, 0, 1, 1], [], []>} : vector<256x4xf32>, vector<4x4xf32>, vector<256x4xf32> -> vector<256x4xf32>
    %125 = arith.addf %119, %124 : vector<256x4xf32>
    %c2_148 = arith.constant 2 : index
    %c0_149 = arith.constant 0 : index
    %c0_150 = arith.constant 0 : index
    %126 = vector.load %arg7[%c2_148, %c0_149, %c0_150] : memref<18x18x4xf32, #tpu.memory_space<vmem>>, vector<16x16x4xf32>
    %127 = vector.shape_cast %126 : vector<16x16x4xf32> to vector<256x4xf32>
    %c2_151 = arith.constant 2 : index
    %c0_152 = arith.constant 0 : index
    %c0_153 = arith.constant 0 : index
    %c0_154 = arith.constant 0 : index
    %128 = vector.load %arg4[%c2_151, %c0_152, %c0_153, %c0_154] : memref<3x3x4x4xf32, #tpu.memory_space<vmem>>, vector<1x1x4x4xf32>
    %129 = vector.shape_cast %128 : vector<1x1x4x4xf32> to vector<4x4xf32>
    %cst_155 = arith.constant dense<0.000000e+00> : vector<256x4xf32>
    %130 = tpu.matmul %127, %129, %cst_155 {dimension_numbers = #tpu.dot_dimension_numbers<[1], [0], [0], [1], [0, 0, 1, 1], [], []>} : vector<256x4xf32>, vector<4x4xf32>, vector<256x4xf32> -> vector<256x4xf32>
    %131 = arith.addf %125, %130 : vector<256x4xf32>
    %c2_156 = arith.constant 2 : index
    %c1_157 = arith.constant 1 : index
    %c0_158 = arith.constant 0 : index
    %132 = vector.load %arg7[%c2_156, %c1_157, %c0_158] : memref<18x18x4xf32, #tpu.memory_space<vmem>>, vector<16x16x4xf32>
    %133 = vector.shape_cast %132 : vector<16x16x4xf32> to vector<256x4xf32>
    %c2_159 = arith.constant 2 : index
    %c1_160 = arith.constant 1 : index
    %c0_161 = arith.constant 0 : index
    %c0_162 = arith.constant 0 : index
    %134 = vector.load %arg4[%c2_159, %c1_160, %c0_161, %c0_162] : memref<3x3x4x4xf32, #tpu.memory_space<vmem>>, vector<1x1x4x4xf32>
    %135 = vector.shape_cast %134 : vector<1x1x4x4xf32> to vector<4x4xf32>
    %cst_163 = arith.constant dense<0.000000e+00> : vector<256x4xf32>
    %136 = tpu.matmul %133, %135, %cst_163 {dimension_numbers = #tpu.dot_dimension_numbers<[1], [0], [0], [1], [0, 0, 1, 1], [], []>} : vector<256x4xf32>, vector<4x4xf32>, vector<256x4xf32> -> vector<256x4xf32>
    %137 = arith.addf %131, %136 : vector<256x4xf32>
    %c2_164 = arith.constant 2 : index
    %c2_165 = arith.constant 2 : index
    %c0_166 = arith.constant 0 : index
    %138 = vector.load %arg7[%c2_164, %c2_165, %c0_166] : memref<18x18x4xf32, #tpu.memory_space<vmem>>, vector<16x16x4xf32>
    %139 = vector.shape_cast %138 : vector<16x16x4xf32> to vector<256x4xf32>
    %c2_167 = arith.constant 2 : index
    %c2_168 = arith.constant 2 : index
    %c0_169 = arith.constant 0 : index
    %c0_170 = arith.constant 0 : index
    %140 = vector.load %arg4[%c2_167, %c2_168, %c0_169, %c0_170] : memref<3x3x4x4xf32, #tpu.memory_space<vmem>>, vector<1x1x4x4xf32>
    %141 = vector.shape_cast %140 : vector<1x1x4x4xf32> to vector<4x4xf32>
    %cst_171 = arith.constant dense<0.000000e+00> : vector<256x4xf32>
    %142 = tpu.matmul %139, %141, %cst_171 {dimension_numbers = #tpu.dot_dimension_numbers<[1], [0], [0], [1], [0, 0, 1, 1], [], []>} : vector<256x4xf32>, vector<4x4xf32>, vector<256x4xf32> -> vector<256x4xf32>
    %143 = arith.addf %137, %142 : vector<256x4xf32>
    %c0_172 = arith.constant 0 : index
    %c0_173 = arith.constant 0 : index
    %144 = vector.load %arg5[%c0_172, %c0_173] : memref<1x4xf32, #tpu.memory_space<vmem>>, vector<1x4xf32>
    %145 = vector.broadcast %144 : vector<1x4xf32> to vector<256x4xf32>
    %146 = arith.addf %143, %145 : vector<256x4xf32>
    %cst_174 = arith.constant dense<0.000000e+00> : vector<4xf32>
    %147 = vector.multi_reduction <add>, %146, %cst_174 [0] : vector<256x4xf32> to vector<4xf32>
    %148 = vector.shape_cast %147 : vector<4xf32> to vector<1x4xf32>
    %cst_175 = arith.constant 3.906250e-03 : f32
    %149 = vector.broadcast %cst_175 : f32 to vector<1x4xf32>
    %150 = arith.mulf %148, %149 : vector<1x4xf32>
    %151 = vector.broadcast %150 : vector<1x4xf32> to vector<256x4xf32>
    %152 = arith.subf %146, %151 : vector<256x4xf32>
    %153 = arith.mulf %152, %152 : vector<256x4xf32>
    %cst_176 = arith.constant dense<0.000000e+00> : vector<4xf32>
    %154 = vector.multi_reduction <add>, %153, %cst_176 [0] : vector<256x4xf32> to vector<4xf32>
    %155 = vector.shape_cast %154 : vector<4xf32> to vector<1x4xf32>
    %cst_177 = arith.constant 3.906250e-03 : f32
    %156 = vector.broadcast %cst_177 : f32 to vector<1x4xf32>
    %157 = arith.mulf %155, %156 : vector<1x4xf32>
    %cst_178 = arith.constant 9.99999974E-6 : f32
    %158 = vector.broadcast %cst_178 : f32 to vector<1x4xf32>
    %159 = arith.addf %157, %158 : vector<1x4xf32>
    %160 = math.rsqrt %159 : vector<1x4xf32>
    %161 = vector.broadcast %160 : vector<1x4xf32> to vector<256x4xf32>
    %162 = arith.mulf %152, %161 : vector<256x4xf32>
    %163 = tpu.transpose %162, [1, 0] : vector<256x4xf32> -> vector<4x256xf32>
    %c0_179 = arith.constant 0 : index
    %c0_180 = arith.constant 0 : index
    %c0_181 = arith.constant 0 : index
    %164 = vector.load %arg1[%c0_179, %c0_180, %c0_181] : memref<1x4x256xf32, #tpu.memory_space<vmem>>, vector<1x4x256xf32>
    %165 = vector.shape_cast %164 : vector<1x4x256xf32> to vector<4x256xf32>
    %166 = arith.addf %163, %165 : vector<4x256xf32>
    %c0_182 = arith.constant 0 : index
    %c0_183 = arith.constant 0 : index
    %c0_184 = arith.constant 0 : index
    %167 = vector.load %arg6[%c0_182, %c0_183, %c0_184] : memref<1x4x256xf32, #tpu.memory_space<vmem>>, vector<1x4x256xf32>
    %168 = vector.shape_cast %167 : vector<1x4x256xf32> to vector<4x256xf32>
    %169 = vector.shape_cast %166 : vector<4x256xf32> to vector<1x4x256xf32>
    tpu.vector_store %arg6[%c0_182, %c0_183, %c0_184], %169 {strides = array<i32>} : memref<1x4x256xf32, #tpu.memory_space<vmem>>, vector<1x4x256xf32>,
    return
  }
  func.func @transform_0(%arg0: i32) -> (i32, i32, i32) {
    %c0_i32 = arith.constant 0 : i32
    %c0_i32_0 = arith.constant 0 : i32
    %c0_i32_1 = arith.constant 0 : i32
    return %arg0, %c0_i32, %c0_i32_0 : i32, i32, i32
  }
  func.func @transform_1(%arg0: i32) -> (i32, i32, i32, i32) {
    %c0_i32 = arith.constant 0 : i32
    %c0_i32_0 = arith.constant 0 : i32
    %c0_i32_1 = arith.constant 0 : i32
    %c0_i32_2 = arith.constant 0 : i32
    %c0_i32_3 = arith.constant 0 : i32
    return %c0_i32, %c0_i32_0, %c0_i32_1, %c0_i32_2 : i32, i32, i32, i32
  }
  func.func @transform_2(%arg0: i32) -> (i32, i32) {
    %c0_i32 = arith.constant 0 : i32
    %c0_i32_0 = arith.constant 0 : i32
    %c0_i32_1 = arith.constant 0 : i32
    return %c0_i32, %c0_i32_0 : i32, i32
  }
  func.func @transform_3(%arg0: i32) -> (i32, i32, i32, i32) {
    %c0_i32 = arith.constant 0 : i32
    %c0_i32_0 = arith.constant 0 : i32
    %c0_i32_1 = arith.constant 0 : i32
    %c0_i32_2 = arith.constant 0 : i32
    %c0_i32_3 = arith.constant 0 : i32
    return %c0_i32, %c0_i32_0, %c0_i32_1, %c0_i32_2 : i32, i32, i32, i32
  }
  func.func @transform_4(%arg0: i32) -> (i32, i32) {
    %c0_i32 = arith.constant 0 : i32
    %c0_i32_0 = arith.constant 0 : i32
    %c0_i32_1 = arith.constant 0 : i32
    return %c0_i32, %c0_i32_0 : i32, i32
  }
  func.func @transform_5(%arg0: i32) -> (i32, i32, i32) {
    %c0_i32 = arith.constant 0 : i32
    %c0_i32_0 = arith.constant 0 : i32
    %c0_i32_1 = arith.constant 0 : i32
    return %arg0, %c0_i32, %c0_i32_0 : i32, i32, i32
  }
}

</mosaic_0001>

<llo_original>
// kernel: resblock_forward.1
$region0: #{resblock_forward.1}
  #allocation0 [shape = 'u32[]', space=smem, size = 0x4, offset = 0x4, fixed_abs, tag = 'smem constant byte address 0x4 - core index']
  #allocation1 [shape = 'u32[144,128]{1,0:T(1,128)}', space=vmem, size = 0x12000, scoped, tag = 'internal scratch']
  #allocation2 [shape = 'f32[18,18,4]{2,1,0:T(8,128)}', space=vmem, size = 0x36000, scoped, tag = 'scratch operand']
  %s0 = inlined_call_operand.vmem [shape: f32[2,4,256], index: 0, kind: input, shape index: {}]
  %s1 = inlined_call_operand.vmem [shape: f32[3,3,4,4], index: 1, kind: input, shape index: {}]
  %s2 = inlined_call_operand.vmem [shape: f32[1,4], index: 2, kind: input, shape index: {}]
  %s3 = inlined_call_operand.vmem [shape: f32[3,3,4,4], index: 3, kind: input, shape index: {}]
  %s4 = inlined_call_operand.vmem [shape: f32[1,4], index: 4, kind: input, shape index: {}]
  %s5 = inlined_call_operand.vmem [shape: f32[2,4,256], index: 5, kind: output, shape index: {}]
  %s6 = sld [smem:[#allocation0]]
  $region53: #{resblock_forward.1} parent=0
    _
  %s8 = ssub.s32 1, %s6
  %s9 = scalar_select 0, %s8, %s6
  loop: start=0, step=1, limit=4
  $region2: #{resblock_forward.1} parent=0 // loop_pre_header
    _
  $region3: #{resblock_forward.1} parent=0 // loop_header
    %s11 = sphi 0, %s15
    %p12 = scmp.ge.s32.totalorder %s11, 4
    %s21 = sphi 0, %s23
    %s24 = sphi 0, %s21
    %s25 = sphi 0, %s24
    %s41 = sphi 0, %s25
    %s45 = sphi 0, %s45
    %s47 = sphi 0, %s45
    %s48 = sphi 0, %s47
    %s62 = sphi 0, %s48
    %s66 = sphi 0, %s66
    %s68 = sphi 0, %s66
    %s69 = sphi 0, %s68
    %s83 = sphi 0, %s69
    %s87 = sphi 0, %s87
    %s89 = sphi 0, %s87
    %s90 = sphi 0, %s89
    %s104 = sphi 0, %s90
    %s108 = sphi 0, %s108
    %s110 = sphi 0, %s108
    %s111 = sphi 0, %s110
    %s125 = sphi 0, %s111
    %s131 = sphi 0, %s133
    %s134 = sphi 0, %s131
    %s135 = sphi 0, %s134
    %s151 = sphi 0, %s135
  $region4: #{resblock_forward.1} parent=0 // loop_header_branch
    %14 = sbr.rel (%p12) target = $region8
  $region5: #{resblock_forward.1} parent=0 // loop_body
    %s16 = ssub.s32 %s11, 1
    %s17 = ssub.s32 %s11, 2
    %s18 = sadd.s32 %s11, 1
    %s19 = ssub.s32 %s11, %s18
    %p20 = scmp.eq.s32.totalorder %s19, 0
    %s22 = sadd.s32 %s21, 1
    %s23 = scalar_select %p20, %s21, %s22
    %p26 = pneg %p20
    %p27 = scmp.eq.s32.totalorder %s11, 1
    %p28 = por %p26, %p27
    %p29 = scmp.ne.s32.totalorder %s21, %s24
    %p30 = scmp.eq.s32.totalorder %s11, 0
    %p31 = por %p29, %p30
    %p32 = scmp.ne.s32.totalorder %s21, %s24
    %p33 = scmp.eq.s32.totalorder %s16, 1
    %p34 = por %p32, %p33
    %p35 = scmp.ne.s32.totalorder %s24, %s25
    %p36 = scmp.eq.s32.totalorder %s16, 0
    %p37 = por %p35, %p36
    %p38 = scmp.ne.s32.totalorder %s24, %s25
    %p39 = scmp.eq.s32.totalorder %s17, 1
    %p40 = por %p38, %p39
    %p42 = scmp.ne.s32.totalorder %s25, %s41
    %p43 = scmp.eq.s32.totalorder %s17, 0
    %p44 = por %p42, %p43
    %s46 = sadd.s32 %s45, 1
    %p49 = scmp.eq.s32.totalorder %s11, 1
    %p50 = scmp.ne.s32.totalorder %s45, %s47
    %p51 = scmp.eq.s32.totalorder %s11, 0
    %p52 = por %p50, %p51
    %p53 = scmp.ne.s32.totalorder %s45, %s47
    %p54 = scmp.eq.s32.totalorder %s16, 1
    %p55 = por %p53, %p54
    %p56 = scmp.ne.s32.totalorder %s47, %s48
    %p57 = scmp.eq.s32.totalorder %s16, 0
    %p58 = por %p56, %p57
    %p59 = scmp.ne.s32.totalorder %s47, %s48
    %p60 = scmp.eq.s32.totalorder %s17, 1
    %p61 = por %p59, %p60
    %p63 = scmp.ne.s32.totalorder %s48, %s62
    %p64 = scmp.eq.s32.totalorder %s17, 0
    %p65 = por %p63, %p64
    %s67 = sadd.s32 %s66, 1
    %p70 = scmp.eq.s32.totalorder %s11, 1
    %p71 = scmp.ne.s32.totalorder %s66, %s68
    %p72 = scmp.eq.s32.totalorder %s11, 0
    %p73 = por %p71, %p72
    %p74 = scmp.ne.s32.totalorder %s66, %s68
    %p75 = scmp.eq.s32.totalorder %s16, 1
    %p76 = por %p74, %p75
    %p77 = scmp.ne.s32.totalorder %s68, %s69
    %p78 = scmp.eq.s32.totalorder %s16, 0
    %p79 = por %p77, %p78
    %p80 = scmp.ne.s32.totalorder %s68, %s69
    %p81 = scmp.eq.s32.totalorder %s17, 1
    %p82 = por %p80, %p81
    %p84 = scmp.ne.s32.totalorder %s69, %s83
    %p85 = scmp.eq.s32.totalorder %s17, 0
    %p86 = por %p84, %p85
    %s88 = sadd.s32 %s87, 1
    %p91 = scmp.eq.s32.totalorder %s11, 1
    %p92 = scmp.ne.s32.totalorder %s87, %s89
    %p93 = scmp.eq.s32.totalorder %s11, 0
    %p94 = por %p92, %p93
    %p95 = scmp.ne.s32.totalorder %s87, %s89
    %p96 = scmp.eq.s32.totalorder %s16, 1
    %p97 = por %p95, %p96
    %p98 = scmp.ne.s32.totalorder %s89, %s90
    %p99 = scmp.eq.s32.totalorder %s16, 0
    %p100 = por %p98, %p99
    %p101 = scmp.ne.s32.totalorder %s89, %s90
    %p102 = scmp.eq.s32.totalorder %s17, 1
    %p103 = por %p101, %p102
    %p105 = scmp.ne.s32.totalorder %s90, %s104
    %p106 = scmp.eq.s32.totalorder %s17, 0
    %p107 = por %p105, %p106
    %s109 = sadd.s32 %s108, 1
    %p112 = scmp.eq.s32.totalorder %s11, 1
    %p113 = scmp.ne.s32.totalorder %s108, %s110
    %p114 = scmp.eq.s32.totalorder %s11, 0
    %p115 = por %p113, %p114
    %p116 = scmp.ne.s32.totalorder %s108, %s110
    %p117 = scmp.eq.s32.totalorder %s16, 1
    %p118 = por %p116, %p117
    %p119 = scmp.ne.s32.totalorder %s110, %s111
    %p120 = scmp.eq.s32.totalorder %s16, 0
    %p121 = por %p119, %p120
    %p122 = scmp.ne.s32.totalorder %s110, %s111
    %p123 = scmp.eq.s32.totalorder %s17, 1
    %p124 = por %p122, %p123
    %p126 = scmp.ne.s32.totalorder %s111, %s125
    %p127 = scmp.eq.s32.totalorder %s17, 0
    %p128 = por %p126, %p127
    %s129 = ssub.s32 %s11, %s18
    %p130 = scmp.eq.s32.totalorder %s129, 0
    %s132 = sadd.s32 %s131, 1
    %s133 = scalar_select %p130, %s131, %s132
    %p136 = pneg %p130
    %p137 = scmp.eq.s32.totalorder %s11, 1
    %p138 = por %p136, %p137
    %p139 = scmp.ne.s32.totalorder %s131, %s134
    %p140 = scmp.eq.s32.totalorder %s11, 0
    %p141 = por %p139, %p140
    %p142 = scmp.ne.s32.totalorder %s131, %s134
    %p143 = scmp.eq.s32.totalorder %s16, 1
    %p144 = por %p142, %p143
    %p145 = scmp.ne.s32.totalorder %s134, %s135
    %p146 = scmp.eq.s32.totalorder %s16, 0
    %p147 = por %p145, %p146
    %p148 = scmp.ne.s32.totalorder %s134, %s135
    %p149 = scmp.eq.s32.totalorder %s17, 1
    %p150 = por %p148, %p149
    %p152 = scmp.ne.s32.totalorder %s135, %s151
    %p153 = scmp.eq.s32.totalorder %s17, 0
    %p154 = por %p152, %p153
    %p155 = scmp.le.s32.totalorder 1, %s11
    %p156 = scmp.lt.s32.totalorder %s11, 3
    %p157 = pnand %p155, %p156
    %p158 = pneg %p157
    // Predicated region
    $region9: #{resblock_forward.1} parent=5 // pred_check
      _
    $region10: #{resblock_forward.1} parent=5 // pred_check_branch
      %160 = sbr.rel (%p157) target = $region12
    $region11: #{resblock_forward.1} parent=5 // pred_region
      %s161 = ssub.s32 %s11, 1
      // Predicated region
      $region13: #{resblock_forward.1} parent=11 // pred_check
        %p162 = pneg %p58
      $region14: #{resblock_forward.1} parent=11 // pred_check_branch
        %164 = sbr.rel (%p162) target = $region16
      $region15: #{resblock_forward.1} parent=11 // pred_region
        _
      $region16: #{resblock_forward.1} parent=11 // pred_fallthru
        _
      // Predicated region
      $region17: #{resblock_forward.1} parent=11 // pred_check
        %p165 = pneg %p79
      $region18: #{resblock_forward.1} parent=11 // pred_check_branch
        %167 = sbr.rel (%p165) target = $region20
      $region19: #{resblock_forward.1} parent=11 // pred_region
        _
      $region20: #{resblock_forward.1} parent=11 // pred_fallthru
        _
      // Predicated region
      $region21: #{resblock_forward.1} parent=11 // pred_check
        %p168 = pneg %p100
      $region22: #{resblock_forward.1} parent=11 // pred_check_branch
        %170 = sbr.rel (%p168) target = $region24
      $region23: #{resblock_forward.1} parent=11 // pred_region
        _
      $region24: #{resblock_forward.1} parent=11 // pred_fallthru
        _
      // Predicated region
      $region25: #{resblock_forward.1} parent=11 // pred_check
        %p171 = pneg %p121
      $region26: #{resblock_forward.1} parent=11 // pred_check_branch
        %173 = sbr.rel (%p171) target = $region28
      $region27: #{resblock_forward.1} parent=11 // pred_region
        _
      $region28: #{resblock_forward.1} parent=11 // pred_fallthru
        _
    $region12: #{resblock_forward.1} parent=5 // pred_fallthru
      _
    %p174 = scmp.lt.s32.totalorder %s11, 2
    // Predicated region
    $region29: #{resblock_forward.1} parent=5 // pred_check
      %p175 = pneg %p174
    $region30: #{resblock_forward.1} parent=5 // pred_check_branch
      %177 = sbr.rel (%p175) target = $region32
    $region31: #{resblock_forward.1} parent=5 // pred_region
      // Predicated region
      $region33: #{resblock_forward.1} parent=31 // pred_check
        %p178 = pneg %p31
      $region34: #{resblock_forward.1} parent=31 // pred_check_branch
        %180 = sbr.rel (%p178) target = $region36
      $region35: #{resblock_forward.1} parent=31 // pred_region
        %p181 = scmp.lt.s32.totalorder %s11, 1
        %s182 = scalar_select %p181, %s11, 1
        %s183 = smul.addr %s182, 2
        %s184 = smul.addr %s183, 4
        %s185 = scalar_lea.vmem %s0, %s184
      $region36: #{resblock_forward.1} parent=31 // pred_fallthru
        _
    $region32: #{resblock_forward.1} parent=5 // pred_fallthru
      _
    %p186 = scmp.le.s32.totalorder 1, %s11
    %p187 = scmp.lt.s32.totalorder %s11, 3
    %p188 = pnand %p186, %p187
    %p189 = pneg %p188
    // Predicated region
    $region37: #{resblock_forward.1} parent=5 // pred_check
      _
    $region38: #{resblock_forward.1} parent=5 // pred_check_branch
      %191 = sbr.rel (%p188) target = $region40
    $region39: #{resblock_forward.1} parent=5 // pred_region
      %s192 = ssub.s32 %s11, 1
      %p193 = scmp.lt.s32.totalorder %s16, 1
      %s194 = scalar_select %p193, %s16, 1
      %s195 = smul.addr %s194, 2
      %s196 = smul.addr %s195, 4
      %s197 = scalar_lea.vmem %s0, %s196
      %p198 = pneg %p37
      %p199 = pneg %p34
      %p200 = pneg %p58
      %p201 = pneg %p55
      %p202 = pneg %p79
      %p203 = pneg %p76
      %p204 = pneg %p100
      %p205 = pneg %p97
      %p206 = pneg %p121
      %p207 = pneg %p118
      %p208 = pneg %p147
      %p209 = pneg %p144
      %p210 = scmp.lt.s32.totalorder %s16, 1
      %s211 = scalar_select %p210, %s16, 1
      %s212 = smul.addr %s211, 2
      %s213 = smul.addr %s212, 4
      %s214 = scalar_lea.vmem %s5, %s213
      %p215 = scmp.lt.s32.totalorder %s16, 1
      %s216 = scalar_select %p215, %s16, 1
      %s217 = smul.addr %s216, 2
      %s218 = smul.addr %s217, 4
      %s219 = scalar_lea.vmem %s0, %s218
      %p220 = scmp.lt.s32.totalorder %s16, 1
      %s221 = scalar_select %p220, %s16, 1
      %s222 = smul.addr %s221, 2
      %s223 = smul.addr %s222, 4
      %s224 = scalar_lea.vmem %s5, %s223
      %vm225 = vcmask 31744
      %226 = vst.msk [vmem:[#allocation2] sm:$0xff] %vm225, 0.0
      %227 = vst.msk [vmem:[#allocation2 + $0x8] sm:$0xff] %vm225, 0.0
      %vm228 = vcmask 25600
      %229 = vst.msk [vmem:[#allocation2 + $0x10] sm:$0x3] %vm228, 0.0
      %s230 = scalar_lea.vmem [#allocation2], 408
      %231 = vst.msk [vmem:[%s230] sm:$0xff] %vm225, 0.0
      %232 = vst.msk [vmem:[%s230 + $0x8] sm:$0xff] %vm225, 0.0
      %233 = vst.msk [vmem:[%s230 + $0x10] sm:$0x3] %vm228, 0.0
      %vm234 = vcmask 24576
      %235 = vst.msk [vmem:[#allocation2] sm:$0x1] %vm234, 0.0
      %236 = vst.msk [vmem:[#allocation2 + $0x18] sm:$0x1] %vm234, 0.0
      %237 = vst.msk [vmem:[#allocation2 + $0x30] sm:$0x1] %vm234, 0.0
      %238 = vst.msk [vmem:[#allocation2 + $0x48] sm:$0x1] %vm234, 0.0
      %239 = vst.msk [vmem:[#allocation2 + $0x60] sm:$0x1] %vm234, 0.0
      %240 = vst.msk [vmem:[#allocation2 + $0x78] sm:$0x1] %vm234, 0.0
      %241 = vst.msk [vmem:[#allocation2 + $0x90] sm:$0x1] %vm234, 0.0
      %242 = vst.msk [vmem:[#allocation2 + $0xa8] sm:$0x1] %vm234, 0.0
      %243 = vst.msk [vmem:[#allocation2 + $0xc0] sm:$0x1] %vm234, 0.0
      %244 = vst.msk [vmem:[#allocation2 + $0xd8] sm:$0x1] %vm234, 0.0
      %245 = vst.msk [vmem:[#allocation2 + $0xf0] sm:$0x1] %vm234, 0.0
      %246 = vst.msk [vmem:[#allocation2 + $0x108] sm:$0x1] %vm234, 0.0
      %247 = vst.msk [vmem:[#allocation2 + $0x120] sm:$0x1] %vm234, 0.0
      %248 = vst.msk [vmem:[#allocation2 + $0x138] sm:$0x1] %vm234, 0.0
      %249 = vst.msk [vmem:[#allocation2 + $0x150] sm:$0x1] %vm234, 0.0
      %250 = vst.msk [vmem:[#allocation2 + $0x168] sm:$0x1] %vm234, 0.0
      %251 = vst.msk [vmem:[#allocation2 + $0x180] sm:$0x1] %vm234, 0.0
      %252 = vst.msk [vmem:[#allocation2 + $0x198] sm:$0x1] %vm234, 0.0
      %253 = vst.msk [vmem:[#allocation2 + $0x11] sm:$0x1] %vm234, 0.0
      %254 = vst.msk [vmem:[#allocation2 + $0x29] sm:$0x1] %vm234, 0.0
      %255 = vst.msk [vmem:[#allocation2 + $0x41] sm:$0x1] %vm234, 0.0
      %256 = vst.msk [vmem:[#allocation2 + $0x59] sm:$0x1] %vm234, 0.0
      %257 = vst.msk [vmem:[#allocation2 + $0x71] sm:$0x1] %vm234, 0.0
      %258 = vst.msk [vmem:[#allocation2 + $0x89] sm:$0x1] %vm234, 0.0
      %259 = vst.msk [vmem:[#allocation2 + $0xa1] sm:$0x1] %vm234, 0.0
      %260 = vst.msk [vmem:[#allocation2 + $0xb9] sm:$0x1] %vm234, 0.0
      %261 = vst.msk [vmem:[#allocation2 + $0xd1] sm:$0x1] %vm234, 0.0
      %262 = vst.msk [vmem:[#allocation2 + $0xe9] sm:$0x1] %vm234, 0.0
      %263 = vst.msk [vmem:[#allocation2 + $0x101] sm:$0x1] %vm234, 0.0
      %264 = vst.msk [vmem:[#allocation2 + $0x119] sm:$0x1] %vm234, 0.0
      %265 = vst.msk [vmem:[#allocation2 + $0x131] sm:$0x1] %vm234, 0.0
      %266 = vst.msk [vmem:[#allocation2 + $0x149] sm:$0x1] %vm234, 0.0
      %267 = vst.msk [vmem:[#allocation2 + $0x161] sm:$0x1] %vm234, 0.0
      %268 = vst.msk [vmem:[#allocation2 + $0x179] sm:$0x1] %vm234, 0.0
      %269 = vst.msk [vmem:[#allocation2 + $0x191] sm:$0x1] %vm234, 0.0
      %270 = vst.msk [vmem:[#allocation2 + $0x1a9] sm:$0x1] %vm234, 0.0
      %v271 = vld [vmem:[%s219] sm:$0xff]
      %v273 = vcombine.high %v271, %v271
      %275 = vxpose.xlu0.b32.start [1/16] %v271, 128
      %276 = vxpose.xlu0.b32.cont [2/16] 0.0, 128
      %277 = vxpose.xlu0.b32.cont [3/16] 0.0, 128
      %278 = vxpose.xlu0.b32.cont [4/16] 0.0, 128
      %279 = vxpose.xlu0.b32.cont [5/16] 0.0, 128
      %280 = vxpose.xlu0.b32.cont [6/16] 0.0, 128
      %281 = vxpose.xlu0.b32.cont [7/16] 0.0, 128
      %282 = vxpose.xlu0.b32.cont [8/16] 0.0, 128
      %283 = vxpose.xlu0.b32.cont [9/16] 0.0, 128
      %284 = vxpose.xlu0.b32.cont [10/16] 0.0, 128
      %285 = vxpose.xlu0.b32.cont [11/16] 0.0, 128
      %286 = vxpose.xlu0.b32.cont [12/16] 0.0, 128
      %287 = vxpose.xlu0.b32.cont [13/16] 0.0, 128
      %288 = vxpose.xlu0.b32.cont [14/16] 0.0, 128
      %289 = vxpose.xlu0.b32.cont [15/16] 0.0, 128
      %290 = vxpose.xlu0.b32.end [16/16] 0.0, 128
      %v291 = vpop.trf.xlu0
      %v292 = vpop.trf.xlu0
      %v293 = vpop.trf.xlu0
      %v294 = vpop.trf.xlu0
      %v295 = vpop.trf.xlu0
      %v296 = vpop.trf.xlu0
      %v297 = vpop.trf.xlu0
      %v298 = vpop.trf.xlu0
      %v299 = vpop.trf.xlu0
      %v300 = vpop.trf.xlu0
      %v301 = vpop.trf.xlu0
      %v302 = vpop.trf.xlu0
      %v303 = vpop.trf.xlu0
      %v304 = vpop.trf.xlu0
      %v305 = vpop.trf.xlu0
      %v306 = vpop.trf.xlu0
      %307 = vxpose.xlu0.b32.start [1/16] %v273, 128
      %308 = vxpose.xlu0.b32.cont [2/16] 0.0, 128
      %309 = vxpose.xlu0.b32.cont [3/16] 0.0, 128
      %310 = vxpose.xlu0.b32.cont [4/16] 0.0, 128
      %311 = vxpose.xlu0.b32.cont [5/16] 0.0, 128
      %312 = vxpose.xlu0.b32.cont [6/16] 0.0, 128
      %313 = vxpose.xlu0.b32.cont [7/16] 0.0, 128
      %314 = vxpose.xlu0.b32.cont [8/16] 0.0, 128
      %315 = vxpose.xlu0.b32.cont [9/16] 0.0, 128
      %316 = vxpose.xlu0.b32.cont [10/16] 0.0, 128
      %317 = vxpose.xlu0.b32.cont [11/16] 0.0, 128
      %318 = vxpose.xlu0.b32.cont [12/16] 0.0, 128
      %319 = vxpose.xlu0.b32.cont [13/16] 0.0, 128
      %320 = vxpose.xlu0.b32.cont [14/16] 0.0, 128
      %321 = vxpose.xlu0.b32.cont [15/16] 0.0, 128
      %322 = vxpose.xlu0.b32.end [16/16] 0.0, 128
      %v323 = vpop.trf.xlu0
      %v324 = vpop.trf.xlu0
      %v325 = vpop.trf.xlu0
      %v326 = vpop.trf.xlu0
      %v327 = vpop.trf.xlu0
      %v328 = vpop.trf.xlu0
      %v329 = vpop.trf.xlu0
      %v330 = vpop.trf.xlu0
      %v331 = vpop.trf.xlu0
      %v332 = vpop.trf.xlu0
      %v333 = vpop.trf.xlu0
      %v334 = vpop.trf.xlu0
      %v335 = vpop.trf.xlu0
      %v336 = vpop.trf.xlu0
      %v337 = vpop.trf.xlu0
      %v338 = vpop.trf.xlu0
      %s339 = scalar_lea.vmem [#allocation2], 24
      %340 = vst.msk [vmem:[%s339 + $0x1] sm:$0xff] %vm225, %v291
      %341 = vst.msk [vmem:[%s339 + $0x9] sm:$0xff] %vm225, %v292
      %342 = vst.msk [vmem:[%s339 + $0x19] sm:$0xff] %vm225, %v293
      %343 = vst.msk [vmem:[%s339 + $0x21] sm:$0xff] %vm225, %v294
      %344 = vst.msk [vmem:[%s339 + $0x31] sm:$0xff] %vm225, %v295
      %345 = vst.msk [vmem:[%s339 + $0x39] sm:$0xff] %vm225, %v296
      %346 = vst.msk [vmem:[%s339 + $0x49] sm:$0xff] %vm225, %v297
      %347 = vst.msk [vmem:[%s339 + $0x51] sm:$0xff] %vm225, %v298
      %348 = vst.msk [vmem:[%s339 + $0x61] sm:$0xff] %vm225, %v299
      %349 = vst.msk [vmem:[%s339 + $0x69] sm:$0xff] %vm225, %v300
      %350 = vst.msk [vmem:[%s339 + $0x79] sm:$0xff] %vm225, %v301
      %351 = vst.msk [vmem:[%s339 + $0x81] sm:$0xff] %vm225, %v302
      %352 = vst.msk [vmem:[%s339 + $0x91] sm:$0xff] %vm225, %v303
      %353 = vst.msk [vmem:[%s339 + $0x99] sm:$0xff] %vm225, %v304
      %354 = vst.msk [vmem:[%s339 + $0xa9] sm:$0xff] %vm225, %v305
      %355 = vst.msk [vmem:[%s339 + $0xb1] sm:$0xff] %vm225, %v306
      %356 = vst.msk [vmem:[%s339 + $0xc1] sm:$0xff] %vm225, %v323
      %357 = vst.msk [vmem:[%s339 + $0xc9] sm:$0xff] %vm225, %v324
      %358 = vst.msk [vmem:[%s339 + $0xd9] sm:$0xff] %vm225, %v325
      %359 = vst.msk [vmem:[%s339 + $0xe1] sm:$0xff] %vm225, %v326
      %360 = vst.msk [vmem:[%s339 + $0xf1] sm:$0xff] %vm225, %v327
      %361 = vst.msk [vmem:[%s339 + $0xf9] sm:$0xff] %vm225, %v328
      %362 = vst.msk [vmem:[%s339 + $0x109] sm:$0xff] %vm225, %v329
      %363 = vst.msk [vmem:[%s339 + $0x111] sm:$0xff] %vm225, %v330
      %364 = vst.msk [vmem:[%s339 + $0x121] sm:$0xff] %vm225, %v331
      %365 = vst.msk [vmem:[%s339 + $0x129] sm:$0xff] %vm225, %v332
      %366 = vst.msk [vmem:[%s339 + $0x139] sm:$0xff] %vm225, %v333
      %367 = vst.msk [vmem:[%s339 + $0x141] sm:$0xff] %vm225, %v334
      %368 = vst.msk [vmem:[%s339 + $0x151] sm:$0xff] %vm225, %v335
      %369 = vst.msk [vmem:[%s339 + $0x159] sm:$0xff] %vm225, %v336
      %370 = vst.msk [vmem:[%s339 + $0x169] sm:$0xff] %vm225, %v337
      %371 = vst.msk [vmem:[%s339 + $0x171] sm:$0xff] %vm225, %v338
      %v372 = vld [vmem:[#allocation2] sm:$0xff]
      %v373 = vld [vmem:[#allocation2 + $0x8] sm:$0xff]
      %v374 = vld [vmem:[#allocation2 + $0x18] sm:$0xff]
      %v375 = vld [vmem:[#allocation2 + $0x20] sm:$0xff]
      %v376 = vld [vmem:[#allocation2 + $0x30] sm:$0xff]
      %v377 = vld [vmem:[#allocation2 + $0x38] sm:$0xff]
      %v378 = vld [vmem:[#allocation2 + $0x48] sm:$0xff]
      %v379 = vld [vmem:[#allocation2 + $0x50] sm:$0xff]
      %v380 = vld [vmem:[#allocation2 + $0x60] sm:$0xff]
      %v381 = vld [vmem:[#allocation2 + $0x68] sm:$0xff]
      %v382 = vld [vmem:[#allocation2 + $0x78] sm:$0xff]
      %v383 = vld [vmem:[#allocation2 + $0x80] sm:$0xff]
      %v384 = vld [vmem:[#allocation2 + $0x90] sm:$0xff]
      %v385 = vld [vmem:[#allocation2 + $0x98] sm:$0xff]
      %v386 = vld [vmem:[#allocation2 + $0xa8] sm:$0xff]
      %v387 = vld [vmem:[#allocation2 + $0xb0] sm:$0xff]
      %v388 = vld [vmem:[#allocation2 + $0xc0] sm:$0xff]
      %v389 = vld [vmem:[#allocation2 + $0xc8] sm:$0xff]
      %v390 = vld [vmem:[#allocation2 + $0xd8] sm:$0xff]
      %v391 = vld [vmem:[#allocation2 + $0xe0] sm:$0xff]
      %v392 = vld [vmem:[#allocation2 + $0xf0] sm:$0xff]
      %v393 = vld [vmem:[#allocation2 + $0xf8] sm:$0xff]
      %v394 = vld [vmem:[#allocation2 + $0x108] sm:$0xff]
      %v395 = vld [vmem:[#allocation2 + $0x110] sm:$0xff]
      %v396 = vld [vmem:[#allocation2 + $0x120] sm:$0xff]
      %v397 = vld [vmem:[#allocation2 + $0x128] sm:$0xff]
      %v398 = vld [vmem:[#allocation2 + $0x138] sm:$0xff]
      %v399 = vld [vmem:[#allocation2 + $0x140] sm:$0xff]
      %v400 = vld [vmem:[#allocation2 + $0x150] sm:$0xff]
      %v401 = vld [vmem:[#allocation2 + $0x158] sm:$0xff]
      %v402 = vld [vmem:[#allocation2 + $0x168] sm:$0xff]
      %v403 = vld [vmem:[#allocation2 + $0x170] sm:$0xff]
      %v404 = vld [vmem:[%s1] sm:$0xf]
      %v405 = vld [vmem:[#allocation2 + $0x1] sm:$0xff]
      %v406 = vld [vmem:[#allocation2 + $0x9] sm:$0xff]
      %v407 = vld [vmem:[#allocation2 + $0x19] sm:$0xff]
      %v408 = vld [vmem:[#allocation2 + $0x21] sm:$0xff]
      %v409 = vld [vmem:[#allocation2 + $0x31] sm:$0xff]
      %v410 = vld [vmem:[#allocation2 + $0x39] sm:$0xff]
      %v411 = vld [vmem:[#allocation2 + $0x49] sm:$0xff]
      %v412 = vld [vmem:[#allocation2 + $0x51] sm:$0xff]
      %v413 = vld [vmem:[#allocation2 + $0x61] sm:$0xff]
      %v414 = vld [vmem:[#allocation2 + $0x69] sm:$0xff]
      %v415 = vld [vmem:[#allocation2 + $0x79] sm:$0xff]
      %v416 = vld [vmem:[#allocation2 + $0x81] sm:$0xff]
      %v417 = vld [vmem:[#allocation2 + $0x91] sm:$0xff]
      %v418 = vld [vmem:[#allocation2 + $0x99] sm:$0xff]
      %v419 = vld [vmem:[#allocation2 + $0xa9] sm:$0xff]
      %v420 = vld [vmem:[#allocation2 + $0xb1] sm:$0xff]
      %v421 = vld [vmem:[#allocation2 + $0xc1] sm:$0xff]
      %v422 = vld [vmem:[#allocation2 + $0xc9] sm:$0xff]
      %v423 = vld [vmem:[#allocation2 + $0xd9] sm:$0xff]
      %v424 = vld [vmem:[#allocation2 + $0xe1] sm:$0xff]
      %v425 = vld [vmem:[#allocation2 + $0xf1] sm:$0xff]
      %v426 = vld [vmem:[#allocation2 + $0xf9] sm:$0xff]
      %v427 = vld [vmem:[#allocation2 + $0x109] sm:$0xff]
      %v428 = vld [vmem:[#allocation2 + $0x111] sm:$0xff]
      %v429 = vld [vmem:[#allocation2 + $0x121] sm:$0xff]
      %v430 = vld [vmem:[#allocation2 + $0x129] sm:$0xff]
      %v431 = vld [vmem:[#allocation2 + $0x139] sm:$0xff]
      %v432 = vld [vmem:[#allocation2 + $0x141] sm:$0xff]
      %v433 = vld [vmem:[#allocation2 + $0x151] sm:$0xff]
      %v434 = vld [vmem:[#allocation2 + $0x159] sm:$0xff]
      %v435 = vld [vmem:[#allocation2 + $0x169] sm:$0xff]
      %v436 = vld [vmem:[#allocation2 + $0x171] sm:$0xff]
      %s437 = scalar_lea.vmem %s1, 4
      %v438 = vld [vmem:[%s437] sm:$0xf]
      %v440 = vsel %vm225, %v405, 0
      %v443 = vsel %vm225, %v406, 0
      %v446 = vsel %vm225, %v407, 0
      %v449 = vsel %vm225, %v408, 0
      %v452 = vsel %vm225, %v409, 0
      %v455 = vsel %vm225, %v410, 0
      %v458 = vsel %vm225, %v411, 0
      %v461 = vsel %vm225, %v412, 0
      %v464 = vsel %vm225, %v413, 0
      %v467 = vsel %vm225, %v414, 0
      %v470 = vsel %vm225, %v415, 0
      %v473 = vsel %vm225, %v416, 0
      %v476 = vsel %vm225, %v417, 0
      %v479 = vsel %vm225, %v418, 0
      %v482 = vsel %vm225, %v419, 0
      %v485 = vsel %vm225, %v420, 0
      %v488 = vsel %vm225, %v421, 0
      %v491 = vsel %vm225, %v422, 0
      %v494 = vsel %vm225, %v423, 0
      %v497 = vsel %vm225, %v424, 0
      %v500 = vsel %vm225, %v425, 0
      %v503 = vsel %vm225, %v426, 0
      %v506 = vsel %vm225, %v427, 0
      %v509 = vsel %vm225, %v428, 0
      %v512 = vsel %vm225, %v429, 0
      %v515 = vsel %vm225, %v430, 0
      %v518 = vsel %vm225, %v431, 0
      %v521 = vsel %vm225, %v432, 0
      %v524 = vsel %vm225, %v433, 0
      %v527 = vsel %vm225, %v434, 0
      %v530 = vsel %vm225, %v435, 0
      %v533 = vsel %vm225, %v436, 0
      %vm535 = vcmask 1043456
      %v537 = vsel %vm535, %v438, 0
      %539 = vmatprep.subr.mxu0 0.0
      %540 = vmatpush1.msra.mxu0 0.0
      %541 = vmatprep.subr.mxu0 0.0
      %542 = vmatpush1.msra.mxu0 0.0
      %543 = vmatprep.subr.mxu0 0.0
      %544 = vmatpush1.msra.mxu0 0.0
      %545 = vmatprep.subr.mxu0 0.0
      %546 = vmatpush1.msra.mxu0 0.0
      %547 = vmatprep.subr.mxu0 0.0
      %548 = vmatpush1.msra.mxu0 0.0
      %549 = vmatprep.subr.mxu0 0.0
      %550 = vmatpush1.msra.mxu0 0.0
      %551 = vmatprep.subr.mxu0 0.0
      %552 = vmatpush1.msra.mxu0 0.0
      %553 = vmatprep.subr.mxu0 0.0
      %554 = vmatpush1.msra.mxu0 0.0
      %555 = vmatprep.subr.mxu0 0.0
      %556 = vmatpush1.msra.mxu0 0.0
      %557 = vmatprep.subr.mxu0 0.0
      %558 = vmatpush1.msra.mxu0 0.0
      %559 = vmatprep.subr.mxu0 0.0
      %560 = vmatpush1.msra.mxu0 0.0
      %561 = vmatprep.subr.mxu0 0.0
      %562 = vmatpush1.msra.mxu0 0.0
      %563 = vmatprep.subr.mxu0 0.0
      %564 = vmatpush1.msra.mxu0 0.0
      %565 = vmatprep.subr.mxu0 0.0
      %566 = vmatpush1.msra.mxu0 0.0
      %567 = vmatprep.subr.mxu0 0.0
      %568 = vmatpush1.msra.mxu0 0.0
      %569 = vmatprep.subr.mxu0 0.0
      %570 = vmatpush1.msra.mxu0 %v537
      %571 = vmatprep.subr.mxu0 0.0
      %572 = vmatpush2.msra.mxu0 0.0
      %573 = vmatprep.subr.mxu0 0.0
      %574 = vmatpush2.msra.mxu0 0.0
      %575 = vmatprep.subr.mxu0 0.0
      %576 = vmatpush2.msra.mxu0 0.0
      %577 = vmatprep.subr.mxu0 0.0
      %578 = vmatpush2.msra.mxu0 0.0
      %579 = vmatprep.subr.mxu0 0.0
      %580 = vmatpush2.msra.mxu0 0.0
      %581 = vmatprep.subr.mxu0 0.0
      %582 = vmatpush2.msra.mxu0 0.0
      %583 = vmatprep.subr.mxu0 0.0
      %584 = vmatpush2.msra.mxu0 0.0
      %585 = vmatprep.subr.mxu0 0.0
      %586 = vmatpush2.msra.mxu0 0.0
      %587 = vmatprep.subr.mxu0 0.0
      %588 = vmatpush2.msra.mxu0 0.0
      %589 = vmatprep.subr.mxu0 0.0
      %590 = vmatpush2.msra.mxu0 0.0
      %591 = vmatprep.subr.mxu0 0.0
      %592 = vmatpush2.msra.mxu0 0.0
      %593 = vmatprep.subr.mxu0 0.0
      %594 = vmatpush2.msra.mxu0 0.0
      %595 = vmatprep.subr.mxu0 0.0
      %596 = vmatpush2.msra.mxu0 0.0
      %597 = vmatprep.subr.mxu0 0.0
      %598 = vmatpush2.msra.mxu0 0.0
      %599 = vmatprep.subr.mxu0 0.0
      %600 = vmatpush2.msra.mxu0 0.0
      %601 = vmatprep.subr.mxu0 0.0
      %602 = vmatpush2.msra.mxu0 0.0
      %603 = vmatprep.mubr.f32.mxu0 0.0
      %604 = vmatmul.mubr.f32.gmra.mxu0 %v440
      %v605 = vpop.f32.mrf.mxu0
      %v606 = vadd.f32 0.0, %v605
      %v607 = vpop.f32.mrf.mxu0
      %608 = vmatprep.mubr.f32.mxu0 0.0
      %609 = vmatmul.mubr.f32.gmra.mxu0 %v443
      %v610 = vpop.f32.mrf.mxu0
      %v611 = vadd.f32 0.0, %v610
      %v612 = vpop.f32.mrf.mxu0
      %613 = vmatprep.mubr.f32.mxu0 0.0
      %614 = vmatmul.mubr.f32.gmra.mxu0 %v446
      %v615 = vpop.f32.mrf.mxu0
      %v616 = vadd.f32 0.0, %v615
      %v617 = vpop.f32.mrf.mxu0
      %618 = vmatprep.mubr.f32.mxu0 0.0
      %619 = vmatmul.mubr.f32.gmra.mxu0 %v449
      %v620 = vpop.f32.mrf.mxu0
      %v621 = vadd.f32 0.0, %v620
      %v622 = vpop.f32.mrf.mxu0
      %623 = vmatprep.mubr.f32.mxu0 0.0
      %624 = vmatmul.mubr.f32.gmra.mxu0 %v452
      %v625 = vpop.f32.mrf.mxu0
      %v626 = vadd.f32 0.0, %v625
      %v627 = vpop.f32.mrf.mxu0
      %628 = vmatprep.mubr.f32.mxu0 0.0
      %629 = vmatmul.mubr.f32.gmra.mxu0 %v455
      %v630 = vpop.f32.mrf.mxu0
      %v631 = vadd.f32 0.0, %v630
      %v632 = vpop.f32.mrf.mxu0
      %633 = vmatprep.mubr.f32.mxu0 0.0
      %634 = vmatmul.mubr.f32.gmra.mxu0 %v458
      %v635 = vpop.f32.mrf.mxu0
      %v636 = vadd.f32 0.0, %v635
      %v637 = vpop.f32.mrf.mxu0
      %638 = vmatprep.mubr.f32.mxu0 0.0
      %639 = vmatmul.mubr.f32.gmra.mxu0 %v461
      %v640 = vpop.f32.mrf.mxu0
      %v641 = vadd.f32 0.0, %v640
      %v642 = vpop.f32.mrf.mxu0
      %643 = vmatprep.mubr.f32.mxu0 0.0
      %644 = vmatmul.mubr.f32.gmra.mxu0 %v464
      %v645 = vpop.f32.mrf.mxu0
      %v646 = vadd.f32 0.0, %v645
      %v647 = vpop.f32.mrf.mxu0
      %648 = vmatprep.mubr.f32.mxu0 0.0
      %649 = vmatmul.mubr.f32.gmra.mxu0 %v467
      %v650 = vpop.f32.mrf.mxu0
      %v651 = vadd.f32 0.0, %v650
      %v652 = vpop.f32.mrf.mxu0
      %653 = vmatprep.mubr.f32.mxu0 0.0
      %654 = vmatmul.mubr.f32.gmra.mxu0 %v470
      %v655 = vpop.f32.mrf.mxu0
      %v656 = vadd.f32 0.0, %v655
      %v657 = vpop.f32.mrf.mxu0
      %658 = vmatprep.mubr.f32.mxu0 0.0
      %659 = vmatmul.mubr.f32.gmra.mxu0 %v473
      %v660 = vpop.f32.mrf.mxu0
      %v661 = vadd.f32 0.0, %v660
      %v662 = vpop.f32.mrf.mxu0
      %663 = vmatprep.mubr.f32.mxu0 0.0
      %664 = vmatmul.mubr.f32.gmra.mxu0 %v476
      %v665 = vpop.f32.mrf.mxu0
      %v666 = vadd.f32 0.0, %v665
      %v667 = vpop.f32.mrf.mxu0
      %668 = vmatprep.mubr.f32.mxu0 0.0
      %669 = vmatmul.mubr.f32.gmra.mxu0 %v479
      %v670 = vpop.f32.mrf.mxu0
      %v671 = vadd.f32 0.0, %v670
      %v672 = vpop.f32.mrf.mxu0
      %673 = vmatprep.mubr.f32.mxu0 0.0
      %674 = vmatmul.mubr.f32.gmra.mxu0 %v482
      %v675 = vpop.f32.mrf.mxu0
      %v676 = vadd.f32 0.0, %v675
      %v677 = vpop.f32.mrf.mxu0
      %678 = vmatprep.mubr.f32.mxu0 0.0
      %679 = vmatmul.mubr.f32.gmra.mxu0 %v485
      %v680 = vpop.f32.mrf.mxu0
      %v681 = vadd.f32 0.0, %v680
      %v682 = vpop.f32.mrf.mxu0
      %683 = vmatprep.mubr.f32.mxu0 0.0
      %684 = vmatmul.mubr.f32.gmra.mxu0 %v488
      %v685 = vpop.f32.mrf.mxu0
      %v686 = vadd.f32 0.0, %v685
      %v687 = vpop.f32.mrf.mxu0
      %688 = vmatprep.mubr.f32.mxu0 0.0
      %689 = vmatmul.mubr.f32.gmra.mxu0 %v491
      %v690 = vpop.f32.mrf.mxu0
      %v691 = vadd.f32 0.0, %v690
      %v692 = vpop.f32.mrf.mxu0
      %693 = vmatprep.mubr.f32.mxu0 0.0
      %694 = vmatmul.mubr.f32.gmra.mxu0 %v494
      %v695 = vpop.f32.mrf.mxu0
      %v696 = vadd.f32 0.0, %v695
      %v697 = vpop.f32.mrf.mxu0
      %698 = vmatprep.mubr.f32.mxu0 0.0
      %699 = vmatmul.mubr.f32.gmra.mxu0 %v497
      %v700 = vpop.f32.mrf.mxu0
      %v701 = vadd.f32 0.0, %v700
      %v702 = vpop.f32.mrf.mxu0
      %703 = vmatprep.mubr.f32.mxu0 0.0
      %704 = vmatmul.mubr.f32.gmra.mxu0 %v500
      %v705 = vpop.f32.mrf.mxu0
      %v706 = vadd.f32 0.0, %v705
      %v707 = vpop.f32.mrf.mxu0
      %708 = vmatprep.mubr.f32.mxu0 0.0
      %709 = vmatmul.mubr.f32.gmra.mxu0 %v503
      %v710 = vpop.f32.mrf.mxu0
      %v711 = vadd.f32 0.0, %v710
      %v712 = vpop.f32.mrf.mxu0
      %713 = vmatprep.mubr.f32.mxu0 0.0
      %714 = vmatmul.mubr.f32.gmra.mxu0 %v506
      %v715 = vpop.f32.mrf.mxu0
      %v716 = vadd.f32 0.0, %v715
      %v717 = vpop.f32.mrf.mxu0
      %718 = vmatprep.mubr.f32.mxu0 0.0
      %719 = vmatmul.mubr.f32.gmra.mxu0 %v509
      %v720 = vpop.f32.mrf.mxu0
      %v721 = vadd.f32 0.0, %v720
      %v722 = vpop.f32.mrf.mxu0
      %723 = vmatprep.mubr.f32.mxu0 0.0
      %724 = vmatmul.mubr.f32.gmra.mxu0 %v512
      %v725 = vpop.f32.mrf.mxu0
      %v726 = vadd.f32 0.0, %v725
      %v727 = vpop.f32.mrf.mxu0
      %728 = vmatprep.mubr.f32.mxu0 0.0
      %729 = vmatmul.mubr.f32.gmra.mxu0 %v515
      %v730 = vpop.f32.mrf.mxu0
      %v731 = vadd.f32 0.0, %v730
      %v732 = vpop.f32.mrf.mxu0
      %733 = vmatprep.mubr.f32.mxu0 0.0
      %734 = vmatmul.mubr.f32.gmra.mxu0 %v518
      %v735 = vpop.f32.mrf.mxu0
      %v736 = vadd.f32 0.0, %v735
      %v737 = vpop.f32.mrf.mxu0
      %738 = vmatprep.mubr.f32.mxu0 0.0
      %739 = vmatmul.mubr.f32.gmra.mxu0 %v521
      %v740 = vpop.f32.mrf.mxu0
      %v741 = vadd.f32 0.0, %v740
      %v742 = vpop.f32.mrf.mxu0
      %743 = vmatprep.mubr.f32.mxu0 0.0
      %744 = vmatmul.mubr.f32.gmra.mxu0 %v524
      %v745 = vpop.f32.mrf.mxu0
      %v746 = vadd.f32 0.0, %v745
      %v747 = vpop.f32.mrf.mxu0
      %748 = vmatprep.mubr.f32.mxu0 0.0
      %749 = vmatmul.mubr.f32.gmra.mxu0 %v527
      %v750 = vpop.f32.mrf.mxu0
      %v751 = vadd.f32 0.0, %v750
      %v752 = vpop.f32.mrf.mxu0
      %753 = vmatprep.mubr.f32.mxu0 0.0
      %754 = vmatmul.mubr.f32.gmra.mxu0 %v530
      %v755 = vpop.f32.mrf.mxu0
      %v756 = vadd.f32 0.0, %v755
      %v757 = vpop.f32.mrf.mxu0
      %758 = vmatprep.mubr.f32.mxu0 0.0
      %759 = vmatmul.mubr.f32.gmra.mxu0 %v533
      %v760 = vpop.f32.mrf.mxu0
      %v761 = vadd.f32 0.0, %v760
      %v762 = vpop.f32.mrf.mxu0
      %763 = vdwg.mxu0
      %v765 = vsel %vm225, %v372, 0
      %v768 = vsel %vm225, %v373, 0
      %v771 = vsel %vm225, %v374, 0
      %v774 = vsel %vm225, %v375, 0
      %v777 = vsel %vm225, %v376, 0
      %v780 = vsel %vm225, %v377, 0
      %v783 = vsel %vm225, %v378, 0
      %v786 = vsel %vm225, %v379, 0
      %v789 = vsel %vm225, %v380, 0
      %v792 = vsel %vm225, %v381, 0
      %v795 = vsel %vm225, %v382, 0
      %v798 = vsel %vm225, %v383, 0
      %v801 = vsel %vm225, %v384, 0
      %v804 = vsel %vm225, %v385, 0
      %v807 = vsel %vm225, %v386, 0
      %v810 = vsel %vm225, %v387, 0
      %v813 = vsel %vm225, %v388, 0
      %v816 = vsel %vm225, %v389, 0
      %v819 = vsel %vm225, %v390, 0
      %v822 = vsel %vm225, %v391, 0
      %v825 = vsel %vm225, %v392, 0
      %v828 = vsel %vm225, %v393, 0
      %v831 = vsel %vm225, %v394, 0
      %v834 = vsel %vm225, %v395, 0
      %v837 = vsel %vm225, %v396, 0
      %v840 = vsel %vm225, %v397, 0
      %v843 = vsel %vm225, %v398, 0
      %v846 = vsel %vm225, %v399, 0
      %v849 = vsel %vm225, %v400, 0
      %v852 = vsel %vm225, %v401, 0
      %v855 = vsel %vm225, %v402, 0
      %v858 = vsel %vm225, %v403, 0
      %v861 = vsel %vm535, %v404, 0
      %863 = vmatprep.subr.mxu0 0.0
      %864 = vmatpush1.msra.mxu0 0.0
      %865 = vmatprep.subr.mxu0 0.0
      %866 = vmatpush1.msra.mxu0 0.0
      %867 = vmatprep.subr.mxu0 0.0
      %868 = vmatpush1.msra.mxu0 0.0
      %869 = vmatprep.subr.mxu0 0.0
      %870 = vmatpush1.msra.mxu0 0.0
      %871 = vmatprep.subr.mxu0 0.0
      %872 = vmatpush1.msra.mxu0 0.0
      %873 = vmatprep.subr.mxu0 0.0
      %874 = vmatpush1.msra.mxu0 0.0
      %875 = vmatprep.subr.mxu0 0.0
      %876 = vmatpush1.msra.mxu0 0.0
      %877 = vmatprep.subr.mxu0 0.0
      %878 = vmatpush1.msra.mxu0 0.0
      %879 = vmatprep.subr.mxu0 0.0
      %880 = vmatpush1.msra.mxu0 0.0
      %881 = vmatprep.subr.mxu0 0.0
      %882 = vmatpush1.msra.mxu0 0.0
      %883 = vmatprep.subr.mxu0 0.0
      %884 = vmatpush1.msra.mxu0 0.0
      %885 = vmatprep.subr.mxu0 0.0
      %886 = vmatpush1.msra.mxu0 0.0
      %887 = vmatprep.subr.mxu0 0.0
      %888 = vmatpush1.msra.mxu0 0.0
      %889 = vmatprep.subr.mxu0 0.0
      %890 = vmatpush1.msra.mxu0 0.0
      %891 = vmatprep.subr.mxu0 0.0
      %892 = vmatpush1.msra.mxu0 0.0
      %893 = vmatprep.subr.mxu0 0.0
      %894 = vmatpush1.msra.mxu0 %v861
      %895 = vmatprep.subr.mxu0 0.0
      %896 = vmatpush2.msra.mxu0 0.0
      %897 = vmatprep.subr.mxu0 0.0
      %898 = vmatpush2.msra.mxu0 0.0
      %899 = vmatprep.subr.mxu0 0.0
      %900 = vmatpush2.msra.mxu0 0.0
      %901 = vmatprep.subr.mxu0 0.0
      %902 = vmatpush2.msra.mxu0 0.0
      %903 = vmatprep.subr.mxu0 0.0
      %904 = vmatpush2.msra.mxu0 0.0
      %905 = vmatprep.subr.mxu0 0.0
      %906 = vmatpush2.msra.mxu0 0.0
      %907 = vmatprep.subr.mxu0 0.0
      %908 = vmatpush2.msra.mxu0 0.0
      %909 = vmatprep.subr.mxu0 0.0
      %910 = vmatpush2.msra.mxu0 0.0
      %911 = vmatprep.subr.mxu0 0.0
      %912 = vmatpush2.msra.mxu0 0.0
      %913 = vmatprep.subr.mxu0 0.0
      %914 = vmatpush2.msra.mxu0 0.0
      %915 = vmatprep.subr.mxu0 0.0
      %916 = vmatpush2.msra.mxu0 0.0
      %917 = vmatprep.subr.mxu0 0.0
      %918 = vmatpush2.msra.mxu0 0.0
      %919 = vmatprep.subr.mxu0 0.0
      %920 = vmatpush2.msra.mxu0 0.0
      %921 = vmatprep.subr.mxu0 0.0
      %922 = vmatpush2.msra.mxu0 0.0
      %923 = vmatprep.subr.mxu0 0.0
      %924 = vmatpush2.msra.mxu0 0.0
      %925 = vmatprep.subr.mxu0 0.0
      %926 = vmatpush2.msra.mxu0 0.0
      %927 = vmatprep.mubr.f32.mxu0 0.0
      %928 = vmatmul.mubr.f32.gmra.mxu0 %v765
      %v929 = vpop.f32.mrf.mxu0
      %v930 = vadd.f32 %v606, %v929
      %v931 = vpop.f32.mrf.mxu0
      %932 = vmatprep.mubr.f32.mxu0 0.0
      %933 = vmatmul.mubr.f32.gmra.mxu0 %v768
      %v934 = vpop.f32.mrf.mxu0
      %v935 = vadd.f32 %v611, %v934
      %v936 = vpop.f32.mrf.mxu0
      %937 = vmatprep.mubr.f32.mxu0 0.0
      %938 = vmatmul.mubr.f32.gmra.mxu0 %v771
      %v939 = vpop.f32.mrf.mxu0
      %v940 = vadd.f32 %v616, %v939
      %v941 = vpop.f32.mrf.mxu0
      %942 = vmatprep.mubr.f32.mxu0 0.0
      %943 = vmatmul.mubr.f32.gmra.mxu0 %v774
      %v944 = vpop.f32.mrf.mxu0
      %v945 = vadd.f32 %v621, %v944
      %v946 = vpop.f32.mrf.mxu0
      %947 = vmatprep.mubr.f32.mxu0 0.0
      %948 = vmatmul.mubr.f32.gmra.mxu0 %v777
      %v949 = vpop.f32.mrf.mxu0
      %v950 = vadd.f32 %v626, %v949
      %v951 = vpop.f32.mrf.mxu0
      %952 = vmatprep.mubr.f32.mxu0 0.0
      %953 = vmatmul.mubr.f32.gmra.mxu0 %v780
      %v954 = vpop.f32.mrf.mxu0
      %v955 = vadd.f32 %v631, %v954
      %v956 = vpop.f32.mrf.mxu0
      %957 = vmatprep.mubr.f32.mxu0 0.0
      %958 = vmatmul.mubr.f32.gmra.mxu0 %v783
      %v959 = vpop.f32.mrf.mxu0
      %v960 = vadd.f32 %v636, %v959
      %v961 = vpop.f32.mrf.mxu0
      %962 = vmatprep.mubr.f32.mxu0 0.0
      %963 = vmatmul.mubr.f32.gmra.mxu0 %v786
      %v964 = vpop.f32.mrf.mxu0
      %v965 = vadd.f32 %v641, %v964
      %v966 = vpop.f32.mrf.mxu0
      %967 = vmatprep.mubr.f32.mxu0 0.0
      %968 = vmatmul.mubr.f32.gmra.mxu0 %v789
      %v969 = vpop.f32.mrf.mxu0
      %v970 = vadd.f32 %v646, %v969
      %v971 = vpop.f32.mrf.mxu0
      %972 = vmatprep.mubr.f32.mxu0 0.0
      %973 = vmatmul.mubr.f32.gmra.mxu0 %v792
      %v974 = vpop.f32.mrf.mxu0
      %v975 = vadd.f32 %v651, %v974
      %v976 = vpop.f32.mrf.mxu0
      %977 = vmatprep.mubr.f32.mxu0 0.0
      %978 = vmatmul.mubr.f32.gmra.mxu0 %v795
      %v979 = vpop.f32.mrf.mxu0
      %v980 = vadd.f32 %v656, %v979
      %v981 = vpop.f32.mrf.mxu0
      %982 = vmatprep.mubr.f32.mxu0 0.0
      %983 = vmatmul.mubr.f32.gmra.mxu0 %v798
      %v984 = vpop.f32.mrf.mxu0
      %v985 = vadd.f32 %v661, %v984
      %v986 = vpop.f32.mrf.mxu0
      %987 = vmatprep.mubr.f32.mxu0 0.0
      %988 = vmatmul.mubr.f32.gmra.mxu0 %v801
      %v989 = vpop.f32.mrf.mxu0
      %v990 = vadd.f32 %v666, %v989
      %v991 = vpop.f32.mrf.mxu0
      %992 = vmatprep.mubr.f32.mxu0 0.0
      %993 = vmatmul.mubr.f32.gmra.mxu0 %v804
      %v994 = vpop.f32.mrf.mxu0
      %v995 = vadd.f32 %v671, %v994
      %v996 = vpop.f32.mrf.mxu0
      %997 = vmatprep.mubr.f32.mxu0 0.0
      %998 = vmatmul.mubr.f32.gmra.mxu0 %v807
      %v999 = vpop.f32.mrf.mxu0
      %v1000 = vadd.f32 %v676, %v999
      %v1001 = vpop.f32.mrf.mxu0
      %1002 = vmatprep.mubr.f32.mxu0 0.0
      %1003 = vmatmul.mubr.f32.gmra.mxu0 %v810
      %v1004 = vpop.f32.mrf.mxu0
      %v1005 = vadd.f32 %v681, %v1004
      %v1006 = vpop.f32.mrf.mxu0
      %1007 = vmatprep.mubr.f32.mxu0 0.0
      %1008 = vmatmul.mubr.f32.gmra.mxu0 %v813
      %v1009 = vpop.f32.mrf.mxu0
      %v1010 = vadd.f32 %v686, %v1009
      %v1011 = vpop.f32.mrf.mxu0
      %1012 = vmatprep.mubr.f32.mxu0 0.0
      %1013 = vmatmul.mubr.f32.gmra.mxu0 %v816
      %v1014 = vpop.f32.mrf.mxu0
      %v1015 = vadd.f32 %v691, %v1014
      %v1016 = vpop.f32.mrf.mxu0
      %1017 = vmatprep.mubr.f32.mxu0 0.0
      %1018 = vmatmul.mubr.f32.gmra.mxu0 %v819
      %v1019 = vpop.f32.mrf.mxu0
      %v1020 = vadd.f32 %v696, %v1019
      %v1021 = vpop.f32.mrf.mxu0
      %1022 = vmatprep.mubr.f32.mxu0 0.0
      %1023 = vmatmul.mubr.f32.gmra.mxu0 %v822
      %v1024 = vpop.f32.mrf.mxu0
      %v1025 = vadd.f32 %v701, %v1024
      %v1026 = vpop.f32.mrf.mxu0
      %1027 = vmatprep.mubr.f32.mxu0 0.0
      %1028 = vmatmul.mubr.f32.gmra.mxu0 %v825
      %v1029 = vpop.f32.mrf.mxu0
      %v1030 = vadd.f32 %v706, %v1029
      %v1031 = vpop.f32.mrf.mxu0
      %1032 = vmatprep.mubr.f32.mxu0 0.0
      %1033 = vmatmul.mubr.f32.gmra.mxu0 %v828
      %v1034 = vpop.f32.mrf.mxu0
      %v1035 = vadd.f32 %v711, %v1034
      %v1036 = vpop.f32.mrf.mxu0
      %1037 = vmatprep.mubr.f32.mxu0 0.0
      %1038 = vmatmul.mubr.f32.gmra.mxu0 %v831
      %v1039 = vpop.f32.mrf.mxu0
      %v1040 = vadd.f32 %v716, %v1039
      %v1041 = vpop.f32.mrf.mxu0
      %1042 = vmatprep.mubr.f32.mxu0 0.0
      %1043 = vmatmul.mubr.f32.gmra.mxu0 %v834
      %v1044 = vpop.f32.mrf.mxu0
      %v1045 = vadd.f32 %v721, %v1044
      %v1046 = vpop.f32.mrf.mxu0
      %1047 = vmatprep.mubr.f32.mxu0 0.0
      %1048 = vmatmul.mubr.f32.gmra.mxu0 %v837
      %v1049 = vpop.f32.mrf.mxu0
      %v1050 = vadd.f32 %v726, %v1049
      %v1051 = vpop.f32.mrf.mxu0
      %1052 = vmatprep.mubr.f32.mxu0 0.0
      %1053 = vmatmul.mubr.f32.gmra.mxu0 %v840
      %v1054 = vpop.f32.mrf.mxu0
      %v1055 = vadd.f32 %v731, %v1054
      %v1056 = vpop.f32.mrf.mxu0
      %1057 = vmatprep.mubr.f32.mxu0 0.0
      %1058 = vmatmul.mubr.f32.gmra.mxu0 %v843
      %v1059 = vpop.f32.mrf.mxu0
      %v1060 = vadd.f32 %v736, %v1059
      %v1061 = vpop.f32.mrf.mxu0
      %1062 = vmatprep.mubr.f32.mxu0 0.0
      %1063 = vmatmul.mubr.f32.gmra.mxu0 %v846
      %v1064 = vpop.f32.mrf.mxu0
      %v1065 = vadd.f32 %v741, %v1064
      %v1066 = vpop.f32.mrf.mxu0
      %1067 = vmatprep.mubr.f32.mxu0 0.0
      %1068 = vmatmul.mubr.f32.gmra.mxu0 %v849
      %v1069 = vpop.f32.mrf.mxu0
      %v1070 = vadd.f32 %v746, %v1069
      %v1071 = vpop.f32.mrf.mxu0
      %1072 = vmatprep.mubr.f32.mxu0 0.0
      %1073 = vmatmul.mubr.f32.gmra.mxu0 %v852
      %v1074 = vpop.f32.mrf.mxu0
      %v1075 = vadd.f32 %v751, %v1074
      %v1076 = vpop.f32.mrf.mxu0
      %1077 = vmatprep.mubr.f32.mxu0 0.0
      %1078 = vmatmul.mubr.f32.gmra.mxu0 %v855
      %v1079 = vpop.f32.mrf.mxu0
      %v1080 = vadd.f32 %v756, %v1079
      %v1081 = vpop.f32.mrf.mxu0
      %1082 = vmatprep.mubr.f32.mxu0 0.0
      %1083 = vmatmul.mubr.f32.gmra.mxu0 %v858
      %v1084 = vpop.f32.mrf.mxu0
      %v1085 = vadd.f32 %v761, %v1084
      %v1086 = vpop.f32.mrf.mxu0
      %1087 = vdwg.mxu0
      %v1088 = vld [vmem:[#allocation2 + $0x2] sm:$0xff]
      %v1089 = vld [vmem:[#allocation2 + $0xa] sm:$0xff]
      %v1090 = vld [vmem:[#allocation2 + $0x1a] sm:$0xff]
      %v1091 = vld [vmem:[#allocation2 + $0x22] sm:$0xff]
      %v1092 = vld [vmem:[#allocation2 + $0x32] sm:$0xff]
      %v1093 = vld [vmem:[#allocation2 + $0x3a] sm:$0xff]
      %v1094 = vld [vmem:[#allocation2 + $0x4a] sm:$0xff]
      %v1095 = vld [vmem:[#allocation2 + $0x52] sm:$0xff]
      %v1096 = vld [vmem:[#allocation2 + $0x62] sm:$0xff]
      %v1097 = vld [vmem:[#allocation2 + $0x6a] sm:$0xff]
      %v1098 = vld [vmem:[#allocation2 + $0x7a] sm:$0xff]
      %v1099 = vld [vmem:[#allocation2 + $0x82] sm:$0xff]
      %v1100 = vld [vmem:[#allocation2 + $0x92] sm:$0xff]
      %v1101 = vld [vmem:[#allocation2 + $0x9a] sm:$0xff]
      %v1102 = vld [vmem:[#allocation2 + $0xaa] sm:$0xff]
      %v1103 = vld [vmem:[#allocation2 + $0xb2] sm:$0xff]
      %v1104 = vld [vmem:[#allocation2 + $0xc2] sm:$0xff]
      %v1105 = vld [vmem:[#allocation2 + $0xca] sm:$0xff]
      %v1106 = vld [vmem:[#allocation2 + $0xda] sm:$0xff]
      %v1107 = vld [vmem:[#allocation2 + $0xe2] sm:$0xff]
      %v1108 = vld [vmem:[#allocation2 + $0xf2] sm:$0xff]
      %v1109 = vld [vmem:[#allocation2 + $0xfa] sm:$0xff]
      %v1110 = vld [vmem:[#allocation2 + $0x10a] sm:$0xff]
      %v1111 = vld [vmem:[#allocation2 + $0x112] sm:$0xff]
      %v1112 = vld [vmem:[#allocation2 + $0x122] sm:$0xff]
      %v1113 = vld [vmem:[#allocation2 + $0x12a] sm:$0xff]
      %v1114 = vld [vmem:[#allocation2 + $0x13a] sm:$0xff]
      %v1115 = vld [vmem:[#allocation2 + $0x142] sm:$0xff]
      %v1116 = vld [vmem:[#allocation2 + $0x152] sm:$0xff]
      %v1117 = vld [vmem:[#allocation2 + $0x15a] sm:$0xff]
      %v1118 = vld [vmem:[#allocation2 + $0x16a] sm:$0xff]
      %v1119 = vld [vmem:[#allocation2 + $0x172] sm:$0xff]
      %s1120 = scalar_lea.vmem %s1, 8
      %v1121 = vld [vmem:[%s1120] sm:$0xf]
      %v1123 = vsel %vm225, %v1088, 0
      %v1126 = vsel %vm225, %v1089, 0
      %v1129 = vsel %vm225, %v1090, 0
      %v1132 = vsel %vm225, %v1091, 0
      %v1135 = vsel %vm225, %v1092, 0
      %v1138 = vsel %vm225, %v1093, 0
      %v1141 = vsel %vm225, %v1094, 0
      %v1144 = vsel %vm225, %v1095, 0
      %v1147 = vsel %vm225, %v1096, 0
      %v1150 = vsel %vm225, %v1097, 0
      %v1153 = vsel %vm225, %v1098, 0
      %v1156 = vsel %vm225, %v1099, 0
      %v1159 = vsel %vm225, %v1100, 0
      %v1162 = vsel %vm225, %v1101, 0
      %v1165 = vsel %vm225, %v1102, 0
      %v1168 = vsel %vm225, %v1103, 0
      %v1171 = vsel %vm225, %v1104, 0
      %v1174 = vsel %vm225, %v1105, 0
      %v1177 = vsel %vm225, %v1106, 0
      %v1180 = vsel %vm225, %v1107, 0
      %v1183 = vsel %vm225, %v1108, 0
      %v1186 = vsel %vm225, %v1109, 0
      %v1189 = vsel %vm225, %v1110, 0
      %v1192 = vsel %vm225, %v1111, 0
      %v1195 = vsel %vm225, %v1112, 0
      %v1198 = vsel %vm225, %v1113, 0
      %v1201 = vsel %vm225, %v1114, 0
      %v1204 = vsel %vm225, %v1115, 0
      %v1207 = vsel %vm225, %v1116, 0
      %v1210 = vsel %vm225, %v1117, 0
      %v1213 = vsel %vm225, %v1118, 0
      %v1216 = vsel %vm225, %v1119, 0
      %v1219 = vsel %vm535, %v1121, 0
      %1221 = vmatprep.subr.mxu0 0.0
      %1222 = vmatpush1.msra.mxu0 0.0
      %1223 = vmatprep.subr.mxu0 0.0
      %1224 = vmatpush1.msra.mxu0 0.0
      %1225 = vmatprep.subr.mxu0 0.0
      %1226 = vmatpush1.msra.mxu0 0.0
      %1227 = vmatprep.subr.mxu0 0.0
      %1228 = vmatpush1.msra.mxu0 0.0
      %1229 = vmatprep.subr.mxu0 0.0
      %1230 = vmatpush1.msra.mxu0 0.0
      %1231 = vmatprep.subr.mxu0 0.0
      %1232 = vmatpush1.msra.mxu0 0.0
      %1233 = vmatprep.subr.mxu0 0.0
      %1234 = vmatpush1.msra.mxu0 0.0
      %1235 = vmatprep.subr.mxu0 0.0
      %1236 = vmatpush1.msra.mxu0 0.0
      %1237 = vmatprep.subr.mxu0 0.0
      %1238 = vmatpush1.msra.mxu0 0.0
      %1239 = vmatprep.subr.mxu0 0.0
      %1240 = vmatpush1.msra.mxu0 0.0
      %1241 = vmatprep.subr.mxu0 0.0
      %1242 = vmatpush1.msra.mxu0 0.0
      %1243 = vmatprep.subr.mxu0 0.0
      %1244 = vmatpush1.msra.mxu0 0.0
      %1245 = vmatprep.subr.mxu0 0.0
      %1246 = vmatpush1.msra.mxu0 0.0
      %1247 = vmatprep.subr.mxu0 0.0
      %1248 = vmatpush1.msra.mxu0 0.0
      %1249 = vmatprep.subr.mxu0 0.0
      %1250 = vmatpush1.msra.mxu0 0.0
      %1251 = vmatprep.subr.mxu0 0.0
      %1252 = vmatpush1.msra.mxu0 %v1219
      %1253 = vmatprep.subr.mxu0 0.0
      %1254 = vmatpush2.msra.mxu0 0.0
      %1255 = vmatprep.subr.mxu0 0.0
      %1256 = vmatpush2.msra.mxu0 0.0
      %1257 = vmatprep.subr.mxu0 0.0
      %1258 = vmatpush2.msra.mxu0 0.0
      %1259 = vmatprep.subr.mxu0 0.0
      %1260 = vmatpush2.msra.mxu0 0.0
      %1261 = vmatprep.subr.mxu0 0.0
      %1262 = vmatpush2.msra.mxu0 0.0
      %1263 = vmatprep.subr.mxu0 0.0
      %1264 = vmatpush2.msra.mxu0 0.0
      %1265 = vmatprep.subr.mxu0 0.0
      %1266 = vmatpush2.msra.mxu0 0.0
      %1267 = vmatprep.subr.mxu0 0.0
      %1268 = vmatpush2.msra.mxu0 0.0
      %1269 = vmatprep.subr.mxu0 0.0
      %1270 = vmatpush2.msra.mxu0 0.0
      %1271 = vmatprep.subr.mxu0 0.0
      %1272 = vmatpush2.msra.mxu0 0.0
      %1273 = vmatprep.subr.mxu0 0.0
      %1274 = vmatpush2.msra.mxu0 0.0
      %1275 = vmatprep.subr.mxu0 0.0
      %1276 = vmatpush2.msra.mxu0 0.0
      %1277 = vmatprep.subr.mxu0 0.0
      %1278 = vmatpush2.msra.mxu0 0.0
      %1279 = vmatprep.subr.mxu0 0.0
      %1280 = vmatpush2.msra.mxu0 0.0
      %1281 = vmatprep.subr.mxu0 0.0
      %1282 = vmatpush2.msra.mxu0 0.0
      %1283 = vmatprep.subr.mxu0 0.0
      %1284 = vmatpush2.msra.mxu0 0.0
      %1285 = vmatprep.mubr.f32.mxu0 0.0
      %1286 = vmatmul.mubr.f32.gmra.mxu0 %v1123
      %v1287 = vpop.f32.mrf.mxu0
      %v1288 = vadd.f32 0.0, %v1287
      %v1289 = vpop.f32.mrf.mxu0
      %1290 = vmatprep.mubr.f32.mxu0 0.0
      %1291 = vmatmul.mubr.f32.gmra.mxu0 %v1126
      %v1292 = vpop.f32.mrf.mxu0
      %v1293 = vadd.f32 0.0, %v1292
      %v1294 = vpop.f32.mrf.mxu0
      %1295 = vmatprep.mubr.f32.mxu0 0.0
      %1296 = vmatmul.mubr.f32.gmra.mxu0 %v1129
      %v1297 = vpop.f32.mrf.mxu0
      %v1298 = vadd.f32 0.0, %v1297
      %v1299 = vpop.f32.mrf.mxu0
      %1300 = vmatprep.mubr.f32.mxu0 0.0
      %1301 = vmatmul.mubr.f32.gmra.mxu0 %v1132
      %v1302 = vpop.f32.mrf.mxu0
      %v1303 = vadd.f32 0.0, %v1302
      %v1304 = vpop.f32.mrf.mxu0
      %1305 = vmatprep.mubr.f32.mxu0 0.0
      %1306 = vmatmul.mubr.f32.gmra.mxu0 %v1135
      %v1307 = vpop.f32.mrf.mxu0
      %v1308 = vadd.f32 0.0, %v1307
      %v1309 = vpop.f32.mrf.mxu0
      %1310 = vmatprep.mubr.f32.mxu0 0.0
      %1311 = vmatmul.mubr.f32.gmra.mxu0 %v1138
      %v1312 = vpop.f32.mrf.mxu0
      %v1313 = vadd.f32 0.0, %v1312
      %v1314 = vpop.f32.mrf.mxu0
      %1315 = vmatprep.mubr.f32.mxu0 0.0
      %1316 = vmatmul.mubr.f32.gmra.mxu0 %v1141
      %v1317 = vpop.f32.mrf.mxu0
      %v1318 = vadd.f32 0.0, %v1317
      %v1319 = vpop.f32.mrf.mxu0
      %1320 = vmatprep.mubr.f32.mxu0 0.0
      %1321 = vmatmul.mubr.f32.gmra.mxu0 %v1144
      %v1322 = vpop.f32.mrf.mxu0
      %v1323 = vadd.f32 0.0, %v1322
      %v1324 = vpop.f32.mrf.mxu0
      %1325 = vmatprep.mubr.f32.mxu0 0.0
      %1326 = vmatmul.mubr.f32.gmra.mxu0 %v1147
      %v1327 = vpop.f32.mrf.mxu0
      %v1328 = vadd.f32 0.0, %v1327
      %v1329 = vpop.f32.mrf.mxu0
      %1330 = vmatprep.mubr.f32.mxu0 0.0
      %1331 = vmatmul.mubr.f32.gmra.mxu0 %v1150
      %v1332 = vpop.f32.mrf.mxu0
      %v1333 = vadd.f32 0.0, %v1332
      %v1334 = vpop.f32.mrf.mxu0
      %1335 = vmatprep.mubr.f32.mxu0 0.0
      %1336 = vmatmul.mubr.f32.gmra.mxu0 %v1153
      %v1337 = vpop.f32.mrf.mxu0
      %v1338 = vadd.f32 0.0, %v1337
      %v1339 = vpop.f32.mrf.mxu0
      %1340 = vmatprep.mubr.f32.mxu0 0.0
      %1341 = vmatmul.mubr.f32.gmra.mxu0 %v1156
      %v1342 = vpop.f32.mrf.mxu0
      %v1343 = vadd.f32 0.0, %v1342
      %v1344 = vpop.f32.mrf.mxu0
      %1345 = vmatprep.mubr.f32.mxu0 0.0
      %1346 = vmatmul.mubr.f32.gmra.mxu0 %v1159
      %v1347 = vpop.f32.mrf.mxu0
      %v1348 = vadd.f32 0.0, %v1347
      %v1349 = vpop.f32.mrf.mxu0
      %1350 = vmatprep.mubr.f32.mxu0 0.0
      %1351 = vmatmul.mubr.f32.gmra.mxu0 %v1162
      %v1352 = vpop.f32.mrf.mxu0
      %v1353 = vadd.f32 0.0, %v1352
      %v1354 = vpop.f32.mrf.mxu0
      %1355 = vmatprep.mubr.f32.mxu0 0.0
      %1356 = vmatmul.mubr.f32.gmra.mxu0 %v1165
      %v1357 = vpop.f32.mrf.mxu0
      %v1358 = vadd.f32 0.0, %v1357
      %v1359 = vpop.f32.mrf.mxu0
      %1360 = vmatprep.mubr.f32.mxu0 0.0
      %1361 = vmatmul.mubr.f32.gmra.mxu0 %v1168
      %v1362 = vpop.f32.mrf.mxu0
      %v1363 = vadd.f32 0.0, %v1362
      %v1364 = vpop.f32.mrf.mxu0
      %1365 = vmatprep.mubr.f32.mxu0 0.0
      %1366 = vmatmul.mubr.f32.gmra.mxu0 %v1171
      %v1367 = vpop.f32.mrf.mxu0
      %v1368 = vadd.f32 0.0, %v1367
      %v1369 = vpop.f32.mrf.mxu0
      %1370 = vmatprep.mubr.f32.mxu0 0.0
      %1371 = vmatmul.mubr.f32.gmra.mxu0 %v1174
      %v1372 = vpop.f32.mrf.mxu0
      %v1373 = vadd.f32 0.0, %v1372
      %v1374 = vpop.f32.mrf.mxu0
      %1375 = vmatprep.mubr.f32.mxu0 0.0
      %1376 = vmatmul.mubr.f32.gmra.mxu0 %v1177
      %v1377 = vpop.f32.mrf.mxu0
      %v1378 = vadd.f32 0.0, %v1377
      %v1379 = vpop.f32.mrf.mxu0
      %1380 = vmatprep.mubr.f32.mxu0 0.0
      %1381 = vmatmul.mubr.f32.gmra.mxu0 %v1180
      %v1382 = vpop.f32.mrf.mxu0
      %v1383 = vadd.f32 0.0, %v1382
      %v1384 = vpop.f32.mrf.mxu0
      %1385 = vmatprep.mubr.f32.mxu0 0.0
      %1386 = vmatmul.mubr.f32.gmra.mxu0 %v1183
      %v1387 = vpop.f32.mrf.mxu0
      %v1388 = vadd.f32 0.0, %v1387
      %v1389 = vpop.f32.mrf.mxu0
      %1390 = vmatprep.mubr.f32.mxu0 0.0
      %1391 = vmatmul.mubr.f32.gmra.mxu0 %v1186
      %v1392 = vpop.f32.mrf.mxu0
      %v1393 = vadd.f32 0.0, %v1392
      %v1394 = vpop.f32.mrf.mxu0
      %1395 = vmatprep.mubr.f32.mxu0 0.0
      %1396 = vmatmul.mubr.f32.gmra.mxu0 %v1189
      %v1397 = vpop.f32.mrf.mxu0
      %v1398 = vadd.f32 0.0, %v1397
      %v1399 = vpop.f32.mrf.mxu0
      %1400 = vmatprep.mubr.f32.mxu0 0.0
      %1401 = vmatmul.mubr.f32.gmra.mxu0 %v1192
      %v1402 = vpop.f32.mrf.mxu0
      %v1403 = vadd.f32 0.0, %v1402
      %v1404 = vpop.f32.mrf.mxu0
      %1405 = vmatprep.mubr.f32.mxu0 0.0
      %1406 = vmatmul.mubr.f32.gmra.mxu0 %v1195
      %v1407 = vpop.f32.mrf.mxu0
      %v1408 = vadd.f32 0.0, %v1407
      %v1409 = vpop.f32.mrf.mxu0
      %1410 = vmatprep.mubr.f32.mxu0 0.0
      %1411 = vmatmul.mubr.f32.gmra.mxu0 %v1198
      %v1412 = vpop.f32.mrf.mxu0
      %v1413 = vadd.f32 0.0, %v1412
      %v1414 = vpop.f32.mrf.mxu0
      %1415 = vmatprep.mubr.f32.mxu0 0.0
      %1416 = vmatmul.mubr.f32.gmra.mxu0 %v1201
      %v1417 = vpop.f32.mrf.mxu0
      %v1418 = vadd.f32 0.0, %v1417
      %v1419 = vpop.f32.mrf.mxu0
      %1420 = vmatprep.mubr.f32.mxu0 0.0
      %1421 = vmatmul.mubr.f32.gmra.mxu0 %v1204
      %v1422 = vpop.f32.mrf.mxu0
      %v1423 = vadd.f32 0.0, %v1422
      %v1424 = vpop.f32.mrf.mxu0
      %1425 = vmatprep.mubr.f32.mxu0 0.0
      %1426 = vmatmul.mubr.f32.gmra.mxu0 %v1207
      %v1427 = vpop.f32.mrf.mxu0
      %v1428 = vadd.f32 0.0, %v1427
      %v1429 = vpop.f32.mrf.mxu0
      %1430 = vmatprep.mubr.f32.mxu0 0.0
      %1431 = vmatmul.mubr.f32.gmra.mxu0 %v1210
      %v1432 = vpop.f32.mrf.mxu0
      %v1433 = vadd.f32 0.0, %v1432
      %v1434 = vpop.f32.mrf.mxu0
      %1435 = vmatprep.mubr.f32.mxu0 0.0
      %1436 = vmatmul.mubr.f32.gmra.mxu0 %v1213
      %v1437 = vpop.f32.mrf.mxu0
      %v1438 = vadd.f32 0.0, %v1437
      %v1439 = vpop.f32.mrf.mxu0
      %1440 = vmatprep.mubr.f32.mxu0 0.0
      %1441 = vmatmul.mubr.f32.gmra.mxu0 %v1216
      %v1442 = vpop.f32.mrf.mxu0
      %v1443 = vadd.f32 0.0, %v1442
      %v1444 = vpop.f32.mrf.mxu0
      %1445 = vdwg.mxu0
      %v1446 = vadd.f32 %v930, %v1288
      %v1447 = vadd.f32 %v935, %v1293
      %v1448 = vadd.f32 %v940, %v1298
      %v1449 = vadd.f32 %v945, %v1303
      %v1450 = vadd.f32 %v950, %v1308
      %v1451 = vadd.f32 %v955, %v1313
      %v1452 = vadd.f32 %v960, %v1318
      %v1453 = vadd.f32 %v965, %v1323
      %v1454 = vadd.f32 %v970, %v1328
      %v1455 = vadd.f32 %v975, %v1333
      %v1456 = vadd.f32 %v980, %v1338
      %v1457 = vadd.f32 %v985, %v1343
      %v1458 = vadd.f32 %v990, %v1348
      %v1459 = vadd.f32 %v995, %v1353
      %v1460 = vadd.f32 %v1000, %v1358
      %v1461 = vadd.f32 %v1005, %v1363
      %v1462 = vadd.f32 %v1010, %v1368
      %v1463 = vadd.f32 %v1015, %v1373
      %v1464 = vadd.f32 %v1020, %v1378
      %v1465 = vadd.f32 %v1025, %v1383
      %v1466 = vadd.f32 %v1030, %v1388
      %v1467 = vadd.f32 %v1035, %v1393
      %v1468 = vadd.f32 %v1040, %v1398
      %v1469 = vadd.f32 %v1045, %v1403
      %v1470 = vadd.f32 %v1050, %v1408
      %v1471 = vadd.f32 %v1055, %v1413
      %v1472 = vadd.f32 %v1060, %v1418
      %v1473 = vadd.f32 %v1065, %v1423
      %v1474 = vadd.f32 %v1070, %v1428
      %v1475 = vadd.f32 %v1075, %v1433
      %v1476 = vadd.f32 %v1080, %v1438
      %v1477 = vadd.f32 %v1085, %v1443
      %v1478 = vld [vmem:[%s339] sm:$0xff]
      %v1479 = vld [vmem:[%s339 + $0x8] sm:$0xff]
      %v1480 = vld [vmem:[%s339 + $0x18] sm:$0xff]
      %v1481 = vld [vmem:[%s339 + $0x20] sm:$0xff]
      %v1482 = vld [vmem:[%s339 + $0x30] sm:$0xff]
      %v1483 = vld [vmem:[%s339 + $0x38] sm:$0xff]
      %v1484 = vld [vmem:[%s339 + $0x48] sm:$0xff]
      %v1485 = vld [vmem:[%s339 + $0x50] sm:$0xff]
      %v1486 = vld [vmem:[%s339 + $0x60] sm:$0xff]
      %v1487 = vld [vmem:[%s339 + $0x68] sm:$0xff]
      %v1488 = vld [vmem:[%s339 + $0x78] sm:$0xff]
      %v1489 = vld [vmem:[%s339 + $0x80] sm:$0xff]
      %v1490 = vld [vmem:[%s339 + $0x90] sm:$0xff]
      %v1491 = vld [vmem:[%s339 + $0x98] sm:$0xff]
      %v1492 = vld [vmem:[%s339 + $0xa8] sm:$0xff]
      %v1493 = vld [vmem:[%s339 + $0xb0] sm:$0xff]
      %v1494 = vld [vmem:[%s339 + $0xc0] sm:$0xff]
      %v1495 = vld [vmem:[%s339 + $0xc8] sm:$0xff]
      %v1496 = vld [vmem:[%s339 + $0xd8] sm:$0xff]
      %v1497 = vld [vmem:[%s339 + $0xe0] sm:$0xff]
      %v1498 = vld [vmem:[%s339 + $0xf0] sm:$0xff]
      %v1499 = vld [vmem:[%s339 + $0xf8] sm:$0xff]
      %v1500 = vld [vmem:[%s339 + $0x108] sm:$0xff]
      %v1501 = vld [vmem:[%s339 + $0x110] sm:$0xff]
      %v1502 = vld [vmem:[%s339 + $0x120] sm:$0xff]
      %v1503 = vld [vmem:[%s339 + $0x128] sm:$0xff]
      %v1504 = vld [vmem:[%s339 + $0x138] sm:$0xff]
      %v1505 = vld [vmem:[%s339 + $0x140] sm:$0xff]
      %v1506 = vld [vmem:[%s339 + $0x150] sm:$0xff]
      %v1507 = vld [vmem:[%s339 + $0x158] sm:$0xff]
      %v1508 = vld [vmem:[%s339 + $0x168] sm:$0xff]
      %v1509 = vld [vmem:[%s339 + $0x170] sm:$0xff]
      %s1510 = scalar_lea.vmem %s1, 12
      %v1511 = vld [vmem:[%s1510] sm:$0xf]
      %v1513 = vsel %vm225, %v1478, 0
      %v1516 = vsel %vm225, %v1479, 0
      %v1519 = vsel %vm225, %v1480, 0
      %v1522 = vsel %vm225, %v1481, 0
      %v1525 = vsel %vm225, %v1482, 0
      %v1528 = vsel %vm225, %v1483, 0
      %v1531 = vsel %vm225, %v1484, 0
      %v1534 = vsel %vm225, %v1485, 0
      %v1537 = vsel %vm225, %v1486, 0
      %v1540 = vsel %vm225, %v1487, 0
      %v1543 = vsel %vm225, %v1488, 0
      %v1546 = vsel %vm225, %v1489, 0
      %v1549 = vsel %vm225, %v1490, 0
      %v1552 = vsel %vm225, %v1491, 0
      %v1555 = vsel %vm225, %v1492, 0
      %v1558 = vsel %vm225, %v1493, 0
      %v1561 = vsel %vm225, %v1494, 0
      %v1564 = vsel %vm225, %v1495, 0
      %v1567 = vsel %vm225, %v1496, 0
      %v1570 = vsel %vm225, %v1497, 0
      %v1573 = vsel %vm225, %v1498, 0
      %v1576 = vsel %vm225, %v1499, 0
      %v1579 = vsel %vm225, %v1500, 0
      %v1582 = vsel %vm225, %v1501, 0
      %v1585 = vsel %vm225, %v1502, 0
      %v1588 = vsel %vm225, %v1503, 0
      %v1591 = vsel %vm225, %v1504, 0
      %v1594 = vsel %vm225, %v1505, 0
      %v1597 = vsel %vm225, %v1506, 0
      %v1600 = vsel %vm225, %v1507, 0
      %v1603 = vsel %vm225, %v1508, 0
      %v1606 = vsel %vm225, %v1509, 0
      %v1609 = vsel %vm535, %v1511, 0
      %1611 = vmatprep.subr.mxu0 0.0
      %1612 = vmatpush1.msra.mxu0 0.0
      %1613 = vmatprep.subr.mxu0 0.0
      %1614 = vmatpush1.msra.mxu0 0.0
      %1615 = vmatprep.subr.mxu0 0.0
      %1616 = vmatpush1.msra.mxu0 0.0
      %1617 = vmatprep.subr.mxu0 0.0
      %1618 = vmatpush1.msra.mxu0 0.0
      %1619 = vmatprep.subr.mxu0 0.0
      %1620 = vmatpush1.msra.mxu0 0.0
      %1621 = vmatprep.subr.mxu0 0.0
      %1622 = vmatpush1.msra.mxu0 0.0
      %1623 = vmatprep.subr.mxu0 0.0
      %1624 = vmatpush1.msra.mxu0 0.0
      %1625 = vmatprep.subr.mxu0 0.0
      %1626 = vmatpush1.msra.mxu0 0.0
      %1627 = vmatprep.subr.mxu0 0.0
      %1628 = vmatpush1.msra.mxu0 0.0
      %1629 = vmatprep.subr.mxu0 0.0
      %1630 = vmatpush1.msra.mxu0 0.0
      %1631 = vmatprep.subr.mxu0 0.0
      %1632 = vmatpush1.msra.mxu0 0.0
      %1633 = vmatprep.subr.mxu0 0.0
      %1634 = vmatpush1.msra.mxu0 0.0
      %1635 = vmatprep.subr.mxu0 0.0
      %1636 = vmatpush1.msra.mxu0 0.0
      %1637 = vmatprep.subr.mxu0 0.0
      %1638 = vmatpush1.msra.mxu0 0.0
      %1639 = vmatprep.subr.mxu0 0.0
      %1640 = vmatpush1.msra.mxu0 0.0
      %1641 = vmatprep.subr.mxu0 0.0
      %1642 = vmatpush1.msra.mxu0 %v1609
      %1643 = vmatprep.subr.mxu0 0.0
      %1644 = vmatpush2.msra.mxu0 0.0
      %1645 = vmatprep.subr.mxu0 0.0
      %1646 = vmatpush2.msra.mxu0 0.0
      %1647 = vmatprep.subr.mxu0 0.0
      %1648 = vmatpush2.msra.mxu0 0.0
      %1649 = vmatprep.subr.mxu0 0.0
      %1650 = vmatpush2.msra.mxu0 0.0
      %1651 = vmatprep.subr.mxu0 0.0
      %1652 = vmatpush2.msra.mxu0 0.0
      %1653 = vmatprep.subr.mxu0 0.0
      %1654 = vmatpush2.msra.mxu0 0.0
      %1655 = vmatprep.subr.mxu0 0.0
      %1656 = vmatpush2.msra.mxu0 0.0
      %1657 = vmatprep.subr.mxu0 0.0
      %1658 = vmatpush2.msra.mxu0 0.0
      %1659 = vmatprep.subr.mxu0 0.0
      %1660 = vmatpush2.msra.mxu0 0.0
      %1661 = vmatprep.subr.mxu0 0.0
      %1662 = vmatpush2.msra.mxu0 0.0
      %1663 = vmatprep.subr.mxu0 0.0
      %1664 = vmatpush2.msra.mxu0 0.0
      %1665 = vmatprep.subr.mxu0 0.0
      %1666 = vmatpush2.msra.mxu0 0.0
      %1667 = vmatprep.subr.mxu0 0.0
      %1668 = vmatpush2.msra.mxu0 0.0
      %1669 = vmatprep.subr.mxu0 0.0
      %1670 = vmatpush2.msra.mxu0 0.0
      %1671 = vmatprep.subr.mxu0 0.0
      %1672 = vmatpush2.msra.mxu0 0.0
      %1673 = vmatprep.subr.mxu0 0.0
      %1674 = vmatpush2.msra.mxu0 0.0
      %1675 = vmatprep.mubr.f32.mxu0 0.0
      %1676 = vmatmul.mubr.f32.gmra.mxu0 %v1513
      %v1677 = vpop.f32.mrf.mxu0
      %v1678 = vadd.f32 0.0, %v1677
      %v1679 = vpop.f32.mrf.mxu0
      %1680 = vmatprep.mubr.f32.mxu0 0.0
      %1681 = vmatmul.mubr.f32.gmra.mxu0 %v1516
      %v1682 = vpop.f32.mrf.mxu0
      %v1683 = vadd.f32 0.0, %v1682
      %v1684 = vpop.f32.mrf.mxu0
      %1685 = vmatprep.mubr.f32.mxu0 0.0
      %1686 = vmatmul.mubr.f32.gmra.mxu0 %v1519
      %v1687 = vpop.f32.mrf.mxu0
      %v1688 = vadd.f32 0.0, %v1687
      %v1689 = vpop.f32.mrf.mxu0
      %1690 = vmatprep.mubr.f32.mxu0 0.0
      %1691 = vmatmul.mubr.f32.gmra.mxu0 %v1522
      %v1692 = vpop.f32.mrf.mxu0
      %v1693 = vadd.f32 0.0, %v1692
      %v1694 = vpop.f32.mrf.mxu0
      %1695 = vmatprep.mubr.f32.mxu0 0.0
      %1696 = vmatmul.mubr.f32.gmra.mxu0 %v1525
      %v1697 = vpop.f32.mrf.mxu0
      %v1698 = vadd.f32 0.0, %v1697
      %v1699 = vpop.f32.mrf.mxu0
      %1700 = vmatprep.mubr.f32.mxu0 0.0
      %1701 = vmatmul.mubr.f32.gmra.mxu0 %v1528
      %v1702 = vpop.f32.mrf.mxu0
      %v1703 = vadd.f32 0.0, %v1702
      %v1704 = vpop.f32.mrf.mxu0
      %1705 = vmatprep.mubr.f32.mxu0 0.0
      %1706 = vmatmul.mubr.f32.gmra.mxu0 %v1531
      %v1707 = vpop.f32.mrf.mxu0
      %v1708 = vadd.f32 0.0, %v1707
      %v1709 = vpop.f32.mrf.mxu0
      %1710 = vmatprep.mubr.f32.mxu0 0.0
      %1711 = vmatmul.mubr.f32.gmra.mxu0 %v1534
      %v1712 = vpop.f32.mrf.mxu0
      %v1713 = vadd.f32 0.0, %v1712
      %v1714 = vpop.f32.mrf.mxu0
      %1715 = vmatprep.mubr.f32.mxu0 0.0
      %1716 = vmatmul.mubr.f32.gmra.mxu0 %v1537
      %v1717 = vpop.f32.mrf.mxu0
      %v1718 = vadd.f32 0.0, %v1717
      %v1719 = vpop.f32.mrf.mxu0
      %1720 = vmatprep.mubr.f32.mxu0 0.0
      %1721 = vmatmul.mubr.f32.gmra.mxu0 %v1540
      %v1722 = vpop.f32.mrf.mxu0
      %v1723 = vadd.f32 0.0, %v1722
      %v1724 = vpop.f32.mrf.mxu0
      %1725 = vmatprep.mubr.f32.mxu0 0.0
      %1726 = vmatmul.mubr.f32.gmra.mxu0 %v1543
      %v1727 = vpop.f32.mrf.mxu0
      %v1728 = vadd.f32 0.0, %v1727
      %v1729 = vpop.f32.mrf.mxu0
      %1730 = vmatprep.mubr.f32.mxu0 0.0
      %1731 = vmatmul.mubr.f32.gmra.mxu0 %v1546
      %v1732 = vpop.f32.mrf.mxu0
      %v1733 = vadd.f32 0.0, %v1732
      %v1734 = vpop.f32.mrf.mxu0
      %1735 = vmatprep.mubr.f32.mxu0 0.0
      %1736 = vmatmul.mubr.f32.gmra.mxu0 %v1549
      %v1737 = vpop.f32.mrf.mxu0
      %v1738 = vadd.f32 0.0, %v1737
      %v1739 = vpop.f32.mrf.mxu0
      %1740 = vmatprep.mubr.f32.mxu0 0.0
      %1741 = vmatmul.mubr.f32.gmra.mxu0 %v1552
      %v1742 = vpop.f32.mrf.mxu0
      %v1743 = vadd.f32 0.0, %v1742
      %v1744 = vpop.f32.mrf.mxu0
      %1745 = vmatprep.mubr.f32.mxu0 0.0
      %1746 = vmatmul.mubr.f32.gmra.mxu0 %v1555
      %v1747 = vpop.f32.mrf.mxu0
      %v1748 = vadd.f32 0.0, %v1747
      %v1749 = vpop.f32.mrf.mxu0
      %1750 = vmatprep.mubr.f32.mxu0 0.0
      %1751 = vmatmul.mubr.f32.gmra.mxu0 %v1558
      %v1752 = vpop.f32.mrf.mxu0
      %v1753 = vadd.f32 0.0, %v1752
      %v1754 = vpop.f32.mrf.mxu0
      %1755 = vmatprep.mubr.f32.mxu0 0.0
      %1756 = vmatmul.mubr.f32.gmra.mxu0 %v1561
      %v1757 = vpop.f32.mrf.mxu0
      %v1758 = vadd.f32 0.0, %v1757
      %v1759 = vpop.f32.mrf.mxu0
      %1760 = vmatprep.mubr.f32.mxu0 0.0
      %1761 = vmatmul.mubr.f32.gmra.mxu0 %v1564
      %v1762 = vpop.f32.mrf.mxu0
      %v1763 = vadd.f32 0.0, %v1762
      %v1764 = vpop.f32.mrf.mxu0
      %1765 = vmatprep.mubr.f32.mxu0 0.0
      %1766 = vmatmul.mubr.f32.gmra.mxu0 %v1567
      %v1767 = vpop.f32.mrf.mxu0
      %v1768 = vadd.f32 0.0, %v1767
      %v1769 = vpop.f32.mrf.mxu0
      %1770 = vmatprep.mubr.f32.mxu0 0.0
      %1771 = vmatmul.mubr.f32.gmra.mxu0 %v1570
      %v1772 = vpop.f32.mrf.mxu0
      %v1773 = vadd.f32 0.0, %v1772
      %v1774 = vpop.f32.mrf.mxu0
      %1775 = vmatprep.mubr.f32.mxu0 0.0
      %1776 = vmatmul.mubr.f32.gmra.mxu0 %v1573
      %v1777 = vpop.f32.mrf.mxu0
      %v1778 = vadd.f32 0.0, %v1777
      %v1779 = vpop.f32.mrf.mxu0
      %1780 = vmatprep.mubr.f32.mxu0 0.0
      %1781 = vmatmul.mubr.f32.gmra.mxu0 %v1576
      %v1782 = vpop.f32.mrf.mxu0
      %v1783 = vadd.f32 0.0, %v1782
      %v1784 = vpop.f32.mrf.mxu0
      %1785 = vmatprep.mubr.f32.mxu0 0.0
      %1786 = vmatmul.mubr.f32.gmra.mxu0 %v1579
      %v1787 = vpop.f32.mrf.mxu0
      %v1788 = vadd.f32 0.0, %v1787
      %v1789 = vpop.f32.mrf.mxu0
      %1790 = vmatprep.mubr.f32.mxu0 0.0
      %1791 = vmatmul.mubr.f32.gmra.mxu0 %v1582
      %v1792 = vpop.f32.mrf.mxu0
      %v1793 = vadd.f32 0.0, %v1792
      %v1794 = vpop.f32.mrf.mxu0
      %1795 = vmatprep.mubr.f32.mxu0 0.0
      %1796 = vmatmul.mubr.f32.gmra.mxu0 %v1585
      %v1797 = vpop.f32.mrf.mxu0
      %v1798 = vadd.f32 0.0, %v1797
      %v1799 = vpop.f32.mrf.mxu0
      %1800 = vmatprep.mubr.f32.mxu0 0.0
      %1801 = vmatmul.mubr.f32.gmra.mxu0 %v1588
      %v1802 = vpop.f32.mrf.mxu0
      %v1803 = vadd.f32 0.0, %v1802
      %v1804 = vpop.f32.mrf.mxu0
      %1805 = vmatprep.mubr.f32.mxu0 0.0
      %1806 = vmatmul.mubr.f32.gmra.mxu0 %v1591
      %v1807 = vpop.f32.mrf.mxu0
      %v1808 = vadd.f32 0.0, %v1807
      %v1809 = vpop.f32.mrf.mxu0
      %1810 = vmatprep.mubr.f32.mxu0 0.0
      %1811 = vmatmul.mubr.f32.gmra.mxu0 %v1594
      %v1812 = vpop.f32.mrf.mxu0
      %v1813 = vadd.f32 0.0, %v1812
      %v1814 = vpop.f32.mrf.mxu0
      %1815 = vmatprep.mubr.f32.mxu0 0.0
      %1816 = vmatmul.mubr.f32.gmra.mxu0 %v1597
      %v1817 = vpop.f32.mrf.mxu0
      %v1818 = vadd.f32 0.0, %v1817
      %v1819 = vpop.f32.mrf.mxu0
      %1820 = vmatprep.mubr.f32.mxu0 0.0
      %1821 = vmatmul.mubr.f32.gmra.mxu0 %v1600
      %v1822 = vpop.f32.mrf.mxu0
      %v1823 = vadd.f32 0.0, %v1822
      %v1824 = vpop.f32.mrf.mxu0
      %1825 = vmatprep.mubr.f32.mxu0 0.0
      %1826 = vmatmul.mubr.f32.gmra.mxu0 %v1603
      %v1827 = vpop.f32.mrf.mxu0
      %v1828 = vadd.f32 0.0, %v1827
      %v1829 = vpop.f32.mrf.mxu0
      %1830 = vmatprep.mubr.f32.mxu0 0.0
      %1831 = vmatmul.mubr.f32.gmra.mxu0 %v1606
      %v1832 = vpop.f32.mrf.mxu0
      %v1833 = vadd.f32 0.0, %v1832
      %v1834 = vpop.f32.mrf.mxu0
      %1835 = vdwg.mxu0
      %v1836 = vadd.f32 %v1446, %v1678
      %v1837 = vadd.f32 %v1447, %v1683
      %v1838 = vadd.f32 %v1448, %v1688
      %v1839 = vadd.f32 %v1449, %v1693
      %v1840 = vadd.f32 %v1450, %v1698
      %v1841 = vadd.f32 %v1451, %v1703
      %v1842 = vadd.f32 %v1452, %v1708
      %v1843 = vadd.f32 %v1453, %v1713
      %v1844 = vadd.f32 %v1454, %v1718
      %v1845 = vadd.f32 %v1455, %v1723
      %v1846 = vadd.f32 %v1456, %v1728
      %v1847 = vadd.f32 %v1457, %v1733
      %v1848 = vadd.f32 %v1458, %v1738
      %v1849 = vadd.f32 %v1459, %v1743
      %v1850 = vadd.f32 %v1460, %v1748
      %v1851 = vadd.f32 %v1461, %v1753
      %v1852 = vadd.f32 %v1462, %v1758
      %v1853 = vadd.f32 %v1463, %v1763
      %v1854 = vadd.f32 %v1464, %v1768
      %v1855 = vadd.f32 %v1465, %v1773
      %v1856 = vadd.f32 %v1466, %v1778
      %v1857 = vadd.f32 %v1467, %v1783
      %v1858 = vadd.f32 %v1468, %v1788
      %v1859 = vadd.f32 %v1469, %v1793
      %v1860 = vadd.f32 %v1470, %v1798
      %v1861 = vadd.f32 %v1471, %v1803
      %v1862 = vadd.f32 %v1472, %v1808
      %v1863 = vadd.f32 %v1473, %v1813
      %v1864 = vadd.f32 %v1474, %v1818
      %v1865 = vadd.f32 %v1475, %v1823
      %v1866 = vadd.f32 %v1476, %v1828
      %v1867 = vadd.f32 %v1477, %v1833
      %v1868 = vld [vmem:[%s339 + $0x1] sm:$0xff]
      %v1869 = vld [vmem:[%s339 + $0x9] sm:$0xff]
      %v1870 = vld [vmem:[%s339 + $0x19] sm:$0xff]
      %v1871 = vld [vmem:[%s339 + $0x21] sm:$0xff]
      %v1872 = vld [vmem:[%s339 + $0x31] sm:$0xff]
      %v1873 = vld [vmem:[%s339 + $0x39] sm:$0xff]
      %v1874 = vld [vmem:[%s339 + $0x49] sm:$0xff]
      %v1875 = vld [vmem:[%s339 + $0x51] sm:$0xff]
      %v1876 = vld [vmem:[%s339 + $0x61] sm:$0xff]
      %v1877 = vld [vmem:[%s339 + $0x69] sm:$0xff]
      %v1878 = vld [vmem:[%s339 + $0x79] sm:$0xff]
      %v1879 = vld [vmem:[%s339 + $0x81] sm:$0xff]
      %v1880 = vld [vmem:[%s339 + $0x91] sm:$0xff]
      %v1881 = vld [vmem:[%s339 + $0x99] sm:$0xff]
      %v1882 = vld [vmem:[%s339 + $0xa9] sm:$0xff]
      %v1883 = vld [vmem:[%s339 + $0xb1] sm:$0xff]
      %v1884 = vld [vmem:[%s339 + $0xc1] sm:$0xff]
      %v1885 = vld [vmem:[%s339 + $0xc9] sm:$0xff]
      %v1886 = vld [vmem:[%s339 + $0xd9] sm:$0xff]
      %v1887 = vld [vmem:[%s339 + $0xe1] sm:$0xff]
      %v1888 = vld [vmem:[%s339 + $0xf1] sm:$0xff]
      %v1889 = vld [vmem:[%s339 + $0xf9] sm:$0xff]
      %v1890 = vld [vmem:[%s339 + $0x109] sm:$0xff]
      %v1891 = vld [vmem:[%s339 + $0x111] sm:$0xff]
      %v1892 = vld [vmem:[%s339 + $0x121] sm:$0xff]
      %v1893 = vld [vmem:[%s339 + $0x129] sm:$0xff]
      %v1894 = vld [vmem:[%s339 + $0x139] sm:$0xff]
      %v1895 = vld [vmem:[%s339 + $0x141] sm:$0xff]
      %v1896 = vld [vmem:[%s339 + $0x151] sm:$0xff]
      %v1897 = vld [vmem:[%s339 + $0x159] sm:$0xff]
      %v1898 = vld [vmem:[%s339 + $0x169] sm:$0xff]
      %v1899 = vld [vmem:[%s339 + $0x171] sm:$0xff]
      %s1900 = scalar_lea.vmem %s1, 16
      %v1901 = vld [vmem:[%s1900] sm:$0xf]
      %v1903 = vsel %vm225, %v1868, 0
      %v1906 = vsel %vm225, %v1869, 0
      %v1909 = vsel %vm225, %v1870, 0
      %v1912 = vsel %vm225, %v1871, 0
      %v1915 = vsel %vm225, %v1872, 0
      %v1918 = vsel %vm225, %v1873, 0
      %v1921 = vsel %vm225, %v1874, 0
      %v1924 = vsel %vm225, %v1875, 0
      %v1927 = vsel %vm225, %v1876, 0
      %v1930 = vsel %vm225, %v1877, 0
      %v1933 = vsel %vm225, %v1878, 0
      %v1936 = vsel %vm225, %v1879, 0
      %v1939 = vsel %vm225, %v1880, 0
      %v1942 = vsel %vm225, %v1881, 0
      %v1945 = vsel %vm225, %v1882, 0
      %v1948 = vsel %vm225, %v1883, 0
      %v1951 = vsel %vm225, %v1884, 0
      %v1954 = vsel %vm225, %v1885, 0
      %v1957 = vsel %vm225, %v1886, 0
      %v1960 = vsel %vm225, %v1887, 0
      %v1963 = vsel %vm225, %v1888, 0
      %v1966 = vsel %vm225, %v1889, 0
      %v1969 = vsel %vm225, %v1890, 0
      %v1972 = vsel %vm225, %v1891, 0
      %v1975 = vsel %vm225, %v1892, 0
      %v1978 = vsel %vm225, %v1893, 0
      %v1981 = vsel %vm225, %v1894, 0
      %v1984 = vsel %vm225, %v1895, 0
      %v1987 = vsel %vm225, %v1896, 0
      %v1990 = vsel %vm225, %v1897, 0
      %v1993 = vsel %vm225, %v1898, 0
      %v1996 = vsel %vm225, %v1899, 0
      %v1999 = vsel %vm535, %v1901, 0
      %2001 = vmatprep.subr.mxu0 0.0
      %2002 = vmatpush1.msra.mxu0 0.0
      %2003 = vmatprep.subr.mxu0 0.0
      %2004 = vmatpush1.msra.mxu0 0.0
      %2005 = vmatprep.subr.mxu0 0.0
      %2006 = vmatpush1.msra.mxu0 0.0
      %2007 = vmatprep.subr.mxu0 0.0
      %2008 = vmatpush1.msra.mxu0 0.0
      %2009 = vmatprep.subr.mxu0 0.0
      %2010 = vmatpush1.msra.mxu0 0.0
      %2011 = vmatprep.subr.mxu0 0.0
      %2012 = vmatpush1.msra.mxu0 0.0
      %2013 = vmatprep.subr.mxu0 0.0
      %2014 = vmatpush1.msra.mxu0 0.0
      %2015 = vmatprep.subr.mxu0 0.0
      %2016 = vmatpush1.msra.mxu0 0.0
      %2017 = vmatprep.subr.mxu0 0.0
      %2018 = vmatpush1.msra.mxu0 0.0
      %2019 = vmatprep.subr.mxu0 0.0
      %2020 = vmatpush1.msra.mxu0 0.0
      %2021 = vmatprep.subr.mxu0 0.0
      %2022 = vmatpush1.msra.mxu0 0.0
      %2023 = vmatprep.subr.mxu0 0.0
      %2024 = vmatpush1.msra.mxu0 0.0
      %2025 = vmatprep.subr.mxu0 0.0
      %2026 = vmatpush1.msra.mxu0 0.0
      %2027 = vmatprep.subr.mxu0 0.0
      %2028 = vmatpush1.msra.mxu0 0.0
      %2029 = vmatprep.subr.mxu0 0.0
      %2030 = vmatpush1.msra.mxu0 0.0
      %2031 = vmatprep.subr.mxu0 0.0
      %2032 = vmatpush1.msra.mxu0 %v1999
      %2033 = vmatprep.subr.mxu0 0.0
      %2034 = vmatpush2.msra.mxu0 0.0
      %2035 = vmatprep.subr.mxu0 0.0
      %2036 = vmatpush2.msra.mxu0 0.0
      %2037 = vmatprep.subr.mxu0 0.0
      %2038 = vmatpush2.msra.mxu0 0.0
      %2039 = vmatprep.subr.mxu0 0.0
      %2040 = vmatpush2.msra.mxu0 0.0
      %2041 = vmatprep.subr.mxu0 0.0
      %2042 = vmatpush2.msra.mxu0 0.0
      %2043 = vmatprep.subr.mxu0 0.0
      %2044 = vmatpush2.msra.mxu0 0.0
      %2045 = vmatprep.subr.mxu0 0.0
      %2046 = vmatpush2.msra.mxu0 0.0
      %2047 = vmatprep.subr.mxu0 0.0
      %2048 = vmatpush2.msra.mxu0 0.0
      %2049 = vmatprep.subr.mxu0 0.0
      %2050 = vmatpush2.msra.mxu0 0.0
      %2051 = vmatprep.subr.mxu0 0.0
      %2052 = vmatpush2.msra.mxu0 0.0
      %2053 = vmatprep.subr.mxu0 0.0
      %2054 = vmatpush2.msra.mxu0 0.0
      %2055 = vmatprep.subr.mxu0 0.0
      %2056 = vmatpush2.msra.mxu0 0.0
      %2057 = vmatprep.subr.mxu0 0.0
      %2058 = vmatpush2.msra.mxu0 0.0
      %2059 = vmatprep.subr.mxu0 0.0
      %2060 = vmatpush2.msra.mxu0 0.0
      %2061 = vmatprep.subr.mxu0 0.0
      %2062 = vmatpush2.msra.mxu0 0.0
      %2063 = vmatprep.subr.mxu0 0.0
      %2064 = vmatpush2.msra.mxu0 0.0
      %2065 = vmatprep.mubr.f32.mxu0 0.0
      %2066 = vmatmul.mubr.f32.gmra.mxu0 %v1903
      %v2067 = vpop.f32.mrf.mxu0
      %v2068 = vadd.f32 0.0, %v2067
      %v2069 = vpop.f32.mrf.mxu0
      %2070 = vmatprep.mubr.f32.mxu0 0.0
      %2071 = vmatmul.mubr.f32.gmra.mxu0 %v1906
      %v2072 = vpop.f32.mrf.mxu0
      %v2073 = vadd.f32 0.0, %v2072
      %v2074 = vpop.f32.mrf.mxu0
      %2075 = vmatprep.mubr.f32.mxu0 0.0
      %2076 = vmatmul.mubr.f32.gmra.mxu0 %v1909
      %v2077 = vpop.f32.mrf.mxu0
      %v2078 = vadd.f32 0.0, %v2077
      %v2079 = vpop.f32.mrf.mxu0
      %2080 = vmatprep.mubr.f32.mxu0 0.0
      %2081 = vmatmul.mubr.f32.gmra.mxu0 %v1912
      %v2082 = vpop.f32.mrf.mxu0
      %v2083 = vadd.f32 0.0, %v2082
      %v2084 = vpop.f32.mrf.mxu0
      %2085 = vmatprep.mubr.f32.mxu0 0.0
      %2086 = vmatmul.mubr.f32.gmra.mxu0 %v1915
      %v2087 = vpop.f32.mrf.mxu0
      %v2088 = vadd.f32 0.0, %v2087
      %v2089 = vpop.f32.mrf.mxu0
      %2090 = vmatprep.mubr.f32.mxu0 0.0
      %2091 = vmatmul.mubr.f32.gmra.mxu0 %v1918
      %v2092 = vpop.f32.mrf.mxu0
      %v2093 = vadd.f32 0.0, %v2092
      %v2094 = vpop.f32.mrf.mxu0
      %2095 = vmatprep.mubr.f32.mxu0 0.0
      %2096 = vmatmul.mubr.f32.gmra.mxu0 %v1921
      %v2097 = vpop.f32.mrf.mxu0
      %v2098 = vadd.f32 0.0, %v2097
      %v2099 = vpop.f32.mrf.mxu0
      %2100 = vmatprep.mubr.f32.mxu0 0.0
      %2101 = vmatmul.mubr.f32.gmra.mxu0 %v1924
      %v2102 = vpop.f32.mrf.mxu0
      %v2103 = vadd.f32 0.0, %v2102
      %v2104 = vpop.f32.mrf.mxu0
      %2105 = vmatprep.mubr.f32.mxu0 0.0
      %2106 = vmatmul.mubr.f32.gmra.mxu0 %v1927
      %v2107 = vpop.f32.mrf.mxu0
      %v2108 = vadd.f32 0.0, %v2107
      %v2109 = vpop.f32.mrf.mxu0
      %2110 = vmatprep.mubr.f32.mxu0 0.0
      %2111 = vmatmul.mubr.f32.gmra.mxu0 %v1930
      %v2112 = vpop.f32.mrf.mxu0
      %v2113 = vadd.f32 0.0, %v2112
      %v2114 = vpop.f32.mrf.mxu0
      %2115 = vmatprep.mubr.f32.mxu0 0.0
      %2116 = vmatmul.mubr.f32.gmra.mxu0 %v1933
      %v2117 = vpop.f32.mrf.mxu0
      %v2118 = vadd.f32 0.0, %v2117
      %v2119 = vpop.f32.mrf.mxu0
      %2120 = vmatprep.mubr.f32.mxu0 0.0
      %2121 = vmatmul.mubr.f32.gmra.mxu0 %v1936
      %v2122 = vpop.f32.mrf.mxu0
      %v2123 = vadd.f32 0.0, %v2122
      %v2124 = vpop.f32.mrf.mxu0
      %2125 = vmatprep.mubr.f32.mxu0 0.0
      %2126 = vmatmul.mubr.f32.gmra.mxu0 %v1939
      %v2127 = vpop.f32.mrf.mxu0
      %v2128 = vadd.f32 0.0, %v2127
      %v2129 = vpop.f32.mrf.mxu0
      %2130 = vmatprep.mubr.f32.mxu0 0.0
      %2131 = vmatmul.mubr.f32.gmra.mxu0 %v1942
      %v2132 = vpop.f32.mrf.mxu0
      %v2133 = vadd.f32 0.0, %v2132
      %v2134 = vpop.f32.mrf.mxu0
      %2135 = vmatprep.mubr.f32.mxu0 0.0
      %2136 = vmatmul.mubr.f32.gmra.mxu0 %v1945
      %v2137 = vpop.f32.mrf.mxu0
      %v2138 = vadd.f32 0.0, %v2137
      %v2139 = vpop.f32.mrf.mxu0
      %2140 = vmatprep.mubr.f32.mxu0 0.0
      %2141 = vmatmul.mubr.f32.gmra.mxu0 %v1948
      %v2142 = vpop.f32.mrf.mxu0
      %v2143 = vadd.f32 0.0, %v2142
      %v2144 = vpop.f32.mrf.mxu0
      %2145 = vmatprep.mubr.f32.mxu0 0.0
      %2146 = vmatmul.mubr.f32.gmra.mxu0 %v1951
      %v2147 = vpop.f32.mrf.mxu0
      %v2148 = vadd.f32 0.0, %v2147
      %v2149 = vpop.f32.mrf.mxu0
      %2150 = vmatprep.mubr.f32.mxu0 0.0
      %2151 = vmatmul.mubr.f32.gmra.mxu0 %v1954
      %v2152 = vpop.f32.mrf.mxu0
      %v2153 = vadd.f32 0.0, %v2152
      %v2154 = vpop.f32.mrf.mxu0
      %2155 = vmatprep.mubr.f32.mxu0 0.0
      %2156 = vmatmul.mubr.f32.gmra.mxu0 %v1957
      %v2157 = vpop.f32.mrf.mxu0
      %v2158 = vadd.f32 0.0, %v2157
      %v2159 = vpop.f32.mrf.mxu0
      %2160 = vmatprep.mubr.f32.mxu0 0.0
      %2161 = vmatmul.mubr.f32.gmra.mxu0 %v1960
      %v2162 = vpop.f32.mrf.mxu0
      %v2163 = vadd.f32 0.0, %v2162
      %v2164 = vpop.f32.mrf.mxu0
      %2165 = vmatprep.mubr.f32.mxu0 0.0
      %2166 = vmatmul.mubr.f32.gmra.mxu0 %v1963
      %v2167 = vpop.f32.mrf.mxu0
      %v2168 = vadd.f32 0.0, %v2167
      %v2169 = vpop.f32.mrf.mxu0
      %2170 = vmatprep.mubr.f32.mxu0 0.0
      %2171 = vmatmul.mubr.f32.gmra.mxu0 %v1966
      %v2172 = vpop.f32.mrf.mxu0
      %v2173 = vadd.f32 0.0, %v2172
      %v2174 = vpop.f32.mrf.mxu0
      %2175 = vmatprep.mubr.f32.mxu0 0.0
      %2176 = vmatmul.mubr.f32.gmra.mxu0 %v1969
      %v2177 = vpop.f32.mrf.mxu0
      %v2178 = vadd.f32 0.0, %v2177
      %v2179 = vpop.f32.mrf.mxu0
      %2180 = vmatprep.mubr.f32.mxu0 0.0
      %2181 = vmatmul.mubr.f32.gmra.mxu0 %v1972
      %v2182 = vpop.f32.mrf.mxu0
      %v2183 = vadd.f32 0.0, %v2182
      %v2184 = vpop.f32.mrf.mxu0
      %2185 = vmatprep.mubr.f32.mxu0 0.0
      %2186 = vmatmul.mubr.f32.gmra.mxu0 %v1975
      %v2187 = vpop.f32.mrf.mxu0
      %v2188 = vadd.f32 0.0, %v2187
      %v2189 = vpop.f32.mrf.mxu0
      %2190 = vmatprep.mubr.f32.mxu0 0.0
      %2191 = vmatmul.mubr.f32.gmra.mxu0 %v1978
      %v2192 = vpop.f32.mrf.mxu0
      %v2193 = vadd.f32 0.0, %v2192
      %v2194 = vpop.f32.mrf.mxu0
      %2195 = vmatprep.mubr.f32.mxu0 0.0
      %2196 = vmatmul.mubr.f32.gmra.mxu0 %v1981
      %v2197 = vpop.f32.mrf.mxu0
      %v2198 = vadd.f32 0.0, %v2197
      %v2199 = vpop.f32.mrf.mxu0
      %2200 = vmatprep.mubr.f32.mxu0 0.0
      %2201 = vmatmul.mubr.f32.gmra.mxu0 %v1984
      %v2202 = vpop.f32.mrf.mxu0
      %v2203 = vadd.f32 0.0, %v2202
      %v2204 = vpop.f32.mrf.mxu0
      %2205 = vmatprep.mubr.f32.mxu0 0.0
      %2206 = vmatmul.mubr.f32.gmra.mxu0 %v1987
      %v2207 = vpop.f32.mrf.mxu0
      %v2208 = vadd.f32 0.0, %v2207
      %v2209 = vpop.f32.mrf.mxu0
      %2210 = vmatprep.mubr.f32.mxu0 0.0
      %2211 = vmatmul.mubr.f32.gmra.mxu0 %v1990
      %v2212 = vpop.f32.mrf.mxu0
      %v2213 = vadd.f32 0.0, %v2212
      %v2214 = vpop.f32.mrf.mxu0
      %2215 = vmatprep.mubr.f32.mxu0 0.0
      %2216 = vmatmul.mubr.f32.gmra.mxu0 %v1993
      %v2217 = vpop.f32.mrf.mxu0
      %v2218 = vadd.f32 0.0, %v2217
      %v2219 = vpop.f32.mrf.mxu0
      %2220 = vmatprep.mubr.f32.mxu0 0.0
      %2221 = vmatmul.mubr.f32.gmra.mxu0 %v1996
      %v2222 = vpop.f32.mrf.mxu0
      %v2223 = vadd.f32 0.0, %v2222
      %v2224 = vpop.f32.mrf.mxu0
      %2225 = vdwg.mxu0
      %v2226 = vadd.f32 %v1836, %v2068
      %v2227 = vadd.f32 %v1837, %v2073
      %v2228 = vadd.f32 %v1838, %v2078
      %v2229 = vadd.f32 %v1839, %v2083
      %v2230 = vadd.f32 %v1840, %v2088
      %v2231 = vadd.f32 %v1841, %v2093
      %v2232 = vadd.f32 %v1842, %v2098
      %v2233 = vadd.f32 %v1843, %v2103
      %v2234 = vadd.f32 %v1844, %v2108
      %v2235 = vadd.f32 %v1845, %v2113
      %v2236 = vadd.f32 %v1846, %v2118
      %v2237 = vadd.f32 %v1847, %v2123
      %v2238 = vadd.f32 %v1848, %v2128
      %v2239 = vadd.f32 %v1849, %v2133
      %v2240 = vadd.f32 %v1850, %v2138
      %v2241 = vadd.f32 %v1851, %v2143
      %v2242 = vadd.f32 %v1852, %v2148
      %v2243 = vadd.f32 %v1853, %v2153
      %v2244 = vadd.f32 %v1854, %v2158
      %v2245 = vadd.f32 %v1855, %v2163
      %v2246 = vadd.f32 %v1856, %v2168
      %v2247 = vadd.f32 %v1857, %v2173
      %v2248 = vadd.f32 %v1858, %v2178
      %v2249 = vadd.f32 %v1859, %v2183
      %v2250 = vadd.f32 %v1860, %v2188
      %v2251 = vadd.f32 %v1861, %v2193
      %v2252 = vadd.f32 %v1862, %v2198
      %v2253 = vadd.f32 %v1863, %v2203
      %v2254 = vadd.f32 %v1864, %v2208
      %v2255 = vadd.f32 %v1865, %v2213
      %v2256 = vadd.f32 %v1866, %v2218
      %v2257 = vadd.f32 %v1867, %v2223
      %v2258 = vld [vmem:[%s339 + $0x2] sm:$0xff]
      %v2259 = vld [vmem:[%s339 + $0xa] sm:$0xff]
      %v2260 = vld [vmem:[%s339 + $0x1a] sm:$0xff]
      %v2261 = vld [vmem:[%s339 + $0x22] sm:$0xff]
      %v2262 = vld [vmem:[%s339 + $0x32] sm:$0xff]
      %v2263 = vld [vmem:[%s339 + $0x3a] sm:$0xff]
      %v2264 = vld [vmem:[%s339 + $0x4a] sm:$0xff]
      %v2265 = vld [vmem:[%s339 + $0x52] sm:$0xff]
      %v2266 = vld [vmem:[%s339 + $0x62] sm:$0xff]
      %v2267 = vld [vmem:[%s339 + $0x6a] sm:$0xff]
      %v2268 = vld [vmem:[%s339 + $0x7a] sm:$0xff]
      %v2269 = vld [vmem:[%s339 + $0x82] sm:$0xff]
      %v2270 = vld [vmem:[%s339 + $0x92] sm:$0xff]
      %v2271 = vld [vmem:[%s339 + $0x9a] sm:$0xff]
      %v2272 = vld [vmem:[%s339 + $0xaa] sm:$0xff]
      %v2273 = vld [vmem:[%s339 + $0xb2] sm:$0xff]
      %v2274 = vld [vmem:[%s339 + $0xc2] sm:$0xff]
      %v2275 = vld [vmem:[%s339 + $0xca] sm:$0xff]
      %v2276 = vld [vmem:[%s339 + $0xda] sm:$0xff]
      %v2277 = vld [vmem:[%s339 + $0xe2] sm:$0xff]
      %v2278 = vld [vmem:[%s339 + $0xf2] sm:$0xff]
      %v2279 = vld [vmem:[%s339 + $0xfa] sm:$0xff]
      %v2280 = vld [vmem:[%s339 + $0x10a] sm:$0xff]
      %v2281 = vld [vmem:[%s339 + $0x112] sm:$0xff]
      %v2282 = vld [vmem:[%s339 + $0x122] sm:$0xff]
      %v2283 = vld [vmem:[%s339 + $0x12a] sm:$0xff]
      %v2284 = vld [vmem:[%s339 + $0x13a] sm:$0xff]
      %v2285 = vld [vmem:[%s339 + $0x142] sm:$0xff]
      %v2286 = vld [vmem:[%s339 + $0x152] sm:$0xff]
      %v2287 = vld [vmem:[%s339 + $0x15a] sm:$0xff]
      %v2288 = vld [vmem:[%s339 + $0x16a] sm:$0xff]
      %v2289 = vld [vmem:[%s339 + $0x172] sm:$0xff]
      %s2290 = scalar_lea.vmem %s1, 20
      %v2291 = vld [vmem:[%s2290] sm:$0xf]
      %v2293 = vsel %vm225, %v2258, 0
      %v2296 = vsel %vm225, %v2259, 0
      %v2299 = vsel %vm225, %v2260, 0
      %v2302 = vsel %vm225, %v2261, 0
      %v2305 = vsel %vm225, %v2262, 0
      %v2308 = vsel %vm225, %v2263, 0
      %v2311 = vsel %vm225, %v2264, 0
      %v2314 = vsel %vm225, %v2265, 0
      %v2317 = vsel %vm225, %v2266, 0
      %v2320 = vsel %vm225, %v2267, 0
      %v2323 = vsel %vm225, %v2268, 0
      %v2326 = vsel %vm225, %v2269, 0
      %v2329 = vsel %vm225, %v2270, 0
      %v2332 = vsel %vm225, %v2271, 0
      %v2335 = vsel %vm225, %v2272, 0
      %v2338 = vsel %vm225, %v2273, 0
      %v2341 = vsel %vm225, %v2274, 0
      %v2344 = vsel %vm225, %v2275, 0
      %v2347 = vsel %vm225, %v2276, 0
      %v2350 = vsel %vm225, %v2277, 0
      %v2353 = vsel %vm225, %v2278, 0
      %v2356 = vsel %vm225, %v2279, 0
      %v2359 = vsel %vm225, %v2280, 0
      %v2362 = vsel %vm225, %v2281, 0
      %v2365 = vsel %vm225, %v2282, 0
      %v2368 = vsel %vm225, %v2283, 0
      %v2371 = vsel %vm225, %v2284, 0
      %v2374 = vsel %vm225, %v2285, 0
      %v2377 = vsel %vm225, %v2286, 0
      %v2380 = vsel %vm225, %v2287, 0
      %v2383 = vsel %vm225, %v2288, 0
      %v2386 = vsel %vm225, %v2289, 0
      %v2389 = vsel %vm535, %v2291, 0
      %2391 = vmatprep.subr.mxu0 0.0
      %2392 = vmatpush1.msra.mxu0 0.0
      %2393 = vmatprep.subr.mxu0 0.0
      %2394 = vmatpush1.msra.mxu0 0.0
      %2395 = vmatprep.subr.mxu0 0.0
      %2396 = vmatpush1.msra.mxu0 0.0
      %2397 = vmatprep.subr.mxu0 0.0
      %2398 = vmatpush1.msra.mxu0 0.0
      %2399 = vmatprep.subr.mxu0 0.0
      %2400 = vmatpush1.msra.mxu0 0.0
      %2401 = vmatprep.subr.mxu0 0.0
      %2402 = vmatpush1.msra.mxu0 0.0
      %2403 = vmatprep.subr.mxu0 0.0
      %2404 = vmatpush1.msra.mxu0 0.0
      %2405 = vmatprep.subr.mxu0 0.0
      %2406 = vmatpush1.msra.mxu0 0.0
      %2407 = vmatprep.subr.mxu0 0.0
      %2408 = vmatpush1.msra.mxu0 0.0
      %2409 = vmatprep.subr.mxu0 0.0
      %2410 = vmatpush1.msra.mxu0 0.0
      %2411 = vmatprep.subr.mxu0 0.0
      %2412 = vmatpush1.msra.mxu0 0.0
      %2413 = vmatprep.subr.mxu0 0.0
      %2414 = vmatpush1.msra.mxu0 0.0
      %2415 = vmatprep.subr.mxu0 0.0
      %2416 = vmatpush1.msra.mxu0 0.0
      %2417 = vmatprep.subr.mxu0 0.0
      %2418 = vmatpush1.msra.mxu0 0.0
      %2419 = vmatprep.subr.mxu0 0.0
      %2420 = vmatpush1.msra.mxu0 0.0
      %2421 = vmatprep.subr.mxu0 0.0
      %2422 = vmatpush1.msra.mxu0 %v2389
      %2423 = vmatprep.subr.mxu0 0.0
      %2424 = vmatpush2.msra.mxu0 0.0
      %2425 = vmatprep.subr.mxu0 0.0
      %2426 = vmatpush2.msra.mxu0 0.0
      %2427 = vmatprep.subr.mxu0 0.0
      %2428 = vmatpush2.msra.mxu0 0.0
      %2429 = vmatprep.subr.mxu0 0.0
      %2430 = vmatpush2.msra.mxu0 0.0
      %2431 = vmatprep.subr.mxu0 0.0
      %2432 = vmatpush2.msra.mxu0 0.0
      %2433 = vmatprep.subr.mxu0 0.0
      %2434 = vmatpush2.msra.mxu0 0.0
      %2435 = vmatprep.subr.mxu0 0.0
      %2436 = vmatpush2.msra.mxu0 0.0
      %2437 = vmatprep.subr.mxu0 0.0
      %2438 = vmatpush2.msra.mxu0 0.0
      %2439 = vmatprep.subr.mxu0 0.0
      %2440 = vmatpush2.msra.mxu0 0.0
      %2441 = vmatprep.subr.mxu0 0.0
      %2442 = vmatpush2.msra.mxu0 0.0
      %2443 = vmatprep.subr.mxu0 0.0
      %2444 = vmatpush2.msra.mxu0 0.0
      %2445 = vmatprep.subr.mxu0 0.0
      %2446 = vmatpush2.msra.mxu0 0.0
      %2447 = vmatprep.subr.mxu0 0.0
      %2448 = vmatpush2.msra.mxu0 0.0
      %2449 = vmatprep.subr.mxu0 0.0
      %2450 = vmatpush2.msra.mxu0 0.0
      %2451 = vmatprep.subr.mxu0 0.0
      %2452 = vmatpush2.msra.mxu0 0.0
      %2453 = vmatprep.subr.mxu0 0.0
      %2454 = vmatpush2.msra.mxu0 0.0
      %2455 = vmatprep.mubr.f32.mxu0 0.0
      %2456 = vmatmul.mubr.f32.gmra.mxu0 %v2293
      %v2457 = vpop.f32.mrf.mxu0
      %v2458 = vadd.f32 0.0, %v2457
      %v2459 = vpop.f32.mrf.mxu0
      %2460 = vmatprep.mubr.f32.mxu0 0.0
      %2461 = vmatmul.mubr.f32.gmra.mxu0 %v2296
      %v2462 = vpop.f32.mrf.mxu0
      %v2463 = vadd.f32 0.0, %v2462
      %v2464 = vpop.f32.mrf.mxu0
      %2465 = vmatprep.mubr.f32.mxu0 0.0
      %2466 = vmatmul.mubr.f32.gmra.mxu0 %v2299
      %v2467 = vpop.f32.mrf.mxu0
      %v2468 = vadd.f32 0.0, %v2467
      %v2469 = vpop.f32.mrf.mxu0
      %2470 = vmatprep.mubr.f32.mxu0 0.0
      %2471 = vmatmul.mubr.f32.gmra.mxu0 %v2302
      %v2472 = vpop.f32.mrf.mxu0
      %v2473 = vadd.f32 0.0, %v2472
      %v2474 = vpop.f32.mrf.mxu0
      %2475 = vmatprep.mubr.f32.mxu0 0.0
      %2476 = vmatmul.mubr.f32.gmra.mxu0 %v2305
      %v2477 = vpop.f32.mrf.mxu0
      %v2478 = vadd.f32 0.0, %v2477
      %v2479 = vpop.f32.mrf.mxu0
      %2480 = vmatprep.mubr.f32.mxu0 0.0
      %2481 = vmatmul.mubr.f32.gmra.mxu0 %v2308
      %v2482 = vpop.f32.mrf.mxu0
      %v2483 = vadd.f32 0.0, %v2482
      %v2484 = vpop.f32.mrf.mxu0
      %2485 = vmatprep.mubr.f32.mxu0 0.0
      %2486 = vmatmul.mubr.f32.gmra.mxu0 %v2311
      %v2487 = vpop.f32.mrf.mxu0
      %v2488 = vadd.f32 0.0, %v2487
      %v2489 = vpop.f32.mrf.mxu0
      %2490 = vmatprep.mubr.f32.mxu0 0.0
      %2491 = vmatmul.mubr.f32.gmra.mxu0 %v2314
      %v2492 = vpop.f32.mrf.mxu0
      %v2493 = vadd.f32 0.0, %v2492
      %v2494 = vpop.f32.mrf.mxu0
      %2495 = vmatprep.mubr.f32.mxu0 0.0
      %2496 = vmatmul.mubr.f32.gmra.mxu0 %v2317
      %v2497 = vpop.f32.mrf.mxu0
      %v2498 = vadd.f32 0.0, %v2497
      %v2499 = vpop.f32.mrf.mxu0
      %2500 = vmatprep.mubr.f32.mxu0 0.0
      %2501 = vmatmul.mubr.f32.gmra.mxu0 %v2320
      %v2502 = vpop.f32.mrf.mxu0
      %v2503 = vadd.f32 0.0, %v2502
      %v2504 = vpop.f32.mrf.mxu0
      %2505 = vmatprep.mubr.f32.mxu0 0.0
      %2506 = vmatmul.mubr.f32.gmra.mxu0 %v2323
      %v2507 = vpop.f32.mrf.mxu0
      %v2508 = vadd.f32 0.0, %v2507
      %v2509 = vpop.f32.mrf.mxu0
      %2510 = vmatprep.mubr.f32.mxu0 0.0
      %2511 = vmatmul.mubr.f32.gmra.mxu0 %v2326
      %v2512 = vpop.f32.mrf.mxu0
      %v2513 = vadd.f32 0.0, %v2512
      %v2514 = vpop.f32.mrf.mxu0
      %2515 = vmatprep.mubr.f32.mxu0 0.0
      %2516 = vmatmul.mubr.f32.gmra.mxu0 %v2329
      %v2517 = vpop.f32.mrf.mxu0
      %v2518 = vadd.f32 0.0, %v2517
      %v2519 = vpop.f32.mrf.mxu0
      %2520 = vmatprep.mubr.f32.mxu0 0.0
      %2521 = vmatmul.mubr.f32.gmra.mxu0 %v2332
      %v2522 = vpop.f32.mrf.mxu0
      %v2523 = vadd.f32 0.0, %v2522
      %v2524 = vpop.f32.mrf.mxu0
      %2525 = vmatprep.mubr.f32.mxu0 0.0
      %2526 = vmatmul.mubr.f32.gmra.mxu0 %v2335
      %v2527 = vpop.f32.mrf.mxu0
      %v2528 = vadd.f32 0.0, %v2527
      %v2529 = vpop.f32.mrf.mxu0
      %2530 = vmatprep.mubr.f32.mxu0 0.0
      %2531 = vmatmul.mubr.f32.gmra.mxu0 %v2338
      %v2532 = vpop.f32.mrf.mxu0
      %v2533 = vadd.f32 0.0, %v2532
      %v2534 = vpop.f32.mrf.mxu0
      %2535 = vmatprep.mubr.f32.mxu0 0.0
      %2536 = vmatmul.mubr.f32.gmra.mxu0 %v2341
      %v2537 = vpop.f32.mrf.mxu0
      %v2538 = vadd.f32 0.0, %v2537
      %v2539 = vpop.f32.mrf.mxu0
      %2540 = vmatprep.mubr.f32.mxu0 0.0
      %2541 = vmatmul.mubr.f32.gmra.mxu0 %v2344
      %v2542 = vpop.f32.mrf.mxu0
      %v2543 = vadd.f32 0.0, %v2542
      %v2544 = vpop.f32.mrf.mxu0
      %2545 = vmatprep.mubr.f32.mxu0 0.0
      %2546 = vmatmul.mubr.f32.gmra.mxu0 %v2347
      %v2547 = vpop.f32.mrf.mxu0
      %v2548 = vadd.f32 0.0, %v2547
      %v2549 = vpop.f32.mrf.mxu0
      %2550 = vmatprep.mubr.f32.mxu0 0.0
      %2551 = vmatmul.mubr.f32.gmra.mxu0 %v2350
      %v2552 = vpop.f32.mrf.mxu0
      %v2553 = vadd.f32 0.0, %v2552
      %v2554 = vpop.f32.mrf.mxu0
      %2555 = vmatprep.mubr.f32.mxu0 0.0
      %2556 = vmatmul.mubr.f32.gmra.mxu0 %v2353
      %v2557 = vpop.f32.mrf.mxu0
      %v2558 = vadd.f32 0.0, %v2557
      %v2559 = vpop.f32.mrf.mxu0
      %2560 = vmatprep.mubr.f32.mxu0 0.0
      %2561 = vmatmul.mubr.f32.gmra.mxu0 %v2356
      %v2562 = vpop.f32.mrf.mxu0
      %v2563 = vadd.f32 0.0, %v2562
      %v2564 = vpop.f32.mrf.mxu0
      %2565 = vmatprep.mubr.f32.mxu0 0.0
      %2566 = vmatmul.mubr.f32.gmra.mxu0 %v2359
      %v2567 = vpop.f32.mrf.mxu0
      %v2568 = vadd.f32 0.0, %v2567
      %v2569 = vpop.f32.mrf.mxu0
      %2570 = vmatprep.mubr.f32.mxu0 0.0
      %2571 = vmatmul.mubr.f32.gmra.mxu0 %v2362
      %v2572 = vpop.f32.mrf.mxu0
      %v2573 = vadd.f32 0.0, %v2572
      %v2574 = vpop.f32.mrf.mxu0
      %2575 = vmatprep.mubr.f32.mxu0 0.0
      %2576 = vmatmul.mubr.f32.gmra.mxu0 %v2365
      %v2577 = vpop.f32.mrf.mxu0
      %v2578 = vadd.f32 0.0, %v2577
      %v2579 = vpop.f32.mrf.mxu0
      %2580 = vmatprep.mubr.f32.mxu0 0.0
      %2581 = vmatmul.mubr.f32.gmra.mxu0 %v2368
      %v2582 = vpop.f32.mrf.mxu0
      %v2583 = vadd.f32 0.0, %v2582
      %v2584 = vpop.f32.mrf.mxu0
      %2585 = vmatprep.mubr.f32.mxu0 0.0
      %2586 = vmatmul.mubr.f32.gmra.mxu0 %v2371
      %v2587 = vpop.f32.mrf.mxu0
      %v2588 = vadd.f32 0.0, %v2587
      %v2589 = vpop.f32.mrf.mxu0
      %2590 = vmatprep.mubr.f32.mxu0 0.0
      %2591 = vmatmul.mubr.f32.gmra.mxu0 %v2374
      %v2592 = vpop.f32.mrf.mxu0
      %v2593 = vadd.f32 0.0, %v2592
      %v2594 = vpop.f32.mrf.mxu0
      %2595 = vmatprep.mubr.f32.mxu0 0.0
      %2596 = vmatmul.mubr.f32.gmra.mxu0 %v2377
      %v2597 = vpop.f32.mrf.mxu0
      %v2598 = vadd.f32 0.0, %v2597
      %v2599 = vpop.f32.mrf.mxu0
      %2600 = vmatprep.mubr.f32.mxu0 0.0
      %2601 = vmatmul.mubr.f32.gmra.mxu0 %v2380
      %v2602 = vpop.f32.mrf.mxu0
      %v2603 = vadd.f32 0.0, %v2602
      %v2604 = vpop.f32.mrf.mxu0
      %2605 = vmatprep.mubr.f32.mxu0 0.0
      %2606 = vmatmul.mubr.f32.gmra.mxu0 %v2383
      %v2607 = vpop.f32.mrf.mxu0
      %v2608 = vadd.f32 0.0, %v2607
      %v2609 = vpop.f32.mrf.mxu0
      %2610 = vmatprep.mubr.f32.mxu0 0.0
      %2611 = vmatmul.mubr.f32.gmra.mxu0 %v2386
      %v2612 = vpop.f32.mrf.mxu0
      %v2613 = vadd.f32 0.0, %v2612
      %v2614 = vpop.f32.mrf.mxu0
      %2615 = vdwg.mxu0
      %v2616 = vadd.f32 %v2226, %v2458
      %v2617 = vadd.f32 %v2227, %v2463
      %v2618 = vadd.f32 %v2228, %v2468
      %v2619 = vadd.f32 %v2229, %v2473
      %v2620 = vadd.f32 %v2230, %v2478
      %v2621 = vadd.f32 %v2231, %v2483
      %v2622 = vadd.f32 %v2232, %v2488
      %v2623 = vadd.f32 %v2233, %v2493
      %v2624 = vadd.f32 %v2234, %v2498
      %v2625 = vadd.f32 %v2235, %v2503
      %v2626 = vadd.f32 %v2236, %v2508
      %v2627 = vadd.f32 %v2237, %v2513
      %v2628 = vadd.f32 %v2238, %v2518
      %v2629 = vadd.f32 %v2239, %v2523
      %v2630 = vadd.f32 %v2240, %v2528
      %v2631 = vadd.f32 %v2241, %v2533
      %v2632 = vadd.f32 %v2242, %v2538
      %v2633 = vadd.f32 %v2243, %v2543
      %v2634 = vadd.f32 %v2244, %v2548
      %v2635 = vadd.f32 %v2245, %v2553
      %v2636 = vadd.f32 %v2246, %v2558
      %v2637 = vadd.f32 %v2247, %v2563
      %v2638 = vadd.f32 %v2248, %v2568
      %v2639 = vadd.f32 %v2249, %v2573
      %v2640 = vadd.f32 %v2250, %v2578
      %v2641 = vadd.f32 %v2251, %v2583
      %v2642 = vadd.f32 %v2252, %v2588
      %v2643 = vadd.f32 %v2253, %v2593
      %v2644 = vadd.f32 %v2254, %v2598
      %v2645 = vadd.f32 %v2255, %v2603
      %v2646 = vadd.f32 %v2256, %v2608
      %v2647 = vadd.f32 %v2257, %v2613
      %s2648 = scalar_lea.vmem [#allocation2], 48
      %v2649 = vld [vmem:[%s2648] sm:$0xff]
      %v2650 = vld [vmem:[%s2648 + $0x8] sm:$0xff]
      %v2651 = vld [vmem:[%s2648 + $0x18] sm:$0xff]
      %v2652 = vld [vmem:[%s2648 + $0x20] sm:$0xff]
      %v2653 = vld [vmem:[%s2648 + $0x30] sm:$0xff]
      %v2654 = vld [vmem:[%s2648 + $0x38] sm:$0xff]
      %v2655 = vld [vmem:[%s2648 + $0x48] sm:$0xff]
      %v2656 = vld [vmem:[%s2648 + $0x50] sm:$0xff]
      %v2657 = vld [vmem:[%s2648 + $0x60] sm:$0xff]
      %v2658 = vld [vmem:[%s2648 + $0x68] sm:$0xff]
      %v2659 = vld [vmem:[%s2648 + $0x78] sm:$0xff]
      %v2660 = vld [vmem:[%s2648 + $0x80] sm:$0xff]
      %v2661 = vld [vmem:[%s2648 + $0x90] sm:$0xff]
      %v2662 = vld [vmem:[%s2648 + $0x98] sm:$0xff]
      %v2663 = vld [vmem:[%s2648 + $0xa8] sm:$0xff]
      %v2664 = vld [vmem:[%s2648 + $0xb0] sm:$0xff]
      %v2665 = vld [vmem:[%s2648 + $0xc0] sm:$0xff]
      %v2666 = vld [vmem:[%s2648 + $0xc8] sm:$0xff]
      %v2667 = vld [vmem:[%s2648 + $0xd8] sm:$0xff]
      %v2668 = vld [vmem:[%s2648 + $0xe0] sm:$0xff]
      %v2669 = vld [vmem:[%s2648 + $0xf0] sm:$0xff]
      %v2670 = vld [vmem:[%s2648 + $0xf8] sm:$0xff]
      %v2671 = vld [vmem:[%s2648 + $0x108] sm:$0xff]
      %v2672 = vld [vmem:[%s2648 + $0x110] sm:$0xff]
      %v2673 = vld [vmem:[%s2648 + $0x120] sm:$0xff]
      %v2674 = vld [vmem:[%s2648 + $0x128] sm:$0xff]
      %v2675 = vld [vmem:[%s2648 + $0x138] sm:$0xff]
      %v2676 = vld [vmem:[%s2648 + $0x140] sm:$0xff]
      %v2677 = vld [vmem:[%s2648 + $0x150] sm:$0xff]
      %v2678 = vld [vmem:[%s2648 + $0x158] sm:$0xff]
      %v2679 = vld [vmem:[%s2648 + $0x168] sm:$0xff]
      %v2680 = vld [vmem:[%s2648 + $0x170] sm:$0xff]
      %s2681 = scalar_lea.vmem %s1, 24
      %v2682 = vld [vmem:[%s2681] sm:$0xf]
      %v2684 = vsel %vm225, %v2649, 0
      %v2687 = vsel %vm225, %v2650, 0
      %v2690 = vsel %vm225, %v2651, 0
      %v2693 = vsel %vm225, %v2652, 0
      %v2696 = vsel %vm225, %v2653, 0
      %v2699 = vsel %vm225, %v2654, 0
      %v2702 = vsel %vm225, %v2655, 0
      %v2705 = vsel %vm225, %v2656, 0
      %v2708 = vsel %vm225, %v2657, 0
      %v2711 = vsel %vm225, %v2658, 0
      %v2714 = vsel %vm225, %v2659, 0
      %v2717 = vsel %vm225, %v2660, 0
      %v2720 = vsel %vm225, %v2661, 0
      %v2723 = vsel %vm225, %v2662, 0
      %v2726 = vsel %vm225, %v2663, 0
      %v2729 = vsel %vm225, %v2664, 0
      %v2732 = vsel %vm225, %v2665, 0
      %v2735 = vsel %vm225, %v2666, 0
      %v2738 = vsel %vm225, %v2667, 0
      %v2741 = vsel %vm225, %v2668, 0
      %v2744 = vsel %vm225, %v2669, 0
      %v2747 = vsel %vm225, %v2670, 0
      %v2750 = vsel %vm225, %v2671, 0
      %v2753 = vsel %vm225, %v2672, 0
      %v2756 = vsel %vm225, %v2673, 0
      %v2759 = vsel %vm225, %v2674, 0
      %v2762 = vsel %vm225, %v2675, 0
      %v2765 = vsel %vm225, %v2676, 0
      %v2768 = vsel %vm225, %v2677, 0
      %v2771 = vsel %vm225, %v2678, 0
      %v2774 = vsel %vm225, %v2679, 0
      %v2777 = vsel %vm225, %v2680, 0
      %v2780 = vsel %vm535, %v2682, 0
      %2782 = vmatprep.subr.mxu0 0.0
      %2783 = vmatpush1.msra.mxu0 0.0
      %2784 = vmatprep.subr.mxu0 0.0
      %2785 = vmatpush1.msra.mxu0 0.0
      %2786 = vmatprep.subr.mxu0 0.0
      %2787 = vmatpush1.msra.mxu0 0.0
      %2788 = vmatprep.subr.mxu0 0.0
      %2789 = vmatpush1.msra.mxu0 0.0
      %2790 = vmatprep.subr.mxu0 0.0
      %2791 = vmatpush1.msra.mxu0 0.0
      %2792 = vmatprep.subr.mxu0 0.0
      %2793 = vmatpush1.msra.mxu0 0.0
      %2794 = vmatprep.subr.mxu0 0.0
      %2795 = vmatpush1.msra.mxu0 0.0
      %2796 = vmatprep.subr.mxu0 0.0
      %2797 = vmatpush1.msra.mxu0 0.0
      %2798 = vmatprep.subr.mxu0 0.0
      %2799 = vmatpush1.msra.mxu0 0.0
      %2800 = vmatprep.subr.mxu0 0.0
      %2801 = vmatpush1.msra.mxu0 0.0
      %2802 = vmatprep.subr.mxu0 0.0
      %2803 = vmatpush1.msra.mxu0 0.0
      %2804 = vmatprep.subr.mxu0 0.0
      %2805 = vmatpush1.msra.mxu0 0.0
      %2806 = vmatprep.subr.mxu0 0.0
      %2807 = vmatpush1.msra.mxu0 0.0
      %2808 = vmatprep.subr.mxu0 0.0
      %2809 = vmatpush1.msra.mxu0 0.0
      %2810 = vmatprep.subr.mxu0 0.0
      %2811 = vmatpush1.msra.mxu0 0.0
      %2812 = vmatprep.subr.mxu0 0.0
      %2813 = vmatpush1.msra.mxu0 %v2780
      %2814 = vmatprep.subr.mxu0 0.0
      %2815 = vmatpush2.msra.mxu0 0.0
      %2816 = vmatprep.subr.mxu0 0.0
      %2817 = vmatpush2.msra.mxu0 0.0
      %2818 = vmatprep.subr.mxu0 0.0
      %2819 = vmatpush2.msra.mxu0 0.0
      %2820 = vmatprep.subr.mxu0 0.0
      %2821 = vmatpush2.msra.mxu0 0.0
      %2822 = vmatprep.subr.mxu0 0.0
      %2823 = vmatpush2.msra.mxu0 0.0
      %2824 = vmatprep.subr.mxu0 0.0
      %2825 = vmatpush2.msra.mxu0 0.0
      %2826 = vmatprep.subr.mxu0 0.0
      %2827 = vmatpush2.msra.mxu0 0.0
      %2828 = vmatprep.subr.mxu0 0.0
      %2829 = vmatpush2.msra.mxu0 0.0
      %2830 = vmatprep.subr.mxu0 0.0
      %2831 = vmatpush2.msra.mxu0 0.0
      %2832 = vmatprep.subr.mxu0 0.0
      %2833 = vmatpush2.msra.mxu0 0.0
      %2834 = vmatprep.subr.mxu0 0.0
      %2835 = vmatpush2.msra.mxu0 0.0
      %2836 = vmatprep.subr.mxu0 0.0
      %2837 = vmatpush2.msra.mxu0 0.0
      %2838 = vmatprep.subr.mxu0 0.0
      %2839 = vmatpush2.msra.mxu0 0.0
      %2840 = vmatprep.subr.mxu0 0.0
      %2841 = vmatpush2.msra.mxu0 0.0
      %2842 = vmatprep.subr.mxu0 0.0
      %2843 = vmatpush2.msra.mxu0 0.0
      %2844 = vmatprep.subr.mxu0 0.0
      %2845 = vmatpush2.msra.mxu0 0.0
      %2846 = vmatprep.mubr.f32.mxu0 0.0
      %2847 = vmatmul.mubr.f32.gmra.mxu0 %v2684
      %v2848 = vpop.f32.mrf.mxu0
      %v2849 = vadd.f32 0.0, %v2848
      %v2850 = vpop.f32.mrf.mxu0
      %2851 = vmatprep.mubr.f32.mxu0 0.0
      %2852 = vmatmul.mubr.f32.gmra.mxu0 %v2687
      %v2853 = vpop.f32.mrf.mxu0
      %v2854 = vadd.f32 0.0, %v2853
      %v2855 = vpop.f32.mrf.mxu0
      %2856 = vmatprep.mubr.f32.mxu0 0.0
      %2857 = vmatmul.mubr.f32.gmra.mxu0 %v2690
      %v2858 = vpop.f32.mrf.mxu0
      %v2859 = vadd.f32 0.0, %v2858
      %v2860 = vpop.f32.mrf.mxu0
      %2861 = vmatprep.mubr.f32.mxu0 0.0
      %2862 = vmatmul.mubr.f32.gmra.mxu0 %v2693
      %v2863 = vpop.f32.mrf.mxu0
      %v2864 = vadd.f32 0.0, %v2863
      %v2865 = vpop.f32.mrf.mxu0
      %2866 = vmatprep.mubr.f32.mxu0 0.0
      %2867 = vmatmul.mubr.f32.gmra.mxu0 %v2696
      %v2868 = vpop.f32.mrf.mxu0
      %v2869 = vadd.f32 0.0, %v2868
      %v2870 = vpop.f32.mrf.mxu0
      %2871 = vmatprep.mubr.f32.mxu0 0.0
      %2872 = vmatmul.mubr.f32.gmra.mxu0 %v2699
      %v2873 = vpop.f32.mrf.mxu0
      %v2874 = vadd.f32 0.0, %v2873
      %v2875 = vpop.f32.mrf.mxu0
      %2876 = vmatprep.mubr.f32.mxu0 0.0
      %2877 = vmatmul.mubr.f32.gmra.mxu0 %v2702
      %v2878 = vpop.f32.mrf.mxu0
      %v2879 = vadd.f32 0.0, %v2878
      %v2880 = vpop.f32.mrf.mxu0
      %2881 = vmatprep.mubr.f32.mxu0 0.0
      %2882 = vmatmul.mubr.f32.gmra.mxu0 %v2705
      %v2883 = vpop.f32.mrf.mxu0
      %v2884 = vadd.f32 0.0, %v2883
      %v2885 = vpop.f32.mrf.mxu0
      %2886 = vmatprep.mubr.f32.mxu0 0.0
      %2887 = vmatmul.mubr.f32.gmra.mxu0 %v2708
      %v2888 = vpop.f32.mrf.mxu0
      %v2889 = vadd.f32 0.0, %v2888
      %v2890 = vpop.f32.mrf.mxu0
      %2891 = vmatprep.mubr.f32.mxu0 0.0
      %2892 = vmatmul.mubr.f32.gmra.mxu0 %v2711
      %v2893 = vpop.f32.mrf.mxu0
      %v2894 = vadd.f32 0.0, %v2893
      %v2895 = vpop.f32.mrf.mxu0
      %2896 = vmatprep.mubr.f32.mxu0 0.0
      %2897 = vmatmul.mubr.f32.gmra.mxu0 %v2714
      %v2898 = vpop.f32.mrf.mxu0
      %v2899 = vadd.f32 0.0, %v2898
      %v2900 = vpop.f32.mrf.mxu0
      %2901 = vmatprep.mubr.f32.mxu0 0.0
      %2902 = vmatmul.mubr.f32.gmra.mxu0 %v2717
      %v2903 = vpop.f32.mrf.mxu0
      %v2904 = vadd.f32 0.0, %v2903
      %v2905 = vpop.f32.mrf.mxu0
      %2906 = vmatprep.mubr.f32.mxu0 0.0
      %2907 = vmatmul.mubr.f32.gmra.mxu0 %v2720
      %v2908 = vpop.f32.mrf.mxu0
      %v2909 = vadd.f32 0.0, %v2908
      %v2910 = vpop.f32.mrf.mxu0
      %2911 = vmatprep.mubr.f32.mxu0 0.0
      %2912 = vmatmul.mubr.f32.gmra.mxu0 %v2723
      %v2913 = vpop.f32.mrf.mxu0
      %v2914 = vadd.f32 0.0, %v2913
      %v2915 = vpop.f32.mrf.mxu0
      %2916 = vmatprep.mubr.f32.mxu0 0.0
      %2917 = vmatmul.mubr.f32.gmra.mxu0 %v2726
      %v2918 = vpop.f32.mrf.mxu0
      %v2919 = vadd.f32 0.0, %v2918
      %v2920 = vpop.f32.mrf.mxu0
      %2921 = vmatprep.mubr.f32.mxu0 0.0
      %2922 = vmatmul.mubr.f32.gmra.mxu0 %v2729
      %v2923 = vpop.f32.mrf.mxu0
      %v2924 = vadd.f32 0.0, %v2923
      %v2925 = vpop.f32.mrf.mxu0
      %2926 = vmatprep.mubr.f32.mxu0 0.0
      %2927 = vmatmul.mubr.f32.gmra.mxu0 %v2732
      %v2928 = vpop.f32.mrf.mxu0
      %v2929 = vadd.f32 0.0, %v2928
      %v2930 = vpop.f32.mrf.mxu0
      %2931 = vmatprep.mubr.f32.mxu0 0.0
      %2932 = vmatmul.mubr.f32.gmra.mxu0 %v2735
      %v2933 = vpop.f32.mrf.mxu0
      %v2934 = vadd.f32 0.0, %v2933
      %v2935 = vpop.f32.mrf.mxu0
      %2936 = vmatprep.mubr.f32.mxu0 0.0
      %2937 = vmatmul.mubr.f32.gmra.mxu0 %v2738
      %v2938 = vpop.f32.mrf.mxu0
      %v2939 = vadd.f32 0.0, %v2938
      %v2940 = vpop.f32.mrf.mxu0
      %2941 = vmatprep.mubr.f32.mxu0 0.0
      %2942 = vmatmul.mubr.f32.gmra.mxu0 %v2741
      %v2943 = vpop.f32.mrf.mxu0
      %v2944 = vadd.f32 0.0, %v2943
      %v2945 = vpop.f32.mrf.mxu0
      %2946 = vmatprep.mubr.f32.mxu0 0.0
      %2947 = vmatmul.mubr.f32.gmra.mxu0 %v2744
      %v2948 = vpop.f32.mrf.mxu0
      %v2949 = vadd.f32 0.0, %v2948
      %v2950 = vpop.f32.mrf.mxu0
      %2951 = vmatprep.mubr.f32.mxu0 0.0
      %2952 = vmatmul.mubr.f32.gmra.mxu0 %v2747
      %v2953 = vpop.f32.mrf.mxu0
      %v2954 = vadd.f32 0.0, %v2953
      %v2955 = vpop.f32.mrf.mxu0
      %2956 = vmatprep.mubr.f32.mxu0 0.0
      %2957 = vmatmul.mubr.f32.gmra.mxu0 %v2750
      %v2958 = vpop.f32.mrf.mxu0
      %v2959 = vadd.f32 0.0, %v2958
      %v2960 = vpop.f32.mrf.mxu0
      %2961 = vmatprep.mubr.f32.mxu0 0.0
      %2962 = vmatmul.mubr.f32.gmra.mxu0 %v2753
      %v2963 = vpop.f32.mrf.mxu0
      %v2964 = vadd.f32 0.0, %v2963
      %v2965 = vpop.f32.mrf.mxu0
      %2966 = vmatprep.mubr.f32.mxu0 0.0
      %2967 = vmatmul.mubr.f32.gmra.mxu0 %v2756
      %v2968 = vpop.f32.mrf.mxu0
      %v2969 = vadd.f32 0.0, %v2968
      %v2970 = vpop.f32.mrf.mxu0
      %2971 = vmatprep.mubr.f32.mxu0 0.0
      %2972 = vmatmul.mubr.f32.gmra.mxu0 %v2759
      %v2973 = vpop.f32.mrf.mxu0
      %v2974 = vadd.f32 0.0, %v2973
      %v2975 = vpop.f32.mrf.mxu0
      %2976 = vmatprep.mubr.f32.mxu0 0.0
      %2977 = vmatmul.mubr.f32.gmra.mxu0 %v2762
      %v2978 = vpop.f32.mrf.mxu0
      %v2979 = vadd.f32 0.0, %v2978
      %v2980 = vpop.f32.mrf.mxu0
      %2981 = vmatprep.mubr.f32.mxu0 0.0
      %2982 = vmatmul.mubr.f32.gmra.mxu0 %v2765
      %v2983 = vpop.f32.mrf.mxu0
      %v2984 = vadd.f32 0.0, %v2983
      %v2985 = vpop.f32.mrf.mxu0
      %2986 = vmatprep.mubr.f32.mxu0 0.0
      %2987 = vmatmul.mubr.f32.gmra.mxu0 %v2768
      %v2988 = vpop.f32.mrf.mxu0
      %v2989 = vadd.f32 0.0, %v2988
      %v2990 = vpop.f32.mrf.mxu0
      %2991 = vmatprep.mubr.f32.mxu0 0.0
      %2992 = vmatmul.mubr.f32.gmra.mxu0 %v2771
      %v2993 = vpop.f32.mrf.mxu0
      %v2994 = vadd.f32 0.0, %v2993
      %v2995 = vpop.f32.mrf.mxu0
      %2996 = vmatprep.mubr.f32.mxu0 0.0
      %2997 = vmatmul.mubr.f32.gmra.mxu0 %v2774
      %v2998 = vpop.f32.mrf.mxu0
      %v2999 = vadd.f32 0.0, %v2998
      %v3000 = vpop.f32.mrf.mxu0
      %3001 = vmatprep.mubr.f32.mxu0 0.0
      %3002 = vmatmul.mubr.f32.gmra.mxu0 %v2777
      %v3003 = vpop.f32.mrf.mxu0
      %v3004 = vadd.f32 0.0, %v3003
      %v3005 = vpop.f32.mrf.mxu0
      %3006 = vdwg.mxu0
      %v3007 = vadd.f32 %v2616, %v2849
      %v3008 = vadd.f32 %v2617, %v2854
      %v3009 = vadd.f32 %v2618, %v2859
      %v3010 = vadd.f32 %v2619, %v2864
      %v3011 = vadd.f32 %v2620, %v2869
      %v3012 = vadd.f32 %v2621, %v2874
      %v3013 = vadd.f32 %v2622, %v2879
      %v3014 = vadd.f32 %v2623, %v2884
      %v3015 = vadd.f32 %v2624, %v2889
      %v3016 = vadd.f32 %v2625, %v2894
      %v3017 = vadd.f32 %v2626, %v2899
      %v3018 = vadd.f32 %v2627, %v2904
      %v3019 = vadd.f32 %v2628, %v2909
      %v3020 = vadd.f32 %v2629, %v2914
      %v3021 = vadd.f32 %v2630, %v2919
      %v3022 = vadd.f32 %v2631, %v2924
      %v3023 = vadd.f32 %v2632, %v2929
      %v3024 = vadd.f32 %v2633, %v2934
      %v3025 = vadd.f32 %v2634, %v2939
      %v3026 = vadd.f32 %v2635, %v2944
      %v3027 = vadd.f32 %v2636, %v2949
      %v3028 = vadd.f32 %v2637, %v2954
      %v3029 = vadd.f32 %v2638, %v2959
      %v3030 = vadd.f32 %v2639, %v2964
      %v3031 = vadd.f32 %v2640, %v2969
      %v3032 = vadd.f32 %v2641, %v2974
      %v3033 = vadd.f32 %v2642, %v2979
      %v3034 = vadd.f32 %v2643, %v2984
      %v3035 = vadd.f32 %v2644, %v2989
      %v3036 = vadd.f32 %v2645, %v2994
      %v3037 = vadd.f32 %v2646, %v2999
      %v3038 = vadd.f32 %v2647, %v3004
      %v3039 = vld [vmem:[%s2648 + $0x1] sm:$0xff]
      %v3040 = vld [vmem:[%s2648 + $0x9] sm:$0xff]
      %v3041 = vld [vmem:[%s2648 + $0x19] sm:$0xff]
      %v3042 = vld [vmem:[%s2648 + $0x21] sm:$0xff]
      %v3043 = vld [vmem:[%s2648 + $0x31] sm:$0xff]
      %v3044 = vld [vmem:[%s2648 + $0x39] sm:$0xff]
      %v3045 = vld [vmem:[%s2648 + $0x49] sm:$0xff]
      %v3046 = vld [vmem:[%s2648 + $0x51] sm:$0xff]
      %v3047 = vld [vmem:[%s2648 + $0x61] sm:$0xff]
      %v3048 = vld [vmem:[%s2648 + $0x69] sm:$0xff]
      %v3049 = vld [vmem:[%s2648 + $0x79] sm:$0xff]
      %v3050 = vld [vmem:[%s2648 + $0x81] sm:$0xff]
      %v3051 = vld [vmem:[%s2648 + $0x91] sm:$0xff]
      %v3052 = vld [vmem:[%s2648 + $0x99] sm:$0xff]
      %v3053 = vld [vmem:[%s2648 + $0xa9] sm:$0xff]
      %v3054 = vld [vmem:[%s2648 + $0xb1] sm:$0xff]
      %v3055 = vld [vmem:[%s2648 + $0xc1] sm:$0xff]
      %v3056 = vld [vmem:[%s2648 + $0xc9] sm:$0xff]
      %v3057 = vld [vmem:[%s2648 + $0xd9] sm:$0xff]
      %v3058 = vld [vmem:[%s2648 + $0xe1] sm:$0xff]
      %v3059 = vld [vmem:[%s2648 + $0xf1] sm:$0xff]
      %v3060 = vld [vmem:[%s2648 + $0xf9] sm:$0xff]
      %v3061 = vld [vmem:[%s2648 + $0x109] sm:$0xff]
      %v3062 = vld [vmem:[%s2648 + $0x111] sm:$0xff]
      %v3063 = vld [vmem:[%s2648 + $0x121] sm:$0xff]
      %v3064 = vld [vmem:[%s2648 + $0x129] sm:$0xff]
      %v3065 = vld [vmem:[%s2648 + $0x139] sm:$0xff]
      %v3066 = vld [vmem:[%s2648 + $0x141] sm:$0xff]
      %v3067 = vld [vmem:[%s2648 + $0x151] sm:$0xff]
      %v3068 = vld [vmem:[%s2648 + $0x159] sm:$0xff]
      %v3069 = vld [vmem:[%s2648 + $0x169] sm:$0xff]
      %v3070 = vld [vmem:[%s2648 + $0x171] sm:$0xff]
      %s3071 = scalar_lea.vmem %s1, 28
      %v3072 = vld [vmem:[%s3071] sm:$0xf]
      %v3074 = vsel %vm225, %v3039, 0
      %v3077 = vsel %vm225, %v3040, 0
      %v3080 = vsel %vm225, %v3041, 0
      %v3083 = vsel %vm225, %v3042, 0
      %v3086 = vsel %vm225, %v3043, 0
      %v3089 = vsel %vm225, %v3044, 0
      %v3092 = vsel %vm225, %v3045, 0
      %v3095 = vsel %vm225, %v3046, 0
      %v3098 = vsel %vm225, %v3047, 0
      %v3101 = vsel %vm225, %v3048, 0
      %v3104 = vsel %vm225, %v3049, 0
      %v3107 = vsel %vm225, %v3050, 0
      %v3110 = vsel %vm225, %v3051, 0
      %v3113 = vsel %vm225, %v3052, 0
      %v3116 = vsel %vm225, %v3053, 0
      %v3119 = vsel %vm225, %v3054, 0
      %v3122 = vsel %vm225, %v3055, 0
      %v3125 = vsel %vm225, %v3056, 0
      %v3128 = vsel %vm225, %v3057, 0
      %v3131 = vsel %vm225, %v3058, 0
      %v3134 = vsel %vm225, %v3059, 0
      %v3137 = vsel %vm225, %v3060, 0
      %v3140 = vsel %vm225, %v3061, 0
      %v3143 = vsel %vm225, %v3062, 0
      %v3146 = vsel %vm225, %v3063, 0
      %v3149 = vsel %vm225, %v3064, 0
      %v3152 = vsel %vm225, %v3065, 0
      %v3155 = vsel %vm225, %v3066, 0
      %v3158 = vsel %vm225, %v3067, 0
      %v3161 = vsel %vm225, %v3068, 0
      %v3164 = vsel %vm225, %v3069, 0
      %v3167 = vsel %vm225, %v3070, 0
      %v3170 = vsel %vm535, %v3072, 0
      %3172 = vmatprep.subr.mxu0 0.0
      %3173 = vmatpush1.msra.mxu0 0.0
      %3174 = vmatprep.subr.mxu0 0.0
      %3175 = vmatpush1.msra.mxu0 0.0
      %3176 = vmatprep.subr.mxu0 0.0
      %3177 = vmatpush1.msra.mxu0 0.0
      %3178 = vmatprep.subr.mxu0 0.0
      %3179 = vmatpush1.msra.mxu0 0.0
      %3180 = vmatprep.subr.mxu0 0.0
      %3181 = vmatpush1.msra.mxu0 0.0
      %3182 = vmatprep.subr.mxu0 0.0
      %3183 = vmatpush1.msra.mxu0 0.0
      %3184 = vmatprep.subr.mxu0 0.0
      %3185 = vmatpush1.msra.mxu0 0.0
      %3186 = vmatprep.subr.mxu0 0.0
      %3187 = vmatpush1.msra.mxu0 0.0
      %3188 = vmatprep.subr.mxu0 0.0
      %3189 = vmatpush1.msra.mxu0 0.0
      %3190 = vmatprep.subr.mxu0 0.0
      %3191 = vmatpush1.msra.mxu0 0.0
      %3192 = vmatprep.subr.mxu0 0.0
      %3193 = vmatpush1.msra.mxu0 0.0
      %3194 = vmatprep.subr.mxu0 0.0
      %3195 = vmatpush1.msra.mxu0 0.0
      %3196 = vmatprep.subr.mxu0 0.0
      %3197 = vmatpush1.msra.mxu0 0.0
      %3198 = vmatprep.subr.mxu0 0.0
      %3199 = vmatpush1.msra.mxu0 0.0
      %3200 = vmatprep.subr.mxu0 0.0
      %3201 = vmatpush1.msra.mxu0 0.0
      %3202 = vmatprep.subr.mxu0 0.0
      %3203 = vmatpush1.msra.mxu0 %v3170
      %3204 = vmatprep.subr.mxu0 0.0
      %3205 = vmatpush2.msra.mxu0 0.0
      %3206 = vmatprep.subr.mxu0 0.0
      %3207 = vmatpush2.msra.mxu0 0.0
      %3208 = vmatprep.subr.mxu0 0.0
      %3209 = vmatpush2.msra.mxu0 0.0
      %3210 = vmatprep.subr.mxu0 0.0
      %3211 = vmatpush2.msra.mxu0 0.0
      %3212 = vmatprep.subr.mxu0 0.0
      %3213 = vmatpush2.msra.mxu0 0.0
      %3214 = vmatprep.subr.mxu0 0.0
      %3215 = vmatpush2.msra.mxu0 0.0
      %3216 = vmatprep.subr.mxu0 0.0
      %3217 = vmatpush2.msra.mxu0 0.0
      %3218 = vmatprep.subr.mxu0 0.0
      %3219 = vmatpush2.msra.mxu0 0.0
      %3220 = vmatprep.subr.mxu0 0.0
      %3221 = vmatpush2.msra.mxu0 0.0
      %3222 = vmatprep.subr.mxu0 0.0
      %3223 = vmatpush2.msra.mxu0 0.0
      %3224 = vmatprep.subr.mxu0 0.0
      %3225 = vmatpush2.msra.mxu0 0.0
      %3226 = vmatprep.subr.mxu0 0.0
      %3227 = vmatpush2.msra.mxu0 0.0
      %3228 = vmatprep.subr.mxu0 0.0
      %3229 = vmatpush2.msra.mxu0 0.0
      %3230 = vmatprep.subr.mxu0 0.0
      %3231 = vmatpush2.msra.mxu0 0.0
      %3232 = vmatprep.subr.mxu0 0.0
      %3233 = vmatpush2.msra.mxu0 0.0
      %3234 = vmatprep.subr.mxu0 0.0
      %3235 = vmatpush2.msra.mxu0 0.0
      %3236 = vmatprep.mubr.f32.mxu0 0.0
      %3237 = vmatmul.mubr.f32.gmra.mxu0 %v3074
      %v3238 = vpop.f32.mrf.mxu0
      %v3239 = vadd.f32 0.0, %v3238
      %v3240 = vpop.f32.mrf.mxu0
      %3241 = vmatprep.mubr.f32.mxu0 0.0
      %3242 = vmatmul.mubr.f32.gmra.mxu0 %v3077
      %v3243 = vpop.f32.mrf.mxu0
      %v3244 = vadd.f32 0.0, %v3243
      %v3245 = vpop.f32.mrf.mxu0
      %3246 = vmatprep.mubr.f32.mxu0 0.0
      %3247 = vmatmul.mubr.f32.gmra.mxu0 %v3080
      %v3248 = vpop.f32.mrf.mxu0
      %v3249 = vadd.f32 0.0, %v3248
      %v3250 = vpop.f32.mrf.mxu0
      %3251 = vmatprep.mubr.f32.mxu0 0.0
      %3252 = vmatmul.mubr.f32.gmra.mxu0 %v3083
      %v3253 = vpop.f32.mrf.mxu0
      %v3254 = vadd.f32 0.0, %v3253
      %v3255 = vpop.f32.mrf.mxu0
      %3256 = vmatprep.mubr.f32.mxu0 0.0
      %3257 = vmatmul.mubr.f32.gmra.mxu0 %v3086
      %v3258 = vpop.f32.mrf.mxu0
      %v3259 = vadd.f32 0.0, %v3258
      %v3260 = vpop.f32.mrf.mxu0
      %3261 = vmatprep.mubr.f32.mxu0 0.0
      %3262 = vmatmul.mubr.f32.gmra.mxu0 %v3089
      %v3263 = vpop.f32.mrf.mxu0
      %v3264 = vadd.f32 0.0, %v3263
      %v3265 = vpop.f32.mrf.mxu0
      %3266 = vmatprep.mubr.f32.mxu0 0.0
      %3267 = vmatmul.mubr.f32.gmra.mxu0 %v3092
      %v3268 = vpop.f32.mrf.mxu0
      %v3269 = vadd.f32 0.0, %v3268
      %v3270 = vpop.f32.mrf.mxu0
      %3271 = vmatprep.mubr.f32.mxu0 0.0
      %3272 = vmatmul.mubr.f32.gmra.mxu0 %v3095
      %v3273 = vpop.f32.mrf.mxu0
      %v3274 = vadd.f32 0.0, %v3273
      %v3275 = vpop.f32.mrf.mxu0
      %3276 = vmatprep.mubr.f32.mxu0 0.0
      %3277 = vmatmul.mubr.f32.gmra.mxu0 %v3098
      %v3278 = vpop.f32.mrf.mxu0
      %v3279 = vadd.f32 0.0, %v3278
      %v3280 = vpop.f32.mrf.mxu0
      %3281 = vmatprep.mubr.f32.mxu0 0.0
      %3282 = vmatmul.mubr.f32.gmra.mxu0 %v3101
      %v3283 = vpop.f32.mrf.mxu0
      %v3284 = vadd.f32 0.0, %v3283
      %v3285 = vpop.f32.mrf.mxu0
      %3286 = vmatprep.mubr.f32.mxu0 0.0
      %3287 = vmatmul.mubr.f32.gmra.mxu0 %v3104
      %v3288 = vpop.f32.mrf.mxu0
      %v3289 = vadd.f32 0.0, %v3288
      %v3290 = vpop.f32.mrf.mxu0
      %3291 = vmatprep.mubr.f32.mxu0 0.0
      %3292 = vmatmul.mubr.f32.gmra.mxu0 %v3107
      %v3293 = vpop.f32.mrf.mxu0
      %v3294 = vadd.f32 0.0, %v3293
      %v3295 = vpop.f32.mrf.mxu0
      %3296 = vmatprep.mubr.f32.mxu0 0.0
      %3297 = vmatmul.mubr.f32.gmra.mxu0 %v3110
      %v3298 = vpop.f32.mrf.mxu0
      %v3299 = vadd.f32 0.0, %v3298
      %v3300 = vpop.f32.mrf.mxu0
      %3301 = vmatprep.mubr.f32.mxu0 0.0
      %3302 = vmatmul.mubr.f32.gmra.mxu0 %v3113
      %v3303 = vpop.f32.mrf.mxu0
      %v3304 = vadd.f32 0.0, %v3303
      %v3305 = vpop.f32.mrf.mxu0
      %3306 = vmatprep.mubr.f32.mxu0 0.0
      %3307 = vmatmul.mubr.f32.gmra.mxu0 %v3116
      %v3308 = vpop.f32.mrf.mxu0
      %v3309 = vadd.f32 0.0, %v3308
      %v3310 = vpop.f32.mrf.mxu0
      %3311 = vmatprep.mubr.f32.mxu0 0.0
      %3312 = vmatmul.mubr.f32.gmra.mxu0 %v3119
      %v3313 = vpop.f32.mrf.mxu0
      %v3314 = vadd.f32 0.0, %v3313
      %v3315 = vpop.f32.mrf.mxu0
      %3316 = vmatprep.mubr.f32.mxu0 0.0
      %3317 = vmatmul.mubr.f32.gmra.mxu0 %v3122
      %v3318 = vpop.f32.mrf.mxu0
      %v3319 = vadd.f32 0.0, %v3318
      %v3320 = vpop.f32.mrf.mxu0
      %3321 = vmatprep.mubr.f32.mxu0 0.0
      %3322 = vmatmul.mubr.f32.gmra.mxu0 %v3125
      %v3323 = vpop.f32.mrf.mxu0
      %v3324 = vadd.f32 0.0, %v3323
      %v3325 = vpop.f32.mrf.mxu0
      %3326 = vmatprep.mubr.f32.mxu0 0.0
      %3327 = vmatmul.mubr.f32.gmra.mxu0 %v3128
      %v3328 = vpop.f32.mrf.mxu0
      %v3329 = vadd.f32 0.0, %v3328
      %v3330 = vpop.f32.mrf.mxu0
      %3331 = vmatprep.mubr.f32.mxu0 0.0
      %3332 = vmatmul.mubr.f32.gmra.mxu0 %v3131
      %v3333 = vpop.f32.mrf.mxu0
      %v3334 = vadd.f32 0.0, %v3333
      %v3335 = vpop.f32.mrf.mxu0
      %3336 = vmatprep.mubr.f32.mxu0 0.0
      %3337 = vmatmul.mubr.f32.gmra.mxu0 %v3134
      %v3338 = vpop.f32.mrf.mxu0
      %v3339 = vadd.f32 0.0, %v3338
      %v3340 = vpop.f32.mrf.mxu0
      %3341 = vmatprep.mubr.f32.mxu0 0.0
      %3342 = vmatmul.mubr.f32.gmra.mxu0 %v3137
      %v3343 = vpop.f32.mrf.mxu0
      %v3344 = vadd.f32 0.0, %v3343
      %v3345 = vpop.f32.mrf.mxu0
      %3346 = vmatprep.mubr.f32.mxu0 0.0
      %3347 = vmatmul.mubr.f32.gmra.mxu0 %v3140
      %v3348 = vpop.f32.mrf.mxu0
      %v3349 = vadd.f32 0.0, %v3348
      %v3350 = vpop.f32.mrf.mxu0
      %3351 = vmatprep.mubr.f32.mxu0 0.0
      %3352 = vmatmul.mubr.f32.gmra.mxu0 %v3143
      %v3353 = vpop.f32.mrf.mxu0
      %v3354 = vadd.f32 0.0, %v3353
      %v3355 = vpop.f32.mrf.mxu0
      %3356 = vmatprep.mubr.f32.mxu0 0.0
      %3357 = vmatmul.mubr.f32.gmra.mxu0 %v3146
      %v3358 = vpop.f32.mrf.mxu0
      %v3359 = vadd.f32 0.0, %v3358
      %v3360 = vpop.f32.mrf.mxu0
      %3361 = vmatprep.mubr.f32.mxu0 0.0
      %3362 = vmatmul.mubr.f32.gmra.mxu0 %v3149
      %v3363 = vpop.f32.mrf.mxu0
      %v3364 = vadd.f32 0.0, %v3363
      %v3365 = vpop.f32.mrf.mxu0
      %3366 = vmatprep.mubr.f32.mxu0 0.0
      %3367 = vmatmul.mubr.f32.gmra.mxu0 %v3152
      %v3368 = vpop.f32.mrf.mxu0
      %v3369 = vadd.f32 0.0, %v3368
      %v3370 = vpop.f32.mrf.mxu0
      %3371 = vmatprep.mubr.f32.mxu0 0.0
      %3372 = vmatmul.mubr.f32.gmra.mxu0 %v3155
      %v3373 = vpop.f32.mrf.mxu0
      %v3374 = vadd.f32 0.0, %v3373
      %v3375 = vpop.f32.mrf.mxu0
      %3376 = vmatprep.mubr.f32.mxu0 0.0
      %3377 = vmatmul.mubr.f32.gmra.mxu0 %v3158
      %v3378 = vpop.f32.mrf.mxu0
      %v3379 = vadd.f32 0.0, %v3378
      %v3380 = vpop.f32.mrf.mxu0
      %3381 = vmatprep.mubr.f32.mxu0 0.0
      %3382 = vmatmul.mubr.f32.gmra.mxu0 %v3161
      %v3383 = vpop.f32.mrf.mxu0
      %v3384 = vadd.f32 0.0, %v3383
      %v3385 = vpop.f32.mrf.mxu0
      %3386 = vmatprep.mubr.f32.mxu0 0.0
      %3387 = vmatmul.mubr.f32.gmra.mxu0 %v3164
      %v3388 = vpop.f32.mrf.mxu0
      %v3389 = vadd.f32 0.0, %v3388
      %v3390 = vpop.f32.mrf.mxu0
      %3391 = vmatprep.mubr.f32.mxu0 0.0
      %3392 = vmatmul.mubr.f32.gmra.mxu0 %v3167
      %v3393 = vpop.f32.mrf.mxu0
      %v3394 = vadd.f32 0.0, %v3393
      %v3395 = vpop.f32.mrf.mxu0
      %3396 = vdwg.mxu0
      %v3397 = vadd.f32 %v3007, %v3239
      %v3398 = vadd.f32 %v3008, %v3244
      %v3399 = vadd.f32 %v3009, %v3249
      %v3400 = vadd.f32 %v3010, %v3254
      %v3401 = vadd.f32 %v3011, %v3259
      %v3402 = vadd.f32 %v3012, %v3264
      %v3403 = vadd.f32 %v3013, %v3269
      %v3404 = vadd.f32 %v3014, %v3274
      %v3405 = vadd.f32 %v3015, %v3279
      %v3406 = vadd.f32 %v3016, %v3284
      %v3407 = vadd.f32 %v3017, %v3289
      %v3408 = vadd.f32 %v3018, %v3294
      %v3409 = vadd.f32 %v3019, %v3299
      %v3410 = vadd.f32 %v3020, %v3304
      %v3411 = vadd.f32 %v3021, %v3309
      %v3412 = vadd.f32 %v3022, %v3314
      %v3413 = vadd.f32 %v3023, %v3319
      %v3414 = vadd.f32 %v3024, %v3324
      %v3415 = vadd.f32 %v3025, %v3329
      %v3416 = vadd.f32 %v3026, %v3334
      %v3417 = vadd.f32 %v3027, %v3339
      %v3418 = vadd.f32 %v3028, %v3344
      %v3419 = vadd.f32 %v3029, %v3349
      %v3420 = vadd.f32 %v3030, %v3354
      %v3421 = vadd.f32 %v3031, %v3359
      %v3422 = vadd.f32 %v3032, %v3364
      %v3423 = vadd.f32 %v3033, %v3369
      %v3424 = vadd.f32 %v3034, %v3374
      %v3425 = vadd.f32 %v3035, %v3379
      %v3426 = vadd.f32 %v3036, %v3384
      %v3427 = vadd.f32 %v3037, %v3389
      %v3428 = vadd.f32 %v3038, %v3394
      %v3429 = vld [vmem:[%s2648 + $0x2] sm:$0xff]
      %v3430 = vld [vmem:[%s2648 + $0xa] sm:$0xff]
      %v3431 = vld [vmem:[%s2648 + $0x1a] sm:$0xff]
      %v3432 = vld [vmem:[%s2648 + $0x22] sm:$0xff]
      %v3433 = vld [vmem:[%s2648 + $0x32] sm:$0xff]
      %v3434 = vld [vmem:[%s2648 + $0x3a] sm:$0xff]
      %v3435 = vld [vmem:[%s2648 + $0x4a] sm:$0xff]
      %v3436 = vld [vmem:[%s2648 + $0x52] sm:$0xff]
      %v3437 = vld [vmem:[%s2648 + $0x62] sm:$0xff]
      %v3438 = vld [vmem:[%s2648 + $0x6a] sm:$0xff]
      %v3439 = vld [vmem:[%s2648 + $0x7a] sm:$0xff]
      %v3440 = vld [vmem:[%s2648 + $0x82] sm:$0xff]
      %v3441 = vld [vmem:[%s2648 + $0x92] sm:$0xff]
      %v3442 = vld [vmem:[%s2648 + $0x9a] sm:$0xff]
      %v3443 = vld [vmem:[%s2648 + $0xaa] sm:$0xff]
      %v3444 = vld [vmem:[%s2648 + $0xb2] sm:$0xff]
      %v3445 = vld [vmem:[%s2648 + $0xc2] sm:$0xff]
      %v3446 = vld [vmem:[%s2648 + $0xca] sm:$0xff]
      %v3447 = vld [vmem:[%s2648 + $0xda] sm:$0xff]
      %v3448 = vld [vmem:[%s2648 + $0xe2] sm:$0xff]
      %v3449 = vld [vmem:[%s2648 + $0xf2] sm:$0xff]
      %v3450 = vld [vmem:[%s2648 + $0xfa] sm:$0xff]
      %v3451 = vld [vmem:[%s2648 + $0x10a] sm:$0xff]
      %v3452 = vld [vmem:[%s2648 + $0x112] sm:$0xff]
      %v3453 = vld [vmem:[%s2648 + $0x122] sm:$0xff]
      %v3454 = vld [vmem:[%s2648 + $0x12a] sm:$0xff]
      %v3455 = vld [vmem:[%s2648 + $0x13a] sm:$0xff]
      %v3456 = vld [vmem:[%s2648 + $0x142] sm:$0xff]
      %v3457 = vld [vmem:[%s2648 + $0x152] sm:$0xff]
      %v3458 = vld [vmem:[%s2648 + $0x15a] sm:$0xff]
      %v3459 = vld [vmem:[%s2648 + $0x16a] sm:$0xff]
      %v3460 = vld [vmem:[%s2648 + $0x172] sm:$0xff]
      %s3461 = scalar_lea.vmem %s1, 32
      %v3462 = vld [vmem:[%s3461] sm:$0xf]
      %v3464 = vsel %vm225, %v3429, 0
      %v3467 = vsel %vm225, %v3430, 0
      %v3470 = vsel %vm225, %v3431, 0
      %v3473 = vsel %vm225, %v3432, 0
      %v3476 = vsel %vm225, %v3433, 0
      %v3479 = vsel %vm225, %v3434, 0
      %v3482 = vsel %vm225, %v3435, 0
      %v3485 = vsel %vm225, %v3436, 0
      %v3488 = vsel %vm225, %v3437, 0
      %v3491 = vsel %vm225, %v3438, 0
      %v3494 = vsel %vm225, %v3439, 0
      %v3497 = vsel %vm225, %v3440, 0
      %v3500 = vsel %vm225, %v3441, 0
      %v3503 = vsel %vm225, %v3442, 0
      %v3506 = vsel %vm225, %v3443, 0
      %v3509 = vsel %vm225, %v3444, 0
      %v3512 = vsel %vm225, %v3445, 0
      %v3515 = vsel %vm225, %v3446, 0
      %v3518 = vsel %vm225, %v3447, 0
      %v3521 = vsel %vm225, %v3448, 0
      %v3524 = vsel %vm225, %v3449, 0
      %v3527 = vsel %vm225, %v3450, 0
      %v3530 = vsel %vm225, %v3451, 0
      %v3533 = vsel %vm225, %v3452, 0
      %v3536 = vsel %vm225, %v3453, 0
      %v3539 = vsel %vm225, %v3454, 0
      %v3542 = vsel %vm225, %v3455, 0
      %v3545 = vsel %vm225, %v3456, 0
      %v3548 = vsel %vm225, %v3457, 0
      %v3551 = vsel %vm225, %v3458, 0
      %v3554 = vsel %vm225, %v3459, 0
      %v3557 = vsel %vm225, %v3460, 0
      %v3560 = vsel %vm535, %v3462, 0
      %3562 = vmatprep.subr.mxu0 0.0
      %3563 = vmatpush1.msra.mxu0 0.0
      %3564 = vmatprep.subr.mxu0 0.0
      %3565 = vmatpush1.msra.mxu0 0.0
      %3566 = vmatprep.subr.mxu0 0.0
      %3567 = vmatpush1.msra.mxu0 0.0
      %3568 = vmatprep.subr.mxu0 0.0
      %3569 = vmatpush1.msra.mxu0 0.0
      %3570 = vmatprep.subr.mxu0 0.0
      %3571 = vmatpush1.msra.mxu0 0.0
      %3572 = vmatprep.subr.mxu0 0.0
      %3573 = vmatpush1.msra.mxu0 0.0
      %3574 = vmatprep.subr.mxu0 0.0
      %3575 = vmatpush1.msra.mxu0 0.0
      %3576 = vmatprep.subr.mxu0 0.0
      %3577 = vmatpush1.msra.mxu0 0.0
      %3578 = vmatprep.subr.mxu0 0.0
      %3579 = vmatpush1.msra.mxu0 0.0
      %3580 = vmatprep.subr.mxu0 0.0
      %3581 = vmatpush1.msra.mxu0 0.0
      %3582 = vmatprep.subr.mxu0 0.0
      %3583 = vmatpush1.msra.mxu0 0.0
      %3584 = vmatprep.subr.mxu0 0.0
      %3585 = vmatpush1.msra.mxu0 0.0
      %3586 = vmatprep.subr.mxu0 0.0
      %3587 = vmatpush1.msra.mxu0 0.0
      %3588 = vmatprep.subr.mxu0 0.0
      %3589 = vmatpush1.msra.mxu0 0.0
      %3590 = vmatprep.subr.mxu0 0.0
      %3591 = vmatpush1.msra.mxu0 0.0
      %3592 = vmatprep.subr.mxu0 0.0
      %3593 = vmatpush1.msra.mxu0 %v3560
      %3594 = vmatprep.subr.mxu0 0.0
      %3595 = vmatpush2.msra.mxu0 0.0
      %3596 = vmatprep.subr.mxu0 0.0
      %3597 = vmatpush2.msra.mxu0 0.0
      %3598 = vmatprep.subr.mxu0 0.0
      %3599 = vmatpush2.msra.mxu0 0.0
      %3600 = vmatprep.subr.mxu0 0.0
      %3601 = vmatpush2.msra.mxu0 0.0
      %3602 = vmatprep.subr.mxu0 0.0
      %3603 = vmatpush2.msra.mxu0 0.0
      %3604 = vmatprep.subr.mxu0 0.0
      %3605 = vmatpush2.msra.mxu0 0.0
      %3606 = vmatprep.subr.mxu0 0.0
      %3607 = vmatpush2.msra.mxu0 0.0
      %3608 = vmatprep.subr.mxu0 0.0
      %3609 = vmatpush2.msra.mxu0 0.0
      %3610 = vmatprep.subr.mxu0 0.0
      %3611 = vmatpush2.msra.mxu0 0.0
      %3612 = vmatprep.subr.mxu0 0.0
      %3613 = vmatpush2.msra.mxu0 0.0
      %3614 = vmatprep.subr.mxu0 0.0
      %3615 = vmatpush2.msra.mxu0 0.0
      %3616 = vmatprep.subr.mxu0 0.0
      %3617 = vmatpush2.msra.mxu0 0.0
      %3618 = vmatprep.subr.mxu0 0.0
      %3619 = vmatpush2.msra.mxu0 0.0
      %3620 = vmatprep.subr.mxu0 0.0
      %3621 = vmatpush2.msra.mxu0 0.0
      %3622 = vmatprep.subr.mxu0 0.0
      %3623 = vmatpush2.msra.mxu0 0.0
      %3624 = vmatprep.subr.mxu0 0.0
      %3625 = vmatpush2.msra.mxu0 0.0
      %3626 = vmatprep.mubr.f32.mxu0 0.0
      %3627 = vmatmul.mubr.f32.gmra.mxu0 %v3464
      %v3628 = vpop.f32.mrf.mxu0
      %v3629 = vadd.f32 0.0, %v3628
      %v3630 = vpop.f32.mrf.mxu0
      %3631 = vmatprep.mubr.f32.mxu0 0.0
      %3632 = vmatmul.mubr.f32.gmra.mxu0 %v3467
      %v3633 = vpop.f32.mrf.mxu0
      %v3634 = vadd.f32 0.0, %v3633
      %v3635 = vpop.f32.mrf.mxu0
      %3636 = vmatprep.mubr.f32.mxu0 0.0
      %3637 = vmatmul.mubr.f32.gmra.mxu0 %v3470
      %v3638 = vpop.f32.mrf.mxu0
      %v3639 = vadd.f32 0.0, %v3638
      %v3640 = vpop.f32.mrf.mxu0
      %3641 = vmatprep.mubr.f32.mxu0 0.0
      %3642 = vmatmul.mubr.f32.gmra.mxu0 %v3473
      %v3643 = vpop.f32.mrf.mxu0
      %v3644 = vadd.f32 0.0, %v3643
      %v3645 = vpop.f32.mrf.mxu0
      %3646 = vmatprep.mubr.f32.mxu0 0.0
      %3647 = vmatmul.mubr.f32.gmra.mxu0 %v3476
      %v3648 = vpop.f32.mrf.mxu0
      %v3649 = vadd.f32 0.0, %v3648
      %v3650 = vpop.f32.mrf.mxu0
      %3651 = vmatprep.mubr.f32.mxu0 0.0
      %3652 = vmatmul.mubr.f32.gmra.mxu0 %v3479
      %v3653 = vpop.f32.mrf.mxu0
      %v3654 = vadd.f32 0.0, %v3653
      %v3655 = vpop.f32.mrf.mxu0
      %3656 = vmatprep.mubr.f32.mxu0 0.0
      %3657 = vmatmul.mubr.f32.gmra.mxu0 %v3482
      %v3658 = vpop.f32.mrf.mxu0
      %v3659 = vadd.f32 0.0, %v3658
      %v3660 = vpop.f32.mrf.mxu0
      %3661 = vmatprep.mubr.f32.mxu0 0.0
      %3662 = vmatmul.mubr.f32.gmra.mxu0 %v3485
      %v3663 = vpop.f32.mrf.mxu0
      %v3664 = vadd.f32 0.0, %v3663
      %v3665 = vpop.f32.mrf.mxu0
      %3666 = vmatprep.mubr.f32.mxu0 0.0
      %3667 = vmatmul.mubr.f32.gmra.mxu0 %v3488
      %v3668 = vpop.f32.mrf.mxu0
      %v3669 = vadd.f32 0.0, %v3668
      %v3670 = vpop.f32.mrf.mxu0
      %3671 = vmatprep.mubr.f32.mxu0 0.0
      %3672 = vmatmul.mubr.f32.gmra.mxu0 %v3491
      %v3673 = vpop.f32.mrf.mxu0
      %v3674 = vadd.f32 0.0, %v3673
      %v3675 = vpop.f32.mrf.mxu0
      %3676 = vmatprep.mubr.f32.mxu0 0.0
      %3677 = vmatmul.mubr.f32.gmra.mxu0 %v3494
      %v3678 = vpop.f32.mrf.mxu0
      %v3679 = vadd.f32 0.0, %v3678
      %v3680 = vpop.f32.mrf.mxu0
      %3681 = vmatprep.mubr.f32.mxu0 0.0
      %3682 = vmatmul.mubr.f32.gmra.mxu0 %v3497
      %v3683 = vpop.f32.mrf.mxu0
      %v3684 = vadd.f32 0.0, %v3683
      %v3685 = vpop.f32.mrf.mxu0
      %3686 = vmatprep.mubr.f32.mxu0 0.0
      %3687 = vmatmul.mubr.f32.gmra.mxu0 %v3500
      %v3688 = vpop.f32.mrf.mxu0
      %v3689 = vadd.f32 0.0, %v3688
      %v3690 = vpop.f32.mrf.mxu0
      %3691 = vmatprep.mubr.f32.mxu0 0.0
      %3692 = vmatmul.mubr.f32.gmra.mxu0 %v3503
      %v3693 = vpop.f32.mrf.mxu0
      %v3694 = vadd.f32 0.0, %v3693
      %v3695 = vpop.f32.mrf.mxu0
      %3696 = vmatprep.mubr.f32.mxu0 0.0
      %3697 = vmatmul.mubr.f32.gmra.mxu0 %v3506
      %v3698 = vpop.f32.mrf.mxu0
      %v3699 = vadd.f32 0.0, %v3698
      %v3700 = vpop.f32.mrf.mxu0
      %3701 = vmatprep.mubr.f32.mxu0 0.0
      %3702 = vmatmul.mubr.f32.gmra.mxu0 %v3509
      %v3703 = vpop.f32.mrf.mxu0
      %v3704 = vadd.f32 0.0, %v3703
      %v3705 = vpop.f32.mrf.mxu0
      %3706 = vmatprep.mubr.f32.mxu0 0.0
      %3707 = vmatmul.mubr.f32.gmra.mxu0 %v3512
      %v3708 = vpop.f32.mrf.mxu0
      %v3709 = vadd.f32 0.0, %v3708
      %v3710 = vpop.f32.mrf.mxu0
      %3711 = vmatprep.mubr.f32.mxu0 0.0
      %3712 = vmatmul.mubr.f32.gmra.mxu0 %v3515
      %v3713 = vpop.f32.mrf.mxu0
      %v3714 = vadd.f32 0.0, %v3713
      %v3715 = vpop.f32.mrf.mxu0
      %3716 = vmatprep.mubr.f32.mxu0 0.0
      %3717 = vmatmul.mubr.f32.gmra.mxu0 %v3518
      %v3718 = vpop.f32.mrf.mxu0
      %v3719 = vadd.f32 0.0, %v3718
      %v3720 = vpop.f32.mrf.mxu0
      %3721 = vmatprep.mubr.f32.mxu0 0.0
      %3722 = vmatmul.mubr.f32.gmra.mxu0 %v3521
      %v3723 = vpop.f32.mrf.mxu0
      %v3724 = vadd.f32 0.0, %v3723
      %v3725 = vpop.f32.mrf.mxu0
      %3726 = vmatprep.mubr.f32.mxu0 0.0
      %3727 = vmatmul.mubr.f32.gmra.mxu0 %v3524
      %v3728 = vpop.f32.mrf.mxu0
      %v3729 = vadd.f32 0.0, %v3728
      %v3730 = vpop.f32.mrf.mxu0
      %3731 = vmatprep.mubr.f32.mxu0 0.0
      %3732 = vmatmul.mubr.f32.gmra.mxu0 %v3527
      %v3733 = vpop.f32.mrf.mxu0
      %v3734 = vadd.f32 0.0, %v3733
      %v3735 = vpop.f32.mrf.mxu0
      %3736 = vmatprep.mubr.f32.mxu0 0.0
      %3737 = vmatmul.mubr.f32.gmra.mxu0 %v3530
      %v3738 = vpop.f32.mrf.mxu0
      %v3739 = vadd.f32 0.0, %v3738
      %v3740 = vpop.f32.mrf.mxu0
      %3741 = vmatprep.mubr.f32.mxu0 0.0
      %3742 = vmatmul.mubr.f32.gmra.mxu0 %v3533
      %v3743 = vpop.f32.mrf.mxu0
      %v3744 = vadd.f32 0.0, %v3743
      %v3745 = vpop.f32.mrf.mxu0
      %3746 = vmatprep.mubr.f32.mxu0 0.0
      %3747 = vmatmul.mubr.f32.gmra.mxu0 %v3536
      %v3748 = vpop.f32.mrf.mxu0
      %v3749 = vadd.f32 0.0, %v3748
      %v3750 = vpop.f32.mrf.mxu0
      %3751 = vmatprep.mubr.f32.mxu0 0.0
      %3752 = vmatmul.mubr.f32.gmra.mxu0 %v3539
      %v3753 = vpop.f32.mrf.mxu0
      %v3754 = vadd.f32 0.0, %v3753
      %v3755 = vpop.f32.mrf.mxu0
      %3756 = vmatprep.mubr.f32.mxu0 0.0
      %3757 = vmatmul.mubr.f32.gmra.mxu0 %v3542
      %v3758 = vpop.f32.mrf.mxu0
      %v3759 = vadd.f32 0.0, %v3758
      %v3760 = vpop.f32.mrf.mxu0
      %3761 = vmatprep.mubr.f32.mxu0 0.0
      %3762 = vmatmul.mubr.f32.gmra.mxu0 %v3545
      %v3763 = vpop.f32.mrf.mxu0
      %v3764 = vadd.f32 0.0, %v3763
      %v3765 = vpop.f32.mrf.mxu0
      %3766 = vmatprep.mubr.f32.mxu0 0.0
      %3767 = vmatmul.mubr.f32.gmra.mxu0 %v3548
      %v3768 = vpop.f32.mrf.mxu0
      %v3769 = vadd.f32 0.0, %v3768
      %v3770 = vpop.f32.mrf.mxu0
      %3771 = vmatprep.mubr.f32.mxu0 0.0
      %3772 = vmatmul.mubr.f32.gmra.mxu0 %v3551
      %v3773 = vpop.f32.mrf.mxu0
      %v3774 = vadd.f32 0.0, %v3773
      %v3775 = vpop.f32.mrf.mxu0
      %3776 = vmatprep.mubr.f32.mxu0 0.0
      %3777 = vmatmul.mubr.f32.gmra.mxu0 %v3554
      %v3778 = vpop.f32.mrf.mxu0
      %v3779 = vadd.f32 0.0, %v3778
      %v3780 = vpop.f32.mrf.mxu0
      %3781 = vmatprep.mubr.f32.mxu0 0.0
      %3782 = vmatmul.mubr.f32.gmra.mxu0 %v3557
      %v3783 = vpop.f32.mrf.mxu0
      %v3784 = vadd.f32 0.0, %v3783
      %v3785 = vpop.f32.mrf.mxu0
      %3786 = vdwg.mxu0
      %v3787 = vadd.f32 %v3397, %v3629
      %v3788 = vadd.f32 %v3398, %v3634
      %v3789 = vadd.f32 %v3399, %v3639
      %v3790 = vadd.f32 %v3400, %v3644
      %v3791 = vadd.f32 %v3401, %v3649
      %v3792 = vadd.f32 %v3402, %v3654
      %v3793 = vadd.f32 %v3403, %v3659
      %v3794 = vadd.f32 %v3404, %v3664
      %v3795 = vadd.f32 %v3405, %v3669
      %v3796 = vadd.f32 %v3406, %v3674
      %v3797 = vadd.f32 %v3407, %v3679
      %v3798 = vadd.f32 %v3408, %v3684
      %v3799 = vadd.f32 %v3409, %v3689
      %v3800 = vadd.f32 %v3410, %v3694
      %v3801 = vadd.f32 %v3411, %v3699
      %v3802 = vadd.f32 %v3412, %v3704
      %v3803 = vadd.f32 %v3413, %v3709
      %v3804 = vadd.f32 %v3414, %v3714
      %v3805 = vadd.f32 %v3415, %v3719
      %v3806 = vadd.f32 %v3416, %v3724
      %v3807 = vadd.f32 %v3417, %v3729
      %v3808 = vadd.f32 %v3418, %v3734
      %v3809 = vadd.f32 %v3419, %v3739
      %v3810 = vadd.f32 %v3420, %v3744
      %v3811 = vadd.f32 %v3421, %v3749
      %v3812 = vadd.f32 %v3422, %v3754
      %v3813 = vadd.f32 %v3423, %v3759
      %v3814 = vadd.f32 %v3424, %v3764
      %v3815 = vadd.f32 %v3425, %v3769
      %v3816 = vadd.f32 %v3426, %v3774
      %v3817 = vadd.f32 %v3427, %v3779
      %v3818 = vadd.f32 %v3428, %v3784
      %v3819 = vld [vmem:[%s2] sm:$0x1]
      %v3821 = vlaneseq
      %v3822 = vshrl.u32 %v3821, 7
      %v3823 = vsub.s32 0, %v3822
      %v3824 = vrot.slane %v3819, %v3823
      %v3826 = vadd.f32 %v3787, %v3824
      %v3827 = vadd.f32 %v3788, %v3824
      %v3828 = vadd.f32 %v3789, %v3824
      %v3829 = vadd.f32 %v3790, %v3824
      %v3830 = vadd.f32 %v3791, %v3824
      %v3831 = vadd.f32 %v3792, %v3824
      %v3832 = vadd.f32 %v3793, %v3824
      %v3833 = vadd.f32 %v3794, %v3824
      %v3834 = vadd.f32 %v3795, %v3824
      %v3835 = vadd.f32 %v3796, %v3824
      %v3836 = vadd.f32 %v3797, %v3824
      %v3837 = vadd.f32 %v3798, %v3824
      %v3838 = vadd.f32 %v3799, %v3824
      %v3839 = vadd.f32 %v3800, %v3824
      %v3840 = vadd.f32 %v3801, %v3824
      %v3841 = vadd.f32 %v3802, %v3824
      %v3842 = vadd.f32 %v3803, %v3824
      %v3843 = vadd.f32 %v3804, %v3824
      %v3844 = vadd.f32 %v3805, %v3824
      %v3845 = vadd.f32 %v3806, %v3824
      %v3846 = vadd.f32 %v3807, %v3824
      %v3847 = vadd.f32 %v3808, %v3824
      %v3848 = vadd.f32 %v3809, %v3824
      %v3849 = vadd.f32 %v3810, %v3824
      %v3850 = vadd.f32 %v3811, %v3824
      %v3851 = vadd.f32 %v3812, %v3824
      %v3852 = vadd.f32 %v3813, %v3824
      %v3853 = vadd.f32 %v3814, %v3824
      %v3854 = vadd.f32 %v3815, %v3824
      %v3855 = vadd.f32 %v3816, %v3824
      %v3856 = vadd.f32 %v3817, %v3824
      %v3857 = vadd.f32 %v3818, %v3824
      %v3858 = vsel %vm225, %v3826, 0.0
      %v3859 = vsel %vm225, %v3827, 0.0
      %v3860 = vadd.f32 %v3858, %v3859
      %v3861 = vsel %vm225, %v3828, 0.0
      %v3862 = vadd.f32 %v3860, %v3861
      %v3863 = vsel %vm225, %v3829, 0.0
      %v3864 = vadd.f32 %v3862, %v3863
      %v3865 = vsel %vm225, %v3830, 0.0
      %v3866 = vadd.f32 %v3864, %v3865
      %v3867 = vsel %vm225, %v3831, 0.0
      %v3868 = vadd.f32 %v3866, %v3867
      %v3869 = vsel %vm225, %v3832, 0.0
      %v3870 = vadd.f32 %v3868, %v3869
      %v3871 = vsel %vm225, %v3833, 0.0
      %v3872 = vadd.f32 %v3870, %v3871
      %v3873 = vsel %vm225, %v3834, 0.0
      %v3874 = vadd.f32 %v3872, %v3873
      %v3875 = vsel %vm225, %v3835, 0.0
      %v3876 = vadd.f32 %v3874, %v3875
      %v3877 = vsel %vm225, %v3836, 0.0
      %v3878 = vadd.f32 %v3876, %v3877
      %v3879 = vsel %vm225, %v3837, 0.0
      %v3880 = vadd.f32 %v3878, %v3879
      %v3881 = vsel %vm225, %v3838, 0.0
      %v3882 = vadd.f32 %v3880, %v3881
      %v3883 = vsel %vm225, %v3839, 0.0
      %v3884 = vadd.f32 %v3882, %v3883
      %v3885 = vsel %vm225, %v3840, 0.0
      %v3886 = vadd.f32 %v3884, %v3885
      %v3887 = vsel %vm225, %v3841, 0.0
      %v3888 = vadd.f32 %v3886, %v3887
      %v3889 = vsel %vm225, %v3842, 0.0
      %v3890 = vadd.f32 %v3888, %v3889
      %v3891 = vsel %vm225, %v3843, 0.0
      %v3892 = vadd.f32 %v3890, %v3891
      %v3893 = vsel %vm225, %v3844, 0.0
      %v3894 = vadd.f32 %v3892, %v3893
      %v3895 = vsel %vm225, %v3845, 0.0
      %v3896 = vadd.f32 %v3894, %v3895
      %v3897 = vsel %vm225, %v3846, 0.0
      %v3898 = vadd.f32 %v3896, %v3897
      %v3899 = vsel %vm225, %v3847, 0.0
      %v3900 = vadd.f32 %v3898, %v3899
      %v3901 = vsel %vm225, %v3848, 0.0
      %v3902 = vadd.f32 %v3900, %v3901
      %v3903 = vsel %vm225, %v3849, 0.0
      %v3904 = vadd.f32 %v3902, %v3903
      %v3905 = vsel %vm225, %v3850, 0.0
      %v3906 = vadd.f32 %v3904, %v3905
      %v3907 = vsel %vm225, %v3851, 0.0
      %v3908 = vadd.f32 %v3906, %v3907
      %v3909 = vsel %vm225, %v3852, 0.0
      %v3910 = vadd.f32 %v3908, %v3909
      %v3911 = vsel %vm225, %v3853, 0.0
      %v3912 = vadd.f32 %v3910, %v3911
      %v3913 = vsel %vm225, %v3854, 0.0
      %v3914 = vadd.f32 %v3912, %v3913
      %v3915 = vsel %vm225, %v3855, 0.0
      %v3916 = vadd.f32 %v3914, %v3915
      %v3917 = vsel %vm225, %v3856, 0.0
      %v3918 = vadd.f32 %v3916, %v3917
      %v3919 = vsel %vm225, %v3857, 0.0
      %v3920 = vadd.f32 %v3918, %v3919
      %v3921 = vrot.slane %v3920, 4
      %v3922 = vadd.f32 %v3920, %v3921
      %v3923 = vrot.slane %v3922, 2
      %v3924 = vadd.f32 %v3922, %v3923
      %v3925 = vrot.slane %v3924, 1
      %v3926 = vadd.f32 %v3924, %v3925
      %v3927 = vmul.f32 %v3926, 0.00390625
      %v3928 = vsub.f32 %v3826, %v3927
      %v3929 = vsub.f32 %v3827, %v3927
      %v3930 = vsub.f32 %v3828, %v3927
      %v3931 = vsub.f32 %v3829, %v3927
      %v3932 = vsub.f32 %v3830, %v3927
      %v3933 = vsub.f32 %v3831, %v3927
      %v3934 = vsub.f32 %v3832, %v3927
      %v3935 = vsub.f32 %v3833, %v3927
      %v3936 = vsub.f32 %v3834, %v3927
      %v3937 = vsub.f32 %v3835, %v3927
      %v3938 = vsub.f32 %v3836, %v3927
      %v3939 = vsub.f32 %v3837, %v3927
      %v3940 = vsub.f32 %v3838, %v3927
      %v3941 = vsub.f32 %v3839, %v3927
      %v3942 = vsub.f32 %v3840, %v3927
      %v3943 = vsub.f32 %v3841, %v3927
      %v3944 = vsub.f32 %v3842, %v3927
      %v3945 = vsub.f32 %v3843, %v3927
      %v3946 = vsub.f32 %v3844, %v3927
      %v3947 = vsub.f32 %v3845, %v3927
      %v3948 = vsub.f32 %v3846, %v3927
      %v3949 = vsub.f32 %v3847, %v3927
      %v3950 = vsub.f32 %v3848, %v3927
      %v3951 = vsub.f32 %v3849, %v3927
      %v3952 = vsub.f32 %v3850, %v3927
      %v3953 = vsub.f32 %v3851, %v3927
      %v3954 = vsub.f32 %v3852, %v3927
      %v3955 = vsub.f32 %v3853, %v3927
      %v3956 = vsub.f32 %v3854, %v3927
      %v3957 = vsub.f32 %v3855, %v3927
      %v3958 = vsub.f32 %v3856, %v3927
      %v3959 = vsub.f32 %v3857, %v3927
      %v3960 = vmul.f32 %v3928, %v3928
      %v3961 = vmul.f32 %v3929, %v3929
      %v3962 = vmul.f32 %v3930, %v3930
      %v3963 = vmul.f32 %v3931, %v3931
      %v3964 = vmul.f32 %v3932, %v3932
      %v3965 = vmul.f32 %v3933, %v3933
      %v3966 = vmul.f32 %v3934, %v3934
      %v3967 = vmul.f32 %v3935, %v3935
      %v3968 = vmul.f32 %v3936, %v3936
      %v3969 = vmul.f32 %v3937, %v3937
      %v3970 = vmul.f32 %v3938, %v3938
      %v3971 = vmul.f32 %v3939, %v3939
      %v3972 = vmul.f32 %v3940, %v3940
      %v3973 = vmul.f32 %v3941, %v3941
      %v3974 = vmul.f32 %v3942, %v3942
      %v3975 = vmul.f32 %v3943, %v3943
      %v3976 = vmul.f32 %v3944, %v3944
      %v3977 = vmul.f32 %v3945, %v3945
      %v3978 = vmul.f32 %v3946, %v3946
      %v3979 = vmul.f32 %v3947, %v3947
      %v3980 = vmul.f32 %v3948, %v3948
      %v3981 = vmul.f32 %v3949, %v3949
      %v3982 = vmul.f32 %v3950, %v3950
      %v3983 = vmul.f32 %v3951, %v3951
      %v3984 = vmul.f32 %v3952, %v3952
      %v3985 = vmul.f32 %v3953, %v3953
      %v3986 = vmul.f32 %v3954, %v3954
      %v3987 = vmul.f32 %v3955, %v3955
      %v3988 = vmul.f32 %v3956, %v3956
      %v3989 = vmul.f32 %v3957, %v3957
      %v3990 = vmul.f32 %v3958, %v3958
      %v3991 = vmul.f32 %v3959, %v3959
      %v3992 = vsel %vm225, %v3960, 0.0
      %v3993 = vsel %vm225, %v3961, 0.0
      %v3994 = vadd.f32 %v3992, %v3993
      %v3995 = vsel %vm225, %v3962, 0.0
      %v3996 = vadd.f32 %v3994, %v3995
      %v3997 = vsel %vm225, %v3963, 0.0
      %v3998 = vadd.f32 %v3996, %v3997
      %v3999 = vsel %vm225, %v3964, 0.0
      %v4000 = vadd.f32 %v3998, %v3999
      %v4001 = vsel %vm225, %v3965, 0.0
      %v4002 = vadd.f32 %v4000, %v4001
      %v4003 = vsel %vm225, %v3966, 0.0
      %v4004 = vadd.f32 %v4002, %v4003
      %v4005 = vsel %vm225, %v3967, 0.0
      %v4006 = vadd.f32 %v4004, %v4005
      %v4007 = vsel %vm225, %v3968, 0.0
      %v4008 = vadd.f32 %v4006, %v4007
      %v4009 = vsel %vm225, %v3969, 0.0
      %v4010 = vadd.f32 %v4008, %v4009
      %v4011 = vsel %vm225, %v3970, 0.0
      %v4012 = vadd.f32 %v4010, %v4011
      %v4013 = vsel %vm225, %v3971, 0.0
      %v4014 = vadd.f32 %v4012, %v4013
      %v4015 = vsel %vm225, %v3972, 0.0
      %v4016 = vadd.f32 %v4014, %v4015
      %v4017 = vsel %vm225, %v3973, 0.0
      %v4018 = vadd.f32 %v4016, %v4017
      %v4019 = vsel %vm225, %v3974, 0.0
      %v4020 = vadd.f32 %v4018, %v4019
      %v4021 = vsel %vm225, %v3975, 0.0
      %v4022 = vadd.f32 %v4020, %v4021
      %v4023 = vsel %vm225, %v3976, 0.0
      %v4024 = vadd.f32 %v4022, %v4023
      %v4025 = vsel %vm225, %v3977, 0.0
      %v4026 = vadd.f32 %v4024, %v4025
      %v4027 = vsel %vm225, %v3978, 0.0
      %v4028 = vadd.f32 %v4026, %v4027
      %v4029 = vsel %vm225, %v3979, 0.0
      %v4030 = vadd.f32 %v4028, %v4029
      %v4031 = vsel %vm225, %v3980, 0.0
      %v4032 = vadd.f32 %v4030, %v4031
      %v4033 = vsel %vm225, %v3981, 0.0
      %v4034 = vadd.f32 %v4032, %v4033
      %v4035 = vsel %vm225, %v3982, 0.0
      %v4036 = vadd.f32 %v4034, %v4035
      %v4037 = vsel %vm225, %v3983, 0.0
      %v4038 = vadd.f32 %v4036, %v4037
      %v4039 = vsel %vm225, %v3984, 0.0
      %v4040 = vadd.f32 %v4038, %v4039
      %v4041 = vsel %vm225, %v3985, 0.0
      %v4042 = vadd.f32 %v4040, %v4041
      %v4043 = vsel %vm225, %v3986, 0.0
      %v4044 = vadd.f32 %v4042, %v4043
      %v4045 = vsel %vm225, %v3987, 0.0
      %v4046 = vadd.f32 %v4044, %v4045
      %v4047 = vsel %vm225, %v3988, 0.0
      %v4048 = vadd.f32 %v4046, %v4047
      %v4049 = vsel %vm225, %v3989, 0.0
      %v4050 = vadd.f32 %v4048, %v4049
      %v4051 = vsel %vm225, %v3990, 0.0
      %v4052 = vadd.f32 %v4050, %v4051
      %v4053 = vsel %vm225, %v3991, 0.0
      %v4054 = vadd.f32 %v4052, %v4053
      %v4055 = vrot.slane %v4054, 4
      %v4056 = vadd.f32 %v4054, %v4055
      %v4057 = vrot.slane %v4056, 2
      %v4058 = vadd.f32 %v4056, %v4057
      %v4059 = vrot.slane %v4058, 1
      %v4060 = vadd.f32 %v4058, %v4059
      %v4061 = vmul.f32 %v4060, 0.00390625
      %v4062 = vadd.f32 %v4061, 1e-05
      %v4063 = vrsqrt.pop %v4062
      %v4064 = vmul.f32 %v3928, %v4063
      %v4065 = vmul.f32 %v3929, %v4063
      %v4066 = vmul.f32 %v3930, %v4063
      %v4067 = vmul.f32 %v3931, %v4063
      %v4068 = vmul.f32 %v3932, %v4063
      %v4069 = vmul.f32 %v3933, %v4063
      %v4070 = vmul.f32 %v3934, %v4063
      %v4071 = vmul.f32 %v3935, %v4063
      %v4072 = vmul.f32 %v3936, %v4063
      %v4073 = vmul.f32 %v3937, %v4063
      %v4074 = vmul.f32 %v3938, %v4063
      %v4075 = vmul.f32 %v3939, %v4063
      %v4076 = vmul.f32 %v3940, %v4063
      %v4077 = vmul.f32 %v3941, %v4063
      %v4078 = vmul.f32 %v3942, %v4063
      %v4079 = vmul.f32 %v3943, %v4063
      %v4080 = vmul.f32 %v3944, %v4063
      %v4081 = vmul.f32 %v3945, %v4063
      %v4082 = vmul.f32 %v3946, %v4063
      %v4083 = vmul.f32 %v3947, %v4063
      %v4084 = vmul.f32 %v3948, %v4063
      %v4085 = vmul.f32 %v3949, %v4063
      %v4086 = vmul.f32 %v3950, %v4063
      %v4087 = vmul.f32 %v3951, %v4063
      %v4088 = vmul.f32 %v3952, %v4063
      %v4089 = vmul.f32 %v3953, %v4063
      %v4090 = vmul.f32 %v3954, %v4063
      %v4091 = vmul.f32 %v3955, %v4063
      %v4092 = vmul.f32 %v3956, %v4063
      %v4093 = vmul.f32 %v3957, %v4063
      %v4094 = vmul.f32 %v3958, %v4063
      %v4095 = vmul.f32 %v3959, %v4063
      %v4096 = vmax.f32 %v4064, 0.0
      %v4097 = vmax.f32 %v4065, 0.0
      %v4098 = vmax.f32 %v4066, 0.0
      %v4099 = vmax.f32 %v4067, 0.0
      %v4100 = vmax.f32 %v4068, 0.0
      %v4101 = vmax.f32 %v4069, 0.0
      %v4102 = vmax.f32 %v4070, 0.0
      %v4103 = vmax.f32 %v4071, 0.0
      %v4104 = vmax.f32 %v4072, 0.0
      %v4105 = vmax.f32 %v4073, 0.0
      %v4106 = vmax.f32 %v4074, 0.0
      %v4107 = vmax.f32 %v4075, 0.0
      %v4108 = vmax.f32 %v4076, 0.0
      %v4109 = vmax.f32 %v4077, 0.0
      %v4110 = vmax.f32 %v4078, 0.0
      %v4111 = vmax.f32 %v4079, 0.0
      %v4112 = vmax.f32 %v4080, 0.0
      %v4113 = vmax.f32 %v4081, 0.0
      %v4114 = vmax.f32 %v4082, 0.0
      %v4115 = vmax.f32 %v4083, 0.0
      %v4116 = vmax.f32 %v4084, 0.0
      %v4117 = vmax.f32 %v4085, 0.0
      %v4118 = vmax.f32 %v4086, 0.0
      %v4119 = vmax.f32 %v4087, 0.0
      %v4120 = vmax.f32 %v4088, 0.0
      %v4121 = vmax.f32 %v4089, 0.0
      %v4122 = vmax.f32 %v4090, 0.0
      %v4123 = vmax.f32 %v4091, 0.0
      %v4124 = vmax.f32 %v4092, 0.0
      %v4125 = vmax.f32 %v4093, 0.0
      %v4126 = vmax.f32 %v4094, 0.0
      %v4127 = vmax.f32 %v4095, 0.0
      %4128 = vst.msk [vmem:[%s339 + $0x1] sm:$0xff] %vm225, %v4096
      %4129 = vst.msk [vmem:[%s339 + $0x9] sm:$0xff] %vm225, %v4097
      %4130 = vst.msk [vmem:[%s339 + $0x19] sm:$0xff] %vm225, %v4098
      %4131 = vst.msk [vmem:[%s339 + $0x21] sm:$0xff] %vm225, %v4099
      %4132 = vst.msk [vmem:[%s339 + $0x31] sm:$0xff] %vm225, %v4100
      %4133 = vst.msk [vmem:[%s339 + $0x39] sm:$0xff] %vm225, %v4101
      %4134 = vst.msk [vmem:[%s339 + $0x49] sm:$0xff] %vm225, %v4102
      %4135 = vst.msk [vmem:[%s339 + $0x51] sm:$0xff] %vm225, %v4103
      %4136 = vst.msk [vmem:[%s339 + $0x61] sm:$0xff] %vm225, %v4104
      %4137 = vst.msk [vmem:[%s339 + $0x69] sm:$0xff] %vm225, %v4105
      %4138 = vst.msk [vmem:[%s339 + $0x79] sm:$0xff] %vm225, %v4106
      %4139 = vst.msk [vmem:[%s339 + $0x81] sm:$0xff] %vm225, %v4107
      %4140 = vst.msk [vmem:[%s339 + $0x91] sm:$0xff] %vm225, %v4108
      %4141 = vst.msk [vmem:[%s339 + $0x99] sm:$0xff] %vm225, %v4109
      %4142 = vst.msk [vmem:[%s339 + $0xa9] sm:$0xff] %vm225, %v4110
      %4143 = vst.msk [vmem:[%s339 + $0xb1] sm:$0xff] %vm225, %v4111
      %4144 = vst.msk [vmem:[%s339 + $0xc1] sm:$0xff] %vm225, %v4112
      %4145 = vst.msk [vmem:[%s339 + $0xc9] sm:$0xff] %vm225, %v4113
      %4146 = vst.msk [vmem:[%s339 + $0xd9] sm:$0xff] %vm225, %v4114
      %4147 = vst.msk [vmem:[%s339 + $0xe1] sm:$0xff] %vm225, %v4115
      %4148 = vst.msk [vmem:[%s339 + $0xf1] sm:$0xff] %vm225, %v4116
      %4149 = vst.msk [vmem:[%s339 + $0xf9] sm:$0xff] %vm225, %v4117
      %4150 = vst.msk [vmem:[%s339 + $0x109] sm:$0xff] %vm225, %v4118
      %4151 = vst.msk [vmem:[%s339 + $0x111] sm:$0xff] %vm225, %v4119
      %4152 = vst.msk [vmem:[%s339 + $0x121] sm:$0xff] %vm225, %v4120
      %4153 = vst.msk [vmem:[%s339 + $0x129] sm:$0xff] %vm225, %v4121
      %4154 = vst.msk [vmem:[%s339 + $0x139] sm:$0xff] %vm225, %v4122
      %4155 = vst.msk [vmem:[%s339 + $0x141] sm:$0xff] %vm225, %v4123
      %4156 = vst.msk [vmem:[%s339 + $0x151] sm:$0xff] %vm225, %v4124
      %4157 = vst.msk [vmem:[%s339 + $0x159] sm:$0xff] %vm225, %v4125
      %4158 = vst.msk [vmem:[%s339 + $0x169] sm:$0xff] %vm225, %v4126
      %4159 = vst.msk [vmem:[%s339 + $0x171] sm:$0xff] %vm225, %v4127
      %v4160 = vld [vmem:[#allocation2] sm:$0xff]
      %v4161 = vld [vmem:[#allocation2 + $0x8] sm:$0xff]
      %v4162 = vld [vmem:[#allocation2 + $0x18] sm:$0xff]
      %v4163 = vld [vmem:[#allocation2 + $0x20] sm:$0xff]
      %v4164 = vld [vmem:[#allocation2 + $0x30] sm:$0xff]
      %v4165 = vld [vmem:[#allocation2 + $0x38] sm:$0xff]
      %v4166 = vld [vmem:[#allocation2 + $0x48] sm:$0xff]
      %v4167 = vld [vmem:[#allocation2 + $0x50] sm:$0xff]
      %v4168 = vld [vmem:[#allocation2 + $0x60] sm:$0xff]
      %v4169 = vld [vmem:[#allocation2 + $0x68] sm:$0xff]
      %v4170 = vld [vmem:[#allocation2 + $0x78] sm:$0xff]
      %v4171 = vld [vmem:[#allocation2 + $0x80] sm:$0xff]
      %v4172 = vld [vmem:[#allocation2 + $0x90] sm:$0xff]
      %v4173 = vld [vmem:[#allocation2 + $0x98] sm:$0xff]
      %v4174 = vld [vmem:[#allocation2 + $0xa8] sm:$0xff]
      %v4175 = vld [vmem:[#allocation2 + $0xb0] sm:$0xff]
      %v4176 = vld [vmem:[#allocation2 + $0xc0] sm:$0xff]
      %v4177 = vld [vmem:[#allocation2 + $0xc8] sm:$0xff]
      %v4178 = vld [vmem:[#allocation2 + $0xd8] sm:$0xff]
      %v4179 = vld [vmem:[#allocation2 + $0xe0] sm:$0xff]
      %v4180 = vld [vmem:[#allocation2 + $0xf0] sm:$0xff]
      %v4181 = vld [vmem:[#allocation2 + $0xf8] sm:$0xff]
      %v4182 = vld [vmem:[#allocation2 + $0x108] sm:$0xff]
      %v4183 = vld [vmem:[#allocation2 + $0x110] sm:$0xff]
      %v4184 = vld [vmem:[#allocation2 + $0x120] sm:$0xff]
      %v4185 = vld [vmem:[#allocation2 + $0x128] sm:$0xff]
      %v4186 = vld [vmem:[#allocation2 + $0x138] sm:$0xff]
      %v4187 = vld [vmem:[#allocation2 + $0x140] sm:$0xff]
      %v4188 = vld [vmem:[#allocation2 + $0x150] sm:$0xff]
      %v4189 = vld [vmem:[#allocation2 + $0x158] sm:$0xff]
      %v4190 = vld [vmem:[#allocation2 + $0x168] sm:$0xff]
      %v4191 = vld [vmem:[#allocation2 + $0x170] sm:$0xff]
      %v4192 = vld [vmem:[%s3] sm:$0xf]
      %v4193 = vld [vmem:[#allocation2 + $0x1] sm:$0xff]
      %v4194 = vld [vmem:[#allocation2 + $0x9] sm:$0xff]
      %v4195 = vld [vmem:[#allocation2 + $0x19] sm:$0xff]
      %v4196 = vld [vmem:[#allocation2 + $0x21] sm:$0xff]
      %v4197 = vld [vmem:[#allocation2 + $0x31] sm:$0xff]
      %v4198 = vld [vmem:[#allocation2 + $0x39] sm:$0xff]
      %v4199 = vld [vmem:[#allocation2 + $0x49] sm:$0xff]
      %v4200 = vld [vmem:[#allocation2 + $0x51] sm:$0xff]
      %v4201 = vld [vmem:[#allocation2 + $0x61] sm:$0xff]
      %v4202 = vld [vmem:[#allocation2 + $0x69] sm:$0xff]
      %v4203 = vld [vmem:[#allocation2 + $0x79] sm:$0xff]
      %v4204 = vld [vmem:[#allocation2 + $0x81] sm:$0xff]
      %v4205 = vld [vmem:[#allocation2 + $0x91] sm:$0xff]
      %v4206 = vld [vmem:[#allocation2 + $0x99] sm:$0xff]
      %v4207 = vld [vmem:[#allocation2 + $0xa9] sm:$0xff]
      %v4208 = vld [vmem:[#allocation2 + $0xb1] sm:$0xff]
      %v4209 = vld [vmem:[#allocation2 + $0xc1] sm:$0xff]
      %v4210 = vld [vmem:[#allocation2 + $0xc9] sm:$0xff]
      %v4211 = vld [vmem:[#allocation2 + $0xd9] sm:$0xff]
      %v4212 = vld [vmem:[#allocation2 + $0xe1] sm:$0xff]
      %v4213 = vld [vmem:[#allocation2 + $0xf1] sm:$0xff]
      %v4214 = vld [vmem:[#allocation2 + $0xf9] sm:$0xff]
      %v4215 = vld [vmem:[#allocation2 + $0x109] sm:$0xff]
      %v4216 = vld [vmem:[#allocation2 + $0x111] sm:$0xff]
      %v4217 = vld [vmem:[#allocation2 + $0x121] sm:$0xff]
      %v4218 = vld [vmem:[#allocation2 + $0x129] sm:$0xff]
      %v4219 = vld [vmem:[#allocation2 + $0x139] sm:$0xff]
      %v4220 = vld [vmem:[#allocation2 + $0x141] sm:$0xff]
      %v4221 = vld [vmem:[#allocation2 + $0x151] sm:$0xff]
      %v4222 = vld [vmem:[#allocation2 + $0x159] sm:$0xff]
      %v4223 = vld [vmem:[#allocation2 + $0x169] sm:$0xff]
      %v4224 = vld [vmem:[#allocation2 + $0x171] sm:$0xff]
      %s4225 = scalar_lea.vmem %s3, 4
      %v4226 = vld [vmem:[%s4225] sm:$0xf]
      %v4228 = vsel %vm225, %v4193, 0
      %v4231 = vsel %vm225, %v4194, 0
      %v4234 = vsel %vm225, %v4195, 0
      %v4237 = vsel %vm225, %v4196, 0
      %v4240 = vsel %vm225, %v4197, 0
      %v4243 = vsel %vm225, %v4198, 0
      %v4246 = vsel %vm225, %v4199, 0
      %v4249 = vsel %vm225, %v4200, 0
      %v4252 = vsel %vm225, %v4201, 0
      %v4255 = vsel %vm225, %v4202, 0
      %v4258 = vsel %vm225, %v4203, 0
      %v4261 = vsel %vm225, %v4204, 0
      %v4264 = vsel %vm225, %v4205, 0
      %v4267 = vsel %vm225, %v4206, 0
      %v4270 = vsel %vm225, %v4207, 0
      %v4273 = vsel %vm225, %v4208, 0
      %v4276 = vsel %vm225, %v4209, 0
      %v4279 = vsel %vm225, %v4210, 0
      %v4282 = vsel %vm225, %v4211, 0
      %v4285 = vsel %vm225, %v4212, 0
      %v4288 = vsel %vm225, %v4213, 0
      %v4291 = vsel %vm225, %v4214, 0
      %v4294 = vsel %vm225, %v4215, 0
      %v4297 = vsel %vm225, %v4216, 0
      %v4300 = vsel %vm225, %v4217, 0
      %v4303 = vsel %vm225, %v4218, 0
      %v4306 = vsel %vm225, %v4219, 0
      %v4309 = vsel %vm225, %v4220, 0
      %v4312 = vsel %vm225, %v4221, 0
      %v4315 = vsel %vm225, %v4222, 0
      %v4318 = vsel %vm225, %v4223, 0
      %v4321 = vsel %vm225, %v4224, 0
      %v4324 = vsel %vm535, %v4226, 0
      %4326 = vmatprep.subr.mxu0 0.0
      %4327 = vmatpush1.msra.mxu0 0.0
      %4328 = vmatprep.subr.mxu0 0.0
      %4329 = vmatpush1.msra.mxu0 0.0
      %4330 = vmatprep.subr.mxu0 0.0
      %4331 = vmatpush1.msra.mxu0 0.0
      %4332 = vmatprep.subr.mxu0 0.0
      %4333 = vmatpush1.msra.mxu0 0.0
      %4334 = vmatprep.subr.mxu0 0.0
      %4335 = vmatpush1.msra.mxu0 0.0
      %4336 = vmatprep.subr.mxu0 0.0
      %4337 = vmatpush1.msra.mxu0 0.0
      %4338 = vmatprep.subr.mxu0 0.0
      %4339 = vmatpush1.msra.mxu0 0.0
      %4340 = vmatprep.subr.mxu0 0.0
      %4341 = vmatpush1.msra.mxu0 0.0
      %4342 = vmatprep.subr.mxu0 0.0
      %4343 = vmatpush1.msra.mxu0 0.0
      %4344 = vmatprep.subr.mxu0 0.0
      %4345 = vmatpush1.msra.mxu0 0.0
      %4346 = vmatprep.subr.mxu0 0.0
      %4347 = vmatpush1.msra.mxu0 0.0
      %4348 = vmatprep.subr.mxu0 0.0
      %4349 = vmatpush1.msra.mxu0 0.0
      %4350 = vmatprep.subr.mxu0 0.0
      %4351 = vmatpush1.msra.mxu0 0.0
      %4352 = vmatprep.subr.mxu0 0.0
      %4353 = vmatpush1.msra.mxu0 0.0
      %4354 = vmatprep.subr.mxu0 0.0
      %4355 = vmatpush1.msra.mxu0 0.0
      %4356 = vmatprep.subr.mxu0 0.0
      %4357 = vmatpush1.msra.mxu0 %v4324
      %4358 = vmatprep.subr.mxu0 0.0
      %4359 = vmatpush2.msra.mxu0 0.0
      %4360 = vmatprep.subr.mxu0 0.0
      %4361 = vmatpush2.msra.mxu0 0.0
      %4362 = vmatprep.subr.mxu0 0.0
      %4363 = vmatpush2.msra.mxu0 0.0
      %4364 = vmatprep.subr.mxu0 0.0
      %4365 = vmatpush2.msra.mxu0 0.0
      %4366 = vmatprep.subr.mxu0 0.0
      %4367 = vmatpush2.msra.mxu0 0.0
      %4368 = vmatprep.subr.mxu0 0.0
      %4369 = vmatpush2.msra.mxu0 0.0
      %4370 = vmatprep.subr.mxu0 0.0
      %4371 = vmatpush2.msra.mxu0 0.0
      %4372 = vmatprep.subr.mxu0 0.0
      %4373 = vmatpush2.msra.mxu0 0.0
      %4374 = vmatprep.subr.mxu0 0.0
      %4375 = vmatpush2.msra.mxu0 0.0
      %4376 = vmatprep.subr.mxu0 0.0
      %4377 = vmatpush2.msra.mxu0 0.0
      %4378 = vmatprep.subr.mxu0 0.0
      %4379 = vmatpush2.msra.mxu0 0.0
      %4380 = vmatprep.subr.mxu0 0.0
      %4381 = vmatpush2.msra.mxu0 0.0
      %4382 = vmatprep.subr.mxu0 0.0
      %4383 = vmatpush2.msra.mxu0 0.0
      %4384 = vmatprep.subr.mxu0 0.0
      %4385 = vmatpush2.msra.mxu0 0.0
      %4386 = vmatprep.subr.mxu0 0.0
      %4387 = vmatpush2.msra.mxu0 0.0
      %4388 = vmatprep.subr.mxu0 0.0
      %4389 = vmatpush2.msra.mxu0 0.0
      %4390 = vmatprep.mubr.f32.mxu0 0.0
      %4391 = vmatmul.mubr.f32.gmra.mxu0 %v4228
      %v4392 = vpop.f32.mrf.mxu0
      %v4393 = vadd.f32 0.0, %v4392
      %v4394 = vpop.f32.mrf.mxu0
      %4395 = vmatprep.mubr.f32.mxu0 0.0
      %4396 = vmatmul.mubr.f32.gmra.mxu0 %v4231
      %v4397 = vpop.f32.mrf.mxu0
      %v4398 = vadd.f32 0.0, %v4397
      %v4399 = vpop.f32.mrf.mxu0
      %4400 = vmatprep.mubr.f32.mxu0 0.0
      %4401 = vmatmul.mubr.f32.gmra.mxu0 %v4234
      %v4402 = vpop.f32.mrf.mxu0
      %v4403 = vadd.f32 0.0, %v4402
      %v4404 = vpop.f32.mrf.mxu0
      %4405 = vmatprep.mubr.f32.mxu0 0.0
      %4406 = vmatmul.mubr.f32.gmra.mxu0 %v4237
      %v4407 = vpop.f32.mrf.mxu0
      %v4408 = vadd.f32 0.0, %v4407
      %v4409 = vpop.f32.mrf.mxu0
      %4410 = vmatprep.mubr.f32.mxu0 0.0
      %4411 = vmatmul.mubr.f32.gmra.mxu0 %v4240
      %v4412 = vpop.f32.mrf.mxu0
      %v4413 = vadd.f32 0.0, %v4412
      %v4414 = vpop.f32.mrf.mxu0
      %4415 = vmatprep.mubr.f32.mxu0 0.0
      %4416 = vmatmul.mubr.f32.gmra.mxu0 %v4243
      %v4417 = vpop.f32.mrf.mxu0
      %v4418 = vadd.f32 0.0, %v4417
      %v4419 = vpop.f32.mrf.mxu0
      %4420 = vmatprep.mubr.f32.mxu0 0.0
      %4421 = vmatmul.mubr.f32.gmra.mxu0 %v4246
      %v4422 = vpop.f32.mrf.mxu0
      %v4423 = vadd.f32 0.0, %v4422
      %v4424 = vpop.f32.mrf.mxu0
      %4425 = vmatprep.mubr.f32.mxu0 0.0
      %4426 = vmatmul.mubr.f32.gmra.mxu0 %v4249
      %v4427 = vpop.f32.mrf.mxu0
      %v4428 = vadd.f32 0.0, %v4427
      %v4429 = vpop.f32.mrf.mxu0
      %4430 = vmatprep.mubr.f32.mxu0 0.0
      %4431 = vmatmul.mubr.f32.gmra.mxu0 %v4252
      %v4432 = vpop.f32.mrf.mxu0
      %v4433 = vadd.f32 0.0, %v4432
      %v4434 = vpop.f32.mrf.mxu0
      %4435 = vmatprep.mubr.f32.mxu0 0.0
      %4436 = vmatmul.mubr.f32.gmra.mxu0 %v4255
      %v4437 = vpop.f32.mrf.mxu0
      %v4438 = vadd.f32 0.0, %v4437
      %v4439 = vpop.f32.mrf.mxu0
      %4440 = vmatprep.mubr.f32.mxu0 0.0
      %4441 = vmatmul.mubr.f32.gmra.mxu0 %v4258
      %v4442 = vpop.f32.mrf.mxu0
      %v4443 = vadd.f32 0.0, %v4442
      %v4444 = vpop.f32.mrf.mxu0
      %4445 = vmatprep.mubr.f32.mxu0 0.0
      %4446 = vmatmul.mubr.f32.gmra.mxu0 %v4261
      %v4447 = vpop.f32.mrf.mxu0
      %v4448 = vadd.f32 0.0, %v4447
      %v4449 = vpop.f32.mrf.mxu0
      %4450 = vmatprep.mubr.f32.mxu0 0.0
      %4451 = vmatmul.mubr.f32.gmra.mxu0 %v4264
      %v4452 = vpop.f32.mrf.mxu0
      %v4453 = vadd.f32 0.0, %v4452
      %v4454 = vpop.f32.mrf.mxu0
      %4455 = vmatprep.mubr.f32.mxu0 0.0
      %4456 = vmatmul.mubr.f32.gmra.mxu0 %v4267
      %v4457 = vpop.f32.mrf.mxu0
      %v4458 = vadd.f32 0.0, %v4457
      %v4459 = vpop.f32.mrf.mxu0
      %4460 = vmatprep.mubr.f32.mxu0 0.0
      %4461 = vmatmul.mubr.f32.gmra.mxu0 %v4270
      %v4462 = vpop.f32.mrf.mxu0
      %v4463 = vadd.f32 0.0, %v4462
      %v4464 = vpop.f32.mrf.mxu0
      %4465 = vmatprep.mubr.f32.mxu0 0.0
      %4466 = vmatmul.mubr.f32.gmra.mxu0 %v4273
      %v4467 = vpop.f32.mrf.mxu0
      %v4468 = vadd.f32 0.0, %v4467
      %v4469 = vpop.f32.mrf.mxu0
      %4470 = vmatprep.mubr.f32.mxu0 0.0
      %4471 = vmatmul.mubr.f32.gmra.mxu0 %v4276
      %v4472 = vpop.f32.mrf.mxu0
      %v4473 = vadd.f32 0.0, %v4472
      %v4474 = vpop.f32.mrf.mxu0
      %4475 = vmatprep.mubr.f32.mxu0 0.0
      %4476 = vmatmul.mubr.f32.gmra.mxu0 %v4279
      %v4477 = vpop.f32.mrf.mxu0
      %v4478 = vadd.f32 0.0, %v4477
      %v4479 = vpop.f32.mrf.mxu0
      %4480 = vmatprep.mubr.f32.mxu0 0.0
      %4481 = vmatmul.mubr.f32.gmra.mxu0 %v4282
      %v4482 = vpop.f32.mrf.mxu0
      %v4483 = vadd.f32 0.0, %v4482
      %v4484 = vpop.f32.mrf.mxu0
      %4485 = vmatprep.mubr.f32.mxu0 0.0
      %4486 = vmatmul.mubr.f32.gmra.mxu0 %v4285
      %v4487 = vpop.f32.mrf.mxu0
      %v4488 = vadd.f32 0.0, %v4487
      %v4489 = vpop.f32.mrf.mxu0
      %4490 = vmatprep.mubr.f32.mxu0 0.0
      %4491 = vmatmul.mubr.f32.gmra.mxu0 %v4288
      %v4492 = vpop.f32.mrf.mxu0
      %v4493 = vadd.f32 0.0, %v4492
      %v4494 = vpop.f32.mrf.mxu0
      %4495 = vmatprep.mubr.f32.mxu0 0.0
      %4496 = vmatmul.mubr.f32.gmra.mxu0 %v4291
      %v4497 = vpop.f32.mrf.mxu0
      %v4498 = vadd.f32 0.0, %v4497
      %v4499 = vpop.f32.mrf.mxu0
      %4500 = vmatprep.mubr.f32.mxu0 0.0
      %4501 = vmatmul.mubr.f32.gmra.mxu0 %v4294
      %v4502 = vpop.f32.mrf.mxu0
      %v4503 = vadd.f32 0.0, %v4502
      %v4504 = vpop.f32.mrf.mxu0
      %4505 = vmatprep.mubr.f32.mxu0 0.0
      %4506 = vmatmul.mubr.f32.gmra.mxu0 %v4297
      %v4507 = vpop.f32.mrf.mxu0
      %v4508 = vadd.f32 0.0, %v4507
      %v4509 = vpop.f32.mrf.mxu0
      %4510 = vmatprep.mubr.f32.mxu0 0.0
      %4511 = vmatmul.mubr.f32.gmra.mxu0 %v4300
      %v4512 = vpop.f32.mrf.mxu0
      %v4513 = vadd.f32 0.0, %v4512
      %v4514 = vpop.f32.mrf.mxu0
      %4515 = vmatprep.mubr.f32.mxu0 0.0
      %4516 = vmatmul.mubr.f32.gmra.mxu0 %v4303
      %v4517 = vpop.f32.mrf.mxu0
      %v4518 = vadd.f32 0.0, %v4517
      %v4519 = vpop.f32.mrf.mxu0
      %4520 = vmatprep.mubr.f32.mxu0 0.0
      %4521 = vmatmul.mubr.f32.gmra.mxu0 %v4306
      %v4522 = vpop.f32.mrf.mxu0
      %v4523 = vadd.f32 0.0, %v4522
      %v4524 = vpop.f32.mrf.mxu0
      %4525 = vmatprep.mubr.f32.mxu0 0.0
      %4526 = vmatmul.mubr.f32.gmra.mxu0 %v4309
      %v4527 = vpop.f32.mrf.mxu0
      %v4528 = vadd.f32 0.0, %v4527
      %v4529 = vpop.f32.mrf.mxu0
      %4530 = vmatprep.mubr.f32.mxu0 0.0
      %4531 = vmatmul.mubr.f32.gmra.mxu0 %v4312
      %v4532 = vpop.f32.mrf.mxu0
      %v4533 = vadd.f32 0.0, %v4532
      %v4534 = vpop.f32.mrf.mxu0
      %4535 = vmatprep.mubr.f32.mxu0 0.0
      %4536 = vmatmul.mubr.f32.gmra.mxu0 %v4315
      %v4537 = vpop.f32.mrf.mxu0
      %v4538 = vadd.f32 0.0, %v4537
      %v4539 = vpop.f32.mrf.mxu0
      %4540 = vmatprep.mubr.f32.mxu0 0.0
      %4541 = vmatmul.mubr.f32.gmra.mxu0 %v4318
      %v4542 = vpop.f32.mrf.mxu0
      %v4543 = vadd.f32 0.0, %v4542
      %v4544 = vpop.f32.mrf.mxu0
      %4545 = vmatprep.mubr.f32.mxu0 0.0
      %4546 = vmatmul.mubr.f32.gmra.mxu0 %v4321
      %v4547 = vpop.f32.mrf.mxu0
      %v4548 = vadd.f32 0.0, %v4547
      %v4549 = vpop.f32.mrf.mxu0
      %4550 = vdwg.mxu0
      %v4552 = vsel %vm225, %v4160, 0
      %v4555 = vsel %vm225, %v4161, 0
      %v4558 = vsel %vm225, %v4162, 0
      %v4561 = vsel %vm225, %v4163, 0
      %v4564 = vsel %vm225, %v4164, 0
      %v4567 = vsel %vm225, %v4165, 0
      %v4570 = vsel %vm225, %v4166, 0
      %v4573 = vsel %vm225, %v4167, 0
      %v4576 = vsel %vm225, %v4168, 0
      %v4579 = vsel %vm225, %v4169, 0
      %v4582 = vsel %vm225, %v4170, 0
      %v4585 = vsel %vm225, %v4171, 0
      %v4588 = vsel %vm225, %v4172, 0
      %v4591 = vsel %vm225, %v4173, 0
      %v4594 = vsel %vm225, %v4174, 0
      %v4597 = vsel %vm225, %v4175, 0
      %v4600 = vsel %vm225, %v4176, 0
      %v4603 = vsel %vm225, %v4177, 0
      %v4606 = vsel %vm225, %v4178, 0
      %v4609 = vsel %vm225, %v4179, 0
      %v4612 = vsel %vm225, %v4180, 0
      %v4615 = vsel %vm225, %v4181, 0
      %v4618 = vsel %vm225, %v4182, 0
      %v4621 = vsel %vm225, %v4183, 0
      %v4624 = vsel %vm225, %v4184, 0
      %v4627 = vsel %vm225, %v4185, 0
      %v4630 = vsel %vm225, %v4186, 0
      %v4633 = vsel %vm225, %v4187, 0
      %v4636 = vsel %vm225, %v4188, 0
      %v4639 = vsel %vm225, %v4189, 0
      %v4642 = vsel %vm225, %v4190, 0
      %v4645 = vsel %vm225, %v4191, 0
      %v4648 = vsel %vm535, %v4192, 0
      %4650 = vmatprep.subr.mxu0 0.0
      %4651 = vmatpush1.msra.mxu0 0.0
      %4652 = vmatprep.subr.mxu0 0.0
      %4653 = vmatpush1.msra.mxu0 0.0
      %4654 = vmatprep.subr.mxu0 0.0
      %4655 = vmatpush1.msra.mxu0 0.0
      %4656 = vmatprep.subr.mxu0 0.0
      %4657 = vmatpush1.msra.mxu0 0.0
      %4658 = vmatprep.subr.mxu0 0.0
      %4659 = vmatpush1.msra.mxu0 0.0
      %4660 = vmatprep.subr.mxu0 0.0
      %4661 = vmatpush1.msra.mxu0 0.0
      %4662 = vmatprep.subr.mxu0 0.0
      %4663 = vmatpush1.msra.mxu0 0.0
      %4664 = vmatprep.subr.mxu0 0.0
      %4665 = vmatpush1.msra.mxu0 0.0
      %4666 = vmatprep.subr.mxu0 0.0
      %4667 = vmatpush1.msra.mxu0 0.0
      %4668 = vmatprep.subr.mxu0 0.0
      %4669 = vmatpush1.msra.mxu0 0.0
      %4670 = vmatprep.subr.mxu0 0.0
      %4671 = vmatpush1.msra.mxu0 0.0
      %4672 = vmatprep.subr.mxu0 0.0
      %4673 = vmatpush1.msra.mxu0 0.0
      %4674 = vmatprep.subr.mxu0 0.0
      %4675 = vmatpush1.msra.mxu0 0.0
      %4676 = vmatprep.subr.mxu0 0.0
      %4677 = vmatpush1.msra.mxu0 0.0
      %4678 = vmatprep.subr.mxu0 0.0
      %4679 = vmatpush1.msra.mxu0 0.0
      %4680 = vmatprep.subr.mxu0 0.0
      %4681 = vmatpush1.msra.mxu0 %v4648
      %4682 = vmatprep.subr.mxu0 0.0
      %4683 = vmatpush2.msra.mxu0 0.0
      %4684 = vmatprep.subr.mxu0 0.0
      %4685 = vmatpush2.msra.mxu0 0.0
      %4686 = vmatprep.subr.mxu0 0.0
      %4687 = vmatpush2.msra.mxu0 0.0
      %4688 = vmatprep.subr.mxu0 0.0
      %4689 = vmatpush2.msra.mxu0 0.0
      %4690 = vmatprep.subr.mxu0 0.0
      %4691 = vmatpush2.msra.mxu0 0.0
      %4692 = vmatprep.subr.mxu0 0.0
      %4693 = vmatpush2.msra.mxu0 0.0
      %4694 = vmatprep.subr.mxu0 0.0
      %4695 = vmatpush2.msra.mxu0 0.0
      %4696 = vmatprep.subr.mxu0 0.0
      %4697 = vmatpush2.msra.mxu0 0.0
      %4698 = vmatprep.subr.mxu0 0.0
      %4699 = vmatpush2.msra.mxu0 0.0
      %4700 = vmatprep.subr.mxu0 0.0
      %4701 = vmatpush2.msra.mxu0 0.0
      %4702 = vmatprep.subr.mxu0 0.0
      %4703 = vmatpush2.msra.mxu0 0.0
      %4704 = vmatprep.subr.mxu0 0.0
      %4705 = vmatpush2.msra.mxu0 0.0
      %4706 = vmatprep.subr.mxu0 0.0
      %4707 = vmatpush2.msra.mxu0 0.0
      %4708 = vmatprep.subr.mxu0 0.0
      %4709 = vmatpush2.msra.mxu0 0.0
      %4710 = vmatprep.subr.mxu0 0.0
      %4711 = vmatpush2.msra.mxu0 0.0
      %4712 = vmatprep.subr.mxu0 0.0
      %4713 = vmatpush2.msra.mxu0 0.0
      %4714 = vmatprep.mubr.f32.mxu0 0.0
      %4715 = vmatmul.mubr.f32.gmra.mxu0 %v4552
      %v4716 = vpop.f32.mrf.mxu0
      %v4717 = vadd.f32 %v4393, %v4716
      %v4718 = vpop.f32.mrf.mxu0
      %4719 = vmatprep.mubr.f32.mxu0 0.0
      %4720 = vmatmul.mubr.f32.gmra.mxu0 %v4555
      %v4721 = vpop.f32.mrf.mxu0
      %v4722 = vadd.f32 %v4398, %v4721
      %v4723 = vpop.f32.mrf.mxu0
      %4724 = vmatprep.mubr.f32.mxu0 0.0
      %4725 = vmatmul.mubr.f32.gmra.mxu0 %v4558
      %v4726 = vpop.f32.mrf.mxu0
      %v4727 = vadd.f32 %v4403, %v4726
      %v4728 = vpop.f32.mrf.mxu0
      %4729 = vmatprep.mubr.f32.mxu0 0.0
      %4730 = vmatmul.mubr.f32.gmra.mxu0 %v4561
      %v4731 = vpop.f32.mrf.mxu0
      %v4732 = vadd.f32 %v4408, %v4731
      %v4733 = vpop.f32.mrf.mxu0
      %4734 = vmatprep.mubr.f32.mxu0 0.0
      %4735 = vmatmul.mubr.f32.gmra.mxu0 %v4564
      %v4736 = vpop.f32.mrf.mxu0
      %v4737 = vadd.f32 %v4413, %v4736
      %v4738 = vpop.f32.mrf.mxu0
      %4739 = vmatprep.mubr.f32.mxu0 0.0
      %4740 = vmatmul.mubr.f32.gmra.mxu0 %v4567
      %v4741 = vpop.f32.mrf.mxu0
      %v4742 = vadd.f32 %v4418, %v4741
      %v4743 = vpop.f32.mrf.mxu0
      %4744 = vmatprep.mubr.f32.mxu0 0.0
      %4745 = vmatmul.mubr.f32.gmra.mxu0 %v4570
      %v4746 = vpop.f32.mrf.mxu0
      %v4747 = vadd.f32 %v4423, %v4746
      %v4748 = vpop.f32.mrf.mxu0
      %4749 = vmatprep.mubr.f32.mxu0 0.0
      %4750 = vmatmul.mubr.f32.gmra.mxu0 %v4573
      %v4751 = vpop.f32.mrf.mxu0
      %v4752 = vadd.f32 %v4428, %v4751
      %v4753 = vpop.f32.mrf.mxu0
      %4754 = vmatprep.mubr.f32.mxu0 0.0
      %4755 = vmatmul.mubr.f32.gmra.mxu0 %v4576
      %v4756 = vpop.f32.mrf.mxu0
      %v4757 = vadd.f32 %v4433, %v4756
      %v4758 = vpop.f32.mrf.mxu0
      %4759 = vmatprep.mubr.f32.mxu0 0.0
      %4760 = vmatmul.mubr.f32.gmra.mxu0 %v4579
      %v4761 = vpop.f32.mrf.mxu0
      %v4762 = vadd.f32 %v4438, %v4761
      %v4763 = vpop.f32.mrf.mxu0
      %4764 = vmatprep.mubr.f32.mxu0 0.0
      %4765 = vmatmul.mubr.f32.gmra.mxu0 %v4582
      %v4766 = vpop.f32.mrf.mxu0
      %v4767 = vadd.f32 %v4443, %v4766
      %v4768 = vpop.f32.mrf.mxu0
      %4769 = vmatprep.mubr.f32.mxu0 0.0
      %4770 = vmatmul.mubr.f32.gmra.mxu0 %v4585
      %v4771 = vpop.f32.mrf.mxu0
      %v4772 = vadd.f32 %v4448, %v4771
      %v4773 = vpop.f32.mrf.mxu0
      %4774 = vmatprep.mubr.f32.mxu0 0.0
      %4775 = vmatmul.mubr.f32.gmra.mxu0 %v4588
      %v4776 = vpop.f32.mrf.mxu0
      %v4777 = vadd.f32 %v4453, %v4776
      %v4778 = vpop.f32.mrf.mxu0
      %4779 = vmatprep.mubr.f32.mxu0 0.0
      %4780 = vmatmul.mubr.f32.gmra.mxu0 %v4591
      %v4781 = vpop.f32.mrf.mxu0
      %v4782 = vadd.f32 %v4458, %v4781
      %v4783 = vpop.f32.mrf.mxu0
      %4784 = vmatprep.mubr.f32.mxu0 0.0
      %4785 = vmatmul.mubr.f32.gmra.mxu0 %v4594
      %v4786 = vpop.f32.mrf.mxu0
      %v4787 = vadd.f32 %v4463, %v4786
      %v4788 = vpop.f32.mrf.mxu0
      %4789 = vmatprep.mubr.f32.mxu0 0.0
      %4790 = vmatmul.mubr.f32.gmra.mxu0 %v4597
      %v4791 = vpop.f32.mrf.mxu0
      %v4792 = vadd.f32 %v4468, %v4791
      %v4793 = vpop.f32.mrf.mxu0
      %4794 = vmatprep.mubr.f32.mxu0 0.0
      %4795 = vmatmul.mubr.f32.gmra.mxu0 %v4600
      %v4796 = vpop.f32.mrf.mxu0
      %v4797 = vadd.f32 %v4473, %v4796
      %v4798 = vpop.f32.mrf.mxu0
      %4799 = vmatprep.mubr.f32.mxu0 0.0
      %4800 = vmatmul.mubr.f32.gmra.mxu0 %v4603
      %v4801 = vpop.f32.mrf.mxu0
      %v4802 = vadd.f32 %v4478, %v4801
      %v4803 = vpop.f32.mrf.mxu0
      %4804 = vmatprep.mubr.f32.mxu0 0.0
      %4805 = vmatmul.mubr.f32.gmra.mxu0 %v4606
      %v4806 = vpop.f32.mrf.mxu0
      %v4807 = vadd.f32 %v4483, %v4806
      %v4808 = vpop.f32.mrf.mxu0
      %4809 = vmatprep.mubr.f32.mxu0 0.0
      %4810 = vmatmul.mubr.f32.gmra.mxu0 %v4609
      %v4811 = vpop.f32.mrf.mxu0
      %v4812 = vadd.f32 %v4488, %v4811
      %v4813 = vpop.f32.mrf.mxu0
      %4814 = vmatprep.mubr.f32.mxu0 0.0
      %4815 = vmatmul.mubr.f32.gmra.mxu0 %v4612
      %v4816 = vpop.f32.mrf.mxu0
      %v4817 = vadd.f32 %v4493, %v4816
      %v4818 = vpop.f32.mrf.mxu0
      %4819 = vmatprep.mubr.f32.mxu0 0.0
      %4820 = vmatmul.mubr.f32.gmra.mxu0 %v4615
      %v4821 = vpop.f32.mrf.mxu0
      %v4822 = vadd.f32 %v4498, %v4821
      %v4823 = vpop.f32.mrf.mxu0
      %4824 = vmatprep.mubr.f32.mxu0 0.0
      %4825 = vmatmul.mubr.f32.gmra.mxu0 %v4618
      %v4826 = vpop.f32.mrf.mxu0
      %v4827 = vadd.f32 %v4503, %v4826
      %v4828 = vpop.f32.mrf.mxu0
      %4829 = vmatprep.mubr.f32.mxu0 0.0
      %4830 = vmatmul.mubr.f32.gmra.mxu0 %v4621
      %v4831 = vpop.f32.mrf.mxu0
      %v4832 = vadd.f32 %v4508, %v4831
      %v4833 = vpop.f32.mrf.mxu0
      %4834 = vmatprep.mubr.f32.mxu0 0.0
      %4835 = vmatmul.mubr.f32.gmra.mxu0 %v4624
      %v4836 = vpop.f32.mrf.mxu0
      %v4837 = vadd.f32 %v4513, %v4836
      %v4838 = vpop.f32.mrf.mxu0
      %4839 = vmatprep.mubr.f32.mxu0 0.0
      %4840 = vmatmul.mubr.f32.gmra.mxu0 %v4627
      %v4841 = vpop.f32.mrf.mxu0
      %v4842 = vadd.f32 %v4518, %v4841
      %v4843 = vpop.f32.mrf.mxu0
      %4844 = vmatprep.mubr.f32.mxu0 0.0
      %4845 = vmatmul.mubr.f32.gmra.mxu0 %v4630
      %v4846 = vpop.f32.mrf.mxu0
      %v4847 = vadd.f32 %v4523, %v4846
      %v4848 = vpop.f32.mrf.mxu0
      %4849 = vmatprep.mubr.f32.mxu0 0.0
      %4850 = vmatmul.mubr.f32.gmra.mxu0 %v4633
      %v4851 = vpop.f32.mrf.mxu0
      %v4852 = vadd.f32 %v4528, %v4851
      %v4853 = vpop.f32.mrf.mxu0
      %4854 = vmatprep.mubr.f32.mxu0 0.0
      %4855 = vmatmul.mubr.f32.gmra.mxu0 %v4636
      %v4856 = vpop.f32.mrf.mxu0
      %v4857 = vadd.f32 %v4533, %v4856
      %v4858 = vpop.f32.mrf.mxu0
      %4859 = vmatprep.mubr.f32.mxu0 0.0
      %4860 = vmatmul.mubr.f32.gmra.mxu0 %v4639
      %v4861 = vpop.f32.mrf.mxu0
      %v4862 = vadd.f32 %v4538, %v4861
      %v4863 = vpop.f32.mrf.mxu0
      %4864 = vmatprep.mubr.f32.mxu0 0.0
      %4865 = vmatmul.mubr.f32.gmra.mxu0 %v4642
      %v4866 = vpop.f32.mrf.mxu0
      %v4867 = vadd.f32 %v4543, %v4866
      %v4868 = vpop.f32.mrf.mxu0
      %4869 = vmatprep.mubr.f32.mxu0 0.0
      %4870 = vmatmul.mubr.f32.gmra.mxu0 %v4645
      %v4871 = vpop.f32.mrf.mxu0
      %v4872 = vadd.f32 %v4548, %v4871
      %v4873 = vpop.f32.mrf.mxu0
      %4874 = vdwg.mxu0
      %v4875 = vld [vmem:[#allocation2 + $0x2] sm:$0xff]
      %v4876 = vld [vmem:[#allocation2 + $0xa] sm:$0xff]
      %v4877 = vld [vmem:[#allocation2 + $0x1a] sm:$0xff]
      %v4878 = vld [vmem:[#allocation2 + $0x22] sm:$0xff]
      %v4879 = vld [vmem:[#allocation2 + $0x32] sm:$0xff]
      %v4880 = vld [vmem:[#allocation2 + $0x3a] sm:$0xff]
      %v4881 = vld [vmem:[#allocation2 + $0x4a] sm:$0xff]
      %v4882 = vld [vmem:[#allocation2 + $0x52] sm:$0xff]
      %v4883 = vld [vmem:[#allocation2 + $0x62] sm:$0xff]
      %v4884 = vld [vmem:[#allocation2 + $0x6a] sm:$0xff]
      %v4885 = vld [vmem:[#allocation2 + $0x7a] sm:$0xff]
      %v4886 = vld [vmem:[#allocation2 + $0x82] sm:$0xff]
      %v4887 = vld [vmem:[#allocation2 + $0x92] sm:$0xff]
      %v4888 = vld [vmem:[#allocation2 + $0x9a] sm:$0xff]
      %v4889 = vld [vmem:[#allocation2 + $0xaa] sm:$0xff]
      %v4890 = vld [vmem:[#allocation2 + $0xb2] sm:$0xff]
      %v4891 = vld [vmem:[#allocation2 + $0xc2] sm:$0xff]
      %v4892 = vld [vmem:[#allocation2 + $0xca] sm:$0xff]
      %v4893 = vld [vmem:[#allocation2 + $0xda] sm:$0xff]
      %v4894 = vld [vmem:[#allocation2 + $0xe2] sm:$0xff]
      %v4895 = vld [vmem:[#allocation2 + $0xf2] sm:$0xff]
      %v4896 = vld [vmem:[#allocation2 + $0xfa] sm:$0xff]
      %v4897 = vld [vmem:[#allocation2 + $0x10a] sm:$0xff]
      %v4898 = vld [vmem:[#allocation2 + $0x112] sm:$0xff]
      %v4899 = vld [vmem:[#allocation2 + $0x122] sm:$0xff]
      %v4900 = vld [vmem:[#allocation2 + $0x12a] sm:$0xff]
      %v4901 = vld [vmem:[#allocation2 + $0x13a] sm:$0xff]
      %v4902 = vld [vmem:[#allocation2 + $0x142] sm:$0xff]
      %v4903 = vld [vmem:[#allocation2 + $0x152] sm:$0xff]
      %v4904 = vld [vmem:[#allocation2 + $0x15a] sm:$0xff]
      %v4905 = vld [vmem:[#allocation2 + $0x16a] sm:$0xff]
      %v4906 = vld [vmem:[#allocation2 + $0x172] sm:$0xff]
      %s4907 = scalar_lea.vmem %s3, 8
      %v4908 = vld [vmem:[%s4907] sm:$0xf]
      %v4910 = vsel %vm225, %v4875, 0
      %v4913 = vsel %vm225, %v4876, 0
      %v4916 = vsel %vm225, %v4877, 0
      %v4919 = vsel %vm225, %v4878, 0
      %v4922 = vsel %vm225, %v4879, 0
      %v4925 = vsel %vm225, %v4880, 0
      %v4928 = vsel %vm225, %v4881, 0
      %v4931 = vsel %vm225, %v4882, 0
      %v4934 = vsel %vm225, %v4883, 0
      %v4937 = vsel %vm225, %v4884, 0
      %v4940 = vsel %vm225, %v4885, 0
      %v4943 = vsel %vm225, %v4886, 0
      %v4946 = vsel %vm225, %v4887, 0
      %v4949 = vsel %vm225, %v4888, 0
      %v4952 = vsel %vm225, %v4889, 0
      %v4955 = vsel %vm225, %v4890, 0
      %v4958 = vsel %vm225, %v4891, 0
      %v4961 = vsel %vm225, %v4892, 0
      %v4964 = vsel %vm225, %v4893, 0
      %v4967 = vsel %vm225, %v4894, 0
      %v4970 = vsel %vm225, %v4895, 0
      %v4973 = vsel %vm225, %v4896, 0
      %v4976 = vsel %vm225, %v4897, 0
      %v4979 = vsel %vm225, %v4898, 0
      %v4982 = vsel %vm225, %v4899, 0
      %v4985 = vsel %vm225, %v4900, 0
      %v4988 = vsel %vm225, %v4901, 0
      %v4991 = vsel %vm225, %v4902, 0
      %v4994 = vsel %vm225, %v4903, 0
      %v4997 = vsel %vm225, %v4904, 0
      %v5000 = vsel %vm225, %v4905, 0
      %v5003 = vsel %vm225, %v4906, 0
      %v5006 = vsel %vm535, %v4908, 0
      %5008 = vmatprep.subr.mxu0 0.0
      %5009 = vmatpush1.msra.mxu0 0.0
      %5010 = vmatprep.subr.mxu0 0.0
      %5011 = vmatpush1.msra.mxu0 0.0
      %5012 = vmatprep.subr.mxu0 0.0
      %5013 = vmatpush1.msra.mxu0 0.0
      %5014 = vmatprep.subr.mxu0 0.0
      %5015 = vmatpush1.msra.mxu0 0.0
      %5016 = vmatprep.subr.mxu0 0.0
      %5017 = vmatpush1.msra.mxu0 0.0
      %5018 = vmatprep.subr.mxu0 0.0
      %5019 = vmatpush1.msra.mxu0 0.0
      %5020 = vmatprep.subr.mxu0 0.0
      %5021 = vmatpush1.msra.mxu0 0.0
      %5022 = vmatprep.subr.mxu0 0.0
      %5023 = vmatpush1.msra.mxu0 0.0
      %5024 = vmatprep.subr.mxu0 0.0
      %5025 = vmatpush1.msra.mxu0 0.0
      %5026 = vmatprep.subr.mxu0 0.0
      %5027 = vmatpush1.msra.mxu0 0.0
      %5028 = vmatprep.subr.mxu0 0.0
      %5029 = vmatpush1.msra.mxu0 0.0
      %5030 = vmatprep.subr.mxu0 0.0
      %5031 = vmatpush1.msra.mxu0 0.0
      %5032 = vmatprep.subr.mxu0 0.0
      %5033 = vmatpush1.msra.mxu0 0.0
      %5034 = vmatprep.subr.mxu0 0.0
      %5035 = vmatpush1.msra.mxu0 0.0
      %5036 = vmatprep.subr.mxu0 0.0
      %5037 = vmatpush1.msra.mxu0 0.0
      %5038 = vmatprep.subr.mxu0 0.0
      %5039 = vmatpush1.msra.mxu0 %v5006
      %5040 = vmatprep.subr.mxu0 0.0
      %5041 = vmatpush2.msra.mxu0 0.0
      %5042 = vmatprep.subr.mxu0 0.0
      %5043 = vmatpush2.msra.mxu0 0.0
      %5044 = vmatprep.subr.mxu0 0.0
      %5045 = vmatpush2.msra.mxu0 0.0
      %5046 = vmatprep.subr.mxu0 0.0
      %5047 = vmatpush2.msra.mxu0 0.0
      %5048 = vmatprep.subr.mxu0 0.0
      %5049 = vmatpush2.msra.mxu0 0.0
      %5050 = vmatprep.subr.mxu0 0.0
      %5051 = vmatpush2.msra.mxu0 0.0
      %5052 = vmatprep.subr.mxu0 0.0
      %5053 = vmatpush2.msra.mxu0 0.0
      %5054 = vmatprep.subr.mxu0 0.0
      %5055 = vmatpush2.msra.mxu0 0.0
      %5056 = vmatprep.subr.mxu0 0.0
      %5057 = vmatpush2.msra.mxu0 0.0
      %5058 = vmatprep.subr.mxu0 0.0
      %5059 = vmatpush2.msra.mxu0 0.0
      %5060 = vmatprep.subr.mxu0 0.0
      %5061 = vmatpush2.msra.mxu0 0.0
      %5062 = vmatprep.subr.mxu0 0.0
      %5063 = vmatpush2.msra.mxu0 0.0
      %5064 = vmatprep.subr.mxu0 0.0
      %5065 = vmatpush2.msra.mxu0 0.0
      %5066 = vmatprep.subr.mxu0 0.0
      %5067 = vmatpush2.msra.mxu0 0.0
      %5068 = vmatprep.subr.mxu0 0.0
      %5069 = vmatpush2.msra.mxu0 0.0
      %5070 = vmatprep.subr.mxu0 0.0
      %5071 = vmatpush2.msra.mxu0 0.0
      %5072 = vmatprep.mubr.f32.mxu0 0.0
      %5073 = vmatmul.mubr.f32.gmra.mxu0 %v4910
      %v5074 = vpop.f32.mrf.mxu0
      %v5075 = vadd.f32 0.0, %v5074
      %v5076 = vpop.f32.mrf.mxu0
      %5077 = vmatprep.mubr.f32.mxu0 0.0
      %5078 = vmatmul.mubr.f32.gmra.mxu0 %v4913
      %v5079 = vpop.f32.mrf.mxu0
      %v5080 = vadd.f32 0.0, %v5079
      %v5081 = vpop.f32.mrf.mxu0
      %5082 = vmatprep.mubr.f32.mxu0 0.0
      %5083 = vmatmul.mubr.f32.gmra.mxu0 %v4916
      %v5084 = vpop.f32.mrf.mxu0
      %v5085 = vadd.f32 0.0, %v5084
      %v5086 = vpop.f32.mrf.mxu0
      %5087 = vmatprep.mubr.f32.mxu0 0.0
      %5088 = vmatmul.mubr.f32.gmra.mxu0 %v4919
      %v5089 = vpop.f32.mrf.mxu0
      %v5090 = vadd.f32 0.0, %v5089
      %v5091 = vpop.f32.mrf.mxu0
      %5092 = vmatprep.mubr.f32.mxu0 0.0
      %5093 = vmatmul.mubr.f32.gmra.mxu0 %v4922
      %v5094 = vpop.f32.mrf.mxu0
      %v5095 = vadd.f32 0.0, %v5094
      %v5096 = vpop.f32.mrf.mxu0
      %5097 = vmatprep.mubr.f32.mxu0 0.0
      %5098 = vmatmul.mubr.f32.gmra.mxu0 %v4925
      %v5099 = vpop.f32.mrf.mxu0
      %v5100 = vadd.f32 0.0, %v5099
      %v5101 = vpop.f32.mrf.mxu0
      %5102 = vmatprep.mubr.f32.mxu0 0.0
      %5103 = vmatmul.mubr.f32.gmra.mxu0 %v4928
      %v5104 = vpop.f32.mrf.mxu0
      %v5105 = vadd.f32 0.0, %v5104
      %v5106 = vpop.f32.mrf.mxu0
      %5107 = vmatprep.mubr.f32.mxu0 0.0
      %5108 = vmatmul.mubr.f32.gmra.mxu0 %v4931
      %v5109 = vpop.f32.mrf.mxu0
      %v5110 = vadd.f32 0.0, %v5109
      %v5111 = vpop.f32.mrf.mxu0
      %5112 = vmatprep.mubr.f32.mxu0 0.0
      %5113 = vmatmul.mubr.f32.gmra.mxu0 %v4934
      %v5114 = vpop.f32.mrf.mxu0
      %v5115 = vadd.f32 0.0, %v5114
      %v5116 = vpop.f32.mrf.mxu0
      %5117 = vmatprep.mubr.f32.mxu0 0.0
      %5118 = vmatmul.mubr.f32.gmra.mxu0 %v4937
      %v5119 = vpop.f32.mrf.mxu0
      %v5120 = vadd.f32 0.0, %v5119
      %v5121 = vpop.f32.mrf.mxu0
      %5122 = vmatprep.mubr.f32.mxu0 0.0
      %5123 = vmatmul.mubr.f32.gmra.mxu0 %v4940
      %v5124 = vpop.f32.mrf.mxu0
      %v5125 = vadd.f32 0.0, %v5124
      %v5126 = vpop.f32.mrf.mxu0
      %5127 = vmatprep.mubr.f32.mxu0 0.0
      %5128 = vmatmul.mubr.f32.gmra.mxu0 %v4943
      %v5129 = vpop.f32.mrf.mxu0
      %v5130 = vadd.f32 0.0, %v5129
      %v5131 = vpop.f32.mrf.mxu0
      %5132 = vmatprep.mubr.f32.mxu0 0.0
      %5133 = vmatmul.mubr.f32.gmra.mxu0 %v4946
      %v5134 = vpop.f32.mrf.mxu0
      %v5135 = vadd.f32 0.0, %v5134
      %v5136 = vpop.f32.mrf.mxu0
      %5137 = vmatprep.mubr.f32.mxu0 0.0
      %5138 = vmatmul.mubr.f32.gmra.mxu0 %v4949
      %v5139 = vpop.f32.mrf.mxu0
      %v5140 = vadd.f32 0.0, %v5139
      %v5141 = vpop.f32.mrf.mxu0
      %5142 = vmatprep.mubr.f32.mxu0 0.0
      %5143 = vmatmul.mubr.f32.gmra.mxu0 %v4952
      %v5144 = vpop.f32.mrf.mxu0
      %v5145 = vadd.f32 0.0, %v5144
      %v5146 = vpop.f32.mrf.mxu0
      %5147 = vmatprep.mubr.f32.mxu0 0.0
      %5148 = vmatmul.mubr.f32.gmra.mxu0 %v4955
      %v5149 = vpop.f32.mrf.mxu0
      %v5150 = vadd.f32 0.0, %v5149
      %v5151 = vpop.f32.mrf.mxu0
      %5152 = vmatprep.mubr.f32.mxu0 0.0
      %5153 = vmatmul.mubr.f32.gmra.mxu0 %v4958
      %v5154 = vpop.f32.mrf.mxu0
      %v5155 = vadd.f32 0.0, %v5154
      %v5156 = vpop.f32.mrf.mxu0
      %5157 = vmatprep.mubr.f32.mxu0 0.0
      %5158 = vmatmul.mubr.f32.gmra.mxu0 %v4961
      %v5159 = vpop.f32.mrf.mxu0
      %v5160 = vadd.f32 0.0, %v5159
      %v5161 = vpop.f32.mrf.mxu0
      %5162 = vmatprep.mubr.f32.mxu0 0.0
      %5163 = vmatmul.mubr.f32.gmra.mxu0 %v4964
      %v5164 = vpop.f32.mrf.mxu0
      %v5165 = vadd.f32 0.0, %v5164
      %v5166 = vpop.f32.mrf.mxu0
      %5167 = vmatprep.mubr.f32.mxu0 0.0
      %5168 = vmatmul.mubr.f32.gmra.mxu0 %v4967
      %v5169 = vpop.f32.mrf.mxu0
      %v5170 = vadd.f32 0.0, %v5169
      %v5171 = vpop.f32.mrf.mxu0
      %5172 = vmatprep.mubr.f32.mxu0 0.0
      %5173 = vmatmul.mubr.f32.gmra.mxu0 %v4970
      %v5174 = vpop.f32.mrf.mxu0
      %v5175 = vadd.f32 0.0, %v5174
      %v5176 = vpop.f32.mrf.mxu0
      %5177 = vmatprep.mubr.f32.mxu0 0.0
      %5178 = vmatmul.mubr.f32.gmra.mxu0 %v4973
      %v5179 = vpop.f32.mrf.mxu0
      %v5180 = vadd.f32 0.0, %v5179
      %v5181 = vpop.f32.mrf.mxu0
      %5182 = vmatprep.mubr.f32.mxu0 0.0
      %5183 = vmatmul.mubr.f32.gmra.mxu0 %v4976
      %v5184 = vpop.f32.mrf.mxu0
      %v5185 = vadd.f32 0.0, %v5184
      %v5186 = vpop.f32.mrf.mxu0
      %5187 = vmatprep.mubr.f32.mxu0 0.0
      %5188 = vmatmul.mubr.f32.gmra.mxu0 %v4979
      %v5189 = vpop.f32.mrf.mxu0
      %v5190 = vadd.f32 0.0, %v5189
      %v5191 = vpop.f32.mrf.mxu0
      %5192 = vmatprep.mubr.f32.mxu0 0.0
      %5193 = vmatmul.mubr.f32.gmra.mxu0 %v4982
      %v5194 = vpop.f32.mrf.mxu0
      %v5195 = vadd.f32 0.0, %v5194
      %v5196 = vpop.f32.mrf.mxu0
      %5197 = vmatprep.mubr.f32.mxu0 0.0
      %5198 = vmatmul.mubr.f32.gmra.mxu0 %v4985
      %v5199 = vpop.f32.mrf.mxu0
      %v5200 = vadd.f32 0.0, %v5199
      %v5201 = vpop.f32.mrf.mxu0
      %5202 = vmatprep.mubr.f32.mxu0 0.0
      %5203 = vmatmul.mubr.f32.gmra.mxu0 %v4988
      %v5204 = vpop.f32.mrf.mxu0
      %v5205 = vadd.f32 0.0, %v5204
      %v5206 = vpop.f32.mrf.mxu0
      %5207 = vmatprep.mubr.f32.mxu0 0.0
      %5208 = vmatmul.mubr.f32.gmra.mxu0 %v4991
      %v5209 = vpop.f32.mrf.mxu0
      %v5210 = vadd.f32 0.0, %v5209
      %v5211 = vpop.f32.mrf.mxu0
      %5212 = vmatprep.mubr.f32.mxu0 0.0
      %5213 = vmatmul.mubr.f32.gmra.mxu0 %v4994
      %v5214 = vpop.f32.mrf.mxu0
      %v5215 = vadd.f32 0.0, %v5214
      %v5216 = vpop.f32.mrf.mxu0
      %5217 = vmatprep.mubr.f32.mxu0 0.0
      %5218 = vmatmul.mubr.f32.gmra.mxu0 %v4997
      %v5219 = vpop.f32.mrf.mxu0
      %v5220 = vadd.f32 0.0, %v5219
      %v5221 = vpop.f32.mrf.mxu0
      %5222 = vmatprep.mubr.f32.mxu0 0.0
      %5223 = vmatmul.mubr.f32.gmra.mxu0 %v5000
      %v5224 = vpop.f32.mrf.mxu0
      %v5225 = vadd.f32 0.0, %v5224
      %v5226 = vpop.f32.mrf.mxu0
      %5227 = vmatprep.mubr.f32.mxu0 0.0
      %5228 = vmatmul.mubr.f32.gmra.mxu0 %v5003
      %v5229 = vpop.f32.mrf.mxu0
      %v5230 = vadd.f32 0.0, %v5229
      %v5231 = vpop.f32.mrf.mxu0
      %5232 = vdwg.mxu0
      %v5233 = vadd.f32 %v4717, %v5075
      %v5234 = vadd.f32 %v4722, %v5080
      %v5235 = vadd.f32 %v4727, %v5085
      %v5236 = vadd.f32 %v4732, %v5090
      %v5237 = vadd.f32 %v4737, %v5095
      %v5238 = vadd.f32 %v4742, %v5100
      %v5239 = vadd.f32 %v4747, %v5105
      %v5240 = vadd.f32 %v4752, %v5110
      %v5241 = vadd.f32 %v4757, %v5115
      %v5242 = vadd.f32 %v4762, %v5120
      %v5243 = vadd.f32 %v4767, %v5125
      %v5244 = vadd.f32 %v4772, %v5130
      %v5245 = vadd.f32 %v4777, %v5135
      %v5246 = vadd.f32 %v4782, %v5140
      %v5247 = vadd.f32 %v4787, %v5145
      %v5248 = vadd.f32 %v4792, %v5150
      %v5249 = vadd.f32 %v4797, %v5155
      %v5250 = vadd.f32 %v4802, %v5160
      %v5251 = vadd.f32 %v4807, %v5165
      %v5252 = vadd.f32 %v4812, %v5170
      %v5253 = vadd.f32 %v4817, %v5175
      %v5254 = vadd.f32 %v4822, %v5180
      %v5255 = vadd.f32 %v4827, %v5185
      %v5256 = vadd.f32 %v4832, %v5190
      %v5257 = vadd.f32 %v4837, %v5195
      %v5258 = vadd.f32 %v4842, %v5200
      %v5259 = vadd.f32 %v4847, %v5205
      %v5260 = vadd.f32 %v4852, %v5210
      %v5261 = vadd.f32 %v4857, %v5215
      %v5262 = vadd.f32 %v4862, %v5220
      %v5263 = vadd.f32 %v4867, %v5225
      %v5264 = vadd.f32 %v4872, %v5230
      %v5265 = vld [vmem:[%s339] sm:$0xff]
      %v5266 = vld [vmem:[%s339 + $0x8] sm:$0xff]
      %v5267 = vld [vmem:[%s339 + $0x18] sm:$0xff]
      %v5268 = vld [vmem:[%s339 + $0x20] sm:$0xff]
      %v5269 = vld [vmem:[%s339 + $0x30] sm:$0xff]
      %v5270 = vld [vmem:[%s339 + $0x38] sm:$0xff]
      %v5271 = vld [vmem:[%s339 + $0x48] sm:$0xff]
      %v5272 = vld [vmem:[%s339 + $0x50] sm:$0xff]
      %v5273 = vld [vmem:[%s339 + $0x60] sm:$0xff]
      %v5274 = vld [vmem:[%s339 + $0x68] sm:$0xff]
      %v5275 = vld [vmem:[%s339 + $0x78] sm:$0xff]
      %v5276 = vld [vmem:[%s339 + $0x80] sm:$0xff]
      %v5277 = vld [vmem:[%s339 + $0x90] sm:$0xff]
      %v5278 = vld [vmem:[%s339 + $0x98] sm:$0xff]
      %v5279 = vld [vmem:[%s339 + $0xa8] sm:$0xff]
      %v5280 = vld [vmem:[%s339 + $0xb0] sm:$0xff]
      %v5281 = vld [vmem:[%s339 + $0xc0] sm:$0xff]
      %v5282 = vld [vmem:[%s339 + $0xc8] sm:$0xff]
      %v5283 = vld [vmem:[%s339 + $0xd8] sm:$0xff]
      %v5284 = vld [vmem:[%s339 + $0xe0] sm:$0xff]
      %v5285 = vld [vmem:[%s339 + $0xf0] sm:$0xff]
      %v5286 = vld [vmem:[%s339 + $0xf8] sm:$0xff]
      %v5287 = vld [vmem:[%s339 + $0x108] sm:$0xff]
      %v5288 = vld [vmem:[%s339 + $0x110] sm:$0xff]
      %v5289 = vld [vmem:[%s339 + $0x120] sm:$0xff]
      %v5290 = vld [vmem:[%s339 + $0x128] sm:$0xff]
      %v5291 = vld [vmem:[%s339 + $0x138] sm:$0xff]
      %v5292 = vld [vmem:[%s339 + $0x140] sm:$0xff]
      %v5293 = vld [vmem:[%s339 + $0x150] sm:$0xff]
      %v5294 = vld [vmem:[%s339 + $0x158] sm:$0xff]
      %v5295 = vld [vmem:[%s339 + $0x168] sm:$0xff]
      %v5296 = vld [vmem:[%s339 + $0x170] sm:$0xff]
      %s5297 = scalar_lea.vmem %s3, 12
      %v5298 = vld [vmem:[%s5297] sm:$0xf]
      %v5300 = vsel %vm225, %v5265, 0
      %v5303 = vsel %vm225, %v5266, 0
      %v5306 = vsel %vm225, %v5267, 0
      %v5309 = vsel %vm225, %v5268, 0
      %v5312 = vsel %vm225, %v5269, 0
      %v5315 = vsel %vm225, %v5270, 0
      %v5318 = vsel %vm225, %v5271, 0
      %v5321 = vsel %vm225, %v5272, 0
      %v5324 = vsel %vm225, %v5273, 0
      %v5327 = vsel %vm225, %v5274, 0
      %v5330 = vsel %vm225, %v5275, 0
      %v5333 = vsel %vm225, %v5276, 0
      %v5336 = vsel %vm225, %v5277, 0
      %v5339 = vsel %vm225, %v5278, 0
      %v5342 = vsel %vm225, %v5279, 0
      %v5345 = vsel %vm225, %v5280, 0
      %v5348 = vsel %vm225, %v5281, 0
      %v5351 = vsel %vm225, %v5282, 0
      %v5354 = vsel %vm225, %v5283, 0
      %v5357 = vsel %vm225, %v5284, 0
      %v5360 = vsel %vm225, %v5285, 0
      %v5363 = vsel %vm225, %v5286, 0
      %v5366 = vsel %vm225, %v5287, 0
      %v5369 = vsel %vm225, %v5288, 0
      %v5372 = vsel %vm225, %v5289, 0
      %v5375 = vsel %vm225, %v5290, 0
      %v5378 = vsel %vm225, %v5291, 0
      %v5381 = vsel %vm225, %v5292, 0
      %v5384 = vsel %vm225, %v5293, 0
      %v5387 = vsel %vm225, %v5294, 0
      %v5390 = vsel %vm225, %v5295, 0
      %v5393 = vsel %vm225, %v5296, 0
      %v5396 = vsel %vm535, %v5298, 0
      %5398 = vmatprep.subr.mxu0 0.0
      %5399 = vmatpush1.msra.mxu0 0.0
      %5400 = vmatprep.subr.mxu0 0.0
      %5401 = vmatpush1.msra.mxu0 0.0
      %5402 = vmatprep.subr.mxu0 0.0
      %5403 = vmatpush1.msra.mxu0 0.0
      %5404 = vmatprep.subr.mxu0 0.0
      %5405 = vmatpush1.msra.mxu0 0.0
      %5406 = vmatprep.subr.mxu0 0.0
      %5407 = vmatpush1.msra.mxu0 0.0
      %5408 = vmatprep.subr.mxu0 0.0
      %5409 = vmatpush1.msra.mxu0 0.0
      %5410 = vmatprep.subr.mxu0 0.0
      %5411 = vmatpush1.msra.mxu0 0.0
      %5412 = vmatprep.subr.mxu0 0.0
      %5413 = vmatpush1.msra.mxu0 0.0
      %5414 = vmatprep.subr.mxu0 0.0
      %5415 = vmatpush1.msra.mxu0 0.0
      %5416 = vmatprep.subr.mxu0 0.0
      %5417 = vmatpush1.msra.mxu0 0.0
      %5418 = vmatprep.subr.mxu0 0.0
      %5419 = vmatpush1.msra.mxu0 0.0
      %5420 = vmatprep.subr.mxu0 0.0
      %5421 = vmatpush1.msra.mxu0 0.0
      %5422 = vmatprep.subr.mxu0 0.0
      %5423 = vmatpush1.msra.mxu0 0.0
      %5424 = vmatprep.subr.mxu0 0.0
      %5425 = vmatpush1.msra.mxu0 0.0
      %5426 = vmatprep.subr.mxu0 0.0
      %5427 = vmatpush1.msra.mxu0 0.0
      %5428 = vmatprep.subr.mxu0 0.0
      %5429 = vmatpush1.msra.mxu0 %v5396
      %5430 = vmatprep.subr.mxu0 0.0
      %5431 = vmatpush2.msra.mxu0 0.0
      %5432 = vmatprep.subr.mxu0 0.0
      %5433 = vmatpush2.msra.mxu0 0.0
      %5434 = vmatprep.subr.mxu0 0.0
      %5435 = vmatpush2.msra.mxu0 0.0
      %5436 = vmatprep.subr.mxu0 0.0
      %5437 = vmatpush2.msra.mxu0 0.0
      %5438 = vmatprep.subr.mxu0 0.0
      %5439 = vmatpush2.msra.mxu0 0.0
      %5440 = vmatprep.subr.mxu0 0.0
      %5441 = vmatpush2.msra.mxu0 0.0
      %5442 = vmatprep.subr.mxu0 0.0
      %5443 = vmatpush2.msra.mxu0 0.0
      %5444 = vmatprep.subr.mxu0 0.0
      %5445 = vmatpush2.msra.mxu0 0.0
      %5446 = vmatprep.subr.mxu0 0.0
      %5447 = vmatpush2.msra.mxu0 0.0
      %5448 = vmatprep.subr.mxu0 0.0
      %5449 = vmatpush2.msra.mxu0 0.0
      %5450 = vmatprep.subr.mxu0 0.0
      %5451 = vmatpush2.msra.mxu0 0.0
      %5452 = vmatprep.subr.mxu0 0.0
      %5453 = vmatpush2.msra.mxu0 0.0
      %5454 = vmatprep.subr.mxu0 0.0
      %5455 = vmatpush2.msra.mxu0 0.0
      %5456 = vmatprep.subr.mxu0 0.0
      %5457 = vmatpush2.msra.mxu0 0.0
      %5458 = vmatprep.subr.mxu0 0.0
      %5459 = vmatpush2.msra.mxu0 0.0
      %5460 = vmatprep.subr.mxu0 0.0
      %5461 = vmatpush2.msra.mxu0 0.0
      %5462 = vmatprep.mubr.f32.mxu0 0.0
      %5463 = vmatmul.mubr.f32.gmra.mxu0 %v5300
      %v5464 = vpop.f32.mrf.mxu0
      %v5465 = vadd.f32 0.0, %v5464
      %v5466 = vpop.f32.mrf.mxu0
      %5467 = vmatprep.mubr.f32.mxu0 0.0
      %5468 = vmatmul.mubr.f32.gmra.mxu0 %v5303
      %v5469 = vpop.f32.mrf.mxu0
      %v5470 = vadd.f32 0.0, %v5469
      %v5471 = vpop.f32.mrf.mxu0
      %5472 = vmatprep.mubr.f32.mxu0 0.0
      %5473 = vmatmul.mubr.f32.gmra.mxu0 %v5306
      %v5474 = vpop.f32.mrf.mxu0
      %v5475 = vadd.f32 0.0, %v5474
      %v5476 = vpop.f32.mrf.mxu0
      %5477 = vmatprep.mubr.f32.mxu0 0.0
      %5478 = vmatmul.mubr.f32.gmra.mxu0 %v5309
      %v5479 = vpop.f32.mrf.mxu0
      %v5480 = vadd.f32 0.0, %v5479
      %v5481 = vpop.f32.mrf.mxu0
      %5482 = vmatprep.mubr.f32.mxu0 0.0
      %5483 = vmatmul.mubr.f32.gmra.mxu0 %v5312
      %v5484 = vpop.f32.mrf.mxu0
      %v5485 = vadd.f32 0.0, %v5484
      %v5486 = vpop.f32.mrf.mxu0
      %5487 = vmatprep.mubr.f32.mxu0 0.0
      %5488 = vmatmul.mubr.f32.gmra.mxu0 %v5315
      %v5489 = vpop.f32.mrf.mxu0
      %v5490 = vadd.f32 0.0, %v5489
      %v5491 = vpop.f32.mrf.mxu0
      %5492 = vmatprep.mubr.f32.mxu0 0.0
      %5493 = vmatmul.mubr.f32.gmra.mxu0 %v5318
      %v5494 = vpop.f32.mrf.mxu0
      %v5495 = vadd.f32 0.0, %v5494
      %v5496 = vpop.f32.mrf.mxu0
      %5497 = vmatprep.mubr.f32.mxu0 0.0
      %5498 = vmatmul.mubr.f32.gmra.mxu0 %v5321
      %v5499 = vpop.f32.mrf.mxu0
      %v5500 = vadd.f32 0.0, %v5499
      %v5501 = vpop.f32.mrf.mxu0
      %5502 = vmatprep.mubr.f32.mxu0 0.0
      %5503 = vmatmul.mubr.f32.gmra.mxu0 %v5324
      %v5504 = vpop.f32.mrf.mxu0
      %v5505 = vadd.f32 0.0, %v5504
      %v5506 = vpop.f32.mrf.mxu0
      %5507 = vmatprep.mubr.f32.mxu0 0.0
      %5508 = vmatmul.mubr.f32.gmra.mxu0 %v5327
      %v5509 = vpop.f32.mrf.mxu0
      %v5510 = vadd.f32 0.0, %v5509
      %v5511 = vpop.f32.mrf.mxu0
      %5512 = vmatprep.mubr.f32.mxu0 0.0
      %5513 = vmatmul.mubr.f32.gmra.mxu0 %v5330
      %v5514 = vpop.f32.mrf.mxu0
      %v5515 = vadd.f32 0.0, %v5514
      %v5516 = vpop.f32.mrf.mxu0
      %5517 = vmatprep.mubr.f32.mxu0 0.0
      %5518 = vmatmul.mubr.f32.gmra.mxu0 %v5333
      %v5519 = vpop.f32.mrf.mxu0
      %v5520 = vadd.f32 0.0, %v5519
      %v5521 = vpop.f32.mrf.mxu0
      %5522 = vmatprep.mubr.f32.mxu0 0.0
      %5523 = vmatmul.mubr.f32.gmra.mxu0 %v5336
      %v5524 = vpop.f32.mrf.mxu0
      %v5525 = vadd.f32 0.0, %v5524
      %v5526 = vpop.f32.mrf.mxu0
      %5527 = vmatprep.mubr.f32.mxu0 0.0
      %5528 = vmatmul.mubr.f32.gmra.mxu0 %v5339
      %v5529 = vpop.f32.mrf.mxu0
      %v5530 = vadd.f32 0.0, %v5529
      %v5531 = vpop.f32.mrf.mxu0
      %5532 = vmatprep.mubr.f32.mxu0 0.0
      %5533 = vmatmul.mubr.f32.gmra.mxu0 %v5342
      %v5534 = vpop.f32.mrf.mxu0
      %v5535 = vadd.f32 0.0, %v5534
      %v5536 = vpop.f32.mrf.mxu0
      %5537 = vmatprep.mubr.f32.mxu0 0.0
      %5538 = vmatmul.mubr.f32.gmra.mxu0 %v5345
      %v5539 = vpop.f32.mrf.mxu0
      %v5540 = vadd.f32 0.0, %v5539
      %v5541 = vpop.f32.mrf.mxu0
      %5542 = vmatprep.mubr.f32.mxu0 0.0
      %5543 = vmatmul.mubr.f32.gmra.mxu0 %v5348
      %v5544 = vpop.f32.mrf.mxu0
      %v5545 = vadd.f32 0.0, %v5544
      %v5546 = vpop.f32.mrf.mxu0
      %5547 = vmatprep.mubr.f32.mxu0 0.0
      %5548 = vmatmul.mubr.f32.gmra.mxu0 %v5351
      %v5549 = vpop.f32.mrf.mxu0
      %v5550 = vadd.f32 0.0, %v5549
      %v5551 = vpop.f32.mrf.mxu0
      %5552 = vmatprep.mubr.f32.mxu0 0.0
      %5553 = vmatmul.mubr.f32.gmra.mxu0 %v5354
      %v5554 = vpop.f32.mrf.mxu0
      %v5555 = vadd.f32 0.0, %v5554
      %v5556 = vpop.f32.mrf.mxu0
      %5557 = vmatprep.mubr.f32.mxu0 0.0
      %5558 = vmatmul.mubr.f32.gmra.mxu0 %v5357
      %v5559 = vpop.f32.mrf.mxu0
      %v5560 = vadd.f32 0.0, %v5559
      %v5561 = vpop.f32.mrf.mxu0
      %5562 = vmatprep.mubr.f32.mxu0 0.0
      %5563 = vmatmul.mubr.f32.gmra.mxu0 %v5360
      %v5564 = vpop.f32.mrf.mxu0
      %v5565 = vadd.f32 0.0, %v5564
      %v5566 = vpop.f32.mrf.mxu0
      %5567 = vmatprep.mubr.f32.mxu0 0.0
      %5568 = vmatmul.mubr.f32.gmra.mxu0 %v5363
      %v5569 = vpop.f32.mrf.mxu0
      %v5570 = vadd.f32 0.0, %v5569
      %v5571 = vpop.f32.mrf.mxu0
      %5572 = vmatprep.mubr.f32.mxu0 0.0
      %5573 = vmatmul.mubr.f32.gmra.mxu0 %v5366
      %v5574 = vpop.f32.mrf.mxu0
      %v5575 = vadd.f32 0.0, %v5574
      %v5576 = vpop.f32.mrf.mxu0
      %5577 = vmatprep.mubr.f32.mxu0 0.0
      %5578 = vmatmul.mubr.f32.gmra.mxu0 %v5369
      %v5579 = vpop.f32.mrf.mxu0
      %v5580 = vadd.f32 0.0, %v5579
      %v5581 = vpop.f32.mrf.mxu0
      %5582 = vmatprep.mubr.f32.mxu0 0.0
      %5583 = vmatmul.mubr.f32.gmra.mxu0 %v5372
      %v5584 = vpop.f32.mrf.mxu0
      %v5585 = vadd.f32 0.0, %v5584
      %v5586 = vpop.f32.mrf.mxu0
      %5587 = vmatprep.mubr.f32.mxu0 0.0
      %5588 = vmatmul.mubr.f32.gmra.mxu0 %v5375
      %v5589 = vpop.f32.mrf.mxu0
      %v5590 = vadd.f32 0.0, %v5589
      %v5591 = vpop.f32.mrf.mxu0
      %5592 = vmatprep.mubr.f32.mxu0 0.0
      %5593 = vmatmul.mubr.f32.gmra.mxu0 %v5378
      %v5594 = vpop.f32.mrf.mxu0
      %v5595 = vadd.f32 0.0, %v5594
      %v5596 = vpop.f32.mrf.mxu0
      %5597 = vmatprep.mubr.f32.mxu0 0.0
      %5598 = vmatmul.mubr.f32.gmra.mxu0 %v5381
      %v5599 = vpop.f32.mrf.mxu0
      %v5600 = vadd.f32 0.0, %v5599
      %v5601 = vpop.f32.mrf.mxu0
      %5602 = vmatprep.mubr.f32.mxu0 0.0
      %5603 = vmatmul.mubr.f32.gmra.mxu0 %v5384
      %v5604 = vpop.f32.mrf.mxu0
      %v5605 = vadd.f32 0.0, %v5604
      %v5606 = vpop.f32.mrf.mxu0
      %5607 = vmatprep.mubr.f32.mxu0 0.0
      %5608 = vmatmul.mubr.f32.gmra.mxu0 %v5387
      %v5609 = vpop.f32.mrf.mxu0
      %v5610 = vadd.f32 0.0, %v5609
      %v5611 = vpop.f32.mrf.mxu0
      %5612 = vmatprep.mubr.f32.mxu0 0.0
      %5613 = vmatmul.mubr.f32.gmra.mxu0 %v5390
      %v5614 = vpop.f32.mrf.mxu0
      %v5615 = vadd.f32 0.0, %v5614
      %v5616 = vpop.f32.mrf.mxu0
      %5617 = vmatprep.mubr.f32.mxu0 0.0
      %5618 = vmatmul.mubr.f32.gmra.mxu0 %v5393
      %v5619 = vpop.f32.mrf.mxu0
      %v5620 = vadd.f32 0.0, %v5619
      %v5621 = vpop.f32.mrf.mxu0
      %5622 = vdwg.mxu0
      %v5623 = vadd.f32 %v5233, %v5465
      %v5624 = vadd.f32 %v5234, %v5470
      %v5625 = vadd.f32 %v5235, %v5475
      %v5626 = vadd.f32 %v5236, %v5480
      %v5627 = vadd.f32 %v5237, %v5485
      %v5628 = vadd.f32 %v5238, %v5490
      %v5629 = vadd.f32 %v5239, %v5495
      %v5630 = vadd.f32 %v5240, %v5500
      %v5631 = vadd.f32 %v5241, %v5505
      %v5632 = vadd.f32 %v5242, %v5510
      %v5633 = vadd.f32 %v5243, %v5515
      %v5634 = vadd.f32 %v5244, %v5520
      %v5635 = vadd.f32 %v5245, %v5525
      %v5636 = vadd.f32 %v5246, %v5530
      %v5637 = vadd.f32 %v5247, %v5535
      %v5638 = vadd.f32 %v5248, %v5540
      %v5639 = vadd.f32 %v5249, %v5545
      %v5640 = vadd.f32 %v5250, %v5550
      %v5641 = vadd.f32 %v5251, %v5555
      %v5642 = vadd.f32 %v5252, %v5560
      %v5643 = vadd.f32 %v5253, %v5565
      %v5644 = vadd.f32 %v5254, %v5570
      %v5645 = vadd.f32 %v5255, %v5575
      %v5646 = vadd.f32 %v5256, %v5580
      %v5647 = vadd.f32 %v5257, %v5585
      %v5648 = vadd.f32 %v5258, %v5590
      %v5649 = vadd.f32 %v5259, %v5595
      %v5650 = vadd.f32 %v5260, %v5600
      %v5651 = vadd.f32 %v5261, %v5605
      %v5652 = vadd.f32 %v5262, %v5610
      %v5653 = vadd.f32 %v5263, %v5615
      %v5654 = vadd.f32 %v5264, %v5620
      %v5655 = vld [vmem:[%s339 + $0x1] sm:$0xff]
      %v5656 = vld [vmem:[%s339 + $0x9] sm:$0xff]
      %v5657 = vld [vmem:[%s339 + $0x19] sm:$0xff]
      %v5658 = vld [vmem:[%s339 + $0x21] sm:$0xff]
      %v5659 = vld [vmem:[%s339 + $0x31] sm:$0xff]
      %v5660 = vld [vmem:[%s339 + $0x39] sm:$0xff]
      %v5661 = vld [vmem:[%s339 + $0x49] sm:$0xff]
      %v5662 = vld [vmem:[%s339 + $0x51] sm:$0xff]
      %v5663 = vld [vmem:[%s339 + $0x61] sm:$0xff]
      %v5664 = vld [vmem:[%s339 + $0x69] sm:$0xff]
      %v5665 = vld [vmem:[%s339 + $0x79] sm:$0xff]
      %v5666 = vld [vmem:[%s339 + $0x81] sm:$0xff]
      %v5667 = vld [vmem:[%s339 + $0x91] sm:$0xff]
      %v5668 = vld [vmem:[%s339 + $0x99] sm:$0xff]
      %v5669 = vld [vmem:[%s339 + $0xa9] sm:$0xff]
      %v5670 = vld [vmem:[%s339 + $0xb1] sm:$0xff]
      %v5671 = vld [vmem:[%s339 + $0xc1] sm:$0xff]
      %v5672 = vld [vmem:[%s339 + $0xc9] sm:$0xff]
      %v5673 = vld [vmem:[%s339 + $0xd9] sm:$0xff]
      %v5674 = vld [vmem:[%s339 + $0xe1] sm:$0xff]
      %v5675 = vld [vmem:[%s339 + $0xf1] sm:$0xff]
      %v5676 = vld [vmem:[%s339 + $0xf9] sm:$0xff]
      %v5677 = vld [vmem:[%s339 + $0x109] sm:$0xff]
      %v5678 = vld [vmem:[%s339 + $0x111] sm:$0xff]
      %v5679 = vld [vmem:[%s339 + $0x121] sm:$0xff]
      %v5680 = vld [vmem:[%s339 + $0x129] sm:$0xff]
      %v5681 = vld [vmem:[%s339 + $0x139] sm:$0xff]
      %v5682 = vld [vmem:[%s339 + $0x141] sm:$0xff]
      %v5683 = vld [vmem:[%s339 + $0x151] sm:$0xff]
      %v5684 = vld [vmem:[%s339 + $0x159] sm:$0xff]
      %v5685 = vld [vmem:[%s339 + $0x169] sm:$0xff]
      %v5686 = vld [vmem:[%s339 + $0x171] sm:$0xff]
      %s5687 = scalar_lea.vmem %s3, 16
      %v5688 = vld [vmem:[%s5687] sm:$0xf]
      %v5690 = vsel %vm225, %v5655, 0
      %v5693 = vsel %vm225, %v5656, 0
      %v5696 = vsel %vm225, %v5657, 0
      %v5699 = vsel %vm225, %v5658, 0
      %v5702 = vsel %vm225, %v5659, 0
      %v5705 = vsel %vm225, %v5660, 0
      %v5708 = vsel %vm225, %v5661, 0
      %v5711 = vsel %vm225, %v5662, 0
      %v5714 = vsel %vm225, %v5663, 0
      %v5717 = vsel %vm225, %v5664, 0
      %v5720 = vsel %vm225, %v5665, 0
      %v5723 = vsel %vm225, %v5666, 0
      %v5726 = vsel %vm225, %v5667, 0
      %v5729 = vsel %vm225, %v5668, 0
      %v5732 = vsel %vm225, %v5669, 0
      %v5735 = vsel %vm225, %v5670, 0
      %v5738 = vsel %vm225, %v5671, 0
      %v5741 = vsel %vm225, %v5672, 0
      %v5744 = vsel %vm225, %v5673, 0
      %v5747 = vsel %vm225, %v5674, 0
      %v5750 = vsel %vm225, %v5675, 0
      %v5753 = vsel %vm225, %v5676, 0
      %v5756 = vsel %vm225, %v5677, 0
      %v5759 = vsel %vm225, %v5678, 0
      %v5762 = vsel %vm225, %v5679, 0
      %v5765 = vsel %vm225, %v5680, 0
      %v5768 = vsel %vm225, %v5681, 0
      %v5771 = vsel %vm225, %v5682, 0
      %v5774 = vsel %vm225, %v5683, 0
      %v5777 = vsel %vm225, %v5684, 0
      %v5780 = vsel %vm225, %v5685, 0
      %v5783 = vsel %vm225, %v5686, 0
      %v5786 = vsel %vm535, %v5688, 0
      %5788 = vmatprep.subr.mxu0 0.0
      %5789 = vmatpush1.msra.mxu0 0.0
      %5790 = vmatprep.subr.mxu0 0.0
      %5791 = vmatpush1.msra.mxu0 0.0
      %5792 = vmatprep.subr.mxu0 0.0
      %5793 = vmatpush1.msra.mxu0 0.0
      %5794 = vmatprep.subr.mxu0 0.0
      %5795 = vmatpush1.msra.mxu0 0.0
      %5796 = vmatprep.subr.mxu0 0.0
      %5797 = vmatpush1.msra.mxu0 0.0
      %5798 = vmatprep.subr.mxu0 0.0
      %5799 = vmatpush1.msra.mxu0 0.0
      %5800 = vmatprep.subr.mxu0 0.0
      %5801 = vmatpush1.msra.mxu0 0.0
      %5802 = vmatprep.subr.mxu0 0.0
      %5803 = vmatpush1.msra.mxu0 0.0
      %5804 = vmatprep.subr.mxu0 0.0
      %5805 = vmatpush1.msra.mxu0 0.0
      %5806 = vmatprep.subr.mxu0 0.0
      %5807 = vmatpush1.msra.mxu0 0.0
      %5808 = vmatprep.subr.mxu0 0.0
      %5809 = vmatpush1.msra.mxu0 0.0
      %5810 = vmatprep.subr.mxu0 0.0
      %5811 = vmatpush1.msra.mxu0 0.0
      %5812 = vmatprep.subr.mxu0 0.0
      %5813 = vmatpush1.msra.mxu0 0.0
      %5814 = vmatprep.subr.mxu0 0.0
      %5815 = vmatpush1.msra.mxu0 0.0
      %5816 = vmatprep.subr.mxu0 0.0
      %5817 = vmatpush1.msra.mxu0 0.0
      %5818 = vmatprep.subr.mxu0 0.0
      %5819 = vmatpush1.msra.mxu0 %v5786
      %5820 = vmatprep.subr.mxu0 0.0
      %5821 = vmatpush2.msra.mxu0 0.0
      %5822 = vmatprep.subr.mxu0 0.0
      %5823 = vmatpush2.msra.mxu0 0.0
      %5824 = vmatprep.subr.mxu0 0.0
      %5825 = vmatpush2.msra.mxu0 0.0
      %5826 = vmatprep.subr.mxu0 0.0
      %5827 = vmatpush2.msra.mxu0 0.0
      %5828 = vmatprep.subr.mxu0 0.0
      %5829 = vmatpush2.msra.mxu0 0.0
      %5830 = vmatprep.subr.mxu0 0.0
      %5831 = vmatpush2.msra.mxu0 0.0
      %5832 = vmatprep.subr.mxu0 0.0
      %5833 = vmatpush2.msra.mxu0 0.0
      %5834 = vmatprep.subr.mxu0 0.0
      %5835 = vmatpush2.msra.mxu0 0.0
      %5836 = vmatprep.subr.mxu0 0.0
      %5837 = vmatpush2.msra.mxu0 0.0
      %5838 = vmatprep.subr.mxu0 0.0
      %5839 = vmatpush2.msra.mxu0 0.0
      %5840 = vmatprep.subr.mxu0 0.0
      %5841 = vmatpush2.msra.mxu0 0.0
      %5842 = vmatprep.subr.mxu0 0.0
      %5843 = vmatpush2.msra.mxu0 0.0
      %5844 = vmatprep.subr.mxu0 0.0
      %5845 = vmatpush2.msra.mxu0 0.0
      %5846 = vmatprep.subr.mxu0 0.0
      %5847 = vmatpush2.msra.mxu0 0.0
      %5848 = vmatprep.subr.mxu0 0.0
      %5849 = vmatpush2.msra.mxu0 0.0
      %5850 = vmatprep.subr.mxu0 0.0
      %5851 = vmatpush2.msra.mxu0 0.0
      %5852 = vmatprep.mubr.f32.mxu0 0.0
      %5853 = vmatmul.mubr.f32.gmra.mxu0 %v5690
      %v5854 = vpop.f32.mrf.mxu0
      %v5855 = vadd.f32 0.0, %v5854
      %v5856 = vpop.f32.mrf.mxu0
      %5857 = vmatprep.mubr.f32.mxu0 0.0
      %5858 = vmatmul.mubr.f32.gmra.mxu0 %v5693
      %v5859 = vpop.f32.mrf.mxu0
      %v5860 = vadd.f32 0.0, %v5859
      %v5861 = vpop.f32.mrf.mxu0
      %5862 = vmatprep.mubr.f32.mxu0 0.0
      %5863 = vmatmul.mubr.f32.gmra.mxu0 %v5696
      %v5864 = vpop.f32.mrf.mxu0
      %v5865 = vadd.f32 0.0, %v5864
      %v5866 = vpop.f32.mrf.mxu0
      %5867 = vmatprep.mubr.f32.mxu0 0.0
      %5868 = vmatmul.mubr.f32.gmra.mxu0 %v5699
      %v5869 = vpop.f32.mrf.mxu0
      %v5870 = vadd.f32 0.0, %v5869
      %v5871 = vpop.f32.mrf.mxu0
      %5872 = vmatprep.mubr.f32.mxu0 0.0
      %5873 = vmatmul.mubr.f32.gmra.mxu0 %v5702
      %v5874 = vpop.f32.mrf.mxu0
      %v5875 = vadd.f32 0.0, %v5874
      %v5876 = vpop.f32.mrf.mxu0
      %5877 = vmatprep.mubr.f32.mxu0 0.0
      %5878 = vmatmul.mubr.f32.gmra.mxu0 %v5705
      %v5879 = vpop.f32.mrf.mxu0
      %v5880 = vadd.f32 0.0, %v5879
      %v5881 = vpop.f32.mrf.mxu0
      %5882 = vmatprep.mubr.f32.mxu0 0.0
      %5883 = vmatmul.mubr.f32.gmra.mxu0 %v5708
      %v5884 = vpop.f32.mrf.mxu0
      %v5885 = vadd.f32 0.0, %v5884
      %v5886 = vpop.f32.mrf.mxu0
      %5887 = vmatprep.mubr.f32.mxu0 0.0
      %5888 = vmatmul.mubr.f32.gmra.mxu0 %v5711
      %v5889 = vpop.f32.mrf.mxu0
      %v5890 = vadd.f32 0.0, %v5889
      %v5891 = vpop.f32.mrf.mxu0
      %5892 = vmatprep.mubr.f32.mxu0 0.0
      %5893 = vmatmul.mubr.f32.gmra.mxu0 %v5714
      %v5894 = vpop.f32.mrf.mxu0
      %v5895 = vadd.f32 0.0, %v5894
      %v5896 = vpop.f32.mrf.mxu0
      %5897 = vmatprep.mubr.f32.mxu0 0.0
      %5898 = vmatmul.mubr.f32.gmra.mxu0 %v5717
      %v5899 = vpop.f32.mrf.mxu0
      %v5900 = vadd.f32 0.0, %v5899
      %v5901 = vpop.f32.mrf.mxu0
      %5902 = vmatprep.mubr.f32.mxu0 0.0
      %5903 = vmatmul.mubr.f32.gmra.mxu0 %v5720
      %v5904 = vpop.f32.mrf.mxu0
      %v5905 = vadd.f32 0.0, %v5904
      %v5906 = vpop.f32.mrf.mxu0
      %5907 = vmatprep.mubr.f32.mxu0 0.0
      %5908 = vmatmul.mubr.f32.gmra.mxu0 %v5723
      %v5909 = vpop.f32.mrf.mxu0
      %v5910 = vadd.f32 0.0, %v5909
      %v5911 = vpop.f32.mrf.mxu0
      %5912 = vmatprep.mubr.f32.mxu0 0.0
      %5913 = vmatmul.mubr.f32.gmra.mxu0 %v5726
      %v5914 = vpop.f32.mrf.mxu0
      %v5915 = vadd.f32 0.0, %v5914
      %v5916 = vpop.f32.mrf.mxu0
      %5917 = vmatprep.mubr.f32.mxu0 0.0
      %5918 = vmatmul.mubr.f32.gmra.mxu0 %v5729
      %v5919 = vpop.f32.mrf.mxu0
      %v5920 = vadd.f32 0.0, %v5919
      %v5921 = vpop.f32.mrf.mxu0
      %5922 = vmatprep.mubr.f32.mxu0 0.0
      %5923 = vmatmul.mubr.f32.gmra.mxu0 %v5732
      %v5924 = vpop.f32.mrf.mxu0
      %v5925 = vadd.f32 0.0, %v5924
      %v5926 = vpop.f32.mrf.mxu0
      %5927 = vmatprep.mubr.f32.mxu0 0.0
      %5928 = vmatmul.mubr.f32.gmra.mxu0 %v5735
      %v5929 = vpop.f32.mrf.mxu0
      %v5930 = vadd.f32 0.0, %v5929
      %v5931 = vpop.f32.mrf.mxu0
      %5932 = vmatprep.mubr.f32.mxu0 0.0
      %5933 = vmatmul.mubr.f32.gmra.mxu0 %v5738
      %v5934 = vpop.f32.mrf.mxu0
      %v5935 = vadd.f32 0.0, %v5934
      %v5936 = vpop.f32.mrf.mxu0
      %5937 = vmatprep.mubr.f32.mxu0 0.0
      %5938 = vmatmul.mubr.f32.gmra.mxu0 %v5741
      %v5939 = vpop.f32.mrf.mxu0
      %v5940 = vadd.f32 0.0, %v5939
      %v5941 = vpop.f32.mrf.mxu0
      %5942 = vmatprep.mubr.f32.mxu0 0.0
      %5943 = vmatmul.mubr.f32.gmra.mxu0 %v5744
      %v5944 = vpop.f32.mrf.mxu0
      %v5945 = vadd.f32 0.0, %v5944
      %v5946 = vpop.f32.mrf.mxu0
      %5947 = vmatprep.mubr.f32.mxu0 0.0
      %5948 = vmatmul.mubr.f32.gmra.mxu0 %v5747
      %v5949 = vpop.f32.mrf.mxu0
      %v5950 = vadd.f32 0.0, %v5949
      %v5951 = vpop.f32.mrf.mxu0
      %5952 = vmatprep.mubr.f32.mxu0 0.0
      %5953 = vmatmul.mubr.f32.gmra.mxu0 %v5750
      %v5954 = vpop.f32.mrf.mxu0
      %v5955 = vadd.f32 0.0, %v5954
      %v5956 = vpop.f32.mrf.mxu0
      %5957 = vmatprep.mubr.f32.mxu0 0.0
      %5958 = vmatmul.mubr.f32.gmra.mxu0 %v5753
      %v5959 = vpop.f32.mrf.mxu0
      %v5960 = vadd.f32 0.0, %v5959
      %v5961 = vpop.f32.mrf.mxu0
      %5962 = vmatprep.mubr.f32.mxu0 0.0
      %5963 = vmatmul.mubr.f32.gmra.mxu0 %v5756
      %v5964 = vpop.f32.mrf.mxu0
      %v5965 = vadd.f32 0.0, %v5964
      %v5966 = vpop.f32.mrf.mxu0
      %5967 = vmatprep.mubr.f32.mxu0 0.0
      %5968 = vmatmul.mubr.f32.gmra.mxu0 %v5759
      %v5969 = vpop.f32.mrf.mxu0
      %v5970 = vadd.f32 0.0, %v5969
      %v5971 = vpop.f32.mrf.mxu0
      %5972 = vmatprep.mubr.f32.mxu0 0.0
      %5973 = vmatmul.mubr.f32.gmra.mxu0 %v5762
      %v5974 = vpop.f32.mrf.mxu0
      %v5975 = vadd.f32 0.0, %v5974
      %v5976 = vpop.f32.mrf.mxu0
      %5977 = vmatprep.mubr.f32.mxu0 0.0
      %5978 = vmatmul.mubr.f32.gmra.mxu0 %v5765
      %v5979 = vpop.f32.mrf.mxu0
      %v5980 = vadd.f32 0.0, %v5979
      %v5981 = vpop.f32.mrf.mxu0
      %5982 = vmatprep.mubr.f32.mxu0 0.0
      %5983 = vmatmul.mubr.f32.gmra.mxu0 %v5768
      %v5984 = vpop.f32.mrf.mxu0
      %v5985 = vadd.f32 0.0, %v5984
      %v5986 = vpop.f32.mrf.mxu0
      %5987 = vmatprep.mubr.f32.mxu0 0.0
      %5988 = vmatmul.mubr.f32.gmra.mxu0 %v5771
      %v5989 = vpop.f32.mrf.mxu0
      %v5990 = vadd.f32 0.0, %v5989
      %v5991 = vpop.f32.mrf.mxu0
      %5992 = vmatprep.mubr.f32.mxu0 0.0
      %5993 = vmatmul.mubr.f32.gmra.mxu0 %v5774
      %v5994 = vpop.f32.mrf.mxu0
      %v5995 = vadd.f32 0.0, %v5994
      %v5996 = vpop.f32.mrf.mxu0
      %5997 = vmatprep.mubr.f32.mxu0 0.0
      %5998 = vmatmul.mubr.f32.gmra.mxu0 %v5777
      %v5999 = vpop.f32.mrf.mxu0
      %v6000 = vadd.f32 0.0, %v5999
      %v6001 = vpop.f32.mrf.mxu0
      %6002 = vmatprep.mubr.f32.mxu0 0.0
      %6003 = vmatmul.mubr.f32.gmra.mxu0 %v5780
      %v6004 = vpop.f32.mrf.mxu0
      %v6005 = vadd.f32 0.0, %v6004
      %v6006 = vpop.f32.mrf.mxu0
      %6007 = vmatprep.mubr.f32.mxu0 0.0
      %6008 = vmatmul.mubr.f32.gmra.mxu0 %v5783
      %v6009 = vpop.f32.mrf.mxu0
      %v6010 = vadd.f32 0.0, %v6009
      %v6011 = vpop.f32.mrf.mxu0
      %6012 = vdwg.mxu0
      %v6013 = vadd.f32 %v5623, %v5855
      %v6014 = vadd.f32 %v5624, %v5860
      %v6015 = vadd.f32 %v5625, %v5865
      %v6016 = vadd.f32 %v5626, %v5870
      %v6017 = vadd.f32 %v5627, %v5875
      %v6018 = vadd.f32 %v5628, %v5880
      %v6019 = vadd.f32 %v5629, %v5885
      %v6020 = vadd.f32 %v5630, %v5890
      %v6021 = vadd.f32 %v5631, %v5895
      %v6022 = vadd.f32 %v5632, %v5900
      %v6023 = vadd.f32 %v5633, %v5905
      %v6024 = vadd.f32 %v5634, %v5910
      %v6025 = vadd.f32 %v5635, %v5915
      %v6026 = vadd.f32 %v5636, %v5920
      %v6027 = vadd.f32 %v5637, %v5925
      %v6028 = vadd.f32 %v5638, %v5930
      %v6029 = vadd.f32 %v5639, %v5935
      %v6030 = vadd.f32 %v5640, %v5940
      %v6031 = vadd.f32 %v5641, %v5945
      %v6032 = vadd.f32 %v5642, %v5950
      %v6033 = vadd.f32 %v5643, %v5955
      %v6034 = vadd.f32 %v5644, %v5960
      %v6035 = vadd.f32 %v5645, %v5965
      %v6036 = vadd.f32 %v5646, %v5970
      %v6037 = vadd.f32 %v5647, %v5975
      %v6038 = vadd.f32 %v5648, %v5980
      %v6039 = vadd.f32 %v5649, %v5985
      %v6040 = vadd.f32 %v5650, %v5990
      %v6041 = vadd.f32 %v5651, %v5995
      %v6042 = vadd.f32 %v5652, %v6000
      %v6043 = vadd.f32 %v5653, %v6005
      %v6044 = vadd.f32 %v5654, %v6010
      %v6045 = vld [vmem:[%s339 + $0x2] sm:$0xff]
      %v6046 = vld [vmem:[%s339 + $0xa] sm:$0xff]
      %v6047 = vld [vmem:[%s339 + $0x1a] sm:$0xff]
      %v6048 = vld [vmem:[%s339 + $0x22] sm:$0xff]
      %v6049 = vld [vmem:[%s339 + $0x32] sm:$0xff]
      %v6050 = vld [vmem:[%s339 + $0x3a] sm:$0xff]
      %v6051 = vld [vmem:[%s339 + $0x4a] sm:$0xff]
      %v6052 = vld [vmem:[%s339 + $0x52] sm:$0xff]
      %v6053 = vld [vmem:[%s339 + $0x62] sm:$0xff]
      %v6054 = vld [vmem:[%s339 + $0x6a] sm:$0xff]
      %v6055 = vld [vmem:[%s339 + $0x7a] sm:$0xff]
      %v6056 = vld [vmem:[%s339 + $0x82] sm:$0xff]
      %v6057 = vld [vmem:[%s339 + $0x92] sm:$0xff]
      %v6058 = vld [vmem:[%s339 + $0x9a] sm:$0xff]
      %v6059 = vld [vmem:[%s339 + $0xaa] sm:$0xff]
      %v6060 = vld [vmem:[%s339 + $0xb2] sm:$0xff]
      %v6061 = vld [vmem:[%s339 + $0xc2] sm:$0xff]
      %v6062 = vld [vmem:[%s339 + $0xca] sm:$0xff]
      %v6063 = vld [vmem:[%s339 + $0xda] sm:$0xff]
      %v6064 = vld [vmem:[%s339 + $0xe2] sm:$0xff]
      %v6065 = vld [vmem:[%s339 + $0xf2] sm:$0xff]
      %v6066 = vld [vmem:[%s339 + $0xfa] sm:$0xff]
      %v6067 = vld [vmem:[%s339 + $0x10a] sm:$0xff]
      %v6068 = vld [vmem:[%s339 + $0x112] sm:$0xff]
      %v6069 = vld [vmem:[%s339 + $0x122] sm:$0xff]
      %v6070 = vld [vmem:[%s339 + $0x12a] sm:$0xff]
      %v6071 = vld [vmem:[%s339 + $0x13a] sm:$0xff]
      %v6072 = vld [vmem:[%s339 + $0x142] sm:$0xff]
      %v6073 = vld [vmem:[%s339 + $0x152] sm:$0xff]
      %v6074 = vld [vmem:[%s339 + $0x15a] sm:$0xff]
      %v6075 = vld [vmem:[%s339 + $0x16a] sm:$0xff]
      %v6076 = vld [vmem:[%s339 + $0x172] sm:$0xff]
      %s6077 = scalar_lea.vmem %s3, 20
      %v6078 = vld [vmem:[%s6077] sm:$0xf]
      %v6080 = vsel %vm225, %v6045, 0
      %v6083 = vsel %vm225, %v6046, 0
      %v6086 = vsel %vm225, %v6047, 0
      %v6089 = vsel %vm225, %v6048, 0
      %v6092 = vsel %vm225, %v6049, 0
      %v6095 = vsel %vm225, %v6050, 0
      %v6098 = vsel %vm225, %v6051, 0
      %v6101 = vsel %vm225, %v6052, 0
      %v6104 = vsel %vm225, %v6053, 0
      %v6107 = vsel %vm225, %v6054, 0
      %v6110 = vsel %vm225, %v6055, 0
      %v6113 = vsel %vm225, %v6056, 0
      %v6116 = vsel %vm225, %v6057, 0
      %v6119 = vsel %vm225, %v6058, 0
      %v6122 = vsel %vm225, %v6059, 0
      %v6125 = vsel %vm225, %v6060, 0
      %v6128 = vsel %vm225, %v6061, 0
      %v6131 = vsel %vm225, %v6062, 0
      %v6134 = vsel %vm225, %v6063, 0
      %v6137 = vsel %vm225, %v6064, 0
      %v6140 = vsel %vm225, %v6065, 0
      %v6143 = vsel %vm225, %v6066, 0
      %v6146 = vsel %vm225, %v6067, 0
      %v6149 = vsel %vm225, %v6068, 0
      %v6152 = vsel %vm225, %v6069, 0
      %v6155 = vsel %vm225, %v6070, 0
      %v6158 = vsel %vm225, %v6071, 0
      %v6161 = vsel %vm225, %v6072, 0
      %v6164 = vsel %vm225, %v6073, 0
      %v6167 = vsel %vm225, %v6074, 0
      %v6170 = vsel %vm225, %v6075, 0
      %v6173 = vsel %vm225, %v6076, 0
      %v6176 = vsel %vm535, %v6078, 0
      %6178 = vmatprep.subr.mxu0 0.0
      %6179 = vmatpush1.msra.mxu0 0.0
      %6180 = vmatprep.subr.mxu0 0.0
      %6181 = vmatpush1.msra.mxu0 0.0
      %6182 = vmatprep.subr.mxu0 0.0
      %6183 = vmatpush1.msra.mxu0 0.0
      %6184 = vmatprep.subr.mxu0 0.0
      %6185 = vmatpush1.msra.mxu0 0.0
      %6186 = vmatprep.subr.mxu0 0.0
      %6187 = vmatpush1.msra.mxu0 0.0
      %6188 = vmatprep.subr.mxu0 0.0
      %6189 = vmatpush1.msra.mxu0 0.0
      %6190 = vmatprep.subr.mxu0 0.0
      %6191 = vmatpush1.msra.mxu0 0.0
      %6192 = vmatprep.subr.mxu0 0.0
      %6193 = vmatpush1.msra.mxu0 0.0
      %6194 = vmatprep.subr.mxu0 0.0
      %6195 = vmatpush1.msra.mxu0 0.0
      %6196 = vmatprep.subr.mxu0 0.0
      %6197 = vmatpush1.msra.mxu0 0.0
      %6198 = vmatprep.subr.mxu0 0.0
      %6199 = vmatpush1.msra.mxu0 0.0
      %6200 = vmatprep.subr.mxu0 0.0
      %6201 = vmatpush1.msra.mxu0 0.0
      %6202 = vmatprep.subr.mxu0 0.0
      %6203 = vmatpush1.msra.mxu0 0.0
      %6204 = vmatprep.subr.mxu0 0.0
      %6205 = vmatpush1.msra.mxu0 0.0
      %6206 = vmatprep.subr.mxu0 0.0
      %6207 = vmatpush1.msra.mxu0 0.0
      %6208 = vmatprep.subr.mxu0 0.0
      %6209 = vmatpush1.msra.mxu0 %v6176
      %6210 = vmatprep.subr.mxu0 0.0
      %6211 = vmatpush2.msra.mxu0 0.0
      %6212 = vmatprep.subr.mxu0 0.0
      %6213 = vmatpush2.msra.mxu0 0.0
      %6214 = vmatprep.subr.mxu0 0.0
      %6215 = vmatpush2.msra.mxu0 0.0
      %6216 = vmatprep.subr.mxu0 0.0
      %6217 = vmatpush2.msra.mxu0 0.0
      %6218 = vmatprep.subr.mxu0 0.0
      %6219 = vmatpush2.msra.mxu0 0.0
      %6220 = vmatprep.subr.mxu0 0.0
      %6221 = vmatpush2.msra.mxu0 0.0
      %6222 = vmatprep.subr.mxu0 0.0
      %6223 = vmatpush2.msra.mxu0 0.0
      %6224 = vmatprep.subr.mxu0 0.0
      %6225 = vmatpush2.msra.mxu0 0.0
      %6226 = vmatprep.subr.mxu0 0.0
      %6227 = vmatpush2.msra.mxu0 0.0
      %6228 = vmatprep.subr.mxu0 0.0
      %6229 = vmatpush2.msra.mxu0 0.0
      %6230 = vmatprep.subr.mxu0 0.0
      %6231 = vmatpush2.msra.mxu0 0.0
      %6232 = vmatprep.subr.mxu0 0.0
      %6233 = vmatpush2.msra.mxu0 0.0
      %6234 = vmatprep.subr.mxu0 0.0
      %6235 = vmatpush2.msra.mxu0 0.0
      %6236 = vmatprep.subr.mxu0 0.0
      %6237 = vmatpush2.msra.mxu0 0.0
      %6238 = vmatprep.subr.mxu0 0.0
      %6239 = vmatpush2.msra.mxu0 0.0
      %6240 = vmatprep.subr.mxu0 0.0
      %6241 = vmatpush2.msra.mxu0 0.0
      %6242 = vmatprep.mubr.f32.mxu0 0.0
      %6243 = vmatmul.mubr.f32.gmra.mxu0 %v6080
      %v6244 = vpop.f32.mrf.mxu0
      %v6245 = vadd.f32 0.0, %v6244
      %v6246 = vpop.f32.mrf.mxu0
      %6247 = vmatprep.mubr.f32.mxu0 0.0
      %6248 = vmatmul.mubr.f32.gmra.mxu0 %v6083
      %v6249 = vpop.f32.mrf.mxu0
      %v6250 = vadd.f32 0.0, %v6249
      %v6251 = vpop.f32.mrf.mxu0
      %6252 = vmatprep.mubr.f32.mxu0 0.0
      %6253 = vmatmul.mubr.f32.gmra.mxu0 %v6086
      %v6254 = vpop.f32.mrf.mxu0
      %v6255 = vadd.f32 0.0, %v6254
      %v6256 = vpop.f32.mrf.mxu0
      %6257 = vmatprep.mubr.f32.mxu0 0.0
      %6258 = vmatmul.mubr.f32.gmra.mxu0 %v6089
      %v6259 = vpop.f32.mrf.mxu0
      %v6260 = vadd.f32 0.0, %v6259
      %v6261 = vpop.f32.mrf.mxu0
      %6262 = vmatprep.mubr.f32.mxu0 0.0
      %6263 = vmatmul.mubr.f32.gmra.mxu0 %v6092
      %v6264 = vpop.f32.mrf.mxu0
      %v6265 = vadd.f32 0.0, %v6264
      %v6266 = vpop.f32.mrf.mxu0
      %6267 = vmatprep.mubr.f32.mxu0 0.0
      %6268 = vmatmul.mubr.f32.gmra.mxu0 %v6095
      %v6269 = vpop.f32.mrf.mxu0
      %v6270 = vadd.f32 0.0, %v6269
      %v6271 = vpop.f32.mrf.mxu0
      %6272 = vmatprep.mubr.f32.mxu0 0.0
      %6273 = vmatmul.mubr.f32.gmra.mxu0 %v6098
      %v6274 = vpop.f32.mrf.mxu0
      %v6275 = vadd.f32 0.0, %v6274
      %v6276 = vpop.f32.mrf.mxu0
      %6277 = vmatprep.mubr.f32.mxu0 0.0
      %6278 = vmatmul.mubr.f32.gmra.mxu0 %v6101
      %v6279 = vpop.f32.mrf.mxu0
      %v6280 = vadd.f32 0.0, %v6279
      %v6281 = vpop.f32.mrf.mxu0
      %6282 = vmatprep.mubr.f32.mxu0 0.0
      %6283 = vmatmul.mubr.f32.gmra.mxu0 %v6104
      %v6284 = vpop.f32.mrf.mxu0
      %v6285 = vadd.f32 0.0, %v6284
      %v6286 = vpop.f32.mrf.mxu0
      %6287 = vmatprep.mubr.f32.mxu0 0.0
      %6288 = vmatmul.mubr.f32.gmra.mxu0 %v6107
      %v6289 = vpop.f32.mrf.mxu0
      %v6290 = vadd.f32 0.0, %v6289
      %v6291 = vpop.f32.mrf.mxu0
      %6292 = vmatprep.mubr.f32.mxu0 0.0
      %6293 = vmatmul.mubr.f32.gmra.mxu0 %v6110
      %v6294 = vpop.f32.mrf.mxu0
      %v6295 = vadd.f32 0.0, %v6294
      %v6296 = vpop.f32.mrf.mxu0
      %6297 = vmatprep.mubr.f32.mxu0 0.0
      %6298 = vmatmul.mubr.f32.gmra.mxu0 %v6113
      %v6299 = vpop.f32.mrf.mxu0
      %v6300 = vadd.f32 0.0, %v6299
      %v6301 = vpop.f32.mrf.mxu0
      %6302 = vmatprep.mubr.f32.mxu0 0.0
      %6303 = vmatmul.mubr.f32.gmra.mxu0 %v6116
      %v6304 = vpop.f32.mrf.mxu0
      %v6305 = vadd.f32 0.0, %v6304
      %v6306 = vpop.f32.mrf.mxu0
      %6307 = vmatprep.mubr.f32.mxu0 0.0
      %6308 = vmatmul.mubr.f32.gmra.mxu0 %v6119
      %v6309 = vpop.f32.mrf.mxu0
      %v6310 = vadd.f32 0.0, %v6309
      %v6311 = vpop.f32.mrf.mxu0
      %6312 = vmatprep.mubr.f32.mxu0 0.0
      %6313 = vmatmul.mubr.f32.gmra.mxu0 %v6122
      %v6314 = vpop.f32.mrf.mxu0
      %v6315 = vadd.f32 0.0, %v6314
      %v6316 = vpop.f32.mrf.mxu0
      %6317 = vmatprep.mubr.f32.mxu0 0.0
      %6318 = vmatmul.mubr.f32.gmra.mxu0 %v6125
      %v6319 = vpop.f32.mrf.mxu0
      %v6320 = vadd.f32 0.0, %v6319
      %v6321 = vpop.f32.mrf.mxu0
      %6322 = vmatprep.mubr.f32.mxu0 0.0
      %6323 = vmatmul.mubr.f32.gmra.mxu0 %v6128
      %v6324 = vpop.f32.mrf.mxu0
      %v6325 = vadd.f32 0.0, %v6324
      %v6326 = vpop.f32.mrf.mxu0
      %6327 = vmatprep.mubr.f32.mxu0 0.0
      %6328 = vmatmul.mubr.f32.gmra.mxu0 %v6131
      %v6329 = vpop.f32.mrf.mxu0
      %v6330 = vadd.f32 0.0, %v6329
      %v6331 = vpop.f32.mrf.mxu0
      %6332 = vmatprep.mubr.f32.mxu0 0.0
      %6333 = vmatmul.mubr.f32.gmra.mxu0 %v6134
      %v6334 = vpop.f32.mrf.mxu0
      %v6335 = vadd.f32 0.0, %v6334
      %v6336 = vpop.f32.mrf.mxu0
      %6337 = vmatprep.mubr.f32.mxu0 0.0
      %6338 = vmatmul.mubr.f32.gmra.mxu0 %v6137
      %v6339 = vpop.f32.mrf.mxu0
      %v6340 = vadd.f32 0.0, %v6339
      %v6341 = vpop.f32.mrf.mxu0
      %6342 = vmatprep.mubr.f32.mxu0 0.0
      %6343 = vmatmul.mubr.f32.gmra.mxu0 %v6140
      %v6344 = vpop.f32.mrf.mxu0
      %v6345 = vadd.f32 0.0, %v6344
      %v6346 = vpop.f32.mrf.mxu0
      %6347 = vmatprep.mubr.f32.mxu0 0.0
      %6348 = vmatmul.mubr.f32.gmra.mxu0 %v6143
      %v6349 = vpop.f32.mrf.mxu0
      %v6350 = vadd.f32 0.0, %v6349
      %v6351 = vpop.f32.mrf.mxu0
      %6352 = vmatprep.mubr.f32.mxu0 0.0
      %6353 = vmatmul.mubr.f32.gmra.mxu0 %v6146
      %v6354 = vpop.f32.mrf.mxu0
      %v6355 = vadd.f32 0.0, %v6354
      %v6356 = vpop.f32.mrf.mxu0
      %6357 = vmatprep.mubr.f32.mxu0 0.0
      %6358 = vmatmul.mubr.f32.gmra.mxu0 %v6149
      %v6359 = vpop.f32.mrf.mxu0
      %v6360 = vadd.f32 0.0, %v6359
      %v6361 = vpop.f32.mrf.mxu0
      %6362 = vmatprep.mubr.f32.mxu0 0.0
      %6363 = vmatmul.mubr.f32.gmra.mxu0 %v6152
      %v6364 = vpop.f32.mrf.mxu0
      %v6365 = vadd.f32 0.0, %v6364
      %v6366 = vpop.f32.mrf.mxu0
      %6367 = vmatprep.mubr.f32.mxu0 0.0
      %6368 = vmatmul.mubr.f32.gmra.mxu0 %v6155
      %v6369 = vpop.f32.mrf.mxu0
      %v6370 = vadd.f32 0.0, %v6369
      %v6371 = vpop.f32.mrf.mxu0
      %6372 = vmatprep.mubr.f32.mxu0 0.0
      %6373 = vmatmul.mubr.f32.gmra.mxu0 %v6158
      %v6374 = vpop.f32.mrf.mxu0
      %v6375 = vadd.f32 0.0, %v6374
      %v6376 = vpop.f32.mrf.mxu0
      %6377 = vmatprep.mubr.f32.mxu0 0.0
      %6378 = vmatmul.mubr.f32.gmra.mxu0 %v6161
      %v6379 = vpop.f32.mrf.mxu0
      %v6380 = vadd.f32 0.0, %v6379
      %v6381 = vpop.f32.mrf.mxu0
      %6382 = vmatprep.mubr.f32.mxu0 0.0
      %6383 = vmatmul.mubr.f32.gmra.mxu0 %v6164
      %v6384 = vpop.f32.mrf.mxu0
      %v6385 = vadd.f32 0.0, %v6384
      %v6386 = vpop.f32.mrf.mxu0
      %6387 = vmatprep.mubr.f32.mxu0 0.0
      %6388 = vmatmul.mubr.f32.gmra.mxu0 %v6167
      %v6389 = vpop.f32.mrf.mxu0
      %v6390 = vadd.f32 0.0, %v6389
      %v6391 = vpop.f32.mrf.mxu0
      %6392 = vmatprep.mubr.f32.mxu0 0.0
      %6393 = vmatmul.mubr.f32.gmra.mxu0 %v6170
      %v6394 = vpop.f32.mrf.mxu0
      %v6395 = vadd.f32 0.0, %v6394
      %v6396 = vpop.f32.mrf.mxu0
      %6397 = vmatprep.mubr.f32.mxu0 0.0
      %6398 = vmatmul.mubr.f32.gmra.mxu0 %v6173
      %v6399 = vpop.f32.mrf.mxu0
      %v6400 = vadd.f32 0.0, %v6399
      %v6401 = vpop.f32.mrf.mxu0
      %6402 = vdwg.mxu0
      %v6403 = vadd.f32 %v6013, %v6245
      %v6404 = vadd.f32 %v6014, %v6250
      %v6405 = vadd.f32 %v6015, %v6255
      %v6406 = vadd.f32 %v6016, %v6260
      %v6407 = vadd.f32 %v6017, %v6265
      %v6408 = vadd.f32 %v6018, %v6270
      %v6409 = vadd.f32 %v6019, %v6275
      %v6410 = vadd.f32 %v6020, %v6280
      %v6411 = vadd.f32 %v6021, %v6285
      %v6412 = vadd.f32 %v6022, %v6290
      %v6413 = vadd.f32 %v6023, %v6295
      %v6414 = vadd.f32 %v6024, %v6300
      %v6415 = vadd.f32 %v6025, %v6305
      %v6416 = vadd.f32 %v6026, %v6310
      %v6417 = vadd.f32 %v6027, %v6315
      %v6418 = vadd.f32 %v6028, %v6320
      %v6419 = vadd.f32 %v6029, %v6325
      %v6420 = vadd.f32 %v6030, %v6330
      %v6421 = vadd.f32 %v6031, %v6335
      %v6422 = vadd.f32 %v6032, %v6340
      %v6423 = vadd.f32 %v6033, %v6345
      %v6424 = vadd.f32 %v6034, %v6350
      %v6425 = vadd.f32 %v6035, %v6355
      %v6426 = vadd.f32 %v6036, %v6360
      %v6427 = vadd.f32 %v6037, %v6365
      %v6428 = vadd.f32 %v6038, %v6370
      %v6429 = vadd.f32 %v6039, %v6375
      %v6430 = vadd.f32 %v6040, %v6380
      %v6431 = vadd.f32 %v6041, %v6385
      %v6432 = vadd.f32 %v6042, %v6390
      %v6433 = vadd.f32 %v6043, %v6395
      %v6434 = vadd.f32 %v6044, %v6400
      %v6435 = vld [vmem:[%s2648] sm:$0xff]
      %v6436 = vld [vmem:[%s2648 + $0x8] sm:$0xff]
      %v6437 = vld [vmem:[%s2648 + $0x18] sm:$0xff]
      %v6438 = vld [vmem:[%s2648 + $0x20] sm:$0xff]
      %v6439 = vld [vmem:[%s2648 + $0x30] sm:$0xff]
      %v6440 = vld [vmem:[%s2648 + $0x38] sm:$0xff]
      %v6441 = vld [vmem:[%s2648 + $0x48] sm:$0xff]
      %v6442 = vld [vmem:[%s2648 + $0x50] sm:$0xff]
      %v6443 = vld [vmem:[%s2648 + $0x60] sm:$0xff]
      %v6444 = vld [vmem:[%s2648 + $0x68] sm:$0xff]
      %v6445 = vld [vmem:[%s2648 + $0x78] sm:$0xff]
      %v6446 = vld [vmem:[%s2648 + $0x80] sm:$0xff]
      %v6447 = vld [vmem:[%s2648 + $0x90] sm:$0xff]
      %v6448 = vld [vmem:[%s2648 + $0x98] sm:$0xff]
      %v6449 = vld [vmem:[%s2648 + $0xa8] sm:$0xff]
      %v6450 = vld [vmem:[%s2648 + $0xb0] sm:$0xff]
      %v6451 = vld [vmem:[%s2648 + $0xc0] sm:$0xff]
      %v6452 = vld [vmem:[%s2648 + $0xc8] sm:$0xff]
      %v6453 = vld [vmem:[%s2648 + $0xd8] sm:$0xff]
      %v6454 = vld [vmem:[%s2648 + $0xe0] sm:$0xff]
      %v6455 = vld [vmem:[%s2648 + $0xf0] sm:$0xff]
      %v6456 = vld [vmem:[%s2648 + $0xf8] sm:$0xff]
      %v6457 = vld [vmem:[%s2648 + $0x108] sm:$0xff]
      %v6458 = vld [vmem:[%s2648 + $0x110] sm:$0xff]
      %v6459 = vld [vmem:[%s2648 + $0x120] sm:$0xff]
      %v6460 = vld [vmem:[%s2648 + $0x128] sm:$0xff]
      %v6461 = vld [vmem:[%s2648 + $0x138] sm:$0xff]
      %v6462 = vld [vmem:[%s2648 + $0x140] sm:$0xff]
      %v6463 = vld [vmem:[%s2648 + $0x150] sm:$0xff]
      %v6464 = vld [vmem:[%s2648 + $0x158] sm:$0xff]
      %v6465 = vld [vmem:[%s2648 + $0x168] sm:$0xff]
      %v6466 = vld [vmem:[%s2648 + $0x170] sm:$0xff]
      %s6467 = scalar_lea.vmem %s3, 24
      %v6468 = vld [vmem:[%s6467] sm:$0xf]
      %v6470 = vsel %vm225, %v6435, 0
      %v6473 = vsel %vm225, %v6436, 0
      %v6476 = vsel %vm225, %v6437, 0
      %v6479 = vsel %vm225, %v6438, 0
      %v6482 = vsel %vm225, %v6439, 0
      %v6485 = vsel %vm225, %v6440, 0
      %v6488 = vsel %vm225, %v6441, 0
      %v6491 = vsel %vm225, %v6442, 0
      %v6494 = vsel %vm225, %v6443, 0
      %v6497 = vsel %vm225, %v6444, 0
      %v6500 = vsel %vm225, %v6445, 0
      %v6503 = vsel %vm225, %v6446, 0
      %v6506 = vsel %vm225, %v6447, 0
      %v6509 = vsel %vm225, %v6448, 0
      %v6512 = vsel %vm225, %v6449, 0
      %v6515 = vsel %vm225, %v6450, 0
      %v6518 = vsel %vm225, %v6451, 0
      %v6521 = vsel %vm225, %v6452, 0
      %v6524 = vsel %vm225, %v6453, 0
      %v6527 = vsel %vm225, %v6454, 0
      %v6530 = vsel %vm225, %v6455, 0
      %v6533 = vsel %vm225, %v6456, 0
      %v6536 = vsel %vm225, %v6457, 0
      %v6539 = vsel %vm225, %v6458, 0
      %v6542 = vsel %vm225, %v6459, 0
      %v6545 = vsel %vm225, %v6460, 0
      %v6548 = vsel %vm225, %v6461, 0
      %v6551 = vsel %vm225, %v6462, 0
      %v6554 = vsel %vm225, %v6463, 0
      %v6557 = vsel %vm225, %v6464, 0
      %v6560 = vsel %vm225, %v6465, 0
      %v6563 = vsel %vm225, %v6466, 0
      %v6566 = vsel %vm535, %v6468, 0
      %6568 = vmatprep.subr.mxu0 0.0
      %6569 = vmatpush1.msra.mxu0 0.0
      %6570 = vmatprep.subr.mxu0 0.0
      %6571 = vmatpush1.msra.mxu0 0.0
      %6572 = vmatprep.subr.mxu0 0.0
      %6573 = vmatpush1.msra.mxu0 0.0
      %6574 = vmatprep.subr.mxu0 0.0
      %6575 = vmatpush1.msra.mxu0 0.0
      %6576 = vmatprep.subr.mxu0 0.0
      %6577 = vmatpush1.msra.mxu0 0.0
      %6578 = vmatprep.subr.mxu0 0.0
      %6579 = vmatpush1.msra.mxu0 0.0
      %6580 = vmatprep.subr.mxu0 0.0
      %6581 = vmatpush1.msra.mxu0 0.0
      %6582 = vmatprep.subr.mxu0 0.0
      %6583 = vmatpush1.msra.mxu0 0.0
      %6584 = vmatprep.subr.mxu0 0.0
      %6585 = vmatpush1.msra.mxu0 0.0
      %6586 = vmatprep.subr.mxu0 0.0
      %6587 = vmatpush1.msra.mxu0 0.0
      %6588 = vmatprep.subr.mxu0 0.0
      %6589 = vmatpush1.msra.mxu0 0.0
      %6590 = vmatprep.subr.mxu0 0.0
      %6591 = vmatpush1.msra.mxu0 0.0
      %6592 = vmatprep.subr.mxu0 0.0
      %6593 = vmatpush1.msra.mxu0 0.0
      %6594 = vmatprep.subr.mxu0 0.0
      %6595 = vmatpush1.msra.mxu0 0.0
      %6596 = vmatprep.subr.mxu0 0.0
      %6597 = vmatpush1.msra.mxu0 0.0
      %6598 = vmatprep.subr.mxu0 0.0
      %6599 = vmatpush1.msra.mxu0 %v6566
      %6600 = vmatprep.subr.mxu0 0.0
      %6601 = vmatpush2.msra.mxu0 0.0
      %6602 = vmatprep.subr.mxu0 0.0
      %6603 = vmatpush2.msra.mxu0 0.0
      %6604 = vmatprep.subr.mxu0 0.0
      %6605 = vmatpush2.msra.mxu0 0.0
      %6606 = vmatprep.subr.mxu0 0.0
      %6607 = vmatpush2.msra.mxu0 0.0
      %6608 = vmatprep.subr.mxu0 0.0
      %6609 = vmatpush2.msra.mxu0 0.0
      %6610 = vmatprep.subr.mxu0 0.0
      %6611 = vmatpush2.msra.mxu0 0.0
      %6612 = vmatprep.subr.mxu0 0.0
      %6613 = vmatpush2.msra.mxu0 0.0
      %6614 = vmatprep.subr.mxu0 0.0
      %6615 = vmatpush2.msra.mxu0 0.0
      %6616 = vmatprep.subr.mxu0 0.0
      %6617 = vmatpush2.msra.mxu0 0.0
      %6618 = vmatprep.subr.mxu0 0.0
      %6619 = vmatpush2.msra.mxu0 0.0
      %6620 = vmatprep.subr.mxu0 0.0
      %6621 = vmatpush2.msra.mxu0 0.0
      %6622 = vmatprep.subr.mxu0 0.0
      %6623 = vmatpush2.msra.mxu0 0.0
      %6624 = vmatprep.subr.mxu0 0.0
      %6625 = vmatpush2.msra.mxu0 0.0
      %6626 = vmatprep.subr.mxu0 0.0
      %6627 = vmatpush2.msra.mxu0 0.0
      %6628 = vmatprep.subr.mxu0 0.0
      %6629 = vmatpush2.msra.mxu0 0.0
      %6630 = vmatprep.subr.mxu0 0.0
      %6631 = vmatpush2.msra.mxu0 0.0
      %6632 = vmatprep.mubr.f32.mxu0 0.0
      %6633 = vmatmul.mubr.f32.gmra.mxu0 %v6470
      %v6634 = vpop.f32.mrf.mxu0
      %v6635 = vadd.f32 0.0, %v6634
      %v6636 = vpop.f32.mrf.mxu0
      %6637 = vmatprep.mubr.f32.mxu0 0.0
      %6638 = vmatmul.mubr.f32.gmra.mxu0 %v6473
      %v6639 = vpop.f32.mrf.mxu0
      %v6640 = vadd.f32 0.0, %v6639
      %v6641 = vpop.f32.mrf.mxu0
      %6642 = vmatprep.mubr.f32.mxu0 0.0
      %6643 = vmatmul.mubr.f32.gmra.mxu0 %v6476
      %v6644 = vpop.f32.mrf.mxu0
      %v6645 = vadd.f32 0.0, %v6644
      %v6646 = vpop.f32.mrf.mxu0
      %6647 = vmatprep.mubr.f32.mxu0 0.0
      %6648 = vmatmul.mubr.f32.gmra.mxu0 %v6479
      %v6649 = vpop.f32.mrf.mxu0
      %v6650 = vadd.f32 0.0, %v6649
      %v6651 = vpop.f32.mrf.mxu0
      %6652 = vmatprep.mubr.f32.mxu0 0.0
      %6653 = vmatmul.mubr.f32.gmra.mxu0 %v6482
      %v6654 = vpop.f32.mrf.mxu0
      %v6655 = vadd.f32 0.0, %v6654
      %v6656 = vpop.f32.mrf.mxu0
      %6657 = vmatprep.mubr.f32.mxu0 0.0
      %6658 = vmatmul.mubr.f32.gmra.mxu0 %v6485
      %v6659 = vpop.f32.mrf.mxu0
      %v6660 = vadd.f32 0.0, %v6659
      %v6661 = vpop.f32.mrf.mxu0
      %6662 = vmatprep.mubr.f32.mxu0 0.0
      %6663 = vmatmul.mubr.f32.gmra.mxu0 %v6488
      %v6664 = vpop.f32.mrf.mxu0
      %v6665 = vadd.f32 0.0, %v6664
      %v6666 = vpop.f32.mrf.mxu0
      %6667 = vmatprep.mubr.f32.mxu0 0.0
      %6668 = vmatmul.mubr.f32.gmra.mxu0 %v6491
      %v6669 = vpop.f32.mrf.mxu0
      %v6670 = vadd.f32 0.0, %v6669
      %v6671 = vpop.f32.mrf.mxu0
      %6672 = vmatprep.mubr.f32.mxu0 0.0
      %6673 = vmatmul.mubr.f32.gmra.mxu0 %v6494
      %v6674 = vpop.f32.mrf.mxu0
      %v6675 = vadd.f32 0.0, %v6674
      %v6676 = vpop.f32.mrf.mxu0
      %6677 = vmatprep.mubr.f32.mxu0 0.0
      %6678 = vmatmul.mubr.f32.gmra.mxu0 %v6497
      %v6679 = vpop.f32.mrf.mxu0
      %v6680 = vadd.f32 0.0, %v6679
      %v6681 = vpop.f32.mrf.mxu0
      %6682 = vmatprep.mubr.f32.mxu0 0.0
      %6683 = vmatmul.mubr.f32.gmra.mxu0 %v6500
      %v6684 = vpop.f32.mrf.mxu0
      %v6685 = vadd.f32 0.0, %v6684
      %v6686 = vpop.f32.mrf.mxu0
      %6687 = vmatprep.mubr.f32.mxu0 0.0
      %6688 = vmatmul.mubr.f32.gmra.mxu0 %v6503
      %v6689 = vpop.f32.mrf.mxu0
      %v6690 = vadd.f32 0.0, %v6689
      %v6691 = vpop.f32.mrf.mxu0
      %6692 = vmatprep.mubr.f32.mxu0 0.0
      %6693 = vmatmul.mubr.f32.gmra.mxu0 %v6506
      %v6694 = vpop.f32.mrf.mxu0
      %v6695 = vadd.f32 0.0, %v6694
      %v6696 = vpop.f32.mrf.mxu0
      %6697 = vmatprep.mubr.f32.mxu0 0.0
      %6698 = vmatmul.mubr.f32.gmra.mxu0 %v6509
      %v6699 = vpop.f32.mrf.mxu0
      %v6700 = vadd.f32 0.0, %v6699
      %v6701 = vpop.f32.mrf.mxu0
      %6702 = vmatprep.mubr.f32.mxu0 0.0
      %6703 = vmatmul.mubr.f32.gmra.mxu0 %v6512
      %v6704 = vpop.f32.mrf.mxu0
      %v6705 = vadd.f32 0.0, %v6704
      %v6706 = vpop.f32.mrf.mxu0
      %6707 = vmatprep.mubr.f32.mxu0 0.0
      %6708 = vmatmul.mubr.f32.gmra.mxu0 %v6515
      %v6709 = vpop.f32.mrf.mxu0
      %v6710 = vadd.f32 0.0, %v6709
      %v6711 = vpop.f32.mrf.mxu0
      %6712 = vmatprep.mubr.f32.mxu0 0.0
      %6713 = vmatmul.mubr.f32.gmra.mxu0 %v6518
      %v6714 = vpop.f32.mrf.mxu0
      %v6715 = vadd.f32 0.0, %v6714
      %v6716 = vpop.f32.mrf.mxu0
      %6717 = vmatprep.mubr.f32.mxu0 0.0
      %6718 = vmatmul.mubr.f32.gmra.mxu0 %v6521
      %v6719 = vpop.f32.mrf.mxu0
      %v6720 = vadd.f32 0.0, %v6719
      %v6721 = vpop.f32.mrf.mxu0
      %6722 = vmatprep.mubr.f32.mxu0 0.0
      %6723 = vmatmul.mubr.f32.gmra.mxu0 %v6524
      %v6724 = vpop.f32.mrf.mxu0
      %v6725 = vadd.f32 0.0, %v6724
      %v6726 = vpop.f32.mrf.mxu0
      %6727 = vmatprep.mubr.f32.mxu0 0.0
      %6728 = vmatmul.mubr.f32.gmra.mxu0 %v6527
      %v6729 = vpop.f32.mrf.mxu0
      %v6730 = vadd.f32 0.0, %v6729
      %v6731 = vpop.f32.mrf.mxu0
      %6732 = vmatprep.mubr.f32.mxu0 0.0
      %6733 = vmatmul.mubr.f32.gmra.mxu0 %v6530
      %v6734 = vpop.f32.mrf.mxu0
      %v6735 = vadd.f32 0.0, %v6734
      %v6736 = vpop.f32.mrf.mxu0
      %6737 = vmatprep.mubr.f32.mxu0 0.0
      %6738 = vmatmul.mubr.f32.gmra.mxu0 %v6533
      %v6739 = vpop.f32.mrf.mxu0
      %v6740 = vadd.f32 0.0, %v6739
      %v6741 = vpop.f32.mrf.mxu0
      %6742 = vmatprep.mubr.f32.mxu0 0.0
      %6743 = vmatmul.mubr.f32.gmra.mxu0 %v6536
      %v6744 = vpop.f32.mrf.mxu0
      %v6745 = vadd.f32 0.0, %v6744
      %v6746 = vpop.f32.mrf.mxu0
      %6747 = vmatprep.mubr.f32.mxu0 0.0
      %6748 = vmatmul.mubr.f32.gmra.mxu0 %v6539
      %v6749 = vpop.f32.mrf.mxu0
      %v6750 = vadd.f32 0.0, %v6749
      %v6751 = vpop.f32.mrf.mxu0
      %6752 = vmatprep.mubr.f32.mxu0 0.0
      %6753 = vmatmul.mubr.f32.gmra.mxu0 %v6542
      %v6754 = vpop.f32.mrf.mxu0
      %v6755 = vadd.f32 0.0, %v6754
      %v6756 = vpop.f32.mrf.mxu0
      %6757 = vmatprep.mubr.f32.mxu0 0.0
      %6758 = vmatmul.mubr.f32.gmra.mxu0 %v6545
      %v6759 = vpop.f32.mrf.mxu0
      %v6760 = vadd.f32 0.0, %v6759
      %v6761 = vpop.f32.mrf.mxu0
      %6762 = vmatprep.mubr.f32.mxu0 0.0
      %6763 = vmatmul.mubr.f32.gmra.mxu0 %v6548
      %v6764 = vpop.f32.mrf.mxu0
      %v6765 = vadd.f32 0.0, %v6764
      %v6766 = vpop.f32.mrf.mxu0
      %6767 = vmatprep.mubr.f32.mxu0 0.0
      %6768 = vmatmul.mubr.f32.gmra.mxu0 %v6551
      %v6769 = vpop.f32.mrf.mxu0
      %v6770 = vadd.f32 0.0, %v6769
      %v6771 = vpop.f32.mrf.mxu0
      %6772 = vmatprep.mubr.f32.mxu0 0.0
      %6773 = vmatmul.mubr.f32.gmra.mxu0 %v6554
      %v6774 = vpop.f32.mrf.mxu0
      %v6775 = vadd.f32 0.0, %v6774
      %v6776 = vpop.f32.mrf.mxu0
      %6777 = vmatprep.mubr.f32.mxu0 0.0
      %6778 = vmatmul.mubr.f32.gmra.mxu0 %v6557
      %v6779 = vpop.f32.mrf.mxu0
      %v6780 = vadd.f32 0.0, %v6779
      %v6781 = vpop.f32.mrf.mxu0
      %6782 = vmatprep.mubr.f32.mxu0 0.0
      %6783 = vmatmul.mubr.f32.gmra.mxu0 %v6560
      %v6784 = vpop.f32.mrf.mxu0
      %v6785 = vadd.f32 0.0, %v6784
      %v6786 = vpop.f32.mrf.mxu0
      %6787 = vmatprep.mubr.f32.mxu0 0.0
      %6788 = vmatmul.mubr.f32.gmra.mxu0 %v6563
      %v6789 = vpop.f32.mrf.mxu0
      %v6790 = vadd.f32 0.0, %v6789
      %v6791 = vpop.f32.mrf.mxu0
      %6792 = vdwg.mxu0
      %v6793 = vadd.f32 %v6403, %v6635
      %v6794 = vadd.f32 %v6404, %v6640
      %v6795 = vadd.f32 %v6405, %v6645
      %v6796 = vadd.f32 %v6406, %v6650
      %v6797 = vadd.f32 %v6407, %v6655
      %v6798 = vadd.f32 %v6408, %v6660
      %v6799 = vadd.f32 %v6409, %v6665
      %v6800 = vadd.f32 %v6410, %v6670
      %v6801 = vadd.f32 %v6411, %v6675
      %v6802 = vadd.f32 %v6412, %v6680
      %v6803 = vadd.f32 %v6413, %v6685
      %v6804 = vadd.f32 %v6414, %v6690
      %v6805 = vadd.f32 %v6415, %v6695
      %v6806 = vadd.f32 %v6416, %v6700
      %v6807 = vadd.f32 %v6417, %v6705
      %v6808 = vadd.f32 %v6418, %v6710
      %v6809 = vadd.f32 %v6419, %v6715
      %v6810 = vadd.f32 %v6420, %v6720
      %v6811 = vadd.f32 %v6421, %v6725
      %v6812 = vadd.f32 %v6422, %v6730
      %v6813 = vadd.f32 %v6423, %v6735
      %v6814 = vadd.f32 %v6424, %v6740
      %v6815 = vadd.f32 %v6425, %v6745
      %v6816 = vadd.f32 %v6426, %v6750
      %v6817 = vadd.f32 %v6427, %v6755
      %v6818 = vadd.f32 %v6428, %v6760
      %v6819 = vadd.f32 %v6429, %v6765
      %v6820 = vadd.f32 %v6430, %v6770
      %v6821 = vadd.f32 %v6431, %v6775
      %v6822 = vadd.f32 %v6432, %v6780
      %v6823 = vadd.f32 %v6433, %v6785
      %v6824 = vadd.f32 %v6434, %v6790
      %v6825 = vld [vmem:[%s2648 + $0x1] sm:$0xff]
      %v6826 = vld [vmem:[%s2648 + $0x9] sm:$0xff]
      %v6827 = vld [vmem:[%s2648 + $0x19] sm:$0xff]
      %v6828 = vld [vmem:[%s2648 + $0x21] sm:$0xff]
      %v6829 = vld [vmem:[%s2648 + $0x31] sm:$0xff]
      %v6830 = vld [vmem:[%s2648 + $0x39] sm:$0xff]
      %v6831 = vld [vmem:[%s2648 + $0x49] sm:$0xff]
      %v6832 = vld [vmem:[%s2648 + $0x51] sm:$0xff]
      %v6833 = vld [vmem:[%s2648 + $0x61] sm:$0xff]
      %v6834 = vld [vmem:[%s2648 + $0x69] sm:$0xff]
      %v6835 = vld [vmem:[%s2648 + $0x79] sm:$0xff]
      %v6836 = vld [vmem:[%s2648 + $0x81] sm:$0xff]
      %v6837 = vld [vmem:[%s2648 + $0x91] sm:$0xff]
      %v6838 = vld [vmem:[%s2648 + $0x99] sm:$0xff]
      %v6839 = vld [vmem:[%s2648 + $0xa9] sm:$0xff]
      %v6840 = vld [vmem:[%s2648 + $0xb1] sm:$0xff]
      %v6841 = vld [vmem:[%s2648 + $0xc1] sm:$0xff]
      %v6842 = vld [vmem:[%s2648 + $0xc9] sm:$0xff]
      %v6843 = vld [vmem:[%s2648 + $0xd9] sm:$0xff]
      %v6844 = vld [vmem:[%s2648 + $0xe1] sm:$0xff]
      %v6845 = vld [vmem:[%s2648 + $0xf1] sm:$0xff]
      %v6846 = vld [vmem:[%s2648 + $0xf9] sm:$0xff]
      %v6847 = vld [vmem:[%s2648 + $0x109] sm:$0xff]
      %v6848 = vld [vmem:[%s2648 + $0x111] sm:$0xff]
      %v6849 = vld [vmem:[%s2648 + $0x121] sm:$0xff]
      %v6850 = vld [vmem:[%s2648 + $0x129] sm:$0xff]
      %v6851 = vld [vmem:[%s2648 + $0x139] sm:$0xff]
      %v6852 = vld [vmem:[%s2648 + $0x141] sm:$0xff]
      %v6853 = vld [vmem:[%s2648 + $0x151] sm:$0xff]
      %v6854 = vld [vmem:[%s2648 + $0x159] sm:$0xff]
      %v6855 = vld [vmem:[%s2648 + $0x169] sm:$0xff]
      %v6856 = vld [vmem:[%s2648 + $0x171] sm:$0xff]
      %s6857 = scalar_lea.vmem %s3, 28
      %v6858 = vld [vmem:[%s6857] sm:$0xf]
      %v6860 = vsel %vm225, %v6825, 0
      %v6863 = vsel %vm225, %v6826, 0
      %v6866 = vsel %vm225, %v6827, 0
      %v6869 = vsel %vm225, %v6828, 0
      %v6872 = vsel %vm225, %v6829, 0
      %v6875 = vsel %vm225, %v6830, 0
      %v6878 = vsel %vm225, %v6831, 0
      %v6881 = vsel %vm225, %v6832, 0
      %v6884 = vsel %vm225, %v6833, 0
      %v6887 = vsel %vm225, %v6834, 0
      %v6890 = vsel %vm225, %v6835, 0
      %v6893 = vsel %vm225, %v6836, 0
      %v6896 = vsel %vm225, %v6837, 0
      %v6899 = vsel %vm225, %v6838, 0
      %v6902 = vsel %vm225, %v6839, 0
      %v6905 = vsel %vm225, %v6840, 0
      %v6908 = vsel %vm225, %v6841, 0
      %v6911 = vsel %vm225, %v6842, 0
      %v6914 = vsel %vm225, %v6843, 0
      %v6917 = vsel %vm225, %v6844, 0
      %v6920 = vsel %vm225, %v6845, 0
      %v6923 = vsel %vm225, %v6846, 0
      %v6926 = vsel %vm225, %v6847, 0
      %v6929 = vsel %vm225, %v6848, 0
      %v6932 = vsel %vm225, %v6849, 0
      %v6935 = vsel %vm225, %v6850, 0
      %v6938 = vsel %vm225, %v6851, 0
      %v6941 = vsel %vm225, %v6852, 0
      %v6944 = vsel %vm225, %v6853, 0
      %v6947 = vsel %vm225, %v6854, 0
      %v6950 = vsel %vm225, %v6855, 0
      %v6953 = vsel %vm225, %v6856, 0
      %v6956 = vsel %vm535, %v6858, 0
      %6958 = vmatprep.subr.mxu0 0.0
      %6959 = vmatpush1.msra.mxu0 0.0
      %6960 = vmatprep.subr.mxu0 0.0
      %6961 = vmatpush1.msra.mxu0 0.0
      %6962 = vmatprep.subr.mxu0 0.0
      %6963 = vmatpush1.msra.mxu0 0.0
      %6964 = vmatprep.subr.mxu0 0.0
      %6965 = vmatpush1.msra.mxu0 0.0
      %6966 = vmatprep.subr.mxu0 0.0
      %6967 = vmatpush1.msra.mxu0 0.0
      %6968 = vmatprep.subr.mxu0 0.0
      %6969 = vmatpush1.msra.mxu0 0.0
      %6970 = vmatprep.subr.mxu0 0.0
      %6971 = vmatpush1.msra.mxu0 0.0
      %6972 = vmatprep.subr.mxu0 0.0
      %6973 = vmatpush1.msra.mxu0 0.0
      %6974 = vmatprep.subr.mxu0 0.0
      %6975 = vmatpush1.msra.mxu0 0.0
      %6976 = vmatprep.subr.mxu0 0.0
      %6977 = vmatpush1.msra.mxu0 0.0
      %6978 = vmatprep.subr.mxu0 0.0
      %6979 = vmatpush1.msra.mxu0 0.0
      %6980 = vmatprep.subr.mxu0 0.0
      %6981 = vmatpush1.msra.mxu0 0.0
      %6982 = vmatprep.subr.mxu0 0.0
      %6983 = vmatpush1.msra.mxu0 0.0
      %6984 = vmatprep.subr.mxu0 0.0
      %6985 = vmatpush1.msra.mxu0 0.0
      %6986 = vmatprep.subr.mxu0 0.0
      %6987 = vmatpush1.msra.mxu0 0.0
      %6988 = vmatprep.subr.mxu0 0.0
      %6989 = vmatpush1.msra.mxu0 %v6956
      %6990 = vmatprep.subr.mxu0 0.0
      %6991 = vmatpush2.msra.mxu0 0.0
      %6992 = vmatprep.subr.mxu0 0.0
      %6993 = vmatpush2.msra.mxu0 0.0
      %6994 = vmatprep.subr.mxu0 0.0
      %6995 = vmatpush2.msra.mxu0 0.0
      %6996 = vmatprep.subr.mxu0 0.0
      %6997 = vmatpush2.msra.mxu0 0.0
      %6998 = vmatprep.subr.mxu0 0.0
      %6999 = vmatpush2.msra.mxu0 0.0
      %7000 = vmatprep.subr.mxu0 0.0
      %7001 = vmatpush2.msra.mxu0 0.0
      %7002 = vmatprep.subr.mxu0 0.0
      %7003 = vmatpush2.msra.mxu0 0.0
      %7004 = vmatprep.subr.mxu0 0.0
      %7005 = vmatpush2.msra.mxu0 0.0
      %7006 = vmatprep.subr.mxu0 0.0
      %7007 = vmatpush2.msra.mxu0 0.0
      %7008 = vmatprep.subr.mxu0 0.0
      %7009 = vmatpush2.msra.mxu0 0.0
      %7010 = vmatprep.subr.mxu0 0.0
      %7011 = vmatpush2.msra.mxu0 0.0
      %7012 = vmatprep.subr.mxu0 0.0
      %7013 = vmatpush2.msra.mxu0 0.0
      %7014 = vmatprep.subr.mxu0 0.0
      %7015 = vmatpush2.msra.mxu0 0.0
      %7016 = vmatprep.subr.mxu0 0.0
      %7017 = vmatpush2.msra.mxu0 0.0
      %7018 = vmatprep.subr.mxu0 0.0
      %7019 = vmatpush2.msra.mxu0 0.0
      %7020 = vmatprep.subr.mxu0 0.0
      %7021 = vmatpush2.msra.mxu0 0.0
      %7022 = vmatprep.mubr.f32.mxu0 0.0
      %7023 = vmatmul.mubr.f32.gmra.mxu0 %v6860
      %v7024 = vpop.f32.mrf.mxu0
      %v7025 = vadd.f32 0.0, %v7024
      %v7026 = vpop.f32.mrf.mxu0
      %7027 = vmatprep.mubr.f32.mxu0 0.0
      %7028 = vmatmul.mubr.f32.gmra.mxu0 %v6863
      %v7029 = vpop.f32.mrf.mxu0
      %v7030 = vadd.f32 0.0, %v7029
      %v7031 = vpop.f32.mrf.mxu0
      %7032 = vmatprep.mubr.f32.mxu0 0.0
      %7033 = vmatmul.mubr.f32.gmra.mxu0 %v6866
      %v7034 = vpop.f32.mrf.mxu0
      %v7035 = vadd.f32 0.0, %v7034
      %v7036 = vpop.f32.mrf.mxu0
      %7037 = vmatprep.mubr.f32.mxu0 0.0
      %7038 = vmatmul.mubr.f32.gmra.mxu0 %v6869
      %v7039 = vpop.f32.mrf.mxu0
      %v7040 = vadd.f32 0.0, %v7039
      %v7041 = vpop.f32.mrf.mxu0
      %7042 = vmatprep.mubr.f32.mxu0 0.0
      %7043 = vmatmul.mubr.f32.gmra.mxu0 %v6872
      %v7044 = vpop.f32.mrf.mxu0
      %v7045 = vadd.f32 0.0, %v7044
      %v7046 = vpop.f32.mrf.mxu0
      %7047 = vmatprep.mubr.f32.mxu0 0.0
      %7048 = vmatmul.mubr.f32.gmra.mxu0 %v6875
      %v7049 = vpop.f32.mrf.mxu0
      %v7050 = vadd.f32 0.0, %v7049
      %v7051 = vpop.f32.mrf.mxu0
      %7052 = vmatprep.mubr.f32.mxu0 0.0
      %7053 = vmatmul.mubr.f32.gmra.mxu0 %v6878
      %v7054 = vpop.f32.mrf.mxu0
      %v7055 = vadd.f32 0.0, %v7054
      %v7056 = vpop.f32.mrf.mxu0
      %7057 = vmatprep.mubr.f32.mxu0 0.0
      %7058 = vmatmul.mubr.f32.gmra.mxu0 %v6881
      %v7059 = vpop.f32.mrf.mxu0
      %v7060 = vadd.f32 0.0, %v7059
      %v7061 = vpop.f32.mrf.mxu0
      %7062 = vmatprep.mubr.f32.mxu0 0.0
      %7063 = vmatmul.mubr.f32.gmra.mxu0 %v6884
      %v7064 = vpop.f32.mrf.mxu0
      %v7065 = vadd.f32 0.0, %v7064
      %v7066 = vpop.f32.mrf.mxu0
      %7067 = vmatprep.mubr.f32.mxu0 0.0
      %7068 = vmatmul.mubr.f32.gmra.mxu0 %v6887
      %v7069 = vpop.f32.mrf.mxu0
      %v7070 = vadd.f32 0.0, %v7069
      %v7071 = vpop.f32.mrf.mxu0
      %7072 = vmatprep.mubr.f32.mxu0 0.0
      %7073 = vmatmul.mubr.f32.gmra.mxu0 %v6890
      %v7074 = vpop.f32.mrf.mxu0
      %v7075 = vadd.f32 0.0, %v7074
      %v7076 = vpop.f32.mrf.mxu0
      %7077 = vmatprep.mubr.f32.mxu0 0.0
      %7078 = vmatmul.mubr.f32.gmra.mxu0 %v6893
      %v7079 = vpop.f32.mrf.mxu0
      %v7080 = vadd.f32 0.0, %v7079
      %v7081 = vpop.f32.mrf.mxu0
      %7082 = vmatprep.mubr.f32.mxu0 0.0
      %7083 = vmatmul.mubr.f32.gmra.mxu0 %v6896
      %v7084 = vpop.f32.mrf.mxu0
      %v7085 = vadd.f32 0.0, %v7084
      %v7086 = vpop.f32.mrf.mxu0
      %7087 = vmatprep.mubr.f32.mxu0 0.0
      %7088 = vmatmul.mubr.f32.gmra.mxu0 %v6899
      %v7089 = vpop.f32.mrf.mxu0
      %v7090 = vadd.f32 0.0, %v7089
      %v7091 = vpop.f32.mrf.mxu0
      %7092 = vmatprep.mubr.f32.mxu0 0.0
      %7093 = vmatmul.mubr.f32.gmra.mxu0 %v6902
      %v7094 = vpop.f32.mrf.mxu0
      %v7095 = vadd.f32 0.0, %v7094
      %v7096 = vpop.f32.mrf.mxu0
      %7097 = vmatprep.mubr.f32.mxu0 0.0
      %7098 = vmatmul.mubr.f32.gmra.mxu0 %v6905
      %v7099 = vpop.f32.mrf.mxu0
      %v7100 = vadd.f32 0.0, %v7099
      %v7101 = vpop.f32.mrf.mxu0
      %7102 = vmatprep.mubr.f32.mxu0 0.0
      %7103 = vmatmul.mubr.f32.gmra.mxu0 %v6908
      %v7104 = vpop.f32.mrf.mxu0
      %v7105 = vadd.f32 0.0, %v7104
      %v7106 = vpop.f32.mrf.mxu0
      %7107 = vmatprep.mubr.f32.mxu0 0.0
      %7108 = vmatmul.mubr.f32.gmra.mxu0 %v6911
      %v7109 = vpop.f32.mrf.mxu0
      %v7110 = vadd.f32 0.0, %v7109
      %v7111 = vpop.f32.mrf.mxu0
      %7112 = vmatprep.mubr.f32.mxu0 0.0
      %7113 = vmatmul.mubr.f32.gmra.mxu0 %v6914
      %v7114 = vpop.f32.mrf.mxu0
      %v7115 = vadd.f32 0.0, %v7114
      %v7116 = vpop.f32.mrf.mxu0
      %7117 = vmatprep.mubr.f32.mxu0 0.0
      %7118 = vmatmul.mubr.f32.gmra.mxu0 %v6917
      %v7119 = vpop.f32.mrf.mxu0
      %v7120 = vadd.f32 0.0, %v7119
      %v7121 = vpop.f32.mrf.mxu0
      %7122 = vmatprep.mubr.f32.mxu0 0.0
      %7123 = vmatmul.mubr.f32.gmra.mxu0 %v6920
      %v7124 = vpop.f32.mrf.mxu0
      %v7125 = vadd.f32 0.0, %v7124
      %v7126 = vpop.f32.mrf.mxu0
      %7127 = vmatprep.mubr.f32.mxu0 0.0
      %7128 = vmatmul.mubr.f32.gmra.mxu0 %v6923
      %v7129 = vpop.f32.mrf.mxu0
      %v7130 = vadd.f32 0.0, %v7129
      %v7131 = vpop.f32.mrf.mxu0
      %7132 = vmatprep.mubr.f32.mxu0 0.0
      %7133 = vmatmul.mubr.f32.gmra.mxu0 %v6926
      %v7134 = vpop.f32.mrf.mxu0
      %v7135 = vadd.f32 0.0, %v7134
      %v7136 = vpop.f32.mrf.mxu0
      %7137 = vmatprep.mubr.f32.mxu0 0.0
      %7138 = vmatmul.mubr.f32.gmra.mxu0 %v6929
      %v7139 = vpop.f32.mrf.mxu0
      %v7140 = vadd.f32 0.0, %v7139
      %v7141 = vpop.f32.mrf.mxu0
      %7142 = vmatprep.mubr.f32.mxu0 0.0
      %7143 = vmatmul.mubr.f32.gmra.mxu0 %v6932
      %v7144 = vpop.f32.mrf.mxu0
      %v7145 = vadd.f32 0.0, %v7144
      %v7146 = vpop.f32.mrf.mxu0
      %7147 = vmatprep.mubr.f32.mxu0 0.0
      %7148 = vmatmul.mubr.f32.gmra.mxu0 %v6935
      %v7149 = vpop.f32.mrf.mxu0
      %v7150 = vadd.f32 0.0, %v7149
      %v7151 = vpop.f32.mrf.mxu0
      %7152 = vmatprep.mubr.f32.mxu0 0.0
      %7153 = vmatmul.mubr.f32.gmra.mxu0 %v6938
      %v7154 = vpop.f32.mrf.mxu0
      %v7155 = vadd.f32 0.0, %v7154
      %v7156 = vpop.f32.mrf.mxu0
      %7157 = vmatprep.mubr.f32.mxu0 0.0
      %7158 = vmatmul.mubr.f32.gmra.mxu0 %v6941
      %v7159 = vpop.f32.mrf.mxu0
      %v7160 = vadd.f32 0.0, %v7159
      %v7161 = vpop.f32.mrf.mxu0
      %7162 = vmatprep.mubr.f32.mxu0 0.0
      %7163 = vmatmul.mubr.f32.gmra.mxu0 %v6944
      %v7164 = vpop.f32.mrf.mxu0
      %v7165 = vadd.f32 0.0, %v7164
      %v7166 = vpop.f32.mrf.mxu0
      %7167 = vmatprep.mubr.f32.mxu0 0.0
      %7168 = vmatmul.mubr.f32.gmra.mxu0 %v6947
      %v7169 = vpop.f32.mrf.mxu0
      %v7170 = vadd.f32 0.0, %v7169
      %v7171 = vpop.f32.mrf.mxu0
      %7172 = vmatprep.mubr.f32.mxu0 0.0
      %7173 = vmatmul.mubr.f32.gmra.mxu0 %v6950
      %v7174 = vpop.f32.mrf.mxu0
      %v7175 = vadd.f32 0.0, %v7174
      %v7176 = vpop.f32.mrf.mxu0
      %7177 = vmatprep.mubr.f32.mxu0 0.0
      %7178 = vmatmul.mubr.f32.gmra.mxu0 %v6953
      %v7179 = vpop.f32.mrf.mxu0
      %v7180 = vadd.f32 0.0, %v7179
      %v7181 = vpop.f32.mrf.mxu0
      %7182 = vdwg.mxu0
      %v7183 = vadd.f32 %v6793, %v7025
      %v7184 = vadd.f32 %v6794, %v7030
      %v7185 = vadd.f32 %v6795, %v7035
      %v7186 = vadd.f32 %v6796, %v7040
      %v7187 = vadd.f32 %v6797, %v7045
      %v7188 = vadd.f32 %v6798, %v7050
      %v7189 = vadd.f32 %v6799, %v7055
      %v7190 = vadd.f32 %v6800, %v7060
      %v7191 = vadd.f32 %v6801, %v7065
      %v7192 = vadd.f32 %v6802, %v7070
      %v7193 = vadd.f32 %v6803, %v7075
      %v7194 = vadd.f32 %v6804, %v7080
      %v7195 = vadd.f32 %v6805, %v7085
      %v7196 = vadd.f32 %v6806, %v7090
      %v7197 = vadd.f32 %v6807, %v7095
      %v7198 = vadd.f32 %v6808, %v7100
      %v7199 = vadd.f32 %v6809, %v7105
      %v7200 = vadd.f32 %v6810, %v7110
      %v7201 = vadd.f32 %v6811, %v7115
      %v7202 = vadd.f32 %v6812, %v7120
      %v7203 = vadd.f32 %v6813, %v7125
      %v7204 = vadd.f32 %v6814, %v7130
      %v7205 = vadd.f32 %v6815, %v7135
      %v7206 = vadd.f32 %v6816, %v7140
      %v7207 = vadd.f32 %v6817, %v7145
      %v7208 = vadd.f32 %v6818, %v7150
      %v7209 = vadd.f32 %v6819, %v7155
      %v7210 = vadd.f32 %v6820, %v7160
      %v7211 = vadd.f32 %v6821, %v7165
      %v7212 = vadd.f32 %v6822, %v7170
      %v7213 = vadd.f32 %v6823, %v7175
      %v7214 = vadd.f32 %v6824, %v7180
      %v7215 = vld [vmem:[%s2648 + $0x2] sm:$0xff]
      %v7216 = vld [vmem:[%s2648 + $0xa] sm:$0xff]
      %v7217 = vld [vmem:[%s2648 + $0x1a] sm:$0xff]
      %v7218 = vld [vmem:[%s2648 + $0x22] sm:$0xff]
      %v7219 = vld [vmem:[%s2648 + $0x32] sm:$0xff]
      %v7220 = vld [vmem:[%s2648 + $0x3a] sm:$0xff]
      %v7221 = vld [vmem:[%s2648 + $0x4a] sm:$0xff]
      %v7222 = vld [vmem:[%s2648 + $0x52] sm:$0xff]
      %v7223 = vld [vmem:[%s2648 + $0x62] sm:$0xff]
      %v7224 = vld [vmem:[%s2648 + $0x6a] sm:$0xff]
      %v7225 = vld [vmem:[%s2648 + $0x7a] sm:$0xff]
      %v7226 = vld [vmem:[%s2648 + $0x82] sm:$0xff]
      %v7227 = vld [vmem:[%s2648 + $0x92] sm:$0xff]
      %v7228 = vld [vmem:[%s2648 + $0x9a] sm:$0xff]
      %v7229 = vld [vmem:[%s2648 + $0xaa] sm:$0xff]
      %v7230 = vld [vmem:[%s2648 + $0xb2] sm:$0xff]
      %v7231 = vld [vmem:[%s2648 + $0xc2] sm:$0xff]
      %v7232 = vld [vmem:[%s2648 + $0xca] sm:$0xff]
      %v7233 = vld [vmem:[%s2648 + $0xda] sm:$0xff]
      %v7234 = vld [vmem:[%s2648 + $0xe2] sm:$0xff]
      %v7235 = vld [vmem:[%s2648 + $0xf2] sm:$0xff]
      %v7236 = vld [vmem:[%s2648 + $0xfa] sm:$0xff]
      %v7237 = vld [vmem:[%s2648 + $0x10a] sm:$0xff]
      %v7238 = vld [vmem:[%s2648 + $0x112] sm:$0xff]
      %v7239 = vld [vmem:[%s2648 + $0x122] sm:$0xff]
      %v7240 = vld [vmem:[%s2648 + $0x12a] sm:$0xff]
      %v7241 = vld [vmem:[%s2648 + $0x13a] sm:$0xff]
      %v7242 = vld [vmem:[%s2648 + $0x142] sm:$0xff]
      %v7243 = vld [vmem:[%s2648 + $0x152] sm:$0xff]
      %v7244 = vld [vmem:[%s2648 + $0x15a] sm:$0xff]
      %v7245 = vld [vmem:[%s2648 + $0x16a] sm:$0xff]
      %v7246 = vld [vmem:[%s2648 + $0x172] sm:$0xff]
      %s7247 = scalar_lea.vmem %s3, 32
      %v7248 = vld [vmem:[%s7247] sm:$0xf]
      %v7250 = vsel %vm225, %v7215, 0
      %v7253 = vsel %vm225, %v7216, 0
      %v7256 = vsel %vm225, %v7217, 0
      %v7259 = vsel %vm225, %v7218, 0
      %v7262 = vsel %vm225, %v7219, 0
      %v7265 = vsel %vm225, %v7220, 0
      %v7268 = vsel %vm225, %v7221, 0
      %v7271 = vsel %vm225, %v7222, 0
      %v7274 = vsel %vm225, %v7223, 0
      %v7277 = vsel %vm225, %v7224, 0
      %v7280 = vsel %vm225, %v7225, 0
      %v7283 = vsel %vm225, %v7226, 0
      %v7286 = vsel %vm225, %v7227, 0
      %v7289 = vsel %vm225, %v7228, 0
      %v7292 = vsel %vm225, %v7229, 0
      %v7295 = vsel %vm225, %v7230, 0
      %v7298 = vsel %vm225, %v7231, 0
      %v7301 = vsel %vm225, %v7232, 0
      %v7304 = vsel %vm225, %v7233, 0
      %v7307 = vsel %vm225, %v7234, 0
      %v7310 = vsel %vm225, %v7235, 0
      %v7313 = vsel %vm225, %v7236, 0
      %v7316 = vsel %vm225, %v7237, 0
      %v7319 = vsel %vm225, %v7238, 0
      %v7322 = vsel %vm225, %v7239, 0
      %v7325 = vsel %vm225, %v7240, 0
      %v7328 = vsel %vm225, %v7241, 0
      %v7331 = vsel %vm225, %v7242, 0
      %v7334 = vsel %vm225, %v7243, 0
      %v7337 = vsel %vm225, %v7244, 0
      %v7340 = vsel %vm225, %v7245, 0
      %v7343 = vsel %vm225, %v7246, 0
      %v7346 = vsel %vm535, %v7248, 0
      %7348 = vmatprep.subr.mxu0 0.0
      %7349 = vmatpush1.msra.mxu0 0.0
      %7350 = vmatprep.subr.mxu0 0.0
      %7351 = vmatpush1.msra.mxu0 0.0
      %7352 = vmatprep.subr.mxu0 0.0
      %7353 = vmatpush1.msra.mxu0 0.0
      %7354 = vmatprep.subr.mxu0 0.0
      %7355 = vmatpush1.msra.mxu0 0.0
      %7356 = vmatprep.subr.mxu0 0.0
      %7357 = vmatpush1.msra.mxu0 0.0
      %7358 = vmatprep.subr.mxu0 0.0
      %7359 = vmatpush1.msra.mxu0 0.0
      %7360 = vmatprep.subr.mxu0 0.0
      %7361 = vmatpush1.msra.mxu0 0.0
      %7362 = vmatprep.subr.mxu0 0.0
      %7363 = vmatpush1.msra.mxu0 0.0
      %7364 = vmatprep.subr.mxu0 0.0
      %7365 = vmatpush1.msra.mxu0 0.0
      %7366 = vmatprep.subr.mxu0 0.0
      %7367 = vmatpush1.msra.mxu0 0.0
      %7368 = vmatprep.subr.mxu0 0.0
      %7369 = vmatpush1.msra.mxu0 0.0
      %7370 = vmatprep.subr.mxu0 0.0
      %7371 = vmatpush1.msra.mxu0 0.0
      %7372 = vmatprep.subr.mxu0 0.0
      %7373 = vmatpush1.msra.mxu0 0.0
      %7374 = vmatprep.subr.mxu0 0.0
      %7375 = vmatpush1.msra.mxu0 0.0
      %7376 = vmatprep.subr.mxu0 0.0
      %7377 = vmatpush1.msra.mxu0 0.0
      %7378 = vmatprep.subr.mxu0 0.0
      %7379 = vmatpush1.msra.mxu0 %v7346
      %7380 = vmatprep.subr.mxu0 0.0
      %7381 = vmatpush2.msra.mxu0 0.0
      %7382 = vmatprep.subr.mxu0 0.0
      %7383 = vmatpush2.msra.mxu0 0.0
      %7384 = vmatprep.subr.mxu0 0.0
      %7385 = vmatpush2.msra.mxu0 0.0
      %7386 = vmatprep.subr.mxu0 0.0
      %7387 = vmatpush2.msra.mxu0 0.0
      %7388 = vmatprep.subr.mxu0 0.0
      %7389 = vmatpush2.msra.mxu0 0.0
      %7390 = vmatprep.subr.mxu0 0.0
      %7391 = vmatpush2.msra.mxu0 0.0
      %7392 = vmatprep.subr.mxu0 0.0
      %7393 = vmatpush2.msra.mxu0 0.0
      %7394 = vmatprep.subr.mxu0 0.0
      %7395 = vmatpush2.msra.mxu0 0.0
      %7396 = vmatprep.subr.mxu0 0.0
      %7397 = vmatpush2.msra.mxu0 0.0
      %7398 = vmatprep.subr.mxu0 0.0
      %7399 = vmatpush2.msra.mxu0 0.0
      %7400 = vmatprep.subr.mxu0 0.0
      %7401 = vmatpush2.msra.mxu0 0.0
      %7402 = vmatprep.subr.mxu0 0.0
      %7403 = vmatpush2.msra.mxu0 0.0
      %7404 = vmatprep.subr.mxu0 0.0
      %7405 = vmatpush2.msra.mxu0 0.0
      %7406 = vmatprep.subr.mxu0 0.0
      %7407 = vmatpush2.msra.mxu0 0.0
      %7408 = vmatprep.subr.mxu0 0.0
      %7409 = vmatpush2.msra.mxu0 0.0
      %7410 = vmatprep.subr.mxu0 0.0
      %7411 = vmatpush2.msra.mxu0 0.0
      %7412 = vmatprep.mubr.f32.mxu0 0.0
      %7413 = vmatmul.mubr.f32.gmra.mxu0 %v7250
      %v7414 = vpop.f32.mrf.mxu0
      %v7415 = vadd.f32 0.0, %v7414
      %v7416 = vpop.f32.mrf.mxu0
      %7417 = vmatprep.mubr.f32.mxu0 0.0
      %7418 = vmatmul.mubr.f32.gmra.mxu0 %v7253
      %v7419 = vpop.f32.mrf.mxu0
      %v7420 = vadd.f32 0.0, %v7419
      %v7421 = vpop.f32.mrf.mxu0
      %7422 = vmatprep.mubr.f32.mxu0 0.0
      %7423 = vmatmul.mubr.f32.gmra.mxu0 %v7256
      %v7424 = vpop.f32.mrf.mxu0
      %v7425 = vadd.f32 0.0, %v7424
      %v7426 = vpop.f32.mrf.mxu0
      %7427 = vmatprep.mubr.f32.mxu0 0.0
      %7428 = vmatmul.mubr.f32.gmra.mxu0 %v7259
      %v7429 = vpop.f32.mrf.mxu0
      %v7430 = vadd.f32 0.0, %v7429
      %v7431 = vpop.f32.mrf.mxu0
      %7432 = vmatprep.mubr.f32.mxu0 0.0
      %7433 = vmatmul.mubr.f32.gmra.mxu0 %v7262
      %v7434 = vpop.f32.mrf.mxu0
      %v7435 = vadd.f32 0.0, %v7434
      %v7436 = vpop.f32.mrf.mxu0
      %7437 = vmatprep.mubr.f32.mxu0 0.0
      %7438 = vmatmul.mubr.f32.gmra.mxu0 %v7265
      %v7439 = vpop.f32.mrf.mxu0
      %v7440 = vadd.f32 0.0, %v7439
      %v7441 = vpop.f32.mrf.mxu0
      %7442 = vmatprep.mubr.f32.mxu0 0.0
      %7443 = vmatmul.mubr.f32.gmra.mxu0 %v7268
      %v7444 = vpop.f32.mrf.mxu0
      %v7445 = vadd.f32 0.0, %v7444
      %v7446 = vpop.f32.mrf.mxu0
      %7447 = vmatprep.mubr.f32.mxu0 0.0
      %7448 = vmatmul.mubr.f32.gmra.mxu0 %v7271
      %v7449 = vpop.f32.mrf.mxu0
      %v7450 = vadd.f32 0.0, %v7449
      %v7451 = vpop.f32.mrf.mxu0
      %7452 = vmatprep.mubr.f32.mxu0 0.0
      %7453 = vmatmul.mubr.f32.gmra.mxu0 %v7274
      %v7454 = vpop.f32.mrf.mxu0
      %v7455 = vadd.f32 0.0, %v7454
      %v7456 = vpop.f32.mrf.mxu0
      %7457 = vmatprep.mubr.f32.mxu0 0.0
      %7458 = vmatmul.mubr.f32.gmra.mxu0 %v7277
      %v7459 = vpop.f32.mrf.mxu0
      %v7460 = vadd.f32 0.0, %v7459
      %v7461 = vpop.f32.mrf.mxu0
      %7462 = vmatprep.mubr.f32.mxu0 0.0
      %7463 = vmatmul.mubr.f32.gmra.mxu0 %v7280
      %v7464 = vpop.f32.mrf.mxu0
      %v7465 = vadd.f32 0.0, %v7464
      %v7466 = vpop.f32.mrf.mxu0
      %7467 = vmatprep.mubr.f32.mxu0 0.0
      %7468 = vmatmul.mubr.f32.gmra.mxu0 %v7283
      %v7469 = vpop.f32.mrf.mxu0
      %v7470 = vadd.f32 0.0, %v7469
      %v7471 = vpop.f32.mrf.mxu0
      %7472 = vmatprep.mubr.f32.mxu0 0.0
      %7473 = vmatmul.mubr.f32.gmra.mxu0 %v7286
      %v7474 = vpop.f32.mrf.mxu0
      %v7475 = vadd.f32 0.0, %v7474
      %v7476 = vpop.f32.mrf.mxu0
      %7477 = vmatprep.mubr.f32.mxu0 0.0
      %7478 = vmatmul.mubr.f32.gmra.mxu0 %v7289
      %v7479 = vpop.f32.mrf.mxu0
      %v7480 = vadd.f32 0.0, %v7479
      %v7481 = vpop.f32.mrf.mxu0
      %7482 = vmatprep.mubr.f32.mxu0 0.0
      %7483 = vmatmul.mubr.f32.gmra.mxu0 %v7292
      %v7484 = vpop.f32.mrf.mxu0
      %v7485 = vadd.f32 0.0, %v7484
      %v7486 = vpop.f32.mrf.mxu0
      %7487 = vmatprep.mubr.f32.mxu0 0.0
      %7488 = vmatmul.mubr.f32.gmra.mxu0 %v7295
      %v7489 = vpop.f32.mrf.mxu0
      %v7490 = vadd.f32 0.0, %v7489
      %v7491 = vpop.f32.mrf.mxu0
      %7492 = vmatprep.mubr.f32.mxu0 0.0
      %7493 = vmatmul.mubr.f32.gmra.mxu0 %v7298
      %v7494 = vpop.f32.mrf.mxu0
      %v7495 = vadd.f32 0.0, %v7494
      %v7496 = vpop.f32.mrf.mxu0
      %7497 = vmatprep.mubr.f32.mxu0 0.0
      %7498 = vmatmul.mubr.f32.gmra.mxu0 %v7301
      %v7499 = vpop.f32.mrf.mxu0
      %v7500 = vadd.f32 0.0, %v7499
      %v7501 = vpop.f32.mrf.mxu0
      %7502 = vmatprep.mubr.f32.mxu0 0.0
      %7503 = vmatmul.mubr.f32.gmra.mxu0 %v7304
      %v7504 = vpop.f32.mrf.mxu0
      %v7505 = vadd.f32 0.0, %v7504
      %v7506 = vpop.f32.mrf.mxu0
      %7507 = vmatprep.mubr.f32.mxu0 0.0
      %7508 = vmatmul.mubr.f32.gmra.mxu0 %v7307
      %v7509 = vpop.f32.mrf.mxu0
      %v7510 = vadd.f32 0.0, %v7509
      %v7511 = vpop.f32.mrf.mxu0
      %7512 = vmatprep.mubr.f32.mxu0 0.0
      %7513 = vmatmul.mubr.f32.gmra.mxu0 %v7310
      %v7514 = vpop.f32.mrf.mxu0
      %v7515 = vadd.f32 0.0, %v7514
      %v7516 = vpop.f32.mrf.mxu0
      %7517 = vmatprep.mubr.f32.mxu0 0.0
      %7518 = vmatmul.mubr.f32.gmra.mxu0 %v7313
      %v7519 = vpop.f32.mrf.mxu0
      %v7520 = vadd.f32 0.0, %v7519
      %v7521 = vpop.f32.mrf.mxu0
      %7522 = vmatprep.mubr.f32.mxu0 0.0
      %7523 = vmatmul.mubr.f32.gmra.mxu0 %v7316
      %v7524 = vpop.f32.mrf.mxu0
      %v7525 = vadd.f32 0.0, %v7524
      %v7526 = vpop.f32.mrf.mxu0
      %7527 = vmatprep.mubr.f32.mxu0 0.0
      %7528 = vmatmul.mubr.f32.gmra.mxu0 %v7319
      %v7529 = vpop.f32.mrf.mxu0
      %v7530 = vadd.f32 0.0, %v7529
      %v7531 = vpop.f32.mrf.mxu0
      %7532 = vmatprep.mubr.f32.mxu0 0.0
      %7533 = vmatmul.mubr.f32.gmra.mxu0 %v7322
      %v7534 = vpop.f32.mrf.mxu0
      %v7535 = vadd.f32 0.0, %v7534
      %v7536 = vpop.f32.mrf.mxu0
      %7537 = vmatprep.mubr.f32.mxu0 0.0
      %7538 = vmatmul.mubr.f32.gmra.mxu0 %v7325
      %v7539 = vpop.f32.mrf.mxu0
      %v7540 = vadd.f32 0.0, %v7539
      %v7541 = vpop.f32.mrf.mxu0
      %7542 = vmatprep.mubr.f32.mxu0 0.0
      %7543 = vmatmul.mubr.f32.gmra.mxu0 %v7328
      %v7544 = vpop.f32.mrf.mxu0
      %v7545 = vadd.f32 0.0, %v7544
      %v7546 = vpop.f32.mrf.mxu0
      %7547 = vmatprep.mubr.f32.mxu0 0.0
      %7548 = vmatmul.mubr.f32.gmra.mxu0 %v7331
      %v7549 = vpop.f32.mrf.mxu0
      %v7550 = vadd.f32 0.0, %v7549
      %v7551 = vpop.f32.mrf.mxu0
      %7552 = vmatprep.mubr.f32.mxu0 0.0
      %7553 = vmatmul.mubr.f32.gmra.mxu0 %v7334
      %v7554 = vpop.f32.mrf.mxu0
      %v7555 = vadd.f32 0.0, %v7554
      %v7556 = vpop.f32.mrf.mxu0
      %7557 = vmatprep.mubr.f32.mxu0 0.0
      %7558 = vmatmul.mubr.f32.gmra.mxu0 %v7337
      %v7559 = vpop.f32.mrf.mxu0
      %v7560 = vadd.f32 0.0, %v7559
      %v7561 = vpop.f32.mrf.mxu0
      %7562 = vmatprep.mubr.f32.mxu0 0.0
      %7563 = vmatmul.mubr.f32.gmra.mxu0 %v7340
      %v7564 = vpop.f32.mrf.mxu0
      %v7565 = vadd.f32 0.0, %v7564
      %v7566 = vpop.f32.mrf.mxu0
      %7567 = vmatprep.mubr.f32.mxu0 0.0
      %7568 = vmatmul.mubr.f32.gmra.mxu0 %v7343
      %v7569 = vpop.f32.mrf.mxu0
      %v7570 = vadd.f32 0.0, %v7569
      %v7571 = vpop.f32.mrf.mxu0
      %7572 = vdwg.mxu0
      %v7573 = vadd.f32 %v7183, %v7415
      %v7574 = vadd.f32 %v7184, %v7420
      %v7575 = vadd.f32 %v7185, %v7425
      %v7576 = vadd.f32 %v7186, %v7430
      %v7577 = vadd.f32 %v7187, %v7435
      %v7578 = vadd.f32 %v7188, %v7440
      %v7579 = vadd.f32 %v7189, %v7445
      %v7580 = vadd.f32 %v7190, %v7450
      %v7581 = vadd.f32 %v7191, %v7455
      %v7582 = vadd.f32 %v7192, %v7460
      %v7583 = vadd.f32 %v7193, %v7465
      %v7584 = vadd.f32 %v7194, %v7470
      %v7585 = vadd.f32 %v7195, %v7475
      %v7586 = vadd.f32 %v7196, %v7480
      %v7587 = vadd.f32 %v7197, %v7485
      %v7588 = vadd.f32 %v7198, %v7490
      %v7589 = vadd.f32 %v7199, %v7495
      %v7590 = vadd.f32 %v7200, %v7500
      %v7591 = vadd.f32 %v7201, %v7505
      %v7592 = vadd.f32 %v7202, %v7510
      %v7593 = vadd.f32 %v7203, %v7515
      %v7594 = vadd.f32 %v7204, %v7520
      %v7595 = vadd.f32 %v7205, %v7525
      %v7596 = vadd.f32 %v7206, %v7530
      %v7597 = vadd.f32 %v7207, %v7535
      %v7598 = vadd.f32 %v7208, %v7540
      %v7599 = vadd.f32 %v7209, %v7545
      %v7600 = vadd.f32 %v7210, %v7550
      %v7601 = vadd.f32 %v7211, %v7555
      %v7602 = vadd.f32 %v7212, %v7560
      %v7603 = vadd.f32 %v7213, %v7565
      %v7604 = vadd.f32 %v7214, %v7570
      %v7605 = vld [vmem:[%s4] sm:$0x1]
      %v7607 = vlaneseq
      %v7608 = vshrl.u32 %v7607, 7
      %v7609 = vsub.s32 0, %v7608
      %v7610 = vrot.slane %v7605, %v7609
      %v7612 = vadd.f32 %v7573, %v7610
      %v7613 = vadd.f32 %v7574, %v7610
      %v7614 = vadd.f32 %v7575, %v7610
      %v7615 = vadd.f32 %v7576, %v7610
      %v7616 = vadd.f32 %v7577, %v7610
      %v7617 = vadd.f32 %v7578, %v7610
      %v7618 = vadd.f32 %v7579, %v7610
      %v7619 = vadd.f32 %v7580, %v7610
      %v7620 = vadd.f32 %v7581, %v7610
      %v7621 = vadd.f32 %v7582, %v7610
      %v7622 = vadd.f32 %v7583, %v7610
      %v7623 = vadd.f32 %v7584, %v7610
      %v7624 = vadd.f32 %v7585, %v7610
      %v7625 = vadd.f32 %v7586, %v7610
      %v7626 = vadd.f32 %v7587, %v7610
      %v7627 = vadd.f32 %v7588, %v7610
      %v7628 = vadd.f32 %v7589, %v7610
      %v7629 = vadd.f32 %v7590, %v7610
      %v7630 = vadd.f32 %v7591, %v7610
      %v7631 = vadd.f32 %v7592, %v7610
      %v7632 = vadd.f32 %v7593, %v7610
      %v7633 = vadd.f32 %v7594, %v7610
      %v7634 = vadd.f32 %v7595, %v7610
      %v7635 = vadd.f32 %v7596, %v7610
      %v7636 = vadd.f32 %v7597, %v7610
      %v7637 = vadd.f32 %v7598, %v7610
      %v7638 = vadd.f32 %v7599, %v7610
      %v7639 = vadd.f32 %v7600, %v7610
      %v7640 = vadd.f32 %v7601, %v7610
      %v7641 = vadd.f32 %v7602, %v7610
      %v7642 = vadd.f32 %v7603, %v7610
      %v7643 = vadd.f32 %v7604, %v7610
      %v7644 = vsel %vm225, %v7612, 0.0
      %v7645 = vsel %vm225, %v7613, 0.0
      %v7646 = vadd.f32 %v7644, %v7645
      %v7647 = vsel %vm225, %v7614, 0.0
      %v7648 = vadd.f32 %v7646, %v7647
      %v7649 = vsel %vm225, %v7615, 0.0
      %v7650 = vadd.f32 %v7648, %v7649
      %v7651 = vsel %vm225, %v7616, 0.0
      %v7652 = vadd.f32 %v7650, %v7651
      %v7653 = vsel %vm225, %v7617, 0.0
      %v7654 = vadd.f32 %v7652, %v7653
      %v7655 = vsel %vm225, %v7618, 0.0
      %v7656 = vadd.f32 %v7654, %v7655
      %v7657 = vsel %vm225, %v7619, 0.0
      %v7658 = vadd.f32 %v7656, %v7657
      %v7659 = vsel %vm225, %v7620, 0.0
      %v7660 = vadd.f32 %v7658, %v7659
      %v7661 = vsel %vm225, %v7621, 0.0
      %v7662 = vadd.f32 %v7660, %v7661
      %v7663 = vsel %vm225, %v7622, 0.0
      %v7664 = vadd.f32 %v7662, %v7663
      %v7665 = vsel %vm225, %v7623, 0.0
      %v7666 = vadd.f32 %v7664, %v7665
      %v7667 = vsel %vm225, %v7624, 0.0
      %v7668 = vadd.f32 %v7666, %v7667
      %v7669 = vsel %vm225, %v7625, 0.0
      %v7670 = vadd.f32 %v7668, %v7669
      %v7671 = vsel %vm225, %v7626, 0.0
      %v7672 = vadd.f32 %v7670, %v7671
      %v7673 = vsel %vm225, %v7627, 0.0
      %v7674 = vadd.f32 %v7672, %v7673
      %v7675 = vsel %vm225, %v7628, 0.0
      %v7676 = vadd.f32 %v7674, %v7675
      %v7677 = vsel %vm225, %v7629, 0.0
      %v7678 = vadd.f32 %v7676, %v7677
      %v7679 = vsel %vm225, %v7630, 0.0
      %v7680 = vadd.f32 %v7678, %v7679
      %v7681 = vsel %vm225, %v7631, 0.0
      %v7682 = vadd.f32 %v7680, %v7681
      %v7683 = vsel %vm225, %v7632, 0.0
      %v7684 = vadd.f32 %v7682, %v7683
      %v7685 = vsel %vm225, %v7633, 0.0
      %v7686 = vadd.f32 %v7684, %v7685
      %v7687 = vsel %vm225, %v7634, 0.0
      %v7688 = vadd.f32 %v7686, %v7687
      %v7689 = vsel %vm225, %v7635, 0.0
      %v7690 = vadd.f32 %v7688, %v7689
      %v7691 = vsel %vm225, %v7636, 0.0
      %v7692 = vadd.f32 %v7690, %v7691
      %v7693 = vsel %vm225, %v7637, 0.0
      %v7694 = vadd.f32 %v7692, %v7693
      %v7695 = vsel %vm225, %v7638, 0.0
      %v7696 = vadd.f32 %v7694, %v7695
      %v7697 = vsel %vm225, %v7639, 0.0
      %v7698 = vadd.f32 %v7696, %v7697
      %v7699 = vsel %vm225, %v7640, 0.0
      %v7700 = vadd.f32 %v7698, %v7699
      %v7701 = vsel %vm225, %v7641, 0.0
      %v7702 = vadd.f32 %v7700, %v7701
      %v7703 = vsel %vm225, %v7642, 0.0
      %v7704 = vadd.f32 %v7702, %v7703
      %v7705 = vsel %vm225, %v7643, 0.0
      %v7706 = vadd.f32 %v7704, %v7705
      %v7707 = vrot.slane %v7706, 4
      %v7708 = vadd.f32 %v7706, %v7707
      %v7709 = vrot.slane %v7708, 2
      %v7710 = vadd.f32 %v7708, %v7709
      %v7711 = vrot.slane %v7710, 1
      %v7712 = vadd.f32 %v7710, %v7711
      %v7713 = vmul.f32 %v7712, 0.00390625
      %v7714 = vsub.f32 %v7612, %v7713
      %v7715 = vsub.f32 %v7613, %v7713
      %v7716 = vsub.f32 %v7614, %v7713
      %v7717 = vsub.f32 %v7615, %v7713
      %v7718 = vsub.f32 %v7616, %v7713
      %v7719 = vsub.f32 %v7617, %v7713
      %v7720 = vsub.f32 %v7618, %v7713
      %v7721 = vsub.f32 %v7619, %v7713
      %v7722 = vsub.f32 %v7620, %v7713
      %v7723 = vsub.f32 %v7621, %v7713
      %v7724 = vsub.f32 %v7622, %v7713
      %v7725 = vsub.f32 %v7623, %v7713
      %v7726 = vsub.f32 %v7624, %v7713
      %v7727 = vsub.f32 %v7625, %v7713
      %v7728 = vsub.f32 %v7626, %v7713
      %v7729 = vsub.f32 %v7627, %v7713
      %v7730 = vsub.f32 %v7628, %v7713
      %v7731 = vsub.f32 %v7629, %v7713
      %v7732 = vsub.f32 %v7630, %v7713
      %v7733 = vsub.f32 %v7631, %v7713
      %v7734 = vsub.f32 %v7632, %v7713
      %v7735 = vsub.f32 %v7633, %v7713
      %v7736 = vsub.f32 %v7634, %v7713
      %v7737 = vsub.f32 %v7635, %v7713
      %v7738 = vsub.f32 %v7636, %v7713
      %v7739 = vsub.f32 %v7637, %v7713
      %v7740 = vsub.f32 %v7638, %v7713
      %v7741 = vsub.f32 %v7639, %v7713
      %v7742 = vsub.f32 %v7640, %v7713
      %v7743 = vsub.f32 %v7641, %v7713
      %v7744 = vsub.f32 %v7642, %v7713
      %v7745 = vsub.f32 %v7643, %v7713
      %v7746 = vmul.f32 %v7714, %v7714
      %v7747 = vmul.f32 %v7715, %v7715
      %v7748 = vmul.f32 %v7716, %v7716
      %v7749 = vmul.f32 %v7717, %v7717
      %v7750 = vmul.f32 %v7718, %v7718
      %v7751 = vmul.f32 %v7719, %v7719
      %v7752 = vmul.f32 %v7720, %v7720
      %v7753 = vmul.f32 %v7721, %v7721
      %v7754 = vmul.f32 %v7722, %v7722
      %v7755 = vmul.f32 %v7723, %v7723
      %v7756 = vmul.f32 %v7724, %v7724
      %v7757 = vmul.f32 %v7725, %v7725
      %v7758 = vmul.f32 %v7726, %v7726
      %v7759 = vmul.f32 %v7727, %v7727
      %v7760 = vmul.f32 %v7728, %v7728
      %v7761 = vmul.f32 %v7729, %v7729
      %v7762 = vmul.f32 %v7730, %v7730
      %v7763 = vmul.f32 %v7731, %v7731
      %v7764 = vmul.f32 %v7732, %v7732
      %v7765 = vmul.f32 %v7733, %v7733
      %v7766 = vmul.f32 %v7734, %v7734
      %v7767 = vmul.f32 %v7735, %v7735
      %v7768 = vmul.f32 %v7736, %v7736
      %v7769 = vmul.f32 %v7737, %v7737
      %v7770 = vmul.f32 %v7738, %v7738
      %v7771 = vmul.f32 %v7739, %v7739
      %v7772 = vmul.f32 %v7740, %v7740
      %v7773 = vmul.f32 %v7741, %v7741
      %v7774 = vmul.f32 %v7742, %v7742
      %v7775 = vmul.f32 %v7743, %v7743
      %v7776 = vmul.f32 %v7744, %v7744
      %v7777 = vmul.f32 %v7745, %v7745
      %v7778 = vsel %vm225, %v7746, 0.0
      %v7779 = vsel %vm225, %v7747, 0.0
      %v7780 = vadd.f32 %v7778, %v7779
      %v7781 = vsel %vm225, %v7748, 0.0
      %v7782 = vadd.f32 %v7780, %v7781
      %v7783 = vsel %vm225, %v7749, 0.0
      %v7784 = vadd.f32 %v7782, %v7783
      %v7785 = vsel %vm225, %v7750, 0.0
      %v7786 = vadd.f32 %v7784, %v7785
      %v7787 = vsel %vm225, %v7751, 0.0
      %v7788 = vadd.f32 %v7786, %v7787
      %v7789 = vsel %vm225, %v7752, 0.0
      %v7790 = vadd.f32 %v7788, %v7789
      %v7791 = vsel %vm225, %v7753, 0.0
      %v7792 = vadd.f32 %v7790, %v7791
      %v7793 = vsel %vm225, %v7754, 0.0
      %v7794 = vadd.f32 %v7792, %v7793
      %v7795 = vsel %vm225, %v7755, 0.0
      %v7796 = vadd.f32 %v7794, %v7795
      %v7797 = vsel %vm225, %v7756, 0.0
      %v7798 = vadd.f32 %v7796, %v7797
      %v7799 = vsel %vm225, %v7757, 0.0
      %v7800 = vadd.f32 %v7798, %v7799
      %v7801 = vsel %vm225, %v7758, 0.0
      %v7802 = vadd.f32 %v7800, %v7801
      %v7803 = vsel %vm225, %v7759, 0.0
      %v7804 = vadd.f32 %v7802, %v7803
      %v7805 = vsel %vm225, %v7760, 0.0
      %v7806 = vadd.f32 %v7804, %v7805
      %v7807 = vsel %vm225, %v7761, 0.0
      %v7808 = vadd.f32 %v7806, %v7807
      %v7809 = vsel %vm225, %v7762, 0.0
      %v7810 = vadd.f32 %v7808, %v7809
      %v7811 = vsel %vm225, %v7763, 0.0
      %v7812 = vadd.f32 %v7810, %v7811
      %v7813 = vsel %vm225, %v7764, 0.0
      %v7814 = vadd.f32 %v7812, %v7813
      %v7815 = vsel %vm225, %v7765, 0.0
      %v7816 = vadd.f32 %v7814, %v7815
      %v7817 = vsel %vm225, %v7766, 0.0
      %v7818 = vadd.f32 %v7816, %v7817
      %v7819 = vsel %vm225, %v7767, 0.0
      %v7820 = vadd.f32 %v7818, %v7819
      %v7821 = vsel %vm225, %v7768, 0.0
      %v7822 = vadd.f32 %v7820, %v7821
      %v7823 = vsel %vm225, %v7769, 0.0
      %v7824 = vadd.f32 %v7822, %v7823
      %v7825 = vsel %vm225, %v7770, 0.0
      %v7826 = vadd.f32 %v7824, %v7825
      %v7827 = vsel %vm225, %v7771, 0.0
      %v7828 = vadd.f32 %v7826, %v7827
      %v7829 = vsel %vm225, %v7772, 0.0
      %v7830 = vadd.f32 %v7828, %v7829
      %v7831 = vsel %vm225, %v7773, 0.0
      %v7832 = vadd.f32 %v7830, %v7831
      %v7833 = vsel %vm225, %v7774, 0.0
      %v7834 = vadd.f32 %v7832, %v7833
      %v7835 = vsel %vm225, %v7775, 0.0
      %v7836 = vadd.f32 %v7834, %v7835
      %v7837 = vsel %vm225, %v7776, 0.0
      %v7838 = vadd.f32 %v7836, %v7837
      %v7839 = vsel %vm225, %v7777, 0.0
      %v7840 = vadd.f32 %v7838, %v7839
      %v7841 = vrot.slane %v7840, 4
      %v7842 = vadd.f32 %v7840, %v7841
      %v7843 = vrot.slane %v7842, 2
      %v7844 = vadd.f32 %v7842, %v7843
      %v7845 = vrot.slane %v7844, 1
      %v7846 = vadd.f32 %v7844, %v7845
      %v7847 = vmul.f32 %v7846, 0.00390625
      %v7848 = vadd.f32 %v7847, 1e-05
      %v7849 = vrsqrt.pop %v7848
      %v7850 = vmul.f32 %v7714, %v7849
      %v7851 = vmul.f32 %v7715, %v7849
      %v7852 = vmul.f32 %v7716, %v7849
      %v7853 = vmul.f32 %v7717, %v7849
      %v7854 = vmul.f32 %v7718, %v7849
      %v7855 = vmul.f32 %v7719, %v7849
      %v7856 = vmul.f32 %v7720, %v7849
      %v7857 = vmul.f32 %v7721, %v7849
      %v7858 = vmul.f32 %v7722, %v7849
      %v7859 = vmul.f32 %v7723, %v7849
      %v7860 = vmul.f32 %v7724, %v7849
      %v7861 = vmul.f32 %v7725, %v7849
      %v7862 = vmul.f32 %v7726, %v7849
      %v7863 = vmul.f32 %v7727, %v7849
      %v7864 = vmul.f32 %v7728, %v7849
      %v7865 = vmul.f32 %v7729, %v7849
      %v7866 = vmul.f32 %v7730, %v7849
      %v7867 = vmul.f32 %v7731, %v7849
      %v7868 = vmul.f32 %v7732, %v7849
      %v7869 = vmul.f32 %v7733, %v7849
      %v7870 = vmul.f32 %v7734, %v7849
      %v7871 = vmul.f32 %v7735, %v7849
      %v7872 = vmul.f32 %v7736, %v7849
      %v7873 = vmul.f32 %v7737, %v7849
      %v7874 = vmul.f32 %v7738, %v7849
      %v7875 = vmul.f32 %v7739, %v7849
      %v7876 = vmul.f32 %v7740, %v7849
      %v7877 = vmul.f32 %v7741, %v7849
      %v7878 = vmul.f32 %v7742, %v7849
      %v7879 = vmul.f32 %v7743, %v7849
      %v7880 = vmul.f32 %v7744, %v7849
      %v7881 = vmul.f32 %v7745, %v7849
      %7882 = vxpose.xlu0.b32.start [1/16] %v7850, 128
      %7883 = vxpose.xlu0.b32.cont [2/16] %v7851, 128
      %7884 = vxpose.xlu0.b32.cont [3/16] %v7852, 128
      %7885 = vxpose.xlu0.b32.cont [4/16] %v7853, 128
      %7886 = vxpose.xlu0.b32.cont [5/16] %v7854, 128
      %7887 = vxpose.xlu0.b32.cont [6/16] %v7855, 128
      %7888 = vxpose.xlu0.b32.cont [7/16] %v7856, 128
      %7889 = vxpose.xlu0.b32.cont [8/16] %v7857, 128
      %7890 = vxpose.xlu0.b32.cont [9/16] %v7858, 128
      %7891 = vxpose.xlu0.b32.cont [10/16] %v7859, 128
      %7892 = vxpose.xlu0.b32.cont [11/16] %v7860, 128
      %7893 = vxpose.xlu0.b32.cont [12/16] %v7861, 128
      %7894 = vxpose.xlu0.b32.cont [13/16] %v7862, 128
      %7895 = vxpose.xlu0.b32.cont [14/16] %v7863, 128
      %7896 = vxpose.xlu0.b32.cont [15/16] %v7864, 128
      %7897 = vxpose.xlu0.b32.end [16/16] %v7865, 128
      %v7898 = vpop.trf.xlu0
      %v7899 = vpop.trf.xlu0
      %v7900 = vpop.trf.xlu0
      %v7901 = vpop.trf.xlu0
      %v7902 = vpop.trf.xlu0
      %v7903 = vpop.trf.xlu0
      %v7904 = vpop.trf.xlu0
      %v7905 = vpop.trf.xlu0
      %v7906 = vpop.trf.xlu0
      %v7907 = vpop.trf.xlu0
      %v7908 = vpop.trf.xlu0
      %v7909 = vpop.trf.xlu0
      %v7910 = vpop.trf.xlu0
      %v7911 = vpop.trf.xlu0
      %v7912 = vpop.trf.xlu0
      %v7913 = vpop.trf.xlu0
      %7914 = vxpose.xlu0.b32.start [1/16] %v7866, 128
      %7915 = vxpose.xlu0.b32.cont [2/16] %v7867, 128
      %7916 = vxpose.xlu0.b32.cont [3/16] %v7868, 128
      %7917 = vxpose.xlu0.b32.cont [4/16] %v7869, 128
      %7918 = vxpose.xlu0.b32.cont [5/16] %v7870, 128
      %7919 = vxpose.xlu0.b32.cont [6/16] %v7871, 128
      %7920 = vxpose.xlu0.b32.cont [7/16] %v7872, 128
      %7921 = vxpose.xlu0.b32.cont [8/16] %v7873, 128
      %7922 = vxpose.xlu0.b32.cont [9/16] %v7874, 128
      %7923 = vxpose.xlu0.b32.cont [10/16] %v7875, 128
      %7924 = vxpose.xlu0.b32.cont [11/16] %v7876, 128
      %7925 = vxpose.xlu0.b32.cont [12/16] %v7877, 128
      %7926 = vxpose.xlu0.b32.cont [13/16] %v7878, 128
      %7927 = vxpose.xlu0.b32.cont [14/16] %v7879, 128
      %7928 = vxpose.xlu0.b32.cont [15/16] %v7880, 128
      %7929 = vxpose.xlu0.b32.end [16/16] %v7881, 128
      %v7930 = vpop.trf.xlu0
      %v7931 = vpop.trf.xlu0
      %v7932 = vpop.trf.xlu0
      %v7933 = vpop.trf.xlu0
      %v7934 = vpop.trf.xlu0
      %v7935 = vpop.trf.xlu0
      %v7936 = vpop.trf.xlu0
      %v7937 = vpop.trf.xlu0
      %v7938 = vpop.trf.xlu0
      %v7939 = vpop.trf.xlu0
      %v7940 = vpop.trf.xlu0
      %v7941 = vpop.trf.xlu0
      %v7942 = vpop.trf.xlu0
      %v7943 = vpop.trf.xlu0
      %v7944 = vpop.trf.xlu0
      %v7945 = vpop.trf.xlu0
      %v7946 = vld [vmem:[%s219] sm:$0xff]
      %v7948 = vcombine.high %v7946, %v7946
      %v7950 = vadd.f32 %v7898, %v7946
      %v7951 = vadd.f32 %v7930, %v7948
      %v7954 = vcombine.low %v7950, %v7951
      %7956 = vst [vmem:[%s224] sm:$0xff] %v7954
      %p7957 = scmp.lt.s32.totalorder %s16, 1
      %s7958 = scalar_select %p7957, %s16, 1
      %s7959 = smul.addr %s7958, 2
      %s7960 = smul.addr %s7959, 4
      %s7961 = scalar_lea.vmem %s5, %s7960
      // Predicated region
      $region41: #{resblock_forward.1} parent=39 // pred_check
        %p7962 = pneg %p144
      $region42: #{resblock_forward.1} parent=39 // pred_check_branch
        %7964 = sbr.rel (%p7962) target = $region44
      $region43: #{resblock_forward.1} parent=39 // pred_region
        _
      $region44: #{resblock_forward.1} parent=39 // pred_fallthru
        _
    $region40: #{resblock_forward.1} parent=5 // pred_fallthru
      _
    %p7965 = scmp.le.s32.totalorder 2, %s11
    // Predicated region
    $region45: #{resblock_forward.1} parent=5 // pred_check
      %p7966 = pneg %p7965
    $region46: #{resblock_forward.1} parent=5 // pred_check_branch
      %7968 = sbr.rel (%p7966) target = $region48
    $region47: #{resblock_forward.1} parent=5 // pred_region
      %s7969 = ssub.s32 %s11, 2
      // Predicated region
      $region49: #{resblock_forward.1} parent=47 // pred_check
        %p7970 = pneg %p150
      $region50: #{resblock_forward.1} parent=47 // pred_check_branch
        %7972 = sbr.rel (%p7970) target = $region52
      $region51: #{resblock_forward.1} parent=47 // pred_region
        %p7973 = scmp.lt.s32.totalorder %s17, 1
        %s7974 = scalar_select %p7973, %s17, 1
        %s7975 = smul.addr %s7974, 2
        %s7976 = smul.addr %s7975, 4
        %s7977 = scalar_lea.vmem %s5, %s7976
      $region52: #{resblock_forward.1} parent=47 // pred_fallthru
        _
    $region48: #{resblock_forward.1} parent=5 // pred_fallthru
      _
  $region6: #{resblock_forward.1} parent=0 // loop_footer
    %s15 = sadd.s32 1, %s11
  $region7: #{resblock_forward.1} parent=0 // loop_footer_branch
    %10 = sbr.rel target = $region3
  $region8: #{resblock_forward.1} parent=0 // loop_exit
    _

</llo_original>
